<compile_context>
chip_gen: v7x
topology: tpu7x:2x2x1
jax: 0.10.0
libtpu: 0.0.40
codegen_flags: <defaults>
</compile_context>

<pallas_src>
import jax
import jax.numpy as jnp
from jax.experimental import pallas as pl
from jax.experimental.pallas import tpu as pltpu

# ---------------------------------------------------------------------------
# Model geometry: feature_size 1344 = 64 * (H-4) * (W-4)  =>  input is 7 x 11.
# ---------------------------------------------------------------------------
H_IN, W_IN = 7, 11
C1, C2 = 32, 64
KSIZE = 3
HO2, WO2 = H_IN - 4, W_IN - 4                  # 3, 7
FEATURE_SIZE = C2 * HO2 * WO2                  # 1344
HIDDEN = 256
NUM_ACTIONS = 4


def _round_up(n, m):
    return ((n + m - 1) // m) * m


MAX_OFF = (KSIZE - 1) * W_IN + (KSIZE - 1)             # 24: largest tap shift
CONV2_POS = _round_up(HO2 * W_IN, 8)                   # 40 conv2 canvas rows/img
A1_POS = _round_up(CONV2_POS + MAX_OFF, 8)             # 64 conv1 canvas rows/img
SPB_X = _round_up(max(A1_POS + MAX_OFF, H_IN * W_IN), 8)  # 88 input rows/img
FEAT_PAD = CONV2_POS * C2                              # 2560 padded fc1 K
MAX_TB = 32                                            # images per grid step
BATCH_ALIGN = 16                                       # bf16 sublane packing


# ---------------------------------------------------------------------------
# Fused kernel.  Canvas rows are position-major: row = p * TB + b, so a tap
# shift of `off` positions is a row shift of off*TB (always 8/16-aligned).
# Garbage rows (canvas positions past the valid image) stay finite because the
# wrapper zero-fills them, and they are annihilated by zero rows of w3.
# ---------------------------------------------------------------------------
def fused_dqn_kernel(xcol_ref, w1_ref, b1_ref, w2_ref, b2_ref,
                     w3_ref, b3_ref, w4_ref, b4_ref, o_ref,
                     a1_ref, col_ref, a2_ref, feat_ref):
    tb = o_ref.shape[0]
    n1 = a1_ref.shape[0]          # A1_POS * tb
    n2 = a2_ref.shape[0]          # CONV2_POS * tb

    # ---- conv1 + ReLU: 9 shifted multiply-adds on the VPU ------------------
    w1 = w1_ref[...]                                        # (9, 32) f32
    acc1 = jnp.zeros((n1, C1), jnp.float32)
    for t in range(KSIZE * KSIZE):
        di, dj = divmod(t, KSIZE)
        off = (di * W_IN + dj) * tb                         # aligned row shift
        acc1 = acc1 + xcol_ref[off:off + n1, :] * w1[t:t + 1]
    a1_ref[...] = jnp.maximum(acc1 + b1_ref[...], 0.0).astype(jnp.bfloat16)

    # ---- conv2 + ReLU: im2col staging + one K=288 bf16 MXU matmul ----------
    for t in range(KSIZE * KSIZE):
        di, dj = divmod(t, KSIZE)
        off = (di * W_IN + dj) * tb
        col_ref[:, t * C1:(t + 1) * C1] = a1_ref[off:off + n2, :]
    a2 = jnp.dot(col_ref[...], w2_ref[...], preferred_element_type=jnp.float32)
    a2_ref[...] = jnp.maximum(a2 + b2_ref[...], 0.0).astype(jnp.bfloat16)

    # ---- gather the p-major conv canvas into lane-major per-image features -
    for p in range(CONV2_POS):
        feat_ref[:, p * C2:(p + 1) * C2] = a2_ref[p * tb:(p + 1) * tb, :]

    # ---- fc1 + ReLU + fc2 ---------------------------------------------------
    h = jnp.dot(feat_ref[...], w3_ref[...], preferred_element_type=jnp.float32)
    h = jnp.maximum(h + b3_ref[...], 0.0)
    o_ref[...] = jnp.dot(h, w4_ref[...],
                         preferred_element_type=jnp.float32) + b4_ref[...]


# ---------------------------------------------------------------------------
# One-time weight repack (outside the per-step forward).
# ---------------------------------------------------------------------------
def prepare_params(params):
    # conv1: (32,1,3,3) -> (9, 32) indexed [tap, c_out]
    w1 = params["conv1_w"].reshape(C1, KSIZE * KSIZE).T
    b1 = params["conv1_b"].reshape(1, C1)
    # conv2 im2col weight: (64,32,3,3) -> (288, 64), row = tap*32 + c_in (bf16)
    w2 = params["conv2_w"].transpose(2, 3, 1, 0).reshape(KSIZE * KSIZE * C1, C2)
    b2 = params["conv2_b"].reshape(1, C2)
    # fc1: scatter PyTorch (c, h2, w2)-ordered columns into canvas (p, c) order
    # (p = h2*W_IN + w2), zero rows for invalid / padded canvas positions (bf16)
    w3_pt = params["fc1_w"].reshape(HIDDEN, C2, HO2, WO2)   # (256,64,3,7)
    w3_hwcn = w3_pt.transpose(2, 3, 1, 0)                   # (3,7,64,256)
    w3_canvas = (jnp.zeros((HO2, W_IN, C2, HIDDEN), jnp.float32)
                 .at[:, :WO2].set(w3_hwcn))                 # (3,11,64,256)
    w3_full = (jnp.zeros((CONV2_POS, C2, HIDDEN), jnp.float32)
               .at[:HO2 * W_IN].set(w3_canvas.reshape(HO2 * W_IN, C2, HIDDEN)))
    w3 = w3_full.reshape(FEAT_PAD, HIDDEN)
    b3 = params["fc1_b"].reshape(1, HIDDEN)
    w4 = params["fc2_w"].T                                  # (256, 4) f32
    b4 = params["fc2_b"].reshape(1, NUM_ACTIONS)
    return {"w1": w1.astype(jnp.float32), "b1": b1.astype(jnp.float32),
            "w2": w2.astype(jnp.bfloat16), "b2": b2.astype(jnp.float32),
            "w3": w3.astype(jnp.bfloat16), "b3": b3.astype(jnp.float32),
            "w4": w4.astype(jnp.float32), "b4": b4.astype(jnp.float32)}


# ---------------------------------------------------------------------------
# Forward pass.
# ---------------------------------------------------------------------------
def convdqn_forward(prep, x):
    if x.ndim == 4:                                         # (B,1,H,W) -> (B,H,W)
        x = x[:, 0]
    B = x.shape[0]
    assert x.shape[1:] == (H_IN, W_IN), x.shape
    x = x.reshape(B, H_IN * W_IN).astype(jnp.float32)

    # Batch tile: always a multiple of 16 (bf16 sublane packing alignment).
    TB = _round_up(B, BATCH_ALIGN) if B <= MAX_TB else MAX_TB
    B_pad = _round_up(B, TB)
    NB = B_pad // TB
    if B_pad != B:
        x = jnp.pad(x, ((0, B_pad - B), (0, 0)))

    # Position-major canvas: row = (tile*SPB_X + p)*TB + b, lanes = 32 (input
    # pixel broadcast), canvas positions >= 77 zero-filled (shift slack).
    xcan = jnp.zeros((B_pad, SPB_X), jnp.float32).at[:, :H_IN * W_IN].set(x)
    xcan = xcan.reshape(NB, TB, SPB_X).transpose(0, 2, 1)            # [i,p,b]
    xcol = jnp.broadcast_to(xcan[..., None],
                            (NB, SPB_X, TB, C1)).reshape(NB * SPB_X * TB, C1)

    cost = pl.CostEstimate(
        flops=B_pad * (2 * A1_POS * 9 * C1
                       + 2 * CONV2_POS * 9 * C1 * C2
                       + 2 * FEAT_PAD * HIDDEN
                       + 2 * HIDDEN * NUM_ACTIONS),
        transcendentals=0,
        bytes_accessed=int(xcol.size * 4
                           + prep["w2"].size * 2 + prep["w3"].size * 2
                           + (prep["w1"].size + prep["w4"].size
                              + C1 + C2 + HIDDEN + NUM_ACTIONS) * 4
                           + B_pad * NUM_ACTIONS * 4),
    )

    out = pl.pallas_call(
        fused_dqn_kernel,
        out_shape=jax.ShapeDtypeStruct((B_pad, NUM_ACTIONS), jnp.float32),
        grid=(NB,),
        in_specs=[
            pl.BlockSpec((SPB_X * TB, C1), lambda i: (i, 0)),        # canvas
            pl.BlockSpec((KSIZE * KSIZE, C1), lambda i: (0, 0)),     # w1
            pl.BlockSpec((1, C1), lambda i: (0, 0)),                 # b1
            pl.BlockSpec((KSIZE * KSIZE * C1, C2), lambda i: (0, 0)),  # w2
            pl.BlockSpec((1, C2), lambda i: (0, 0)),                 # b2
            pl.BlockSpec((FEAT_PAD, HIDDEN), lambda i: (0, 0)),      # w3
            pl.BlockSpec((1, HIDDEN), lambda i: (0, 0)),             # b3
            pl.BlockSpec((HIDDEN, NUM_ACTIONS), lambda i: (0, 0)),   # w4
            pl.BlockSpec((1, NUM_ACTIONS), lambda i: (0, 0)),        # b4
        ],
        out_specs=pl.BlockSpec((TB, NUM_ACTIONS), lambda i: (i, 0)),
        scratch_shapes=[
            pltpu.VMEM((A1_POS * TB, C1), jnp.bfloat16),             # a1
            pltpu.VMEM((CONV2_POS * TB, KSIZE * KSIZE * C1), jnp.bfloat16),
            pltpu.VMEM((CONV2_POS * TB, C2), jnp.bfloat16),          # a2
            pltpu.VMEM((TB, FEAT_PAD), jnp.bfloat16),                # features
        ],
        compiler_params=pltpu.CompilerParams(
            dimension_semantics=("parallel",),
            vmem_limit_bytes=32 * 1024 * 1024),
        cost_estimate=cost,
    )(xcol, prep["w1"], prep["b1"], prep["w2"], prep["b2"],
      prep["w3"], prep["b3"], prep["w4"], prep["b4"])
    return out[:B]


# ---------------------------------------------------------------------------
# Parameters (PyTorch layouts) + pure-JAX reference for the correctness check.
# ---------------------------------------------------------------------------
def init_params(key):
    ks = jax.random.split(key, 8)

    def u(k, shape, fan_in):
        bound = 1.0 / jnp.sqrt(fan_in)
        return jax.random.uniform(k, shape, jnp.float32, -bound, bound)

    return {
        "conv1_w": u(ks[0], (C1, 1, 3, 3), 1 * 9),
        "conv1_b": u(ks[1], (C1,), 1 * 9),
        "conv2_w": u(ks[2], (C2, C1, 3, 3), C1 * 9),
        "conv2_b": u(ks[3], (C2,), C1 * 9),
        "fc1_w":   u(ks[4], (HIDDEN, FEATURE_SIZE), FEATURE_SIZE),
        "fc1_b":   u(ks[5], (HIDDEN,), FEATURE_SIZE),
        "fc2_w":   u(ks[6], (NUM_ACTIONS, HIDDEN), HIDDEN),
        "fc2_b":   u(ks[7], (NUM_ACTIONS,), HIDDEN),
    }


def convdqn_reference(params, x):
    if x.ndim == 3:
        x = x[:, None, :, :]
    dn = ("NCHW", "OIHW", "NCHW")
    x = jax.lax.conv_general_dilated(x, params["conv1_w"], (1, 1), "VALID",
                                     dimension_numbers=dn)
    x = jax.nn.relu(x + params["conv1_b"][None, :, None, None])
    x = jax.lax.conv_general_dilated(x, params["conv2_w"], (1, 1), "VALID",
                                     dimension_numbers=dn)
    x = jax.nn.relu(x + params["conv2_b"][None, :, None, None])
    x = x.reshape(x.shape[0], -1)
    x = jax.nn.relu(x @ params["fc1_w"].T + params["fc1_b"])
    x = x @ params["fc2_w"].T + params["fc2_b"]
    return x


if __name__ == "__main__":
    key = jax.random.PRNGKey(0)
    pkey, xkey = jax.random.split(key)
    params = init_params(pkey)
    prep = prepare_params(params)                           # one-time repack

    # Module's 3D input path (B, H, W); feature_size 1344 => 7 x 11 input.
    x = jax.random.normal(xkey, (2, H_IN, W_IN), jnp.float32)

    fwd = jax.jit(convdqn_forward)
    out = jax.block_until_ready(fwd(prep, x))
    assert out.shape == (2, NUM_ACTIONS), out.shape

    ref = convdqn_reference(params, x)
    # bf16 MXU operands with f32 accumulation => slightly looser tolerance
    # than a pure-f32 pipeline.
    assert jnp.allclose(out, ref, atol=2e-2, rtol=2e-2), (
        float(jnp.max(jnp.abs(out - ref))), out, ref)

    # Also exercise the multi-tile batch-grid path (NB > 1) once.
    xg = jax.random.normal(jax.random.split(xkey)[0], (40, H_IN, W_IN),
                           jnp.float32)
    outg = jax.block_until_ready(fwd(prep, xg))
    refg = convdqn_reference(params, xg)
    assert outg.shape == (40, NUM_ACTIONS), outg.shape
    assert jnp.allclose(outg, refg, atol=2e-2, rtol=2e-2), (
        float(jnp.max(jnp.abs(outg - refg))))

    print("KERNEL_OK")
</pallas_src>

<mosaic_0001>
module attributes {stable_mosaic.version = 11 : i64} {
  func.func @fused_dqn_kernel(%arg0: i32, %arg1: memref<1408x32xf32, #tpu.memory_space<vmem>>, %arg2: memref<9x32xf32, #tpu.memory_space<vmem>>, %arg3: memref<1x32xf32, #tpu.memory_space<vmem>>, %arg4: memref<288x64xbf16, #tpu.memory_space<vmem>>, %arg5: memref<1x64xf32, #tpu.memory_space<vmem>>, %arg6: memref<2560x256xbf16, #tpu.memory_space<vmem>>, %arg7: memref<1x256xf32, #tpu.memory_space<vmem>>, %arg8: memref<256x4xf32, #tpu.memory_space<vmem>>, %arg9: memref<1x4xf32, #tpu.memory_space<vmem>>, %arg10: memref<16x4xf32, #tpu.memory_space<vmem>>, %arg11: memref<1024x32xbf16, #tpu.memory_space<vmem>>, %arg12: memref<640x288xbf16, #tpu.memory_space<vmem>>, %arg13: memref<640x64xbf16, #tpu.memory_space<vmem>>, %arg14: memref<16x2560xbf16, #tpu.memory_space<vmem>>) attributes {dimension_semantics = [#tpu.dimension_semantics<parallel>], iteration_bounds = array<i64: 1>, scalar_prefetch = 0 : i64, scratch_operands = 4 : i64, tpu.core_type = #tpu.core_type<tc>, window_params = [{transform_indices = @transform_0, window_bounds = array<i64: 1408, 32>}, {pipeline_mode = #tpu.pipeline_mode<synchronous>, transform_indices = @transform_1, window_bounds = array<i64: 9, 32>}, {pipeline_mode = #tpu.pipeline_mode<synchronous>, transform_indices = @transform_2, window_bounds = array<i64: 1, 32>}, {pipeline_mode = #tpu.pipeline_mode<synchronous>, transform_indices = @transform_3, window_bounds = array<i64: 288, 64>}, {pipeline_mode = #tpu.pipeline_mode<synchronous>, transform_indices = @transform_4, window_bounds = array<i64: 1, 64>}, {pipeline_mode = #tpu.pipeline_mode<synchronous>, transform_indices = @transform_5, window_bounds = array<i64: 2560, 256>}, {pipeline_mode = #tpu.pipeline_mode<synchronous>, transform_indices = @transform_6, window_bounds = array<i64: 1, 256>}, {pipeline_mode = #tpu.pipeline_mode<synchronous>, transform_indices = @transform_7, window_bounds = array<i64: 256, 4>}, {pipeline_mode = #tpu.pipeline_mode<synchronous>, transform_indices = @transform_8, window_bounds = array<i64: 1, 4>}, {transform_indices = @transform_9, window_bounds = array<i64: 16, 4>}]} {
    %c0 = arith.constant 0 : index
    %c0_0 = arith.constant 0 : index
    %0 = vector.load %arg2[%c0, %c0_0] : memref<9x32xf32, #tpu.memory_space<vmem>>, vector<9x32xf32>
    %cst = arith.constant 0.000000e+00 : f32
    %1 = vector.broadcast %cst : f32 to vector<1024x32xf32>
    %c0_1 = arith.constant 0 : index
    %c0_2 = arith.constant 0 : index
    %2 = vector.load %arg1[%c0_1, %c0_2] : memref<1408x32xf32, #tpu.memory_space<vmem>>, vector<1024x32xf32>
    %3 = vector.extract_strided_slice %0 {offsets = [0, 0], sizes = [1, 32], strides = [1, 1]} : vector<9x32xf32> to vector<1x32xf32>
    %4 = vector.broadcast %3 : vector<1x32xf32> to vector<1024x32xf32>
    %5 = arith.mulf %2, %4 : vector<1024x32xf32>
    %6 = arith.addf %1, %5 : vector<1024x32xf32>
    %c16 = arith.constant 16 : index
    %c0_3 = arith.constant 0 : index
    %7 = vector.load %arg1[%c16, %c0_3] : memref<1408x32xf32, #tpu.memory_space<vmem>>, vector<1024x32xf32>
    %8 = vector.extract_strided_slice %0 {offsets = [1, 0], sizes = [1, 32], strides = [1, 1]} : vector<9x32xf32> to vector<1x32xf32>
    %9 = vector.broadcast %8 : vector<1x32xf32> to vector<1024x32xf32>
    %10 = arith.mulf %7, %9 : vector<1024x32xf32>
    %11 = arith.addf %6, %10 : vector<1024x32xf32>
    %c32 = arith.constant 32 : index
    %c0_4 = arith.constant 0 : index
    %12 = vector.load %arg1[%c32, %c0_4] : memref<1408x32xf32, #tpu.memory_space<vmem>>, vector<1024x32xf32>
    %13 = vector.extract_strided_slice %0 {offsets = [2, 0], sizes = [1, 32], strides = [1, 1]} : vector<9x32xf32> to vector<1x32xf32>
    %14 = vector.broadcast %13 : vector<1x32xf32> to vector<1024x32xf32>
    %15 = arith.mulf %12, %14 : vector<1024x32xf32>
    %16 = arith.addf %11, %15 : vector<1024x32xf32>
    %c176 = arith.constant 176 : index
    %c0_5 = arith.constant 0 : index
    %17 = vector.load %arg1[%c176, %c0_5] : memref<1408x32xf32, #tpu.memory_space<vmem>>, vector<1024x32xf32>
    %18 = vector.extract_strided_slice %0 {offsets = [3, 0], sizes = [1, 32], strides = [1, 1]} : vector<9x32xf32> to vector<1x32xf32>
    %19 = vector.broadcast %18 : vector<1x32xf32> to vector<1024x32xf32>
    %20 = arith.mulf %17, %19 : vector<1024x32xf32>
    %21 = arith.addf %16, %20 : vector<1024x32xf32>
    %c192 = arith.constant 192 : index
    %c0_6 = arith.constant 0 : index
    %22 = vector.load %arg1[%c192, %c0_6] : memref<1408x32xf32, #tpu.memory_space<vmem>>, vector<1024x32xf32>
    %23 = vector.extract_strided_slice %0 {offsets = [4, 0], sizes = [1, 32], strides = [1, 1]} : vector<9x32xf32> to vector<1x32xf32>
    %24 = vector.broadcast %23 : vector<1x32xf32> to vector<1024x32xf32>
    %25 = arith.mulf %22, %24 : vector<1024x32xf32>
    %26 = arith.addf %21, %25 : vector<1024x32xf32>
    %c208 = arith.constant 208 : index
    %c0_7 = arith.constant 0 : index
    %27 = vector.load %arg1[%c208, %c0_7] : memref<1408x32xf32, #tpu.memory_space<vmem>>, vector<1024x32xf32>
    %28 = vector.extract_strided_slice %0 {offsets = [5, 0], sizes = [1, 32], strides = [1, 1]} : vector<9x32xf32> to vector<1x32xf32>
    %29 = vector.broadcast %28 : vector<1x32xf32> to vector<1024x32xf32>
    %30 = arith.mulf %27, %29 : vector<1024x32xf32>
    %31 = arith.addf %26, %30 : vector<1024x32xf32>
    %c352 = arith.constant 352 : index
    %c0_8 = arith.constant 0 : index
    %32 = vector.load %arg1[%c352, %c0_8] : memref<1408x32xf32, #tpu.memory_space<vmem>>, vector<1024x32xf32>
    %33 = vector.extract_strided_slice %0 {offsets = [6, 0], sizes = [1, 32], strides = [1, 1]} : vector<9x32xf32> to vector<1x32xf32>
    %34 = vector.broadcast %33 : vector<1x32xf32> to vector<1024x32xf32>
    %35 = arith.mulf %32, %34 : vector<1024x32xf32>
    %36 = arith.addf %31, %35 : vector<1024x32xf32>
    %c368 = arith.constant 368 : index
    %c0_9 = arith.constant 0 : index
    %37 = vector.load %arg1[%c368, %c0_9] : memref<1408x32xf32, #tpu.memory_space<vmem>>, vector<1024x32xf32>
    %38 = vector.extract_strided_slice %0 {offsets = [7, 0], sizes = [1, 32], strides = [1, 1]} : vector<9x32xf32> to vector<1x32xf32>
    %39 = vector.broadcast %38 : vector<1x32xf32> to vector<1024x32xf32>
    %40 = arith.mulf %37, %39 : vector<1024x32xf32>
    %41 = arith.addf %36, %40 : vector<1024x32xf32>
    %c384 = arith.constant 384 : index
    %c0_10 = arith.constant 0 : index
    %42 = vector.load %arg1[%c384, %c0_10] : memref<1408x32xf32, #tpu.memory_space<vmem>>, vector<1024x32xf32>
    %43 = vector.extract_strided_slice %0 {offsets = [8, 0], sizes = [1, 32], strides = [1, 1]} : vector<9x32xf32> to vector<1x32xf32>
    %44 = vector.broadcast %43 : vector<1x32xf32> to vector<1024x32xf32>
    %45 = arith.mulf %42, %44 : vector<1024x32xf32>
    %46 = arith.addf %41, %45 : vector<1024x32xf32>
    %c0_11 = arith.constant 0 : index
    %c0_12 = arith.constant 0 : index
    %47 = vector.load %arg3[%c0_11, %c0_12] : memref<1x32xf32, #tpu.memory_space<vmem>>, vector<1x32xf32>
    %48 = vector.broadcast %47 : vector<1x32xf32> to vector<1024x32xf32>
    %49 = arith.addf %46, %48 : vector<1024x32xf32>
    %cst_13 = arith.constant 0.000000e+00 : f32
    %50 = vector.broadcast %cst_13 : f32 to vector<1024x32xf32>
    %51 = arith.maximumf %49, %50 : vector<1024x32xf32>
    %52 = arith.truncf %51 : vector<1024x32xf32> to vector<1024x32xbf16>
    %c0_14 = arith.constant 0 : index
    %c0_15 = arith.constant 0 : index
    %53 = vector.load %arg11[%c0_14, %c0_15] : memref<1024x32xbf16, #tpu.memory_space<vmem>>, vector<1024x32xbf16>
    tpu.vector_store %arg11[%c0_14, %c0_15], %52 {strides = array<i32>} : memref<1024x32xbf16, #tpu.memory_space<vmem>>, vector<1024x32xbf16>,
    %c0_16 = arith.constant 0 : index
    %c0_17 = arith.constant 0 : index
    %54 = vector.load %arg11[%c0_16, %c0_17] : memref<1024x32xbf16, #tpu.memory_space<vmem>>, vector<640x32xbf16>
    %c0_18 = arith.constant 0 : index
    %c0_19 = arith.constant 0 : index
    %55 = vector.load %arg12[%c0_18, %c0_19] : memref<640x288xbf16, #tpu.memory_space<vmem>>, vector<640x32xbf16>
    tpu.vector_store %arg12[%c0_18, %c0_19], %54 {strides = array<i32>} : memref<640x288xbf16, #tpu.memory_space<vmem>>, vector<640x32xbf16>,
    %c16_20 = arith.constant 16 : index
    %c0_21 = arith.constant 0 : index
    %56 = vector.load %arg11[%c16_20, %c0_21] : memref<1024x32xbf16, #tpu.memory_space<vmem>>, vector<640x32xbf16>
    %c0_22 = arith.constant 0 : index
    %c32_23 = arith.constant 32 : index
    %57 = vector.load %arg12[%c0_22, %c32_23] : memref<640x288xbf16, #tpu.memory_space<vmem>>, vector<640x32xbf16>
    tpu.vector_store %arg12[%c0_22, %c32_23], %56 {strides = array<i32>} : memref<640x288xbf16, #tpu.memory_space<vmem>>, vector<640x32xbf16>,
    %c32_24 = arith.constant 32 : index
    %c0_25 = arith.constant 0 : index
    %58 = vector.load %arg11[%c32_24, %c0_25] : memref<1024x32xbf16, #tpu.memory_space<vmem>>, vector<640x32xbf16>
    %c0_26 = arith.constant 0 : index
    %c64 = arith.constant 64 : index
    %59 = vector.load %arg12[%c0_26, %c64] : memref<640x288xbf16, #tpu.memory_space<vmem>>, vector<640x32xbf16>
    tpu.vector_store %arg12[%c0_26, %c64], %58 {strides = array<i32>} : memref<640x288xbf16, #tpu.memory_space<vmem>>, vector<640x32xbf16>,
    %c176_27 = arith.constant 176 : index
    %c0_28 = arith.constant 0 : index
    %60 = vector.load %arg11[%c176_27, %c0_28] : memref<1024x32xbf16, #tpu.memory_space<vmem>>, vector<640x32xbf16>
    %c0_29 = arith.constant 0 : index
    %c96 = arith.constant 96 : index
    %61 = vector.load %arg12[%c0_29, %c96] : memref<640x288xbf16, #tpu.memory_space<vmem>>, vector<640x32xbf16>
    tpu.vector_store %arg12[%c0_29, %c96], %60 {strides = array<i32>} : memref<640x288xbf16, #tpu.memory_space<vmem>>, vector<640x32xbf16>,
    %c192_30 = arith.constant 192 : index
    %c0_31 = arith.constant 0 : index
    %62 = vector.load %arg11[%c192_30, %c0_31] : memref<1024x32xbf16, #tpu.memory_space<vmem>>, vector<640x32xbf16>
    %c0_32 = arith.constant 0 : index
    %c128 = arith.constant 128 : index
    %63 = vector.load %arg12[%c0_32, %c128] : memref<640x288xbf16, #tpu.memory_space<vmem>>, vector<640x32xbf16>
    tpu.vector_store %arg12[%c0_32, %c128], %62 {strides = array<i32>} : memref<640x288xbf16, #tpu.memory_space<vmem>>, vector<640x32xbf16>,
    %c208_33 = arith.constant 208 : index
    %c0_34 = arith.constant 0 : index
    %64 = vector.load %arg11[%c208_33, %c0_34] : memref<1024x32xbf16, #tpu.memory_space<vmem>>, vector<640x32xbf16>
    %c0_35 = arith.constant 0 : index
    %c160 = arith.constant 160 : index
    %65 = vector.load %arg12[%c0_35, %c160] : memref<640x288xbf16, #tpu.memory_space<vmem>>, vector<640x32xbf16>
    tpu.vector_store %arg12[%c0_35, %c160], %64 {strides = array<i32>} : memref<640x288xbf16, #tpu.memory_space<vmem>>, vector<640x32xbf16>,
    %c352_36 = arith.constant 352 : index
    %c0_37 = arith.constant 0 : index
    %66 = vector.load %arg11[%c352_36, %c0_37] : memref<1024x32xbf16, #tpu.memory_space<vmem>>, vector<640x32xbf16>
    %c0_38 = arith.constant 0 : index
    %c192_39 = arith.constant 192 : index
    %67 = vector.load %arg12[%c0_38, %c192_39] : memref<640x288xbf16, #tpu.memory_space<vmem>>, vector<640x32xbf16>
    tpu.vector_store %arg12[%c0_38, %c192_39], %66 {strides = array<i32>} : memref<640x288xbf16, #tpu.memory_space<vmem>>, vector<640x32xbf16>,
    %c368_40 = arith.constant 368 : index
    %c0_41 = arith.constant 0 : index
    %68 = vector.load %arg11[%c368_40, %c0_41] : memref<1024x32xbf16, #tpu.memory_space<vmem>>, vector<640x32xbf16>
    %c0_42 = arith.constant 0 : index
    %c224 = arith.constant 224 : index
    %69 = vector.load %arg12[%c0_42, %c224] : memref<640x288xbf16, #tpu.memory_space<vmem>>, vector<640x32xbf16>
    tpu.vector_store %arg12[%c0_42, %c224], %68 {strides = array<i32>} : memref<640x288xbf16, #tpu.memory_space<vmem>>, vector<640x32xbf16>,
    %c384_43 = arith.constant 384 : index
    %c0_44 = arith.constant 0 : index
    %70 = vector.load %arg11[%c384_43, %c0_44] : memref<1024x32xbf16, #tpu.memory_space<vmem>>, vector<640x32xbf16>
    %c0_45 = arith.constant 0 : index
    %c256 = arith.constant 256 : index
    %71 = vector.load %arg12[%c0_45, %c256] : memref<640x288xbf16, #tpu.memory_space<vmem>>, vector<640x32xbf16>
    tpu.vector_store %arg12[%c0_45, %c256], %70 {strides = array<i32>} : memref<640x288xbf16, #tpu.memory_space<vmem>>, vector<640x32xbf16>,
    %c0_46 = arith.constant 0 : index
    %c0_47 = arith.constant 0 : index
    %72 = vector.load %arg12[%c0_46, %c0_47] : memref<640x288xbf16, #tpu.memory_space<vmem>>, vector<640x288xbf16>
    %c0_48 = arith.constant 0 : index
    %c0_49 = arith.constant 0 : index
    %73 = vector.load %arg4[%c0_48, %c0_49] : memref<288x64xbf16, #tpu.memory_space<vmem>>, vector<288x64xbf16>
    %cst_50 = arith.constant dense<0.000000e+00> : vector<640x64xf32>
    %74 = tpu.matmul %72, %73, %cst_50 {dimension_numbers = #tpu.dot_dimension_numbers<[1], [0], [0], [1], [0, 0, 1, 1], [], []>} : vector<640x288xbf16>, vector<288x64xbf16>, vector<640x64xf32> -> vector<640x64xf32>
    %c0_51 = arith.constant 0 : index
    %c0_52 = arith.constant 0 : index
    %75 = vector.load %arg5[%c0_51, %c0_52] : memref<1x64xf32, #tpu.memory_space<vmem>>, vector<1x64xf32>
    %76 = vector.broadcast %75 : vector<1x64xf32> to vector<640x64xf32>
    %77 = arith.addf %74, %76 : vector<640x64xf32>
    %cst_53 = arith.constant 0.000000e+00 : f32
    %78 = vector.broadcast %cst_53 : f32 to vector<640x64xf32>
    %79 = arith.maximumf %77, %78 : vector<640x64xf32>
    %80 = arith.truncf %79 : vector<640x64xf32> to vector<640x64xbf16>
    %c0_54 = arith.constant 0 : index
    %c0_55 = arith.constant 0 : index
    %81 = vector.load %arg13[%c0_54, %c0_55] : memref<640x64xbf16, #tpu.memory_space<vmem>>, vector<640x64xbf16>
    tpu.vector_store %arg13[%c0_54, %c0_55], %80 {strides = array<i32>} : memref<640x64xbf16, #tpu.memory_space<vmem>>, vector<640x64xbf16>,
    %c0_56 = arith.constant 0 : index
    %c0_57 = arith.constant 0 : index
    %82 = vector.load %arg13[%c0_56, %c0_57] : memref<640x64xbf16, #tpu.memory_space<vmem>>, vector<16x64xbf16>
    %c0_58 = arith.constant 0 : index
    %c0_59 = arith.constant 0 : index
    %83 = vector.load %arg14[%c0_58, %c0_59] : memref<16x2560xbf16, #tpu.memory_space<vmem>>, vector<16x64xbf16>
    tpu.vector_store %arg14[%c0_58, %c0_59], %82 {strides = array<i32>} : memref<16x2560xbf16, #tpu.memory_space<vmem>>, vector<16x64xbf16>,
    %c16_60 = arith.constant 16 : index
    %c0_61 = arith.constant 0 : index
    %84 = vector.load %arg13[%c16_60, %c0_61] : memref<640x64xbf16, #tpu.memory_space<vmem>>, vector<16x64xbf16>
    %c0_62 = arith.constant 0 : index
    %c64_63 = arith.constant 64 : index
    %85 = vector.load %arg14[%c0_62, %c64_63] : memref<16x2560xbf16, #tpu.memory_space<vmem>>, vector<16x64xbf16>
    tpu.vector_store %arg14[%c0_62, %c64_63], %84 {strides = array<i32>} : memref<16x2560xbf16, #tpu.memory_space<vmem>>, vector<16x64xbf16>,
    %c32_64 = arith.constant 32 : index
    %c0_65 = arith.constant 0 : index
    %86 = vector.load %arg13[%c32_64, %c0_65] : memref<640x64xbf16, #tpu.memory_space<vmem>>, vector<16x64xbf16>
    %c0_66 = arith.constant 0 : index
    %c128_67 = arith.constant 128 : index
    %87 = vector.load %arg14[%c0_66, %c128_67] : memref<16x2560xbf16, #tpu.memory_space<vmem>>, vector<16x64xbf16>
    tpu.vector_store %arg14[%c0_66, %c128_67], %86 {strides = array<i32>} : memref<16x2560xbf16, #tpu.memory_space<vmem>>, vector<16x64xbf16>,
    %c48 = arith.constant 48 : index
    %c0_68 = arith.constant 0 : index
    %88 = vector.load %arg13[%c48, %c0_68] : memref<640x64xbf16, #tpu.memory_space<vmem>>, vector<16x64xbf16>
    %c0_69 = arith.constant 0 : index
    %c192_70 = arith.constant 192 : index
    %89 = vector.load %arg14[%c0_69, %c192_70] : memref<16x2560xbf16, #tpu.memory_space<vmem>>, vector<16x64xbf16>
    tpu.vector_store %arg14[%c0_69, %c192_70], %88 {strides = array<i32>} : memref<16x2560xbf16, #tpu.memory_space<vmem>>, vector<16x64xbf16>,
    %c64_71 = arith.constant 64 : index
    %c0_72 = arith.constant 0 : index
    %90 = vector.load %arg13[%c64_71, %c0_72] : memref<640x64xbf16, #tpu.memory_space<vmem>>, vector<16x64xbf16>
    %c0_73 = arith.constant 0 : index
    %c256_74 = arith.constant 256 : index
    %91 = vector.load %arg14[%c0_73, %c256_74] : memref<16x2560xbf16, #tpu.memory_space<vmem>>, vector<16x64xbf16>
    tpu.vector_store %arg14[%c0_73, %c256_74], %90 {strides = array<i32>} : memref<16x2560xbf16, #tpu.memory_space<vmem>>, vector<16x64xbf16>,
    %c80 = arith.constant 80 : index
    %c0_75 = arith.constant 0 : index
    %92 = vector.load %arg13[%c80, %c0_75] : memref<640x64xbf16, #tpu.memory_space<vmem>>, vector<16x64xbf16>
    %c0_76 = arith.constant 0 : index
    %c320 = arith.constant 320 : index
    %93 = vector.load %arg14[%c0_76, %c320] : memref<16x2560xbf16, #tpu.memory_space<vmem>>, vector<16x64xbf16>
    tpu.vector_store %arg14[%c0_76, %c320], %92 {strides = array<i32>} : memref<16x2560xbf16, #tpu.memory_space<vmem>>, vector<16x64xbf16>,
    %c96_77 = arith.constant 96 : index
    %c0_78 = arith.constant 0 : index
    %94 = vector.load %arg13[%c96_77, %c0_78] : memref<640x64xbf16, #tpu.memory_space<vmem>>, vector<16x64xbf16>
    %c0_79 = arith.constant 0 : index
    %c384_80 = arith.constant 384 : index
    %95 = vector.load %arg14[%c0_79, %c384_80] : memref<16x2560xbf16, #tpu.memory_space<vmem>>, vector<16x64xbf16>
    tpu.vector_store %arg14[%c0_79, %c384_80], %94 {strides = array<i32>} : memref<16x2560xbf16, #tpu.memory_space<vmem>>, vector<16x64xbf16>,
    %c112 = arith.constant 112 : index
    %c0_81 = arith.constant 0 : index
    %96 = vector.load %arg13[%c112, %c0_81] : memref<640x64xbf16, #tpu.memory_space<vmem>>, vector<16x64xbf16>
    %c0_82 = arith.constant 0 : index
    %c448 = arith.constant 448 : index
    %97 = vector.load %arg14[%c0_82, %c448] : memref<16x2560xbf16, #tpu.memory_space<vmem>>, vector<16x64xbf16>
    tpu.vector_store %arg14[%c0_82, %c448], %96 {strides = array<i32>} : memref<16x2560xbf16, #tpu.memory_space<vmem>>, vector<16x64xbf16>,
    %c128_83 = arith.constant 128 : index
    %c0_84 = arith.constant 0 : index
    %98 = vector.load %arg13[%c128_83, %c0_84] : memref<640x64xbf16, #tpu.memory_space<vmem>>, vector<16x64xbf16>
    %c0_85 = arith.constant 0 : index
    %c512 = arith.constant 512 : index
    %99 = vector.load %arg14[%c0_85, %c512] : memref<16x2560xbf16, #tpu.memory_space<vmem>>, vector<16x64xbf16>
    tpu.vector_store %arg14[%c0_85, %c512], %98 {strides = array<i32>} : memref<16x2560xbf16, #tpu.memory_space<vmem>>, vector<16x64xbf16>,
    %c144 = arith.constant 144 : index
    %c0_86 = arith.constant 0 : index
    %100 = vector.load %arg13[%c144, %c0_86] : memref<640x64xbf16, #tpu.memory_space<vmem>>, vector<16x64xbf16>
    %c0_87 = arith.constant 0 : index
    %c576 = arith.constant 576 : index
    %101 = vector.load %arg14[%c0_87, %c576] : memref<16x2560xbf16, #tpu.memory_space<vmem>>, vector<16x64xbf16>
    tpu.vector_store %arg14[%c0_87, %c576], %100 {strides = array<i32>} : memref<16x2560xbf16, #tpu.memory_space<vmem>>, vector<16x64xbf16>,
    %c160_88 = arith.constant 160 : index
    %c0_89 = arith.constant 0 : index
    %102 = vector.load %arg13[%c160_88, %c0_89] : memref<640x64xbf16, #tpu.memory_space<vmem>>, vector<16x64xbf16>
    %c0_90 = arith.constant 0 : index
    %c640 = arith.constant 640 : index
    %103 = vector.load %arg14[%c0_90, %c640] : memref<16x2560xbf16, #tpu.memory_space<vmem>>, vector<16x64xbf16>
    tpu.vector_store %arg14[%c0_90, %c640], %102 {strides = array<i32>} : memref<16x2560xbf16, #tpu.memory_space<vmem>>, vector<16x64xbf16>,
    %c176_91 = arith.constant 176 : index
    %c0_92 = arith.constant 0 : index
    %104 = vector.load %arg13[%c176_91, %c0_92] : memref<640x64xbf16, #tpu.memory_space<vmem>>, vector<16x64xbf16>
    %c0_93 = arith.constant 0 : index
    %c704 = arith.constant 704 : index
    %105 = vector.load %arg14[%c0_93, %c704] : memref<16x2560xbf16, #tpu.memory_space<vmem>>, vector<16x64xbf16>
    tpu.vector_store %arg14[%c0_93, %c704], %104 {strides = array<i32>} : memref<16x2560xbf16, #tpu.memory_space<vmem>>, vector<16x64xbf16>,
    %c192_94 = arith.constant 192 : index
    %c0_95 = arith.constant 0 : index
    %106 = vector.load %arg13[%c192_94, %c0_95] : memref<640x64xbf16, #tpu.memory_space<vmem>>, vector<16x64xbf16>
    %c0_96 = arith.constant 0 : index
    %c768 = arith.constant 768 : index
    %107 = vector.load %arg14[%c0_96, %c768] : memref<16x2560xbf16, #tpu.memory_space<vmem>>, vector<16x64xbf16>
    tpu.vector_store %arg14[%c0_96, %c768], %106 {strides = array<i32>} : memref<16x2560xbf16, #tpu.memory_space<vmem>>, vector<16x64xbf16>,
    %c208_97 = arith.constant 208 : index
    %c0_98 = arith.constant 0 : index
    %108 = vector.load %arg13[%c208_97, %c0_98] : memref<640x64xbf16, #tpu.memory_space<vmem>>, vector<16x64xbf16>
    %c0_99 = arith.constant 0 : index
    %c832 = arith.constant 832 : index
    %109 = vector.load %arg14[%c0_99, %c832] : memref<16x2560xbf16, #tpu.memory_space<vmem>>, vector<16x64xbf16>
    tpu.vector_store %arg14[%c0_99, %c832], %108 {strides = array<i32>} : memref<16x2560xbf16, #tpu.memory_space<vmem>>, vector<16x64xbf16>,
    %c224_100 = arith.constant 224 : index
    %c0_101 = arith.constant 0 : index
    %110 = vector.load %arg13[%c224_100, %c0_101] : memref<640x64xbf16, #tpu.memory_space<vmem>>, vector<16x64xbf16>
    %c0_102 = arith.constant 0 : index
    %c896 = arith.constant 896 : index
    %111 = vector.load %arg14[%c0_102, %c896] : memref<16x2560xbf16, #tpu.memory_space<vmem>>, vector<16x64xbf16>
    tpu.vector_store %arg14[%c0_102, %c896], %110 {strides = array<i32>} : memref<16x2560xbf16, #tpu.memory_space<vmem>>, vector<16x64xbf16>,
    %c240 = arith.constant 240 : index
    %c0_103 = arith.constant 0 : index
    %112 = vector.load %arg13[%c240, %c0_103] : memref<640x64xbf16, #tpu.memory_space<vmem>>, vector<16x64xbf16>
    %c0_104 = arith.constant 0 : index
    %c960 = arith.constant 960 : index
    %113 = vector.load %arg14[%c0_104, %c960] : memref<16x2560xbf16, #tpu.memory_space<vmem>>, vector<16x64xbf16>
    tpu.vector_store %arg14[%c0_104, %c960], %112 {strides = array<i32>} : memref<16x2560xbf16, #tpu.memory_space<vmem>>, vector<16x64xbf16>,
    %c256_105 = arith.constant 256 : index
    %c0_106 = arith.constant 0 : index
    %114 = vector.load %arg13[%c256_105, %c0_106] : memref<640x64xbf16, #tpu.memory_space<vmem>>, vector<16x64xbf16>
    %c0_107 = arith.constant 0 : index
    %c1024 = arith.constant 1024 : index
    %115 = vector.load %arg14[%c0_107, %c1024] : memref<16x2560xbf16, #tpu.memory_space<vmem>>, vector<16x64xbf16>
    tpu.vector_store %arg14[%c0_107, %c1024], %114 {strides = array<i32>} : memref<16x2560xbf16, #tpu.memory_space<vmem>>, vector<16x64xbf16>,
    %c272 = arith.constant 272 : index
    %c0_108 = arith.constant 0 : index
    %116 = vector.load %arg13[%c272, %c0_108] : memref<640x64xbf16, #tpu.memory_space<vmem>>, vector<16x64xbf16>
    %c0_109 = arith.constant 0 : index
    %c1088 = arith.constant 1088 : index
    %117 = vector.load %arg14[%c0_109, %c1088] : memref<16x2560xbf16, #tpu.memory_space<vmem>>, vector<16x64xbf16>
    tpu.vector_store %arg14[%c0_109, %c1088], %116 {strides = array<i32>} : memref<16x2560xbf16, #tpu.memory_space<vmem>>, vector<16x64xbf16>,
    %c288 = arith.constant 288 : index
    %c0_110 = arith.constant 0 : index
    %118 = vector.load %arg13[%c288, %c0_110] : memref<640x64xbf16, #tpu.memory_space<vmem>>, vector<16x64xbf16>
    %c0_111 = arith.constant 0 : index
    %c1152 = arith.constant 1152 : index
    %119 = vector.load %arg14[%c0_111, %c1152] : memref<16x2560xbf16, #tpu.memory_space<vmem>>, vector<16x64xbf16>
    tpu.vector_store %arg14[%c0_111, %c1152], %118 {strides = array<i32>} : memref<16x2560xbf16, #tpu.memory_space<vmem>>, vector<16x64xbf16>,
    %c304 = arith.constant 304 : index
    %c0_112 = arith.constant 0 : index
    %120 = vector.load %arg13[%c304, %c0_112] : memref<640x64xbf16, #tpu.memory_space<vmem>>, vector<16x64xbf16>
    %c0_113 = arith.constant 0 : index
    %c1216 = arith.constant 1216 : index
    %121 = vector.load %arg14[%c0_113, %c1216] : memref<16x2560xbf16, #tpu.memory_space<vmem>>, vector<16x64xbf16>
    tpu.vector_store %arg14[%c0_113, %c1216], %120 {strides = array<i32>} : memref<16x2560xbf16, #tpu.memory_space<vmem>>, vector<16x64xbf16>,
    %c320_114 = arith.constant 320 : index
    %c0_115 = arith.constant 0 : index
    %122 = vector.load %arg13[%c320_114, %c0_115] : memref<640x64xbf16, #tpu.memory_space<vmem>>, vector<16x64xbf16>
    %c0_116 = arith.constant 0 : index
    %c1280 = arith.constant 1280 : index
    %123 = vector.load %arg14[%c0_116, %c1280] : memref<16x2560xbf16, #tpu.memory_space<vmem>>, vector<16x64xbf16>
    tpu.vector_store %arg14[%c0_116, %c1280], %122 {strides = array<i32>} : memref<16x2560xbf16, #tpu.memory_space<vmem>>, vector<16x64xbf16>,
    %c336 = arith.constant 336 : index
    %c0_117 = arith.constant 0 : index
    %124 = vector.load %arg13[%c336, %c0_117] : memref<640x64xbf16, #tpu.memory_space<vmem>>, vector<16x64xbf16>
    %c0_118 = arith.constant 0 : index
    %c1344 = arith.constant 1344 : index
    %125 = vector.load %arg14[%c0_118, %c1344] : memref<16x2560xbf16, #tpu.memory_space<vmem>>, vector<16x64xbf16>
    tpu.vector_store %arg14[%c0_118, %c1344], %124 {strides = array<i32>} : memref<16x2560xbf16, #tpu.memory_space<vmem>>, vector<16x64xbf16>,
    %c352_119 = arith.constant 352 : index
    %c0_120 = arith.constant 0 : index
    %126 = vector.load %arg13[%c352_119, %c0_120] : memref<640x64xbf16, #tpu.memory_space<vmem>>, vector<16x64xbf16>
    %c0_121 = arith.constant 0 : index
    %c1408 = arith.constant 1408 : index
    %127 = vector.load %arg14[%c0_121, %c1408] : memref<16x2560xbf16, #tpu.memory_space<vmem>>, vector<16x64xbf16>
    tpu.vector_store %arg14[%c0_121, %c1408], %126 {strides = array<i32>} : memref<16x2560xbf16, #tpu.memory_space<vmem>>, vector<16x64xbf16>,
    %c368_122 = arith.constant 368 : index
    %c0_123 = arith.constant 0 : index
    %128 = vector.load %arg13[%c368_122, %c0_123] : memref<640x64xbf16, #tpu.memory_space<vmem>>, vector<16x64xbf16>
    %c0_124 = arith.constant 0 : index
    %c1472 = arith.constant 1472 : index
    %129 = vector.load %arg14[%c0_124, %c1472] : memref<16x2560xbf16, #tpu.memory_space<vmem>>, vector<16x64xbf16>
    tpu.vector_store %arg14[%c0_124, %c1472], %128 {strides = array<i32>} : memref<16x2560xbf16, #tpu.memory_space<vmem>>, vector<16x64xbf16>,
    %c384_125 = arith.constant 384 : index
    %c0_126 = arith.constant 0 : index
    %130 = vector.load %arg13[%c384_125, %c0_126] : memref<640x64xbf16, #tpu.memory_space<vmem>>, vector<16x64xbf16>
    %c0_127 = arith.constant 0 : index
    %c1536 = arith.constant 1536 : index
    %131 = vector.load %arg14[%c0_127, %c1536] : memref<16x2560xbf16, #tpu.memory_space<vmem>>, vector<16x64xbf16>
    tpu.vector_store %arg14[%c0_127, %c1536], %130 {strides = array<i32>} : memref<16x2560xbf16, #tpu.memory_space<vmem>>, vector<16x64xbf16>,
    %c400 = arith.constant 400 : index
    %c0_128 = arith.constant 0 : index
    %132 = vector.load %arg13[%c400, %c0_128] : memref<640x64xbf16, #tpu.memory_space<vmem>>, vector<16x64xbf16>
    %c0_129 = arith.constant 0 : index
    %c1600 = arith.constant 1600 : index
    %133 = vector.load %arg14[%c0_129, %c1600] : memref<16x2560xbf16, #tpu.memory_space<vmem>>, vector<16x64xbf16>
    tpu.vector_store %arg14[%c0_129, %c1600], %132 {strides = array<i32>} : memref<16x2560xbf16, #tpu.memory_space<vmem>>, vector<16x64xbf16>,
    %c416 = arith.constant 416 : index
    %c0_130 = arith.constant 0 : index
    %134 = vector.load %arg13[%c416, %c0_130] : memref<640x64xbf16, #tpu.memory_space<vmem>>, vector<16x64xbf16>
    %c0_131 = arith.constant 0 : index
    %c1664 = arith.constant 1664 : index
    %135 = vector.load %arg14[%c0_131, %c1664] : memref<16x2560xbf16, #tpu.memory_space<vmem>>, vector<16x64xbf16>
    tpu.vector_store %arg14[%c0_131, %c1664], %134 {strides = array<i32>} : memref<16x2560xbf16, #tpu.memory_space<vmem>>, vector<16x64xbf16>,
    %c432 = arith.constant 432 : index
    %c0_132 = arith.constant 0 : index
    %136 = vector.load %arg13[%c432, %c0_132] : memref<640x64xbf16, #tpu.memory_space<vmem>>, vector<16x64xbf16>
    %c0_133 = arith.constant 0 : index
    %c1728 = arith.constant 1728 : index
    %137 = vector.load %arg14[%c0_133, %c1728] : memref<16x2560xbf16, #tpu.memory_space<vmem>>, vector<16x64xbf16>
    tpu.vector_store %arg14[%c0_133, %c1728], %136 {strides = array<i32>} : memref<16x2560xbf16, #tpu.memory_space<vmem>>, vector<16x64xbf16>,
    %c448_134 = arith.constant 448 : index
    %c0_135 = arith.constant 0 : index
    %138 = vector.load %arg13[%c448_134, %c0_135] : memref<640x64xbf16, #tpu.memory_space<vmem>>, vector<16x64xbf16>
    %c0_136 = arith.constant 0 : index
    %c1792 = arith.constant 1792 : index
    %139 = vector.load %arg14[%c0_136, %c1792] : memref<16x2560xbf16, #tpu.memory_space<vmem>>, vector<16x64xbf16>
    tpu.vector_store %arg14[%c0_136, %c1792], %138 {strides = array<i32>} : memref<16x2560xbf16, #tpu.memory_space<vmem>>, vector<16x64xbf16>,
    %c464 = arith.constant 464 : index
    %c0_137 = arith.constant 0 : index
    %140 = vector.load %arg13[%c464, %c0_137] : memref<640x64xbf16, #tpu.memory_space<vmem>>, vector<16x64xbf16>
    %c0_138 = arith.constant 0 : index
    %c1856 = arith.constant 1856 : index
    %141 = vector.load %arg14[%c0_138, %c1856] : memref<16x2560xbf16, #tpu.memory_space<vmem>>, vector<16x64xbf16>
    tpu.vector_store %arg14[%c0_138, %c1856], %140 {strides = array<i32>} : memref<16x2560xbf16, #tpu.memory_space<vmem>>, vector<16x64xbf16>,
    %c480 = arith.constant 480 : index
    %c0_139 = arith.constant 0 : index
    %142 = vector.load %arg13[%c480, %c0_139] : memref<640x64xbf16, #tpu.memory_space<vmem>>, vector<16x64xbf16>
    %c0_140 = arith.constant 0 : index
    %c1920 = arith.constant 1920 : index
    %143 = vector.load %arg14[%c0_140, %c1920] : memref<16x2560xbf16, #tpu.memory_space<vmem>>, vector<16x64xbf16>
    tpu.vector_store %arg14[%c0_140, %c1920], %142 {strides = array<i32>} : memref<16x2560xbf16, #tpu.memory_space<vmem>>, vector<16x64xbf16>,
    %c496 = arith.constant 496 : index
    %c0_141 = arith.constant 0 : index
    %144 = vector.load %arg13[%c496, %c0_141] : memref<640x64xbf16, #tpu.memory_space<vmem>>, vector<16x64xbf16>
    %c0_142 = arith.constant 0 : index
    %c1984 = arith.constant 1984 : index
    %145 = vector.load %arg14[%c0_142, %c1984] : memref<16x2560xbf16, #tpu.memory_space<vmem>>, vector<16x64xbf16>
    tpu.vector_store %arg14[%c0_142, %c1984], %144 {strides = array<i32>} : memref<16x2560xbf16, #tpu.memory_space<vmem>>, vector<16x64xbf16>,
    %c512_143 = arith.constant 512 : index
    %c0_144 = arith.constant 0 : index
    %146 = vector.load %arg13[%c512_143, %c0_144] : memref<640x64xbf16, #tpu.memory_space<vmem>>, vector<16x64xbf16>
    %c0_145 = arith.constant 0 : index
    %c2048 = arith.constant 2048 : index
    %147 = vector.load %arg14[%c0_145, %c2048] : memref<16x2560xbf16, #tpu.memory_space<vmem>>, vector<16x64xbf16>
    tpu.vector_store %arg14[%c0_145, %c2048], %146 {strides = array<i32>} : memref<16x2560xbf16, #tpu.memory_space<vmem>>, vector<16x64xbf16>,
    %c528 = arith.constant 528 : index
    %c0_146 = arith.constant 0 : index
    %148 = vector.load %arg13[%c528, %c0_146] : memref<640x64xbf16, #tpu.memory_space<vmem>>, vector<16x64xbf16>
    %c0_147 = arith.constant 0 : index
    %c2112 = arith.constant 2112 : index
    %149 = vector.load %arg14[%c0_147, %c2112] : memref<16x2560xbf16, #tpu.memory_space<vmem>>, vector<16x64xbf16>
    tpu.vector_store %arg14[%c0_147, %c2112], %148 {strides = array<i32>} : memref<16x2560xbf16, #tpu.memory_space<vmem>>, vector<16x64xbf16>,
    %c544 = arith.constant 544 : index
    %c0_148 = arith.constant 0 : index
    %150 = vector.load %arg13[%c544, %c0_148] : memref<640x64xbf16, #tpu.memory_space<vmem>>, vector<16x64xbf16>
    %c0_149 = arith.constant 0 : index
    %c2176 = arith.constant 2176 : index
    %151 = vector.load %arg14[%c0_149, %c2176] : memref<16x2560xbf16, #tpu.memory_space<vmem>>, vector<16x64xbf16>
    tpu.vector_store %arg14[%c0_149, %c2176], %150 {strides = array<i32>} : memref<16x2560xbf16, #tpu.memory_space<vmem>>, vector<16x64xbf16>,
    %c560 = arith.constant 560 : index
    %c0_150 = arith.constant 0 : index
    %152 = vector.load %arg13[%c560, %c0_150] : memref<640x64xbf16, #tpu.memory_space<vmem>>, vector<16x64xbf16>
    %c0_151 = arith.constant 0 : index
    %c2240 = arith.constant 2240 : index
    %153 = vector.load %arg14[%c0_151, %c2240] : memref<16x2560xbf16, #tpu.memory_space<vmem>>, vector<16x64xbf16>
    tpu.vector_store %arg14[%c0_151, %c2240], %152 {strides = array<i32>} : memref<16x2560xbf16, #tpu.memory_space<vmem>>, vector<16x64xbf16>,
    %c576_152 = arith.constant 576 : index
    %c0_153 = arith.constant 0 : index
    %154 = vector.load %arg13[%c576_152, %c0_153] : memref<640x64xbf16, #tpu.memory_space<vmem>>, vector<16x64xbf16>
    %c0_154 = arith.constant 0 : index
    %c2304 = arith.constant 2304 : index
    %155 = vector.load %arg14[%c0_154, %c2304] : memref<16x2560xbf16, #tpu.memory_space<vmem>>, vector<16x64xbf16>
    tpu.vector_store %arg14[%c0_154, %c2304], %154 {strides = array<i32>} : memref<16x2560xbf16, #tpu.memory_space<vmem>>, vector<16x64xbf16>,
    %c592 = arith.constant 592 : index
    %c0_155 = arith.constant 0 : index
    %156 = vector.load %arg13[%c592, %c0_155] : memref<640x64xbf16, #tpu.memory_space<vmem>>, vector<16x64xbf16>
    %c0_156 = arith.constant 0 : index
    %c2368 = arith.constant 2368 : index
    %157 = vector.load %arg14[%c0_156, %c2368] : memref<16x2560xbf16, #tpu.memory_space<vmem>>, vector<16x64xbf16>
    tpu.vector_store %arg14[%c0_156, %c2368], %156 {strides = array<i32>} : memref<16x2560xbf16, #tpu.memory_space<vmem>>, vector<16x64xbf16>,
    %c608 = arith.constant 608 : index
    %c0_157 = arith.constant 0 : index
    %158 = vector.load %arg13[%c608, %c0_157] : memref<640x64xbf16, #tpu.memory_space<vmem>>, vector<16x64xbf16>
    %c0_158 = arith.constant 0 : index
    %c2432 = arith.constant 2432 : index
    %159 = vector.load %arg14[%c0_158, %c2432] : memref<16x2560xbf16, #tpu.memory_space<vmem>>, vector<16x64xbf16>
    tpu.vector_store %arg14[%c0_158, %c2432], %158 {strides = array<i32>} : memref<16x2560xbf16, #tpu.memory_space<vmem>>, vector<16x64xbf16>,
    %c624 = arith.constant 624 : index
    %c0_159 = arith.constant 0 : index
    %160 = vector.load %arg13[%c624, %c0_159] : memref<640x64xbf16, #tpu.memory_space<vmem>>, vector<16x64xbf16>
    %c0_160 = arith.constant 0 : index
    %c2496 = arith.constant 2496 : index
    %161 = vector.load %arg14[%c0_160, %c2496] : memref<16x2560xbf16, #tpu.memory_space<vmem>>, vector<16x64xbf16>
    tpu.vector_store %arg14[%c0_160, %c2496], %160 {strides = array<i32>} : memref<16x2560xbf16, #tpu.memory_space<vmem>>, vector<16x64xbf16>,
    %c0_161 = arith.constant 0 : index
    %c0_162 = arith.constant 0 : index
    %162 = vector.load %arg14[%c0_161, %c0_162] : memref<16x2560xbf16, #tpu.memory_space<vmem>>, vector<16x2560xbf16>
    %c0_163 = arith.constant 0 : index
    %c0_164 = arith.constant 0 : index
    %163 = vector.load %arg6[%c0_163, %c0_164] : memref<2560x256xbf16, #tpu.memory_space<vmem>>, vector<2560x256xbf16>
    %cst_165 = arith.constant dense<0.000000e+00> : vector<16x256xf32>
    %164 = tpu.matmul %162, %163, %cst_165 {dimension_numbers = #tpu.dot_dimension_numbers<[1], [0], [0], [1], [0, 0, 1, 1], [], []>} : vector<16x2560xbf16>, vector<2560x256xbf16>, vector<16x256xf32> -> vector<16x256xf32>
    %c0_166 = arith.constant 0 : index
    %c0_167 = arith.constant 0 : index
    %165 = vector.load %arg7[%c0_166, %c0_167] : memref<1x256xf32, #tpu.memory_space<vmem>>, vector<1x256xf32>
    %166 = vector.broadcast %165 : vector<1x256xf32> to vector<16x256xf32>
    %167 = arith.addf %164, %166 : vector<16x256xf32>
    %cst_168 = arith.constant 0.000000e+00 : f32
    %168 = vector.broadcast %cst_168 : f32 to vector<16x256xf32>
    %169 = arith.maximumf %167, %168 : vector<16x256xf32>
    %c0_169 = arith.constant 0 : index
    %c0_170 = arith.constant 0 : index
    %170 = vector.load %arg8[%c0_169, %c0_170] : memref<256x4xf32, #tpu.memory_space<vmem>>, vector<256x4xf32>
    %cst_171 = arith.constant dense<0.000000e+00> : vector<16x4xf32>
    %171 = tpu.matmul %169, %170, %cst_171 {dimension_numbers = #tpu.dot_dimension_numbers<[1], [0], [0], [1], [0, 0, 1, 1], [], []>} : vector<16x256xf32>, vector<256x4xf32>, vector<16x4xf32> -> vector<16x4xf32>
    %c0_172 = arith.constant 0 : index
    %c0_173 = arith.constant 0 : index
    %172 = vector.load %arg9[%c0_172, %c0_173] : memref<1x4xf32, #tpu.memory_space<vmem>>, vector<1x4xf32>
    %173 = vector.broadcast %172 : vector<1x4xf32> to vector<16x4xf32>
    %174 = arith.addf %171, %173 : vector<16x4xf32>
    %c0_174 = arith.constant 0 : index
    %c0_175 = arith.constant 0 : index
    %175 = vector.load %arg10[%c0_174, %c0_175] : memref<16x4xf32, #tpu.memory_space<vmem>>, vector<16x4xf32>
    tpu.vector_store %arg10[%c0_174, %c0_175], %174 {strides = array<i32>} : memref<16x4xf32, #tpu.memory_space<vmem>>, vector<16x4xf32>,
    return
  }
  func.func @transform_0(%arg0: i32) -> (i32, i32) {
    %c0_i32 = arith.constant 0 : i32
    %c0_i32_0 = arith.constant 0 : i32
    return %arg0, %c0_i32 : i32, i32
  }
  func.func @transform_1(%arg0: i32) -> (i32, i32) {
    %c0_i32 = arith.constant 0 : i32
    %c0_i32_0 = arith.constant 0 : i32
    %c0_i32_1 = arith.constant 0 : i32
    return %c0_i32, %c0_i32_0 : i32, i32
  }
  func.func @transform_2(%arg0: i32) -> (i32, i32) {
    %c0_i32 = arith.constant 0 : i32
    %c0_i32_0 = arith.constant 0 : i32
    %c0_i32_1 = arith.constant 0 : i32
    return %c0_i32, %c0_i32_0 : i32, i32
  }
  func.func @transform_3(%arg0: i32) -> (i32, i32) {
    %c0_i32 = arith.constant 0 : i32
    %c0_i32_0 = arith.constant 0 : i32
    %c0_i32_1 = arith.constant 0 : i32
    return %c0_i32, %c0_i32_0 : i32, i32
  }
  func.func @transform_4(%arg0: i32) -> (i32, i32) {
    %c0_i32 = arith.constant 0 : i32
    %c0_i32_0 = arith.constant 0 : i32
    %c0_i32_1 = arith.constant 0 : i32
    return %c0_i32, %c0_i32_0 : i32, i32
  }
  func.func @transform_5(%arg0: i32) -> (i32, i32) {
    %c0_i32 = arith.constant 0 : i32
    %c0_i32_0 = arith.constant 0 : i32
    %c0_i32_1 = arith.constant 0 : i32
    return %c0_i32, %c0_i32_0 : i32, i32
  }
  func.func @transform_6(%arg0: i32) -> (i32, i32) {
    %c0_i32 = arith.constant 0 : i32
    %c0_i32_0 = arith.constant 0 : i32
    %c0_i32_1 = arith.constant 0 : i32
    return %c0_i32, %c0_i32_0 : i32, i32
  }
  func.func @transform_7(%arg0: i32) -> (i32, i32) {
    %c0_i32 = arith.constant 0 : i32
    %c0_i32_0 = arith.constant 0 : i32
    %c0_i32_1 = arith.constant 0 : i32
    return %c0_i32, %c0_i32_0 : i32, i32
  }
  func.func @transform_8(%arg0: i32) -> (i32, i32) {
    %c0_i32 = arith.constant 0 : i32
    %c0_i32_0 = arith.constant 0 : i32
    %c0_i32_1 = arith.constant 0 : i32
    return %c0_i32, %c0_i32_0 : i32, i32
  }
  func.func @transform_9(%arg0: i32) -> (i32, i32) {
    %c0_i32 = arith.constant 0 : i32
    %c0_i32_0 = arith.constant 0 : i32
    return %arg0, %c0_i32 : i32, i32
  }
}

</mosaic_0001>

<llo_original>
// kernel: convdqn_forward.1
$region0: #{convdqn_forward.1}
  #allocation0 [shape = 'u32[]', space=smem, size = 0x4, offset = 0x4, fixed_abs, tag = 'smem constant byte address 0x4 - core index']
  #allocation1 [shape = 'u32[144,128]{1,0:T(1,128)}', space=vmem, size = 0x12000, scoped, tag = 'internal scratch']
  #allocation2 [shape = 'bf16[1024,32]{1,0:T(16,128)(2,1)}', space=vmem, size = 0x40000, scoped, tag = 'scratch operand']
  #allocation3 [shape = 'bf16[640,288]{1,0:T(16,128)(2,1)}', space=vmem, size = 0x78000, scoped, tag = 'scratch operand']
  #allocation4 [shape = 'bf16[640,64]{1,0:T(16,128)(2,1)}', space=vmem, size = 0x28000, scoped, tag = 'scratch operand']
  #allocation5 [shape = 'bf16[16,2560]{1,0:T(16,128)(2,1)}', space=vmem, size = 0x14000, scoped, tag = 'scratch operand']
  %s0 = inlined_call_operand.vmem [shape: f32[1408,32], index: 0, kind: input, shape index: {}]
  %s1 = inlined_call_operand.hbm [shape: f32[9,32], index: 1, kind: input, shape index: {}]
  %s2 = inlined_call_operand.hbm [shape: f32[1,32], index: 2, kind: input, shape index: {}]
  %s3 = inlined_call_operand.vmem [shape: bf16[288,64], index: 3, kind: input, shape index: {}]
  %s4 = inlined_call_operand.hbm [shape: f32[1,64], index: 4, kind: input, shape index: {}]
  %s5 = inlined_call_operand.hbm [shape: bf16[2560,256], index: 5, kind: input, shape index: {}]
  %s6 = inlined_call_operand.hbm [shape: f32[1,256], index: 6, kind: input, shape index: {}]
  %s7 = inlined_call_operand.vmem [shape: f32[256,4], index: 7, kind: input, shape index: {}]
  %s8 = inlined_call_operand.hbm [shape: f32[1,4], index: 8, kind: input, shape index: {}]
  %s9 = inlined_call_operand.vmem [shape: f32[16,4], index: 9, kind: output, shape index: {}]
  %s10 = sld [smem:[#allocation0]]
  $region70: #{convdqn_forward.1} parent=0
    _
  %s12 = ssub.s32 1, %s10
  %s13 = scalar_select 0, %s12, %s10
  $region1: #{convdqn_forward.1} parent=0
    #allocation6 [shape = 'u8[8192]{0}', space=vmem, size = 0x2000, scoped, tag = 'input window, operand 1, single buffered']
    #allocation7 [shape = 's32[1]{0}', space=sflag, size = 0x4, scoped, tag = 'scoped memory for convdqn_forward.1']
    #allocation8 [shape = 'u8[512]{0}', space=vmem, size = 0x400, scoped, tag = 'input window, operand 2, single buffered']
    #allocation9 [shape = 's32[1]{0}', space=sflag, size = 0x4, scoped, tag = 'scoped memory for convdqn_forward.1']
    #allocation10 [shape = 'u8[512]{0}', space=vmem, size = 0x400, scoped, tag = 'input window, operand 4, single buffered']
    #allocation11 [shape = 'u8[1310720]{0}', space=vmem, size = 0x140000, scoped, tag = 'input window, operand 5, single buffered']
    #allocation12 [shape = 's32[1]{0}', space=sflag, size = 0x4, scoped, tag = 'scoped memory for convdqn_forward.1']
    #allocation13 [shape = 'u8[1024]{0}', space=vmem, size = 0x400, scoped, tag = 'input window, operand 6, single buffered']
    #allocation14 [shape = 'u8[512]{0}', space=vmem, size = 0x400, scoped, tag = 'input window, operand 8, single buffered']
    #allocation15 [shape = 's32[1]{0}', space=sflag, size = 0x4, scoped, tag = 'scoped memory for convdqn_forward.1']
    %14 = vsyncpa [#allocation7], 0
    %15 = vsyncpa [#allocation9], 0
    %16 = vsyncpa [#allocation12], 0
    %17 = vsyncpa [#allocation15], 0
    // Predicated region
    $region2: #{convdqn_forward.1} parent=1 // pred_check
      _
    $region3: #{convdqn_forward.1} parent=1 // pred_check_branch
      %19 = sbr.rel (0) target = $region5
    $region4: #{convdqn_forward.1} parent=1 // pred_region
      _
    $region5: #{convdqn_forward.1} parent=1 // pred_fallthru
      _
    // Predicated region
    $region6: #{convdqn_forward.1} parent=1 // pred_check
      _
    $region7: #{convdqn_forward.1} parent=1 // pred_check_branch
      %21 = sbr.rel (0) target = $region9
    $region8: #{convdqn_forward.1} parent=1 // pred_region
      %s23 = ssub.s32 256, 256
      %24 = vsyncadd [#allocation7], %s23
      %s25 = sshll.u32 [#allocation6], 4
      %s26 = int_to_ptr.vmem [resolvable:$true] %s25
      %31 = dma.hbm_to_vmem [thread:$0]  %s1, 256, %s26, [#allocation7], 128, 128, 8
    $region9: #{convdqn_forward.1} parent=1 // pred_fallthru
      _
    // Predicated region
    $region10: #{convdqn_forward.1} parent=1 // pred_check
      _
    $region11: #{convdqn_forward.1} parent=1 // pred_check_branch
      %33 = sbr.rel (0) target = $region13
    $region12: #{convdqn_forward.1} parent=1 // pred_region
      %s35 = ssub.s32 16, 16
      %36 = vsyncadd [#allocation9], %s35
      %s38 = sshll.u32 [#allocation8], 4
      %s39 = int_to_ptr.vmem [resolvable:$true] %s38
      %41 = dma.hbm_to_vmem [thread:$0]  %s2, 16, %s39, [#allocation9]
    $region13: #{convdqn_forward.1} parent=1 // pred_fallthru
      _
    // Predicated region
    $region14: #{convdqn_forward.1} parent=1 // pred_check
      _
    $region15: #{convdqn_forward.1} parent=1 // pred_check_branch
      %43 = sbr.rel (0) target = $region17
    $region16: #{convdqn_forward.1} parent=1 // pred_region
      _
    $region17: #{convdqn_forward.1} parent=1 // pred_fallthru
      _
    // Predicated region
    $region18: #{convdqn_forward.1} parent=1 // pred_check
      _
    $region19: #{convdqn_forward.1} parent=1 // pred_check_branch
      %45 = sbr.rel (0) target = $region21
    $region20: #{convdqn_forward.1} parent=1 // pred_region
      %s47 = ssub.s32 16, 16
      %48 = vsyncadd [#allocation9], %s47
      %s50 = sshll.u32 [#allocation10], 4
      %s51 = int_to_ptr.vmem [resolvable:$true] %s50
      %53 = dma.hbm_to_vmem [thread:$0]  %s4, 16, %s51, [#allocation9]
    $region21: #{convdqn_forward.1} parent=1 // pred_fallthru
      _
    // Predicated region
    $region22: #{convdqn_forward.1} parent=1 // pred_check
      _
    $region23: #{convdqn_forward.1} parent=1 // pred_check_branch
      %55 = sbr.rel (0) target = $region25
    $region24: #{convdqn_forward.1} parent=1 // pred_region
      %s57 = ssub.s32 40960, 40960
      %58 = vsyncadd [#allocation12], %s57
      %s59 = sshll.u32 [#allocation11], 4
      %s60 = int_to_ptr.vmem [resolvable:$true] %s59
      %65 = dma.hbm_to_vmem [thread:$0]  %s5, 40960, %s60, [#allocation12], 128, 128, 8
    $region25: #{convdqn_forward.1} parent=1 // pred_fallthru
      _
    // Predicated region
    $region26: #{convdqn_forward.1} parent=1 // pred_check
      _
    $region27: #{convdqn_forward.1} parent=1 // pred_check_branch
      %67 = sbr.rel (0) target = $region29
    $region28: #{convdqn_forward.1} parent=1 // pred_region
      %s69 = ssub.s32 32, 32
      %70 = vsyncadd [#allocation12], %s69
      %s72 = sshll.u32 [#allocation13], 4
      %s73 = int_to_ptr.vmem [resolvable:$true] %s72
      %75 = dma.hbm_to_vmem [thread:$0]  %s6, 32, %s73, [#allocation12]
    $region29: #{convdqn_forward.1} parent=1 // pred_fallthru
      _
    // Predicated region
    $region30: #{convdqn_forward.1} parent=1 // pred_check
      _
    $region31: #{convdqn_forward.1} parent=1 // pred_check_branch
      %77 = sbr.rel (0) target = $region33
    $region32: #{convdqn_forward.1} parent=1 // pred_region
      _
    $region33: #{convdqn_forward.1} parent=1 // pred_fallthru
      _
    // Predicated region
    $region34: #{convdqn_forward.1} parent=1 // pred_check
      _
    $region35: #{convdqn_forward.1} parent=1 // pred_check_branch
      %79 = sbr.rel (0) target = $region37
    $region36: #{convdqn_forward.1} parent=1 // pred_region
      %s81 = ssub.s32 16, 16
      %82 = vsyncadd [#allocation15], %s81
      %s84 = sshll.u32 [#allocation14], 4
      %s85 = int_to_ptr.vmem [resolvable:$true] %s84
      %87 = dma.hbm_to_vmem [thread:$0]  %s8, 16, %s85, [#allocation15]
    $region37: #{convdqn_forward.1} parent=1 // pred_fallthru
      _
    // Predicated region
    $region38: #{convdqn_forward.1} parent=1 // pred_check
      _
    $region39: #{convdqn_forward.1} parent=1 // pred_check_branch
      %89 = sbr.rel (0) target = $region41
    $region40: #{convdqn_forward.1} parent=1 // pred_region
      %90 = dma.done [#allocation7], 256
    $region41: #{convdqn_forward.1} parent=1 // pred_fallthru
      _
    // Predicated region
    $region42: #{convdqn_forward.1} parent=1 // pred_check
      _
    $region43: #{convdqn_forward.1} parent=1 // pred_check_branch
      %92 = sbr.rel (0) target = $region45
    $region44: #{convdqn_forward.1} parent=1 // pred_region
      %93 = dma.done [#allocation9], 16
    $region45: #{convdqn_forward.1} parent=1 // pred_fallthru
      _
    // Predicated region
    $region46: #{convdqn_forward.1} parent=1 // pred_check
      _
    $region47: #{convdqn_forward.1} parent=1 // pred_check_branch
      %95 = sbr.rel (0) target = $region49
    $region48: #{convdqn_forward.1} parent=1 // pred_region
      %96 = dma.done [#allocation9], 16
    $region49: #{convdqn_forward.1} parent=1 // pred_fallthru
      _
    // Predicated region
    $region50: #{convdqn_forward.1} parent=1 // pred_check
      _
    $region51: #{convdqn_forward.1} parent=1 // pred_check_branch
      %98 = sbr.rel (0) target = $region53
    $region52: #{convdqn_forward.1} parent=1 // pred_region
      %99 = dma.done [#allocation12], 40960
    $region53: #{convdqn_forward.1} parent=1 // pred_fallthru
      _
    // Predicated region
    $region54: #{convdqn_forward.1} parent=1 // pred_check
      _
    $region55: #{convdqn_forward.1} parent=1 // pred_check_branch
      %101 = sbr.rel (0) target = $region57
    $region56: #{convdqn_forward.1} parent=1 // pred_region
      %102 = dma.done [#allocation12], 32
    $region57: #{convdqn_forward.1} parent=1 // pred_fallthru
      _
    // Predicated region
    $region58: #{convdqn_forward.1} parent=1 // pred_check
      _
    $region59: #{convdqn_forward.1} parent=1 // pred_check_branch
      %104 = sbr.rel (0) target = $region61
    $region60: #{convdqn_forward.1} parent=1 // pred_region
      %105 = dma.done [#allocation15], 16
    $region61: #{convdqn_forward.1} parent=1 // pred_fallthru
      _
    %v107 = vld [vmem:[#allocation6] sm:$0xff]
    %v108 = vld [vmem:[#allocation6 + $0x8] sm:$0x1]
    %v109 = vld [vmem:[%s0] sm:$0xff]
    %v110 = vld [vmem:[%s0 + $0x8] sm:$0xff]
    %v111 = vld [vmem:[%s0 + $0x10] sm:$0xff]
    %v112 = vld [vmem:[%s0 + $0x18] sm:$0xff]
    %v113 = vld [vmem:[%s0 + $0x20] sm:$0xff]
    %v114 = vld [vmem:[%s0 + $0x28] sm:$0xff]
    %v115 = vld [vmem:[%s0 + $0x30] sm:$0xff]
    %v116 = vld [vmem:[%s0 + $0x38] sm:$0xff]
    %v117 = vld [vmem:[%s0 + $0x40] sm:$0xff]
    %v118 = vld [vmem:[%s0 + $0x48] sm:$0xff]
    %v119 = vld [vmem:[%s0 + $0x50] sm:$0xff]
    %v120 = vld [vmem:[%s0 + $0x58] sm:$0xff]
    %v121 = vld [vmem:[%s0 + $0x60] sm:$0xff]
    %v122 = vld [vmem:[%s0 + $0x68] sm:$0xff]
    %v123 = vld [vmem:[%s0 + $0x70] sm:$0xff]
    %v124 = vld [vmem:[%s0 + $0x78] sm:$0xff]
    %v125 = vld [vmem:[%s0 + $0x80] sm:$0xff]
    %v126 = vld [vmem:[%s0 + $0x88] sm:$0xff]
    %v127 = vld [vmem:[%s0 + $0x90] sm:$0xff]
    %v128 = vld [vmem:[%s0 + $0x98] sm:$0xff]
    %v129 = vld [vmem:[%s0 + $0xa0] sm:$0xff]
    %v130 = vld [vmem:[%s0 + $0xa8] sm:$0xff]
    %v131 = vld [vmem:[%s0 + $0xb0] sm:$0xff]
    %v132 = vld [vmem:[%s0 + $0xb8] sm:$0xff]
    %v133 = vld [vmem:[%s0 + $0xc0] sm:$0xff]
    %v134 = vld [vmem:[%s0 + $0xc8] sm:$0xff]
    %v135 = vld [vmem:[%s0 + $0xd0] sm:$0xff]
    %v136 = vld [vmem:[%s0 + $0xd8] sm:$0xff]
    %v137 = vld [vmem:[%s0 + $0xe0] sm:$0xff]
    %v138 = vld [vmem:[%s0 + $0xe8] sm:$0xff]
    %v139 = vld [vmem:[%s0 + $0xf0] sm:$0xff]
    %v140 = vld [vmem:[%s0 + $0xf8] sm:$0xff]
    %v141 = vld [vmem:[%s0 + $0x100] sm:$0xff]
    %v142 = vld [vmem:[%s0 + $0x108] sm:$0xff]
    %v143 = vld [vmem:[%s0 + $0x110] sm:$0xff]
    %v144 = vld [vmem:[%s0 + $0x118] sm:$0xff]
    %v145 = vld [vmem:[%s0 + $0x120] sm:$0xff]
    %v146 = vld [vmem:[%s0 + $0x128] sm:$0xff]
    %v147 = vld [vmem:[%s0 + $0x130] sm:$0xff]
    %v148 = vld [vmem:[%s0 + $0x138] sm:$0xff]
    %v149 = vld [vmem:[%s0 + $0x140] sm:$0xff]
    %v150 = vld [vmem:[%s0 + $0x148] sm:$0xff]
    %v151 = vld [vmem:[%s0 + $0x150] sm:$0xff]
    %v152 = vld [vmem:[%s0 + $0x158] sm:$0xff]
    %v153 = vld [vmem:[%s0 + $0x160] sm:$0xff]
    %v154 = vld [vmem:[%s0 + $0x168] sm:$0xff]
    %v155 = vld [vmem:[%s0 + $0x170] sm:$0xff]
    %v156 = vld [vmem:[%s0 + $0x178] sm:$0xff]
    %v157 = vld [vmem:[%s0 + $0x180] sm:$0xff]
    %v158 = vld [vmem:[%s0 + $0x188] sm:$0xff]
    %v159 = vld [vmem:[%s0 + $0x190] sm:$0xff]
    %v160 = vld [vmem:[%s0 + $0x198] sm:$0xff]
    %v161 = vld [vmem:[%s0 + $0x1a0] sm:$0xff]
    %v162 = vld [vmem:[%s0 + $0x1a8] sm:$0xff]
    %v163 = vld [vmem:[%s0 + $0x1b0] sm:$0xff]
    %v164 = vld [vmem:[%s0 + $0x1b8] sm:$0xff]
    %v165 = vld [vmem:[%s0 + $0x1c0] sm:$0xff]
    %v166 = vld [vmem:[%s0 + $0x1c8] sm:$0xff]
    %v167 = vld [vmem:[%s0 + $0x1d0] sm:$0xff]
    %v168 = vld [vmem:[%s0 + $0x1d8] sm:$0xff]
    %v169 = vld [vmem:[%s0 + $0x1e0] sm:$0xff]
    %v170 = vld [vmem:[%s0 + $0x1e8] sm:$0xff]
    %v171 = vld [vmem:[%s0 + $0x1f0] sm:$0xff]
    %v172 = vld [vmem:[%s0 + $0x1f8] sm:$0xff]
    %v173 = vld [vmem:[%s0 + $0x200] sm:$0xff]
    %v174 = vld [vmem:[%s0 + $0x208] sm:$0xff]
    %v175 = vld [vmem:[%s0 + $0x210] sm:$0xff]
    %v176 = vld [vmem:[%s0 + $0x218] sm:$0xff]
    %v177 = vld [vmem:[%s0 + $0x220] sm:$0xff]
    %v178 = vld [vmem:[%s0 + $0x228] sm:$0xff]
    %v179 = vld [vmem:[%s0 + $0x230] sm:$0xff]
    %v180 = vld [vmem:[%s0 + $0x238] sm:$0xff]
    %v181 = vld [vmem:[%s0 + $0x240] sm:$0xff]
    %v182 = vld [vmem:[%s0 + $0x248] sm:$0xff]
    %v183 = vld [vmem:[%s0 + $0x250] sm:$0xff]
    %v184 = vld [vmem:[%s0 + $0x258] sm:$0xff]
    %v185 = vld [vmem:[%s0 + $0x260] sm:$0xff]
    %v186 = vld [vmem:[%s0 + $0x268] sm:$0xff]
    %v187 = vld [vmem:[%s0 + $0x270] sm:$0xff]
    %v188 = vld [vmem:[%s0 + $0x278] sm:$0xff]
    %v189 = vld [vmem:[%s0 + $0x280] sm:$0xff]
    %v190 = vld [vmem:[%s0 + $0x288] sm:$0xff]
    %v191 = vld [vmem:[%s0 + $0x290] sm:$0xff]
    %v192 = vld [vmem:[%s0 + $0x298] sm:$0xff]
    %v193 = vld [vmem:[%s0 + $0x2a0] sm:$0xff]
    %v194 = vld [vmem:[%s0 + $0x2a8] sm:$0xff]
    %v195 = vld [vmem:[%s0 + $0x2b0] sm:$0xff]
    %v196 = vld [vmem:[%s0 + $0x2b8] sm:$0xff]
    %v197 = vld [vmem:[%s0 + $0x2c0] sm:$0xff]
    %v198 = vld [vmem:[%s0 + $0x2c8] sm:$0xff]
    %v199 = vld [vmem:[%s0 + $0x2d0] sm:$0xff]
    %v200 = vld [vmem:[%s0 + $0x2d8] sm:$0xff]
    %v201 = vld [vmem:[%s0 + $0x2e0] sm:$0xff]
    %v202 = vld [vmem:[%s0 + $0x2e8] sm:$0xff]
    %v203 = vld [vmem:[%s0 + $0x2f0] sm:$0xff]
    %v204 = vld [vmem:[%s0 + $0x2f8] sm:$0xff]
    %v205 = vld [vmem:[%s0 + $0x300] sm:$0xff]
    %v206 = vld [vmem:[%s0 + $0x308] sm:$0xff]
    %v207 = vld [vmem:[%s0 + $0x310] sm:$0xff]
    %v208 = vld [vmem:[%s0 + $0x318] sm:$0xff]
    %v209 = vld [vmem:[%s0 + $0x320] sm:$0xff]
    %v210 = vld [vmem:[%s0 + $0x328] sm:$0xff]
    %v211 = vld [vmem:[%s0 + $0x330] sm:$0xff]
    %v212 = vld [vmem:[%s0 + $0x338] sm:$0xff]
    %v213 = vld [vmem:[%s0 + $0x340] sm:$0xff]
    %v214 = vld [vmem:[%s0 + $0x348] sm:$0xff]
    %v215 = vld [vmem:[%s0 + $0x350] sm:$0xff]
    %v216 = vld [vmem:[%s0 + $0x358] sm:$0xff]
    %v217 = vld [vmem:[%s0 + $0x360] sm:$0xff]
    %v218 = vld [vmem:[%s0 + $0x368] sm:$0xff]
    %v219 = vld [vmem:[%s0 + $0x370] sm:$0xff]
    %v220 = vld [vmem:[%s0 + $0x378] sm:$0xff]
    %v221 = vld [vmem:[%s0 + $0x380] sm:$0xff]
    %v222 = vld [vmem:[%s0 + $0x388] sm:$0xff]
    %v223 = vld [vmem:[%s0 + $0x390] sm:$0xff]
    %v224 = vld [vmem:[%s0 + $0x398] sm:$0xff]
    %v225 = vld [vmem:[%s0 + $0x3a0] sm:$0xff]
    %v226 = vld [vmem:[%s0 + $0x3a8] sm:$0xff]
    %v227 = vld [vmem:[%s0 + $0x3b0] sm:$0xff]
    %v228 = vld [vmem:[%s0 + $0x3b8] sm:$0xff]
    %v229 = vld [vmem:[%s0 + $0x3c0] sm:$0xff]
    %v230 = vld [vmem:[%s0 + $0x3c8] sm:$0xff]
    %v231 = vld [vmem:[%s0 + $0x3d0] sm:$0xff]
    %v232 = vld [vmem:[%s0 + $0x3d8] sm:$0xff]
    %v233 = vld [vmem:[%s0 + $0x3e0] sm:$0xff]
    %v234 = vld [vmem:[%s0 + $0x3e8] sm:$0xff]
    %v235 = vld [vmem:[%s0 + $0x3f0] sm:$0xff]
    %v236 = vld [vmem:[%s0 + $0x3f8] sm:$0xff]
    %v237 = vlaneseq
    %v238 = vshrl.u32 %v237, 7
    %v239 = vsub.s32 0, %v238
    %v240 = vrot.slane %v107, %v239
    %v241 = vmul.f32 %v109, %v240
    %v242 = vmul.f32 %v110, %v240
    %v243 = vmul.f32 %v111, %v240
    %v244 = vmul.f32 %v112, %v240
    %v245 = vmul.f32 %v113, %v240
    %v246 = vmul.f32 %v114, %v240
    %v247 = vmul.f32 %v115, %v240
    %v248 = vmul.f32 %v116, %v240
    %v249 = vmul.f32 %v117, %v240
    %v250 = vmul.f32 %v118, %v240
    %v251 = vmul.f32 %v119, %v240
    %v252 = vmul.f32 %v120, %v240
    %v253 = vmul.f32 %v121, %v240
    %v254 = vmul.f32 %v122, %v240
    %v255 = vmul.f32 %v123, %v240
    %v256 = vmul.f32 %v124, %v240
    %v257 = vmul.f32 %v125, %v240
    %v258 = vmul.f32 %v126, %v240
    %v259 = vmul.f32 %v127, %v240
    %v260 = vmul.f32 %v128, %v240
    %v261 = vmul.f32 %v129, %v240
    %v262 = vmul.f32 %v130, %v240
    %v263 = vmul.f32 %v131, %v240
    %v264 = vmul.f32 %v132, %v240
    %v265 = vmul.f32 %v133, %v240
    %v266 = vmul.f32 %v134, %v240
    %v267 = vmul.f32 %v135, %v240
    %v268 = vmul.f32 %v136, %v240
    %v269 = vmul.f32 %v137, %v240
    %v270 = vmul.f32 %v138, %v240
    %v271 = vmul.f32 %v139, %v240
    %v272 = vmul.f32 %v140, %v240
    %v273 = vmul.f32 %v141, %v240
    %v274 = vmul.f32 %v142, %v240
    %v275 = vmul.f32 %v143, %v240
    %v276 = vmul.f32 %v144, %v240
    %v277 = vmul.f32 %v145, %v240
    %v278 = vmul.f32 %v146, %v240
    %v279 = vmul.f32 %v147, %v240
    %v280 = vmul.f32 %v148, %v240
    %v281 = vmul.f32 %v149, %v240
    %v282 = vmul.f32 %v150, %v240
    %v283 = vmul.f32 %v151, %v240
    %v284 = vmul.f32 %v152, %v240
    %v285 = vmul.f32 %v153, %v240
    %v286 = vmul.f32 %v154, %v240
    %v287 = vmul.f32 %v155, %v240
    %v288 = vmul.f32 %v156, %v240
    %v289 = vmul.f32 %v157, %v240
    %v290 = vmul.f32 %v158, %v240
    %v291 = vmul.f32 %v159, %v240
    %v292 = vmul.f32 %v160, %v240
    %v293 = vmul.f32 %v161, %v240
    %v294 = vmul.f32 %v162, %v240
    %v295 = vmul.f32 %v163, %v240
    %v296 = vmul.f32 %v164, %v240
    %v297 = vmul.f32 %v165, %v240
    %v298 = vmul.f32 %v166, %v240
    %v299 = vmul.f32 %v167, %v240
    %v300 = vmul.f32 %v168, %v240
    %v301 = vmul.f32 %v169, %v240
    %v302 = vmul.f32 %v170, %v240
    %v303 = vmul.f32 %v171, %v240
    %v304 = vmul.f32 %v172, %v240
    %v305 = vmul.f32 %v173, %v240
    %v306 = vmul.f32 %v174, %v240
    %v307 = vmul.f32 %v175, %v240
    %v308 = vmul.f32 %v176, %v240
    %v309 = vmul.f32 %v177, %v240
    %v310 = vmul.f32 %v178, %v240
    %v311 = vmul.f32 %v179, %v240
    %v312 = vmul.f32 %v180, %v240
    %v313 = vmul.f32 %v181, %v240
    %v314 = vmul.f32 %v182, %v240
    %v315 = vmul.f32 %v183, %v240
    %v316 = vmul.f32 %v184, %v240
    %v317 = vmul.f32 %v185, %v240
    %v318 = vmul.f32 %v186, %v240
    %v319 = vmul.f32 %v187, %v240
    %v320 = vmul.f32 %v188, %v240
    %v321 = vmul.f32 %v189, %v240
    %v322 = vmul.f32 %v190, %v240
    %v323 = vmul.f32 %v191, %v240
    %v324 = vmul.f32 %v192, %v240
    %v325 = vmul.f32 %v193, %v240
    %v326 = vmul.f32 %v194, %v240
    %v327 = vmul.f32 %v195, %v240
    %v328 = vmul.f32 %v196, %v240
    %v329 = vmul.f32 %v197, %v240
    %v330 = vmul.f32 %v198, %v240
    %v331 = vmul.f32 %v199, %v240
    %v332 = vmul.f32 %v200, %v240
    %v333 = vmul.f32 %v201, %v240
    %v334 = vmul.f32 %v202, %v240
    %v335 = vmul.f32 %v203, %v240
    %v336 = vmul.f32 %v204, %v240
    %v337 = vmul.f32 %v205, %v240
    %v338 = vmul.f32 %v206, %v240
    %v339 = vmul.f32 %v207, %v240
    %v340 = vmul.f32 %v208, %v240
    %v341 = vmul.f32 %v209, %v240
    %v342 = vmul.f32 %v210, %v240
    %v343 = vmul.f32 %v211, %v240
    %v344 = vmul.f32 %v212, %v240
    %v345 = vmul.f32 %v213, %v240
    %v346 = vmul.f32 %v214, %v240
    %v347 = vmul.f32 %v215, %v240
    %v348 = vmul.f32 %v216, %v240
    %v349 = vmul.f32 %v217, %v240
    %v350 = vmul.f32 %v218, %v240
    %v351 = vmul.f32 %v219, %v240
    %v352 = vmul.f32 %v220, %v240
    %v353 = vmul.f32 %v221, %v240
    %v354 = vmul.f32 %v222, %v240
    %v355 = vmul.f32 %v223, %v240
    %v356 = vmul.f32 %v224, %v240
    %v357 = vmul.f32 %v225, %v240
    %v358 = vmul.f32 %v226, %v240
    %v359 = vmul.f32 %v227, %v240
    %v360 = vmul.f32 %v228, %v240
    %v361 = vmul.f32 %v229, %v240
    %v362 = vmul.f32 %v230, %v240
    %v363 = vmul.f32 %v231, %v240
    %v364 = vmul.f32 %v232, %v240
    %v365 = vmul.f32 %v233, %v240
    %v366 = vmul.f32 %v234, %v240
    %v367 = vmul.f32 %v235, %v240
    %v368 = vmul.f32 %v236, %v240
    %v369 = vadd.f32 %v241, 0.0
    %v370 = vadd.f32 %v242, 0.0
    %v371 = vadd.f32 %v243, 0.0
    %v372 = vadd.f32 %v244, 0.0
    %v373 = vadd.f32 %v245, 0.0
    %v374 = vadd.f32 %v246, 0.0
    %v375 = vadd.f32 %v247, 0.0
    %v376 = vadd.f32 %v248, 0.0
    %v377 = vadd.f32 %v249, 0.0
    %v378 = vadd.f32 %v250, 0.0
    %v379 = vadd.f32 %v251, 0.0
    %v380 = vadd.f32 %v252, 0.0
    %v381 = vadd.f32 %v253, 0.0
    %v382 = vadd.f32 %v254, 0.0
    %v383 = vadd.f32 %v255, 0.0
    %v384 = vadd.f32 %v256, 0.0
    %v385 = vadd.f32 %v257, 0.0
    %v386 = vadd.f32 %v258, 0.0
    %v387 = vadd.f32 %v259, 0.0
    %v388 = vadd.f32 %v260, 0.0
    %v389 = vadd.f32 %v261, 0.0
    %v390 = vadd.f32 %v262, 0.0
    %v391 = vadd.f32 %v263, 0.0
    %v392 = vadd.f32 %v264, 0.0
    %v393 = vadd.f32 %v265, 0.0
    %v394 = vadd.f32 %v266, 0.0
    %v395 = vadd.f32 %v267, 0.0
    %v396 = vadd.f32 %v268, 0.0
    %v397 = vadd.f32 %v269, 0.0
    %v398 = vadd.f32 %v270, 0.0
    %v399 = vadd.f32 %v271, 0.0
    %v400 = vadd.f32 %v272, 0.0
    %v401 = vadd.f32 %v273, 0.0
    %v402 = vadd.f32 %v274, 0.0
    %v403 = vadd.f32 %v275, 0.0
    %v404 = vadd.f32 %v276, 0.0
    %v405 = vadd.f32 %v277, 0.0
    %v406 = vadd.f32 %v278, 0.0
    %v407 = vadd.f32 %v279, 0.0
    %v408 = vadd.f32 %v280, 0.0
    %v409 = vadd.f32 %v281, 0.0
    %v410 = vadd.f32 %v282, 0.0
    %v411 = vadd.f32 %v283, 0.0
    %v412 = vadd.f32 %v284, 0.0
    %v413 = vadd.f32 %v285, 0.0
    %v414 = vadd.f32 %v286, 0.0
    %v415 = vadd.f32 %v287, 0.0
    %v416 = vadd.f32 %v288, 0.0
    %v417 = vadd.f32 %v289, 0.0
    %v418 = vadd.f32 %v290, 0.0
    %v419 = vadd.f32 %v291, 0.0
    %v420 = vadd.f32 %v292, 0.0
    %v421 = vadd.f32 %v293, 0.0
    %v422 = vadd.f32 %v294, 0.0
    %v423 = vadd.f32 %v295, 0.0
    %v424 = vadd.f32 %v296, 0.0
    %v425 = vadd.f32 %v297, 0.0
    %v426 = vadd.f32 %v298, 0.0
    %v427 = vadd.f32 %v299, 0.0
    %v428 = vadd.f32 %v300, 0.0
    %v429 = vadd.f32 %v301, 0.0
    %v430 = vadd.f32 %v302, 0.0
    %v431 = vadd.f32 %v303, 0.0
    %v432 = vadd.f32 %v304, 0.0
    %v433 = vadd.f32 %v305, 0.0
    %v434 = vadd.f32 %v306, 0.0
    %v435 = vadd.f32 %v307, 0.0
    %v436 = vadd.f32 %v308, 0.0
    %v437 = vadd.f32 %v309, 0.0
    %v438 = vadd.f32 %v310, 0.0
    %v439 = vadd.f32 %v311, 0.0
    %v440 = vadd.f32 %v312, 0.0
    %v441 = vadd.f32 %v313, 0.0
    %v442 = vadd.f32 %v314, 0.0
    %v443 = vadd.f32 %v315, 0.0
    %v444 = vadd.f32 %v316, 0.0
    %v445 = vadd.f32 %v317, 0.0
    %v446 = vadd.f32 %v318, 0.0
    %v447 = vadd.f32 %v319, 0.0
    %v448 = vadd.f32 %v320, 0.0
    %v449 = vadd.f32 %v321, 0.0
    %v450 = vadd.f32 %v322, 0.0
    %v451 = vadd.f32 %v323, 0.0
    %v452 = vadd.f32 %v324, 0.0
    %v453 = vadd.f32 %v325, 0.0
    %v454 = vadd.f32 %v326, 0.0
    %v455 = vadd.f32 %v327, 0.0
    %v456 = vadd.f32 %v328, 0.0
    %v457 = vadd.f32 %v329, 0.0
    %v458 = vadd.f32 %v330, 0.0
    %v459 = vadd.f32 %v331, 0.0
    %v460 = vadd.f32 %v332, 0.0
    %v461 = vadd.f32 %v333, 0.0
    %v462 = vadd.f32 %v334, 0.0
    %v463 = vadd.f32 %v335, 0.0
    %v464 = vadd.f32 %v336, 0.0
    %v465 = vadd.f32 %v337, 0.0
    %v466 = vadd.f32 %v338, 0.0
    %v467 = vadd.f32 %v339, 0.0
    %v468 = vadd.f32 %v340, 0.0
    %v469 = vadd.f32 %v341, 0.0
    %v470 = vadd.f32 %v342, 0.0
    %v471 = vadd.f32 %v343, 0.0
    %v472 = vadd.f32 %v344, 0.0
    %v473 = vadd.f32 %v345, 0.0
    %v474 = vadd.f32 %v346, 0.0
    %v475 = vadd.f32 %v347, 0.0
    %v476 = vadd.f32 %v348, 0.0
    %v477 = vadd.f32 %v349, 0.0
    %v478 = vadd.f32 %v350, 0.0
    %v479 = vadd.f32 %v351, 0.0
    %v480 = vadd.f32 %v352, 0.0
    %v481 = vadd.f32 %v353, 0.0
    %v482 = vadd.f32 %v354, 0.0
    %v483 = vadd.f32 %v355, 0.0
    %v484 = vadd.f32 %v356, 0.0
    %v485 = vadd.f32 %v357, 0.0
    %v486 = vadd.f32 %v358, 0.0
    %v487 = vadd.f32 %v359, 0.0
    %v488 = vadd.f32 %v360, 0.0
    %v489 = vadd.f32 %v361, 0.0
    %v490 = vadd.f32 %v362, 0.0
    %v491 = vadd.f32 %v363, 0.0
    %v492 = vadd.f32 %v364, 0.0
    %v493 = vadd.f32 %v365, 0.0
    %v494 = vadd.f32 %v366, 0.0
    %v495 = vadd.f32 %v367, 0.0
    %v496 = vadd.f32 %v368, 0.0
    %v497 = vld [vmem:[%s0 + $0x400] sm:$0xff]
    %v498 = vld [vmem:[%s0 + $0x408] sm:$0xff]
    %v499 = vlaneseq
    %v500 = vshrl.u32 %v499, 7
    %v501 = vsub.s32 1, %v500
    %v502 = vrot.slane %v107, %v501
    %v503 = vmul.f32 %v111, %v502
    %v504 = vmul.f32 %v112, %v502
    %v505 = vmul.f32 %v113, %v502
    %v506 = vmul.f32 %v114, %v502
    %v507 = vmul.f32 %v115, %v502
    %v508 = vmul.f32 %v116, %v502
    %v509 = vmul.f32 %v117, %v502
    %v510 = vmul.f32 %v118, %v502
    %v511 = vmul.f32 %v119, %v502
    %v512 = vmul.f32 %v120, %v502
    %v513 = vmul.f32 %v121, %v502
    %v514 = vmul.f32 %v122, %v502
    %v515 = vmul.f32 %v123, %v502
    %v516 = vmul.f32 %v124, %v502
    %v517 = vmul.f32 %v125, %v502
    %v518 = vmul.f32 %v126, %v502
    %v519 = vmul.f32 %v127, %v502
    %v520 = vmul.f32 %v128, %v502
    %v521 = vmul.f32 %v129, %v502
    %v522 = vmul.f32 %v130, %v502
    %v523 = vmul.f32 %v131, %v502
    %v524 = vmul.f32 %v132, %v502
    %v525 = vmul.f32 %v133, %v502
    %v526 = vmul.f32 %v134, %v502
    %v527 = vmul.f32 %v135, %v502
    %v528 = vmul.f32 %v136, %v502
    %v529 = vmul.f32 %v137, %v502
    %v530 = vmul.f32 %v138, %v502
    %v531 = vmul.f32 %v139, %v502
    %v532 = vmul.f32 %v140, %v502
    %v533 = vmul.f32 %v141, %v502
    %v534 = vmul.f32 %v142, %v502
    %v535 = vmul.f32 %v143, %v502
    %v536 = vmul.f32 %v144, %v502
    %v537 = vmul.f32 %v145, %v502
    %v538 = vmul.f32 %v146, %v502
    %v539 = vmul.f32 %v147, %v502
    %v540 = vmul.f32 %v148, %v502
    %v541 = vmul.f32 %v149, %v502
    %v542 = vmul.f32 %v150, %v502
    %v543 = vmul.f32 %v151, %v502
    %v544 = vmul.f32 %v152, %v502
    %v545 = vmul.f32 %v153, %v502
    %v546 = vmul.f32 %v154, %v502
    %v547 = vmul.f32 %v155, %v502
    %v548 = vmul.f32 %v156, %v502
    %v549 = vmul.f32 %v157, %v502
    %v550 = vmul.f32 %v158, %v502
    %v551 = vmul.f32 %v159, %v502
    %v552 = vmul.f32 %v160, %v502
    %v553 = vmul.f32 %v161, %v502
    %v554 = vmul.f32 %v162, %v502
    %v555 = vmul.f32 %v163, %v502
    %v556 = vmul.f32 %v164, %v502
    %v557 = vmul.f32 %v165, %v502
    %v558 = vmul.f32 %v166, %v502
    %v559 = vmul.f32 %v167, %v502
    %v560 = vmul.f32 %v168, %v502
    %v561 = vmul.f32 %v169, %v502
    %v562 = vmul.f32 %v170, %v502
    %v563 = vmul.f32 %v171, %v502
    %v564 = vmul.f32 %v172, %v502
    %v565 = vmul.f32 %v173, %v502
    %v566 = vmul.f32 %v174, %v502
    %v567 = vmul.f32 %v175, %v502
    %v568 = vmul.f32 %v176, %v502
    %v569 = vmul.f32 %v177, %v502
    %v570 = vmul.f32 %v178, %v502
    %v571 = vmul.f32 %v179, %v502
    %v572 = vmul.f32 %v180, %v502
    %v573 = vmul.f32 %v181, %v502
    %v574 = vmul.f32 %v182, %v502
    %v575 = vmul.f32 %v183, %v502
    %v576 = vmul.f32 %v184, %v502
    %v577 = vmul.f32 %v185, %v502
    %v578 = vmul.f32 %v186, %v502
    %v579 = vmul.f32 %v187, %v502
    %v580 = vmul.f32 %v188, %v502
    %v581 = vmul.f32 %v189, %v502
    %v582 = vmul.f32 %v190, %v502
    %v583 = vmul.f32 %v191, %v502
    %v584 = vmul.f32 %v192, %v502
    %v585 = vmul.f32 %v193, %v502
    %v586 = vmul.f32 %v194, %v502
    %v587 = vmul.f32 %v195, %v502
    %v588 = vmul.f32 %v196, %v502
    %v589 = vmul.f32 %v197, %v502
    %v590 = vmul.f32 %v198, %v502
    %v591 = vmul.f32 %v199, %v502
    %v592 = vmul.f32 %v200, %v502
    %v593 = vmul.f32 %v201, %v502
    %v594 = vmul.f32 %v202, %v502
    %v595 = vmul.f32 %v203, %v502
    %v596 = vmul.f32 %v204, %v502
    %v597 = vmul.f32 %v205, %v502
    %v598 = vmul.f32 %v206, %v502
    %v599 = vmul.f32 %v207, %v502
    %v600 = vmul.f32 %v208, %v502
    %v601 = vmul.f32 %v209, %v502
    %v602 = vmul.f32 %v210, %v502
    %v603 = vmul.f32 %v211, %v502
    %v604 = vmul.f32 %v212, %v502
    %v605 = vmul.f32 %v213, %v502
    %v606 = vmul.f32 %v214, %v502
    %v607 = vmul.f32 %v215, %v502
    %v608 = vmul.f32 %v216, %v502
    %v609 = vmul.f32 %v217, %v502
    %v610 = vmul.f32 %v218, %v502
    %v611 = vmul.f32 %v219, %v502
    %v612 = vmul.f32 %v220, %v502
    %v613 = vmul.f32 %v221, %v502
    %v614 = vmul.f32 %v222, %v502
    %v615 = vmul.f32 %v223, %v502
    %v616 = vmul.f32 %v224, %v502
    %v617 = vmul.f32 %v225, %v502
    %v618 = vmul.f32 %v226, %v502
    %v619 = vmul.f32 %v227, %v502
    %v620 = vmul.f32 %v228, %v502
    %v621 = vmul.f32 %v229, %v502
    %v622 = vmul.f32 %v230, %v502
    %v623 = vmul.f32 %v231, %v502
    %v624 = vmul.f32 %v232, %v502
    %v625 = vmul.f32 %v233, %v502
    %v626 = vmul.f32 %v234, %v502
    %v627 = vmul.f32 %v235, %v502
    %v628 = vmul.f32 %v236, %v502
    %v629 = vmul.f32 %v497, %v502
    %v630 = vmul.f32 %v498, %v502
    %v631 = vadd.f32 %v369, %v503
    %v632 = vadd.f32 %v370, %v504
    %v633 = vadd.f32 %v371, %v505
    %v634 = vadd.f32 %v372, %v506
    %v635 = vadd.f32 %v373, %v507
    %v636 = vadd.f32 %v374, %v508
    %v637 = vadd.f32 %v375, %v509
    %v638 = vadd.f32 %v376, %v510
    %v639 = vadd.f32 %v377, %v511
    %v640 = vadd.f32 %v378, %v512
    %v641 = vadd.f32 %v379, %v513
    %v642 = vadd.f32 %v380, %v514
    %v643 = vadd.f32 %v381, %v515
    %v644 = vadd.f32 %v382, %v516
    %v645 = vadd.f32 %v383, %v517
    %v646 = vadd.f32 %v384, %v518
    %v647 = vadd.f32 %v385, %v519
    %v648 = vadd.f32 %v386, %v520
    %v649 = vadd.f32 %v387, %v521
    %v650 = vadd.f32 %v388, %v522
    %v651 = vadd.f32 %v389, %v523
    %v652 = vadd.f32 %v390, %v524
    %v653 = vadd.f32 %v391, %v525
    %v654 = vadd.f32 %v392, %v526
    %v655 = vadd.f32 %v393, %v527
    %v656 = vadd.f32 %v394, %v528
    %v657 = vadd.f32 %v395, %v529
    %v658 = vadd.f32 %v396, %v530
    %v659 = vadd.f32 %v397, %v531
    %v660 = vadd.f32 %v398, %v532
    %v661 = vadd.f32 %v399, %v533
    %v662 = vadd.f32 %v400, %v534
    %v663 = vadd.f32 %v401, %v535
    %v664 = vadd.f32 %v402, %v536
    %v665 = vadd.f32 %v403, %v537
    %v666 = vadd.f32 %v404, %v538
    %v667 = vadd.f32 %v405, %v539
    %v668 = vadd.f32 %v406, %v540
    %v669 = vadd.f32 %v407, %v541
    %v670 = vadd.f32 %v408, %v542
    %v671 = vadd.f32 %v409, %v543
    %v672 = vadd.f32 %v410, %v544
    %v673 = vadd.f32 %v411, %v545
    %v674 = vadd.f32 %v412, %v546
    %v675 = vadd.f32 %v413, %v547
    %v676 = vadd.f32 %v414, %v548
    %v677 = vadd.f32 %v415, %v549
    %v678 = vadd.f32 %v416, %v550
    %v679 = vadd.f32 %v417, %v551
    %v680 = vadd.f32 %v418, %v552
    %v681 = vadd.f32 %v419, %v553
    %v682 = vadd.f32 %v420, %v554
    %v683 = vadd.f32 %v421, %v555
    %v684 = vadd.f32 %v422, %v556
    %v685 = vadd.f32 %v423, %v557
    %v686 = vadd.f32 %v424, %v558
    %v687 = vadd.f32 %v425, %v559
    %v688 = vadd.f32 %v426, %v560
    %v689 = vadd.f32 %v427, %v561
    %v690 = vadd.f32 %v428, %v562
    %v691 = vadd.f32 %v429, %v563
    %v692 = vadd.f32 %v430, %v564
    %v693 = vadd.f32 %v431, %v565
    %v694 = vadd.f32 %v432, %v566
    %v695 = vadd.f32 %v433, %v567
    %v696 = vadd.f32 %v434, %v568
    %v697 = vadd.f32 %v435, %v569
    %v698 = vadd.f32 %v436, %v570
    %v699 = vadd.f32 %v437, %v571
    %v700 = vadd.f32 %v438, %v572
    %v701 = vadd.f32 %v439, %v573
    %v702 = vadd.f32 %v440, %v574
    %v703 = vadd.f32 %v441, %v575
    %v704 = vadd.f32 %v442, %v576
    %v705 = vadd.f32 %v443, %v577
    %v706 = vadd.f32 %v444, %v578
    %v707 = vadd.f32 %v445, %v579
    %v708 = vadd.f32 %v446, %v580
    %v709 = vadd.f32 %v447, %v581
    %v710 = vadd.f32 %v448, %v582
    %v711 = vadd.f32 %v449, %v583
    %v712 = vadd.f32 %v450, %v584
    %v713 = vadd.f32 %v451, %v585
    %v714 = vadd.f32 %v452, %v586
    %v715 = vadd.f32 %v453, %v587
    %v716 = vadd.f32 %v454, %v588
    %v717 = vadd.f32 %v455, %v589
    %v718 = vadd.f32 %v456, %v590
    %v719 = vadd.f32 %v457, %v591
    %v720 = vadd.f32 %v458, %v592
    %v721 = vadd.f32 %v459, %v593
    %v722 = vadd.f32 %v460, %v594
    %v723 = vadd.f32 %v461, %v595
    %v724 = vadd.f32 %v462, %v596
    %v725 = vadd.f32 %v463, %v597
    %v726 = vadd.f32 %v464, %v598
    %v727 = vadd.f32 %v465, %v599
    %v728 = vadd.f32 %v466, %v600
    %v729 = vadd.f32 %v467, %v601
    %v730 = vadd.f32 %v468, %v602
    %v731 = vadd.f32 %v469, %v603
    %v732 = vadd.f32 %v470, %v604
    %v733 = vadd.f32 %v471, %v605
    %v734 = vadd.f32 %v472, %v606
    %v735 = vadd.f32 %v473, %v607
    %v736 = vadd.f32 %v474, %v608
    %v737 = vadd.f32 %v475, %v609
    %v738 = vadd.f32 %v476, %v610
    %v739 = vadd.f32 %v477, %v611
    %v740 = vadd.f32 %v478, %v612
    %v741 = vadd.f32 %v479, %v613
    %v742 = vadd.f32 %v480, %v614
    %v743 = vadd.f32 %v481, %v615
    %v744 = vadd.f32 %v482, %v616
    %v745 = vadd.f32 %v483, %v617
    %v746 = vadd.f32 %v484, %v618
    %v747 = vadd.f32 %v485, %v619
    %v748 = vadd.f32 %v486, %v620
    %v749 = vadd.f32 %v487, %v621
    %v750 = vadd.f32 %v488, %v622
    %v751 = vadd.f32 %v489, %v623
    %v752 = vadd.f32 %v490, %v624
    %v753 = vadd.f32 %v491, %v625
    %v754 = vadd.f32 %v492, %v626
    %v755 = vadd.f32 %v493, %v627
    %v756 = vadd.f32 %v494, %v628
    %v757 = vadd.f32 %v495, %v629
    %v758 = vadd.f32 %v496, %v630
    %v759 = vld [vmem:[%s0 + $0x410] sm:$0xff]
    %v760 = vld [vmem:[%s0 + $0x418] sm:$0xff]
    %v761 = vlaneseq
    %v762 = vshrl.u32 %v761, 7
    %v763 = vsub.s32 2, %v762
    %v764 = vrot.slane %v107, %v763
    %v765 = vmul.f32 %v113, %v764
    %v766 = vmul.f32 %v114, %v764
    %v767 = vmul.f32 %v115, %v764
    %v768 = vmul.f32 %v116, %v764
    %v769 = vmul.f32 %v117, %v764
    %v770 = vmul.f32 %v118, %v764
    %v771 = vmul.f32 %v119, %v764
    %v772 = vmul.f32 %v120, %v764
    %v773 = vmul.f32 %v121, %v764
    %v774 = vmul.f32 %v122, %v764
    %v775 = vmul.f32 %v123, %v764
    %v776 = vmul.f32 %v124, %v764
    %v777 = vmul.f32 %v125, %v764
    %v778 = vmul.f32 %v126, %v764
    %v779 = vmul.f32 %v127, %v764
    %v780 = vmul.f32 %v128, %v764
    %v781 = vmul.f32 %v129, %v764
    %v782 = vmul.f32 %v130, %v764
    %v783 = vmul.f32 %v131, %v764
    %v784 = vmul.f32 %v132, %v764
    %v785 = vmul.f32 %v133, %v764
    %v786 = vmul.f32 %v134, %v764
    %v787 = vmul.f32 %v135, %v764
    %v788 = vmul.f32 %v136, %v764
    %v789 = vmul.f32 %v137, %v764
    %v790 = vmul.f32 %v138, %v764
    %v791 = vmul.f32 %v139, %v764
    %v792 = vmul.f32 %v140, %v764
    %v793 = vmul.f32 %v141, %v764
    %v794 = vmul.f32 %v142, %v764
    %v795 = vmul.f32 %v143, %v764
    %v796 = vmul.f32 %v144, %v764
    %v797 = vmul.f32 %v145, %v764
    %v798 = vmul.f32 %v146, %v764
    %v799 = vmul.f32 %v147, %v764
    %v800 = vmul.f32 %v148, %v764
    %v801 = vmul.f32 %v149, %v764
    %v802 = vmul.f32 %v150, %v764
    %v803 = vmul.f32 %v151, %v764
    %v804 = vmul.f32 %v152, %v764
    %v805 = vmul.f32 %v153, %v764
    %v806 = vmul.f32 %v154, %v764
    %v807 = vmul.f32 %v155, %v764
    %v808 = vmul.f32 %v156, %v764
    %v809 = vmul.f32 %v157, %v764
    %v810 = vmul.f32 %v158, %v764
    %v811 = vmul.f32 %v159, %v764
    %v812 = vmul.f32 %v160, %v764
    %v813 = vmul.f32 %v161, %v764
    %v814 = vmul.f32 %v162, %v764
    %v815 = vmul.f32 %v163, %v764
    %v816 = vmul.f32 %v164, %v764
    %v817 = vmul.f32 %v165, %v764
    %v818 = vmul.f32 %v166, %v764
    %v819 = vmul.f32 %v167, %v764
    %v820 = vmul.f32 %v168, %v764
    %v821 = vmul.f32 %v169, %v764
    %v822 = vmul.f32 %v170, %v764
    %v823 = vmul.f32 %v171, %v764
    %v824 = vmul.f32 %v172, %v764
    %v825 = vmul.f32 %v173, %v764
    %v826 = vmul.f32 %v174, %v764
    %v827 = vmul.f32 %v175, %v764
    %v828 = vmul.f32 %v176, %v764
    %v829 = vmul.f32 %v177, %v764
    %v830 = vmul.f32 %v178, %v764
    %v831 = vmul.f32 %v179, %v764
    %v832 = vmul.f32 %v180, %v764
    %v833 = vmul.f32 %v181, %v764
    %v834 = vmul.f32 %v182, %v764
    %v835 = vmul.f32 %v183, %v764
    %v836 = vmul.f32 %v184, %v764
    %v837 = vmul.f32 %v185, %v764
    %v838 = vmul.f32 %v186, %v764
    %v839 = vmul.f32 %v187, %v764
    %v840 = vmul.f32 %v188, %v764
    %v841 = vmul.f32 %v189, %v764
    %v842 = vmul.f32 %v190, %v764
    %v843 = vmul.f32 %v191, %v764
    %v844 = vmul.f32 %v192, %v764
    %v845 = vmul.f32 %v193, %v764
    %v846 = vmul.f32 %v194, %v764
    %v847 = vmul.f32 %v195, %v764
    %v848 = vmul.f32 %v196, %v764
    %v849 = vmul.f32 %v197, %v764
    %v850 = vmul.f32 %v198, %v764
    %v851 = vmul.f32 %v199, %v764
    %v852 = vmul.f32 %v200, %v764
    %v853 = vmul.f32 %v201, %v764
    %v854 = vmul.f32 %v202, %v764
    %v855 = vmul.f32 %v203, %v764
    %v856 = vmul.f32 %v204, %v764
    %v857 = vmul.f32 %v205, %v764
    %v858 = vmul.f32 %v206, %v764
    %v859 = vmul.f32 %v207, %v764
    %v860 = vmul.f32 %v208, %v764
    %v861 = vmul.f32 %v209, %v764
    %v862 = vmul.f32 %v210, %v764
    %v863 = vmul.f32 %v211, %v764
    %v864 = vmul.f32 %v212, %v764
    %v865 = vmul.f32 %v213, %v764
    %v866 = vmul.f32 %v214, %v764
    %v867 = vmul.f32 %v215, %v764
    %v868 = vmul.f32 %v216, %v764
    %v869 = vmul.f32 %v217, %v764
    %v870 = vmul.f32 %v218, %v764
    %v871 = vmul.f32 %v219, %v764
    %v872 = vmul.f32 %v220, %v764
    %v873 = vmul.f32 %v221, %v764
    %v874 = vmul.f32 %v222, %v764
    %v875 = vmul.f32 %v223, %v764
    %v876 = vmul.f32 %v224, %v764
    %v877 = vmul.f32 %v225, %v764
    %v878 = vmul.f32 %v226, %v764
    %v879 = vmul.f32 %v227, %v764
    %v880 = vmul.f32 %v228, %v764
    %v881 = vmul.f32 %v229, %v764
    %v882 = vmul.f32 %v230, %v764
    %v883 = vmul.f32 %v231, %v764
    %v884 = vmul.f32 %v232, %v764
    %v885 = vmul.f32 %v233, %v764
    %v886 = vmul.f32 %v234, %v764
    %v887 = vmul.f32 %v235, %v764
    %v888 = vmul.f32 %v236, %v764
    %v889 = vmul.f32 %v497, %v764
    %v890 = vmul.f32 %v498, %v764
    %v891 = vmul.f32 %v759, %v764
    %v892 = vmul.f32 %v760, %v764
    %v893 = vadd.f32 %v631, %v765
    %v894 = vadd.f32 %v632, %v766
    %v895 = vadd.f32 %v633, %v767
    %v896 = vadd.f32 %v634, %v768
    %v897 = vadd.f32 %v635, %v769
    %v898 = vadd.f32 %v636, %v770
    %v899 = vadd.f32 %v637, %v771
    %v900 = vadd.f32 %v638, %v772
    %v901 = vadd.f32 %v639, %v773
    %v902 = vadd.f32 %v640, %v774
    %v903 = vadd.f32 %v641, %v775
    %v904 = vadd.f32 %v642, %v776
    %v905 = vadd.f32 %v643, %v777
    %v906 = vadd.f32 %v644, %v778
    %v907 = vadd.f32 %v645, %v779
    %v908 = vadd.f32 %v646, %v780
    %v909 = vadd.f32 %v647, %v781
    %v910 = vadd.f32 %v648, %v782
    %v911 = vadd.f32 %v649, %v783
    %v912 = vadd.f32 %v650, %v784
    %v913 = vadd.f32 %v651, %v785
    %v914 = vadd.f32 %v652, %v786
    %v915 = vadd.f32 %v653, %v787
    %v916 = vadd.f32 %v654, %v788
    %v917 = vadd.f32 %v655, %v789
    %v918 = vadd.f32 %v656, %v790
    %v919 = vadd.f32 %v657, %v791
    %v920 = vadd.f32 %v658, %v792
    %v921 = vadd.f32 %v659, %v793
    %v922 = vadd.f32 %v660, %v794
    %v923 = vadd.f32 %v661, %v795
    %v924 = vadd.f32 %v662, %v796
    %v925 = vadd.f32 %v663, %v797
    %v926 = vadd.f32 %v664, %v798
    %v927 = vadd.f32 %v665, %v799
    %v928 = vadd.f32 %v666, %v800
    %v929 = vadd.f32 %v667, %v801
    %v930 = vadd.f32 %v668, %v802
    %v931 = vadd.f32 %v669, %v803
    %v932 = vadd.f32 %v670, %v804
    %v933 = vadd.f32 %v671, %v805
    %v934 = vadd.f32 %v672, %v806
    %v935 = vadd.f32 %v673, %v807
    %v936 = vadd.f32 %v674, %v808
    %v937 = vadd.f32 %v675, %v809
    %v938 = vadd.f32 %v676, %v810
    %v939 = vadd.f32 %v677, %v811
    %v940 = vadd.f32 %v678, %v812
    %v941 = vadd.f32 %v679, %v813
    %v942 = vadd.f32 %v680, %v814
    %v943 = vadd.f32 %v681, %v815
    %v944 = vadd.f32 %v682, %v816
    %v945 = vadd.f32 %v683, %v817
    %v946 = vadd.f32 %v684, %v818
    %v947 = vadd.f32 %v685, %v819
    %v948 = vadd.f32 %v686, %v820
    %v949 = vadd.f32 %v687, %v821
    %v950 = vadd.f32 %v688, %v822
    %v951 = vadd.f32 %v689, %v823
    %v952 = vadd.f32 %v690, %v824
    %v953 = vadd.f32 %v691, %v825
    %v954 = vadd.f32 %v692, %v826
    %v955 = vadd.f32 %v693, %v827
    %v956 = vadd.f32 %v694, %v828
    %v957 = vadd.f32 %v695, %v829
    %v958 = vadd.f32 %v696, %v830
    %v959 = vadd.f32 %v697, %v831
    %v960 = vadd.f32 %v698, %v832
    %v961 = vadd.f32 %v699, %v833
    %v962 = vadd.f32 %v700, %v834
    %v963 = vadd.f32 %v701, %v835
    %v964 = vadd.f32 %v702, %v836
    %v965 = vadd.f32 %v703, %v837
    %v966 = vadd.f32 %v704, %v838
    %v967 = vadd.f32 %v705, %v839
    %v968 = vadd.f32 %v706, %v840
    %v969 = vadd.f32 %v707, %v841
    %v970 = vadd.f32 %v708, %v842
    %v971 = vadd.f32 %v709, %v843
    %v972 = vadd.f32 %v710, %v844
    %v973 = vadd.f32 %v711, %v845
    %v974 = vadd.f32 %v712, %v846
    %v975 = vadd.f32 %v713, %v847
    %v976 = vadd.f32 %v714, %v848
    %v977 = vadd.f32 %v715, %v849
    %v978 = vadd.f32 %v716, %v850
    %v979 = vadd.f32 %v717, %v851
    %v980 = vadd.f32 %v718, %v852
    %v981 = vadd.f32 %v719, %v853
    %v982 = vadd.f32 %v720, %v854
    %v983 = vadd.f32 %v721, %v855
    %v984 = vadd.f32 %v722, %v856
    %v985 = vadd.f32 %v723, %v857
    %v986 = vadd.f32 %v724, %v858
    %v987 = vadd.f32 %v725, %v859
    %v988 = vadd.f32 %v726, %v860
    %v989 = vadd.f32 %v727, %v861
    %v990 = vadd.f32 %v728, %v862
    %v991 = vadd.f32 %v729, %v863
    %v992 = vadd.f32 %v730, %v864
    %v993 = vadd.f32 %v731, %v865
    %v994 = vadd.f32 %v732, %v866
    %v995 = vadd.f32 %v733, %v867
    %v996 = vadd.f32 %v734, %v868
    %v997 = vadd.f32 %v735, %v869
    %v998 = vadd.f32 %v736, %v870
    %v999 = vadd.f32 %v737, %v871
    %v1000 = vadd.f32 %v738, %v872
    %v1001 = vadd.f32 %v739, %v873
    %v1002 = vadd.f32 %v740, %v874
    %v1003 = vadd.f32 %v741, %v875
    %v1004 = vadd.f32 %v742, %v876
    %v1005 = vadd.f32 %v743, %v877
    %v1006 = vadd.f32 %v744, %v878
    %v1007 = vadd.f32 %v745, %v879
    %v1008 = vadd.f32 %v746, %v880
    %v1009 = vadd.f32 %v747, %v881
    %v1010 = vadd.f32 %v748, %v882
    %v1011 = vadd.f32 %v749, %v883
    %v1012 = vadd.f32 %v750, %v884
    %v1013 = vadd.f32 %v751, %v885
    %v1014 = vadd.f32 %v752, %v886
    %v1015 = vadd.f32 %v753, %v887
    %v1016 = vadd.f32 %v754, %v888
    %v1017 = vadd.f32 %v755, %v889
    %v1018 = vadd.f32 %v756, %v890
    %v1019 = vadd.f32 %v757, %v891
    %v1020 = vadd.f32 %v758, %v892
    %v1021 = vld [vmem:[%s0 + $0x420] sm:$0xff]
    %v1022 = vld [vmem:[%s0 + $0x428] sm:$0xff]
    %v1023 = vld [vmem:[%s0 + $0x430] sm:$0xff]
    %v1024 = vld [vmem:[%s0 + $0x438] sm:$0xff]
    %v1025 = vld [vmem:[%s0 + $0x440] sm:$0xff]
    %v1026 = vld [vmem:[%s0 + $0x448] sm:$0xff]
    %v1027 = vld [vmem:[%s0 + $0x450] sm:$0xff]
    %v1028 = vld [vmem:[%s0 + $0x458] sm:$0xff]
    %v1029 = vld [vmem:[%s0 + $0x460] sm:$0xff]
    %v1030 = vld [vmem:[%s0 + $0x468] sm:$0xff]
    %v1031 = vld [vmem:[%s0 + $0x470] sm:$0xff]
    %v1032 = vld [vmem:[%s0 + $0x478] sm:$0xff]
    %v1033 = vld [vmem:[%s0 + $0x480] sm:$0xff]
    %v1034 = vld [vmem:[%s0 + $0x488] sm:$0xff]
    %v1035 = vld [vmem:[%s0 + $0x490] sm:$0xff]
    %v1036 = vld [vmem:[%s0 + $0x498] sm:$0xff]
    %v1037 = vld [vmem:[%s0 + $0x4a0] sm:$0xff]
    %v1038 = vld [vmem:[%s0 + $0x4a8] sm:$0xff]
    %v1039 = vlaneseq
    %v1040 = vshrl.u32 %v1039, 7
    %v1041 = vsub.s32 3, %v1040
    %v1042 = vrot.slane %v107, %v1041
    %v1043 = vmul.f32 %v131, %v1042
    %v1044 = vmul.f32 %v132, %v1042
    %v1045 = vmul.f32 %v133, %v1042
    %v1046 = vmul.f32 %v134, %v1042
    %v1047 = vmul.f32 %v135, %v1042
    %v1048 = vmul.f32 %v136, %v1042
    %v1049 = vmul.f32 %v137, %v1042
    %v1050 = vmul.f32 %v138, %v1042
    %v1051 = vmul.f32 %v139, %v1042
    %v1052 = vmul.f32 %v140, %v1042
    %v1053 = vmul.f32 %v141, %v1042
    %v1054 = vmul.f32 %v142, %v1042
    %v1055 = vmul.f32 %v143, %v1042
    %v1056 = vmul.f32 %v144, %v1042
    %v1057 = vmul.f32 %v145, %v1042
    %v1058 = vmul.f32 %v146, %v1042
    %v1059 = vmul.f32 %v147, %v1042
    %v1060 = vmul.f32 %v148, %v1042
    %v1061 = vmul.f32 %v149, %v1042
    %v1062 = vmul.f32 %v150, %v1042
    %v1063 = vmul.f32 %v151, %v1042
    %v1064 = vmul.f32 %v152, %v1042
    %v1065 = vmul.f32 %v153, %v1042
    %v1066 = vmul.f32 %v154, %v1042
    %v1067 = vmul.f32 %v155, %v1042
    %v1068 = vmul.f32 %v156, %v1042
    %v1069 = vmul.f32 %v157, %v1042
    %v1070 = vmul.f32 %v158, %v1042
    %v1071 = vmul.f32 %v159, %v1042
    %v1072 = vmul.f32 %v160, %v1042
    %v1073 = vmul.f32 %v161, %v1042
    %v1074 = vmul.f32 %v162, %v1042
    %v1075 = vmul.f32 %v163, %v1042
    %v1076 = vmul.f32 %v164, %v1042
    %v1077 = vmul.f32 %v165, %v1042
    %v1078 = vmul.f32 %v166, %v1042
    %v1079 = vmul.f32 %v167, %v1042
    %v1080 = vmul.f32 %v168, %v1042
    %v1081 = vmul.f32 %v169, %v1042
    %v1082 = vmul.f32 %v170, %v1042
    %v1083 = vmul.f32 %v171, %v1042
    %v1084 = vmul.f32 %v172, %v1042
    %v1085 = vmul.f32 %v173, %v1042
    %v1086 = vmul.f32 %v174, %v1042
    %v1087 = vmul.f32 %v175, %v1042
    %v1088 = vmul.f32 %v176, %v1042
    %v1089 = vmul.f32 %v177, %v1042
    %v1090 = vmul.f32 %v178, %v1042
    %v1091 = vmul.f32 %v179, %v1042
    %v1092 = vmul.f32 %v180, %v1042
    %v1093 = vmul.f32 %v181, %v1042
    %v1094 = vmul.f32 %v182, %v1042
    %v1095 = vmul.f32 %v183, %v1042
    %v1096 = vmul.f32 %v184, %v1042
    %v1097 = vmul.f32 %v185, %v1042
    %v1098 = vmul.f32 %v186, %v1042
    %v1099 = vmul.f32 %v187, %v1042
    %v1100 = vmul.f32 %v188, %v1042
    %v1101 = vmul.f32 %v189, %v1042
    %v1102 = vmul.f32 %v190, %v1042
    %v1103 = vmul.f32 %v191, %v1042
    %v1104 = vmul.f32 %v192, %v1042
    %v1105 = vmul.f32 %v193, %v1042
    %v1106 = vmul.f32 %v194, %v1042
    %v1107 = vmul.f32 %v195, %v1042
    %v1108 = vmul.f32 %v196, %v1042
    %v1109 = vmul.f32 %v197, %v1042
    %v1110 = vmul.f32 %v198, %v1042
    %v1111 = vmul.f32 %v199, %v1042
    %v1112 = vmul.f32 %v200, %v1042
    %v1113 = vmul.f32 %v201, %v1042
    %v1114 = vmul.f32 %v202, %v1042
    %v1115 = vmul.f32 %v203, %v1042
    %v1116 = vmul.f32 %v204, %v1042
    %v1117 = vmul.f32 %v205, %v1042
    %v1118 = vmul.f32 %v206, %v1042
    %v1119 = vmul.f32 %v207, %v1042
    %v1120 = vmul.f32 %v208, %v1042
    %v1121 = vmul.f32 %v209, %v1042
    %v1122 = vmul.f32 %v210, %v1042
    %v1123 = vmul.f32 %v211, %v1042
    %v1124 = vmul.f32 %v212, %v1042
    %v1125 = vmul.f32 %v213, %v1042
    %v1126 = vmul.f32 %v214, %v1042
    %v1127 = vmul.f32 %v215, %v1042
    %v1128 = vmul.f32 %v216, %v1042
    %v1129 = vmul.f32 %v217, %v1042
    %v1130 = vmul.f32 %v218, %v1042
    %v1131 = vmul.f32 %v219, %v1042
    %v1132 = vmul.f32 %v220, %v1042
    %v1133 = vmul.f32 %v221, %v1042
    %v1134 = vmul.f32 %v222, %v1042
    %v1135 = vmul.f32 %v223, %v1042
    %v1136 = vmul.f32 %v224, %v1042
    %v1137 = vmul.f32 %v225, %v1042
    %v1138 = vmul.f32 %v226, %v1042
    %v1139 = vmul.f32 %v227, %v1042
    %v1140 = vmul.f32 %v228, %v1042
    %v1141 = vmul.f32 %v229, %v1042
    %v1142 = vmul.f32 %v230, %v1042
    %v1143 = vmul.f32 %v231, %v1042
    %v1144 = vmul.f32 %v232, %v1042
    %v1145 = vmul.f32 %v233, %v1042
    %v1146 = vmul.f32 %v234, %v1042
    %v1147 = vmul.f32 %v235, %v1042
    %v1148 = vmul.f32 %v236, %v1042
    %v1149 = vmul.f32 %v497, %v1042
    %v1150 = vmul.f32 %v498, %v1042
    %v1151 = vmul.f32 %v759, %v1042
    %v1152 = vmul.f32 %v760, %v1042
    %v1153 = vmul.f32 %v1021, %v1042
    %v1154 = vmul.f32 %v1022, %v1042
    %v1155 = vmul.f32 %v1023, %v1042
    %v1156 = vmul.f32 %v1024, %v1042
    %v1157 = vmul.f32 %v1025, %v1042
    %v1158 = vmul.f32 %v1026, %v1042
    %v1159 = vmul.f32 %v1027, %v1042
    %v1160 = vmul.f32 %v1028, %v1042
    %v1161 = vmul.f32 %v1029, %v1042
    %v1162 = vmul.f32 %v1030, %v1042
    %v1163 = vmul.f32 %v1031, %v1042
    %v1164 = vmul.f32 %v1032, %v1042
    %v1165 = vmul.f32 %v1033, %v1042
    %v1166 = vmul.f32 %v1034, %v1042
    %v1167 = vmul.f32 %v1035, %v1042
    %v1168 = vmul.f32 %v1036, %v1042
    %v1169 = vmul.f32 %v1037, %v1042
    %v1170 = vmul.f32 %v1038, %v1042
    %v1171 = vadd.f32 %v893, %v1043
    %v1172 = vadd.f32 %v894, %v1044
    %v1173 = vadd.f32 %v895, %v1045
    %v1174 = vadd.f32 %v896, %v1046
    %v1175 = vadd.f32 %v897, %v1047
    %v1176 = vadd.f32 %v898, %v1048
    %v1177 = vadd.f32 %v899, %v1049
    %v1178 = vadd.f32 %v900, %v1050
    %v1179 = vadd.f32 %v901, %v1051
    %v1180 = vadd.f32 %v902, %v1052
    %v1181 = vadd.f32 %v903, %v1053
    %v1182 = vadd.f32 %v904, %v1054
    %v1183 = vadd.f32 %v905, %v1055
    %v1184 = vadd.f32 %v906, %v1056
    %v1185 = vadd.f32 %v907, %v1057
    %v1186 = vadd.f32 %v908, %v1058
    %v1187 = vadd.f32 %v909, %v1059
    %v1188 = vadd.f32 %v910, %v1060
    %v1189 = vadd.f32 %v911, %v1061
    %v1190 = vadd.f32 %v912, %v1062
    %v1191 = vadd.f32 %v913, %v1063
    %v1192 = vadd.f32 %v914, %v1064
    %v1193 = vadd.f32 %v915, %v1065
    %v1194 = vadd.f32 %v916, %v1066
    %v1195 = vadd.f32 %v917, %v1067
    %v1196 = vadd.f32 %v918, %v1068
    %v1197 = vadd.f32 %v919, %v1069
    %v1198 = vadd.f32 %v920, %v1070
    %v1199 = vadd.f32 %v921, %v1071
    %v1200 = vadd.f32 %v922, %v1072
    %v1201 = vadd.f32 %v923, %v1073
    %v1202 = vadd.f32 %v924, %v1074
    %v1203 = vadd.f32 %v925, %v1075
    %v1204 = vadd.f32 %v926, %v1076
    %v1205 = vadd.f32 %v927, %v1077
    %v1206 = vadd.f32 %v928, %v1078
    %v1207 = vadd.f32 %v929, %v1079
    %v1208 = vadd.f32 %v930, %v1080
    %v1209 = vadd.f32 %v931, %v1081
    %v1210 = vadd.f32 %v932, %v1082
    %v1211 = vadd.f32 %v933, %v1083
    %v1212 = vadd.f32 %v934, %v1084
    %v1213 = vadd.f32 %v935, %v1085
    %v1214 = vadd.f32 %v936, %v1086
    %v1215 = vadd.f32 %v937, %v1087
    %v1216 = vadd.f32 %v938, %v1088
    %v1217 = vadd.f32 %v939, %v1089
    %v1218 = vadd.f32 %v940, %v1090
    %v1219 = vadd.f32 %v941, %v1091
    %v1220 = vadd.f32 %v942, %v1092
    %v1221 = vadd.f32 %v943, %v1093
    %v1222 = vadd.f32 %v944, %v1094
    %v1223 = vadd.f32 %v945, %v1095
    %v1224 = vadd.f32 %v946, %v1096
    %v1225 = vadd.f32 %v947, %v1097
    %v1226 = vadd.f32 %v948, %v1098
    %v1227 = vadd.f32 %v949, %v1099
    %v1228 = vadd.f32 %v950, %v1100
    %v1229 = vadd.f32 %v951, %v1101
    %v1230 = vadd.f32 %v952, %v1102
    %v1231 = vadd.f32 %v953, %v1103
    %v1232 = vadd.f32 %v954, %v1104
    %v1233 = vadd.f32 %v955, %v1105
    %v1234 = vadd.f32 %v956, %v1106
    %v1235 = vadd.f32 %v957, %v1107
    %v1236 = vadd.f32 %v958, %v1108
    %v1237 = vadd.f32 %v959, %v1109
    %v1238 = vadd.f32 %v960, %v1110
    %v1239 = vadd.f32 %v961, %v1111
    %v1240 = vadd.f32 %v962, %v1112
    %v1241 = vadd.f32 %v963, %v1113
    %v1242 = vadd.f32 %v964, %v1114
    %v1243 = vadd.f32 %v965, %v1115
    %v1244 = vadd.f32 %v966, %v1116
    %v1245 = vadd.f32 %v967, %v1117
    %v1246 = vadd.f32 %v968, %v1118
    %v1247 = vadd.f32 %v969, %v1119
    %v1248 = vadd.f32 %v970, %v1120
    %v1249 = vadd.f32 %v971, %v1121
    %v1250 = vadd.f32 %v972, %v1122
    %v1251 = vadd.f32 %v973, %v1123
    %v1252 = vadd.f32 %v974, %v1124
    %v1253 = vadd.f32 %v975, %v1125
    %v1254 = vadd.f32 %v976, %v1126
    %v1255 = vadd.f32 %v977, %v1127
    %v1256 = vadd.f32 %v978, %v1128
    %v1257 = vadd.f32 %v979, %v1129
    %v1258 = vadd.f32 %v980, %v1130
    %v1259 = vadd.f32 %v981, %v1131
    %v1260 = vadd.f32 %v982, %v1132
    %v1261 = vadd.f32 %v983, %v1133
    %v1262 = vadd.f32 %v984, %v1134
    %v1263 = vadd.f32 %v985, %v1135
    %v1264 = vadd.f32 %v986, %v1136
    %v1265 = vadd.f32 %v987, %v1137
    %v1266 = vadd.f32 %v988, %v1138
    %v1267 = vadd.f32 %v989, %v1139
    %v1268 = vadd.f32 %v990, %v1140
    %v1269 = vadd.f32 %v991, %v1141
    %v1270 = vadd.f32 %v992, %v1142
    %v1271 = vadd.f32 %v993, %v1143
    %v1272 = vadd.f32 %v994, %v1144
    %v1273 = vadd.f32 %v995, %v1145
    %v1274 = vadd.f32 %v996, %v1146
    %v1275 = vadd.f32 %v997, %v1147
    %v1276 = vadd.f32 %v998, %v1148
    %v1277 = vadd.f32 %v999, %v1149
    %v1278 = vadd.f32 %v1000, %v1150
    %v1279 = vadd.f32 %v1001, %v1151
    %v1280 = vadd.f32 %v1002, %v1152
    %v1281 = vadd.f32 %v1003, %v1153
    %v1282 = vadd.f32 %v1004, %v1154
    %v1283 = vadd.f32 %v1005, %v1155
    %v1284 = vadd.f32 %v1006, %v1156
    %v1285 = vadd.f32 %v1007, %v1157
    %v1286 = vadd.f32 %v1008, %v1158
    %v1287 = vadd.f32 %v1009, %v1159
    %v1288 = vadd.f32 %v1010, %v1160
    %v1289 = vadd.f32 %v1011, %v1161
    %v1290 = vadd.f32 %v1012, %v1162
    %v1291 = vadd.f32 %v1013, %v1163
    %v1292 = vadd.f32 %v1014, %v1164
    %v1293 = vadd.f32 %v1015, %v1165
    %v1294 = vadd.f32 %v1016, %v1166
    %v1295 = vadd.f32 %v1017, %v1167
    %v1296 = vadd.f32 %v1018, %v1168
    %v1297 = vadd.f32 %v1019, %v1169
    %v1298 = vadd.f32 %v1020, %v1170
    %v1299 = vld [vmem:[%s0 + $0x4b0] sm:$0xff]
    %v1300 = vld [vmem:[%s0 + $0x4b8] sm:$0xff]
    %v1301 = vlaneseq
    %v1302 = vshrl.u32 %v1301, 7
    %v1303 = vsub.s32 4, %v1302
    %v1304 = vrot.slane %v107, %v1303
    %v1305 = vmul.f32 %v133, %v1304
    %v1306 = vmul.f32 %v134, %v1304
    %v1307 = vmul.f32 %v135, %v1304
    %v1308 = vmul.f32 %v136, %v1304
    %v1309 = vmul.f32 %v137, %v1304
    %v1310 = vmul.f32 %v138, %v1304
    %v1311 = vmul.f32 %v139, %v1304
    %v1312 = vmul.f32 %v140, %v1304
    %v1313 = vmul.f32 %v141, %v1304
    %v1314 = vmul.f32 %v142, %v1304
    %v1315 = vmul.f32 %v143, %v1304
    %v1316 = vmul.f32 %v144, %v1304
    %v1317 = vmul.f32 %v145, %v1304
    %v1318 = vmul.f32 %v146, %v1304
    %v1319 = vmul.f32 %v147, %v1304
    %v1320 = vmul.f32 %v148, %v1304
    %v1321 = vmul.f32 %v149, %v1304
    %v1322 = vmul.f32 %v150, %v1304
    %v1323 = vmul.f32 %v151, %v1304
    %v1324 = vmul.f32 %v152, %v1304
    %v1325 = vmul.f32 %v153, %v1304
    %v1326 = vmul.f32 %v154, %v1304
    %v1327 = vmul.f32 %v155, %v1304
    %v1328 = vmul.f32 %v156, %v1304
    %v1329 = vmul.f32 %v157, %v1304
    %v1330 = vmul.f32 %v158, %v1304
    %v1331 = vmul.f32 %v159, %v1304
    %v1332 = vmul.f32 %v160, %v1304
    %v1333 = vmul.f32 %v161, %v1304
    %v1334 = vmul.f32 %v162, %v1304
    %v1335 = vmul.f32 %v163, %v1304
    %v1336 = vmul.f32 %v164, %v1304
    %v1337 = vmul.f32 %v165, %v1304
    %v1338 = vmul.f32 %v166, %v1304
    %v1339 = vmul.f32 %v167, %v1304
    %v1340 = vmul.f32 %v168, %v1304
    %v1341 = vmul.f32 %v169, %v1304
    %v1342 = vmul.f32 %v170, %v1304
    %v1343 = vmul.f32 %v171, %v1304
    %v1344 = vmul.f32 %v172, %v1304
    %v1345 = vmul.f32 %v173, %v1304
    %v1346 = vmul.f32 %v174, %v1304
    %v1347 = vmul.f32 %v175, %v1304
    %v1348 = vmul.f32 %v176, %v1304
    %v1349 = vmul.f32 %v177, %v1304
    %v1350 = vmul.f32 %v178, %v1304
    %v1351 = vmul.f32 %v179, %v1304
    %v1352 = vmul.f32 %v180, %v1304
    %v1353 = vmul.f32 %v181, %v1304
    %v1354 = vmul.f32 %v182, %v1304
    %v1355 = vmul.f32 %v183, %v1304
    %v1356 = vmul.f32 %v184, %v1304
    %v1357 = vmul.f32 %v185, %v1304
    %v1358 = vmul.f32 %v186, %v1304
    %v1359 = vmul.f32 %v187, %v1304
    %v1360 = vmul.f32 %v188, %v1304
    %v1361 = vmul.f32 %v189, %v1304
    %v1362 = vmul.f32 %v190, %v1304
    %v1363 = vmul.f32 %v191, %v1304
    %v1364 = vmul.f32 %v192, %v1304
    %v1365 = vmul.f32 %v193, %v1304
    %v1366 = vmul.f32 %v194, %v1304
    %v1367 = vmul.f32 %v195, %v1304
    %v1368 = vmul.f32 %v196, %v1304
    %v1369 = vmul.f32 %v197, %v1304
    %v1370 = vmul.f32 %v198, %v1304
    %v1371 = vmul.f32 %v199, %v1304
    %v1372 = vmul.f32 %v200, %v1304
    %v1373 = vmul.f32 %v201, %v1304
    %v1374 = vmul.f32 %v202, %v1304
    %v1375 = vmul.f32 %v203, %v1304
    %v1376 = vmul.f32 %v204, %v1304
    %v1377 = vmul.f32 %v205, %v1304
    %v1378 = vmul.f32 %v206, %v1304
    %v1379 = vmul.f32 %v207, %v1304
    %v1380 = vmul.f32 %v208, %v1304
    %v1381 = vmul.f32 %v209, %v1304
    %v1382 = vmul.f32 %v210, %v1304
    %v1383 = vmul.f32 %v211, %v1304
    %v1384 = vmul.f32 %v212, %v1304
    %v1385 = vmul.f32 %v213, %v1304
    %v1386 = vmul.f32 %v214, %v1304
    %v1387 = vmul.f32 %v215, %v1304
    %v1388 = vmul.f32 %v216, %v1304
    %v1389 = vmul.f32 %v217, %v1304
    %v1390 = vmul.f32 %v218, %v1304
    %v1391 = vmul.f32 %v219, %v1304
    %v1392 = vmul.f32 %v220, %v1304
    %v1393 = vmul.f32 %v221, %v1304
    %v1394 = vmul.f32 %v222, %v1304
    %v1395 = vmul.f32 %v223, %v1304
    %v1396 = vmul.f32 %v224, %v1304
    %v1397 = vmul.f32 %v225, %v1304
    %v1398 = vmul.f32 %v226, %v1304
    %v1399 = vmul.f32 %v227, %v1304
    %v1400 = vmul.f32 %v228, %v1304
    %v1401 = vmul.f32 %v229, %v1304
    %v1402 = vmul.f32 %v230, %v1304
    %v1403 = vmul.f32 %v231, %v1304
    %v1404 = vmul.f32 %v232, %v1304
    %v1405 = vmul.f32 %v233, %v1304
    %v1406 = vmul.f32 %v234, %v1304
    %v1407 = vmul.f32 %v235, %v1304
    %v1408 = vmul.f32 %v236, %v1304
    %v1409 = vmul.f32 %v497, %v1304
    %v1410 = vmul.f32 %v498, %v1304
    %v1411 = vmul.f32 %v759, %v1304
    %v1412 = vmul.f32 %v760, %v1304
    %v1413 = vmul.f32 %v1021, %v1304
    %v1414 = vmul.f32 %v1022, %v1304
    %v1415 = vmul.f32 %v1023, %v1304
    %v1416 = vmul.f32 %v1024, %v1304
    %v1417 = vmul.f32 %v1025, %v1304
    %v1418 = vmul.f32 %v1026, %v1304
    %v1419 = vmul.f32 %v1027, %v1304
    %v1420 = vmul.f32 %v1028, %v1304
    %v1421 = vmul.f32 %v1029, %v1304
    %v1422 = vmul.f32 %v1030, %v1304
    %v1423 = vmul.f32 %v1031, %v1304
    %v1424 = vmul.f32 %v1032, %v1304
    %v1425 = vmul.f32 %v1033, %v1304
    %v1426 = vmul.f32 %v1034, %v1304
    %v1427 = vmul.f32 %v1035, %v1304
    %v1428 = vmul.f32 %v1036, %v1304
    %v1429 = vmul.f32 %v1037, %v1304
    %v1430 = vmul.f32 %v1038, %v1304
    %v1431 = vmul.f32 %v1299, %v1304
    %v1432 = vmul.f32 %v1300, %v1304
    %v1433 = vadd.f32 %v1171, %v1305
    %v1434 = vadd.f32 %v1172, %v1306
    %v1435 = vadd.f32 %v1173, %v1307
    %v1436 = vadd.f32 %v1174, %v1308
    %v1437 = vadd.f32 %v1175, %v1309
    %v1438 = vadd.f32 %v1176, %v1310
    %v1439 = vadd.f32 %v1177, %v1311
    %v1440 = vadd.f32 %v1178, %v1312
    %v1441 = vadd.f32 %v1179, %v1313
    %v1442 = vadd.f32 %v1180, %v1314
    %v1443 = vadd.f32 %v1181, %v1315
    %v1444 = vadd.f32 %v1182, %v1316
    %v1445 = vadd.f32 %v1183, %v1317
    %v1446 = vadd.f32 %v1184, %v1318
    %v1447 = vadd.f32 %v1185, %v1319
    %v1448 = vadd.f32 %v1186, %v1320
    %v1449 = vadd.f32 %v1187, %v1321
    %v1450 = vadd.f32 %v1188, %v1322
    %v1451 = vadd.f32 %v1189, %v1323
    %v1452 = vadd.f32 %v1190, %v1324
    %v1453 = vadd.f32 %v1191, %v1325
    %v1454 = vadd.f32 %v1192, %v1326
    %v1455 = vadd.f32 %v1193, %v1327
    %v1456 = vadd.f32 %v1194, %v1328
    %v1457 = vadd.f32 %v1195, %v1329
    %v1458 = vadd.f32 %v1196, %v1330
    %v1459 = vadd.f32 %v1197, %v1331
    %v1460 = vadd.f32 %v1198, %v1332
    %v1461 = vadd.f32 %v1199, %v1333
    %v1462 = vadd.f32 %v1200, %v1334
    %v1463 = vadd.f32 %v1201, %v1335
    %v1464 = vadd.f32 %v1202, %v1336
    %v1465 = vadd.f32 %v1203, %v1337
    %v1466 = vadd.f32 %v1204, %v1338
    %v1467 = vadd.f32 %v1205, %v1339
    %v1468 = vadd.f32 %v1206, %v1340
    %v1469 = vadd.f32 %v1207, %v1341
    %v1470 = vadd.f32 %v1208, %v1342
    %v1471 = vadd.f32 %v1209, %v1343
    %v1472 = vadd.f32 %v1210, %v1344
    %v1473 = vadd.f32 %v1211, %v1345
    %v1474 = vadd.f32 %v1212, %v1346
    %v1475 = vadd.f32 %v1213, %v1347
    %v1476 = vadd.f32 %v1214, %v1348
    %v1477 = vadd.f32 %v1215, %v1349
    %v1478 = vadd.f32 %v1216, %v1350
    %v1479 = vadd.f32 %v1217, %v1351
    %v1480 = vadd.f32 %v1218, %v1352
    %v1481 = vadd.f32 %v1219, %v1353
    %v1482 = vadd.f32 %v1220, %v1354
    %v1483 = vadd.f32 %v1221, %v1355
    %v1484 = vadd.f32 %v1222, %v1356
    %v1485 = vadd.f32 %v1223, %v1357
    %v1486 = vadd.f32 %v1224, %v1358
    %v1487 = vadd.f32 %v1225, %v1359
    %v1488 = vadd.f32 %v1226, %v1360
    %v1489 = vadd.f32 %v1227, %v1361
    %v1490 = vadd.f32 %v1228, %v1362
    %v1491 = vadd.f32 %v1229, %v1363
    %v1492 = vadd.f32 %v1230, %v1364
    %v1493 = vadd.f32 %v1231, %v1365
    %v1494 = vadd.f32 %v1232, %v1366
    %v1495 = vadd.f32 %v1233, %v1367
    %v1496 = vadd.f32 %v1234, %v1368
    %v1497 = vadd.f32 %v1235, %v1369
    %v1498 = vadd.f32 %v1236, %v1370
    %v1499 = vadd.f32 %v1237, %v1371
    %v1500 = vadd.f32 %v1238, %v1372
    %v1501 = vadd.f32 %v1239, %v1373
    %v1502 = vadd.f32 %v1240, %v1374
    %v1503 = vadd.f32 %v1241, %v1375
    %v1504 = vadd.f32 %v1242, %v1376
    %v1505 = vadd.f32 %v1243, %v1377
    %v1506 = vadd.f32 %v1244, %v1378
    %v1507 = vadd.f32 %v1245, %v1379
    %v1508 = vadd.f32 %v1246, %v1380
    %v1509 = vadd.f32 %v1247, %v1381
    %v1510 = vadd.f32 %v1248, %v1382
    %v1511 = vadd.f32 %v1249, %v1383
    %v1512 = vadd.f32 %v1250, %v1384
    %v1513 = vadd.f32 %v1251, %v1385
    %v1514 = vadd.f32 %v1252, %v1386
    %v1515 = vadd.f32 %v1253, %v1387
    %v1516 = vadd.f32 %v1254, %v1388
    %v1517 = vadd.f32 %v1255, %v1389
    %v1518 = vadd.f32 %v1256, %v1390
    %v1519 = vadd.f32 %v1257, %v1391
    %v1520 = vadd.f32 %v1258, %v1392
    %v1521 = vadd.f32 %v1259, %v1393
    %v1522 = vadd.f32 %v1260, %v1394
    %v1523 = vadd.f32 %v1261, %v1395
    %v1524 = vadd.f32 %v1262, %v1396
    %v1525 = vadd.f32 %v1263, %v1397
    %v1526 = vadd.f32 %v1264, %v1398
    %v1527 = vadd.f32 %v1265, %v1399
    %v1528 = vadd.f32 %v1266, %v1400
    %v1529 = vadd.f32 %v1267, %v1401
    %v1530 = vadd.f32 %v1268, %v1402
    %v1531 = vadd.f32 %v1269, %v1403
    %v1532 = vadd.f32 %v1270, %v1404
    %v1533 = vadd.f32 %v1271, %v1405
    %v1534 = vadd.f32 %v1272, %v1406
    %v1535 = vadd.f32 %v1273, %v1407
    %v1536 = vadd.f32 %v1274, %v1408
    %v1537 = vadd.f32 %v1275, %v1409
    %v1538 = vadd.f32 %v1276, %v1410
    %v1539 = vadd.f32 %v1277, %v1411
    %v1540 = vadd.f32 %v1278, %v1412
    %v1541 = vadd.f32 %v1279, %v1413
    %v1542 = vadd.f32 %v1280, %v1414
    %v1543 = vadd.f32 %v1281, %v1415
    %v1544 = vadd.f32 %v1282, %v1416
    %v1545 = vadd.f32 %v1283, %v1417
    %v1546 = vadd.f32 %v1284, %v1418
    %v1547 = vadd.f32 %v1285, %v1419
    %v1548 = vadd.f32 %v1286, %v1420
    %v1549 = vadd.f32 %v1287, %v1421
    %v1550 = vadd.f32 %v1288, %v1422
    %v1551 = vadd.f32 %v1289, %v1423
    %v1552 = vadd.f32 %v1290, %v1424
    %v1553 = vadd.f32 %v1291, %v1425
    %v1554 = vadd.f32 %v1292, %v1426
    %v1555 = vadd.f32 %v1293, %v1427
    %v1556 = vadd.f32 %v1294, %v1428
    %v1557 = vadd.f32 %v1295, %v1429
    %v1558 = vadd.f32 %v1296, %v1430
    %v1559 = vadd.f32 %v1297, %v1431
    %v1560 = vadd.f32 %v1298, %v1432
    %v1561 = vld [vmem:[%s0 + $0x4c0] sm:$0xff]
    %v1562 = vld [vmem:[%s0 + $0x4c8] sm:$0xff]
    %v1563 = vlaneseq
    %v1564 = vshrl.u32 %v1563, 7
    %v1565 = vsub.s32 5, %v1564
    %v1566 = vrot.slane %v107, %v1565
    %v1567 = vmul.f32 %v135, %v1566
    %v1568 = vmul.f32 %v136, %v1566
    %v1569 = vmul.f32 %v137, %v1566
    %v1570 = vmul.f32 %v138, %v1566
    %v1571 = vmul.f32 %v139, %v1566
    %v1572 = vmul.f32 %v140, %v1566
    %v1573 = vmul.f32 %v141, %v1566
    %v1574 = vmul.f32 %v142, %v1566
    %v1575 = vmul.f32 %v143, %v1566
    %v1576 = vmul.f32 %v144, %v1566
    %v1577 = vmul.f32 %v145, %v1566
    %v1578 = vmul.f32 %v146, %v1566
    %v1579 = vmul.f32 %v147, %v1566
    %v1580 = vmul.f32 %v148, %v1566
    %v1581 = vmul.f32 %v149, %v1566
    %v1582 = vmul.f32 %v150, %v1566
    %v1583 = vmul.f32 %v151, %v1566
    %v1584 = vmul.f32 %v152, %v1566
    %v1585 = vmul.f32 %v153, %v1566
    %v1586 = vmul.f32 %v154, %v1566
    %v1587 = vmul.f32 %v155, %v1566
    %v1588 = vmul.f32 %v156, %v1566
    %v1589 = vmul.f32 %v157, %v1566
    %v1590 = vmul.f32 %v158, %v1566
    %v1591 = vmul.f32 %v159, %v1566
    %v1592 = vmul.f32 %v160, %v1566
    %v1593 = vmul.f32 %v161, %v1566
    %v1594 = vmul.f32 %v162, %v1566
    %v1595 = vmul.f32 %v163, %v1566
    %v1596 = vmul.f32 %v164, %v1566
    %v1597 = vmul.f32 %v165, %v1566
    %v1598 = vmul.f32 %v166, %v1566
    %v1599 = vmul.f32 %v167, %v1566
    %v1600 = vmul.f32 %v168, %v1566
    %v1601 = vmul.f32 %v169, %v1566
    %v1602 = vmul.f32 %v170, %v1566
    %v1603 = vmul.f32 %v171, %v1566
    %v1604 = vmul.f32 %v172, %v1566
    %v1605 = vmul.f32 %v173, %v1566
    %v1606 = vmul.f32 %v174, %v1566
    %v1607 = vmul.f32 %v175, %v1566
    %v1608 = vmul.f32 %v176, %v1566
    %v1609 = vmul.f32 %v177, %v1566
    %v1610 = vmul.f32 %v178, %v1566
    %v1611 = vmul.f32 %v179, %v1566
    %v1612 = vmul.f32 %v180, %v1566
    %v1613 = vmul.f32 %v181, %v1566
    %v1614 = vmul.f32 %v182, %v1566
    %v1615 = vmul.f32 %v183, %v1566
    %v1616 = vmul.f32 %v184, %v1566
    %v1617 = vmul.f32 %v185, %v1566
    %v1618 = vmul.f32 %v186, %v1566
    %v1619 = vmul.f32 %v187, %v1566
    %v1620 = vmul.f32 %v188, %v1566
    %v1621 = vmul.f32 %v189, %v1566
    %v1622 = vmul.f32 %v190, %v1566
    %v1623 = vmul.f32 %v191, %v1566
    %v1624 = vmul.f32 %v192, %v1566
    %v1625 = vmul.f32 %v193, %v1566
    %v1626 = vmul.f32 %v194, %v1566
    %v1627 = vmul.f32 %v195, %v1566
    %v1628 = vmul.f32 %v196, %v1566
    %v1629 = vmul.f32 %v197, %v1566
    %v1630 = vmul.f32 %v198, %v1566
    %v1631 = vmul.f32 %v199, %v1566
    %v1632 = vmul.f32 %v200, %v1566
    %v1633 = vmul.f32 %v201, %v1566
    %v1634 = vmul.f32 %v202, %v1566
    %v1635 = vmul.f32 %v203, %v1566
    %v1636 = vmul.f32 %v204, %v1566
    %v1637 = vmul.f32 %v205, %v1566
    %v1638 = vmul.f32 %v206, %v1566
    %v1639 = vmul.f32 %v207, %v1566
    %v1640 = vmul.f32 %v208, %v1566
    %v1641 = vmul.f32 %v209, %v1566
    %v1642 = vmul.f32 %v210, %v1566
    %v1643 = vmul.f32 %v211, %v1566
    %v1644 = vmul.f32 %v212, %v1566
    %v1645 = vmul.f32 %v213, %v1566
    %v1646 = vmul.f32 %v214, %v1566
    %v1647 = vmul.f32 %v215, %v1566
    %v1648 = vmul.f32 %v216, %v1566
    %v1649 = vmul.f32 %v217, %v1566
    %v1650 = vmul.f32 %v218, %v1566
    %v1651 = vmul.f32 %v219, %v1566
    %v1652 = vmul.f32 %v220, %v1566
    %v1653 = vmul.f32 %v221, %v1566
    %v1654 = vmul.f32 %v222, %v1566
    %v1655 = vmul.f32 %v223, %v1566
    %v1656 = vmul.f32 %v224, %v1566
    %v1657 = vmul.f32 %v225, %v1566
    %v1658 = vmul.f32 %v226, %v1566
    %v1659 = vmul.f32 %v227, %v1566
    %v1660 = vmul.f32 %v228, %v1566
    %v1661 = vmul.f32 %v229, %v1566
    %v1662 = vmul.f32 %v230, %v1566
    %v1663 = vmul.f32 %v231, %v1566
    %v1664 = vmul.f32 %v232, %v1566
    %v1665 = vmul.f32 %v233, %v1566
    %v1666 = vmul.f32 %v234, %v1566
    %v1667 = vmul.f32 %v235, %v1566
    %v1668 = vmul.f32 %v236, %v1566
    %v1669 = vmul.f32 %v497, %v1566
    %v1670 = vmul.f32 %v498, %v1566
    %v1671 = vmul.f32 %v759, %v1566
    %v1672 = vmul.f32 %v760, %v1566
    %v1673 = vmul.f32 %v1021, %v1566
    %v1674 = vmul.f32 %v1022, %v1566
    %v1675 = vmul.f32 %v1023, %v1566
    %v1676 = vmul.f32 %v1024, %v1566
    %v1677 = vmul.f32 %v1025, %v1566
    %v1678 = vmul.f32 %v1026, %v1566
    %v1679 = vmul.f32 %v1027, %v1566
    %v1680 = vmul.f32 %v1028, %v1566
    %v1681 = vmul.f32 %v1029, %v1566
    %v1682 = vmul.f32 %v1030, %v1566
    %v1683 = vmul.f32 %v1031, %v1566
    %v1684 = vmul.f32 %v1032, %v1566
    %v1685 = vmul.f32 %v1033, %v1566
    %v1686 = vmul.f32 %v1034, %v1566
    %v1687 = vmul.f32 %v1035, %v1566
    %v1688 = vmul.f32 %v1036, %v1566
    %v1689 = vmul.f32 %v1037, %v1566
    %v1690 = vmul.f32 %v1038, %v1566
    %v1691 = vmul.f32 %v1299, %v1566
    %v1692 = vmul.f32 %v1300, %v1566
    %v1693 = vmul.f32 %v1561, %v1566
    %v1694 = vmul.f32 %v1562, %v1566
    %v1695 = vadd.f32 %v1433, %v1567
    %v1696 = vadd.f32 %v1434, %v1568
    %v1697 = vadd.f32 %v1435, %v1569
    %v1698 = vadd.f32 %v1436, %v1570
    %v1699 = vadd.f32 %v1437, %v1571
    %v1700 = vadd.f32 %v1438, %v1572
    %v1701 = vadd.f32 %v1439, %v1573
    %v1702 = vadd.f32 %v1440, %v1574
    %v1703 = vadd.f32 %v1441, %v1575
    %v1704 = vadd.f32 %v1442, %v1576
    %v1705 = vadd.f32 %v1443, %v1577
    %v1706 = vadd.f32 %v1444, %v1578
    %v1707 = vadd.f32 %v1445, %v1579
    %v1708 = vadd.f32 %v1446, %v1580
    %v1709 = vadd.f32 %v1447, %v1581
    %v1710 = vadd.f32 %v1448, %v1582
    %v1711 = vadd.f32 %v1449, %v1583
    %v1712 = vadd.f32 %v1450, %v1584
    %v1713 = vadd.f32 %v1451, %v1585
    %v1714 = vadd.f32 %v1452, %v1586
    %v1715 = vadd.f32 %v1453, %v1587
    %v1716 = vadd.f32 %v1454, %v1588
    %v1717 = vadd.f32 %v1455, %v1589
    %v1718 = vadd.f32 %v1456, %v1590
    %v1719 = vadd.f32 %v1457, %v1591
    %v1720 = vadd.f32 %v1458, %v1592
    %v1721 = vadd.f32 %v1459, %v1593
    %v1722 = vadd.f32 %v1460, %v1594
    %v1723 = vadd.f32 %v1461, %v1595
    %v1724 = vadd.f32 %v1462, %v1596
    %v1725 = vadd.f32 %v1463, %v1597
    %v1726 = vadd.f32 %v1464, %v1598
    %v1727 = vadd.f32 %v1465, %v1599
    %v1728 = vadd.f32 %v1466, %v1600
    %v1729 = vadd.f32 %v1467, %v1601
    %v1730 = vadd.f32 %v1468, %v1602
    %v1731 = vadd.f32 %v1469, %v1603
    %v1732 = vadd.f32 %v1470, %v1604
    %v1733 = vadd.f32 %v1471, %v1605
    %v1734 = vadd.f32 %v1472, %v1606
    %v1735 = vadd.f32 %v1473, %v1607
    %v1736 = vadd.f32 %v1474, %v1608
    %v1737 = vadd.f32 %v1475, %v1609
    %v1738 = vadd.f32 %v1476, %v1610
    %v1739 = vadd.f32 %v1477, %v1611
    %v1740 = vadd.f32 %v1478, %v1612
    %v1741 = vadd.f32 %v1479, %v1613
    %v1742 = vadd.f32 %v1480, %v1614
    %v1743 = vadd.f32 %v1481, %v1615
    %v1744 = vadd.f32 %v1482, %v1616
    %v1745 = vadd.f32 %v1483, %v1617
    %v1746 = vadd.f32 %v1484, %v1618
    %v1747 = vadd.f32 %v1485, %v1619
    %v1748 = vadd.f32 %v1486, %v1620
    %v1749 = vadd.f32 %v1487, %v1621
    %v1750 = vadd.f32 %v1488, %v1622
    %v1751 = vadd.f32 %v1489, %v1623
    %v1752 = vadd.f32 %v1490, %v1624
    %v1753 = vadd.f32 %v1491, %v1625
    %v1754 = vadd.f32 %v1492, %v1626
    %v1755 = vadd.f32 %v1493, %v1627
    %v1756 = vadd.f32 %v1494, %v1628
    %v1757 = vadd.f32 %v1495, %v1629
    %v1758 = vadd.f32 %v1496, %v1630
    %v1759 = vadd.f32 %v1497, %v1631
    %v1760 = vadd.f32 %v1498, %v1632
    %v1761 = vadd.f32 %v1499, %v1633
    %v1762 = vadd.f32 %v1500, %v1634
    %v1763 = vadd.f32 %v1501, %v1635
    %v1764 = vadd.f32 %v1502, %v1636
    %v1765 = vadd.f32 %v1503, %v1637
    %v1766 = vadd.f32 %v1504, %v1638
    %v1767 = vadd.f32 %v1505, %v1639
    %v1768 = vadd.f32 %v1506, %v1640
    %v1769 = vadd.f32 %v1507, %v1641
    %v1770 = vadd.f32 %v1508, %v1642
    %v1771 = vadd.f32 %v1509, %v1643
    %v1772 = vadd.f32 %v1510, %v1644
    %v1773 = vadd.f32 %v1511, %v1645
    %v1774 = vadd.f32 %v1512, %v1646
    %v1775 = vadd.f32 %v1513, %v1647
    %v1776 = vadd.f32 %v1514, %v1648
    %v1777 = vadd.f32 %v1515, %v1649
    %v1778 = vadd.f32 %v1516, %v1650
    %v1779 = vadd.f32 %v1517, %v1651
    %v1780 = vadd.f32 %v1518, %v1652
    %v1781 = vadd.f32 %v1519, %v1653
    %v1782 = vadd.f32 %v1520, %v1654
    %v1783 = vadd.f32 %v1521, %v1655
    %v1784 = vadd.f32 %v1522, %v1656
    %v1785 = vadd.f32 %v1523, %v1657
    %v1786 = vadd.f32 %v1524, %v1658
    %v1787 = vadd.f32 %v1525, %v1659
    %v1788 = vadd.f32 %v1526, %v1660
    %v1789 = vadd.f32 %v1527, %v1661
    %v1790 = vadd.f32 %v1528, %v1662
    %v1791 = vadd.f32 %v1529, %v1663
    %v1792 = vadd.f32 %v1530, %v1664
    %v1793 = vadd.f32 %v1531, %v1665
    %v1794 = vadd.f32 %v1532, %v1666
    %v1795 = vadd.f32 %v1533, %v1667
    %v1796 = vadd.f32 %v1534, %v1668
    %v1797 = vadd.f32 %v1535, %v1669
    %v1798 = vadd.f32 %v1536, %v1670
    %v1799 = vadd.f32 %v1537, %v1671
    %v1800 = vadd.f32 %v1538, %v1672
    %v1801 = vadd.f32 %v1539, %v1673
    %v1802 = vadd.f32 %v1540, %v1674
    %v1803 = vadd.f32 %v1541, %v1675
    %v1804 = vadd.f32 %v1542, %v1676
    %v1805 = vadd.f32 %v1543, %v1677
    %v1806 = vadd.f32 %v1544, %v1678
    %v1807 = vadd.f32 %v1545, %v1679
    %v1808 = vadd.f32 %v1546, %v1680
    %v1809 = vadd.f32 %v1547, %v1681
    %v1810 = vadd.f32 %v1548, %v1682
    %v1811 = vadd.f32 %v1549, %v1683
    %v1812 = vadd.f32 %v1550, %v1684
    %v1813 = vadd.f32 %v1551, %v1685
    %v1814 = vadd.f32 %v1552, %v1686
    %v1815 = vadd.f32 %v1553, %v1687
    %v1816 = vadd.f32 %v1554, %v1688
    %v1817 = vadd.f32 %v1555, %v1689
    %v1818 = vadd.f32 %v1556, %v1690
    %v1819 = vadd.f32 %v1557, %v1691
    %v1820 = vadd.f32 %v1558, %v1692
    %v1821 = vadd.f32 %v1559, %v1693
    %v1822 = vadd.f32 %v1560, %v1694
    %v1823 = vld [vmem:[%s0 + $0x4d0] sm:$0xff]
    %v1824 = vld [vmem:[%s0 + $0x4d8] sm:$0xff]
    %v1825 = vld [vmem:[%s0 + $0x4e0] sm:$0xff]
    %v1826 = vld [vmem:[%s0 + $0x4e8] sm:$0xff]
    %v1827 = vld [vmem:[%s0 + $0x4f0] sm:$0xff]
    %v1828 = vld [vmem:[%s0 + $0x4f8] sm:$0xff]
    %v1829 = vld [vmem:[%s0 + $0x500] sm:$0xff]
    %v1830 = vld [vmem:[%s0 + $0x508] sm:$0xff]
    %v1831 = vld [vmem:[%s0 + $0x510] sm:$0xff]
    %v1832 = vld [vmem:[%s0 + $0x518] sm:$0xff]
    %v1833 = vld [vmem:[%s0 + $0x520] sm:$0xff]
    %v1834 = vld [vmem:[%s0 + $0x528] sm:$0xff]
    %v1835 = vld [vmem:[%s0 + $0x530] sm:$0xff]
    %v1836 = vld [vmem:[%s0 + $0x538] sm:$0xff]
    %v1837 = vld [vmem:[%s0 + $0x540] sm:$0xff]
    %v1838 = vld [vmem:[%s0 + $0x548] sm:$0xff]
    %v1839 = vld [vmem:[%s0 + $0x550] sm:$0xff]
    %v1840 = vld [vmem:[%s0 + $0x558] sm:$0xff]
    %v1841 = vlaneseq
    %v1842 = vshrl.u32 %v1841, 7
    %v1843 = vsub.s32 6, %v1842
    %v1844 = vrot.slane %v107, %v1843
    %v1845 = vmul.f32 %v153, %v1844
    %v1846 = vmul.f32 %v154, %v1844
    %v1847 = vmul.f32 %v155, %v1844
    %v1848 = vmul.f32 %v156, %v1844
    %v1849 = vmul.f32 %v157, %v1844
    %v1850 = vmul.f32 %v158, %v1844
    %v1851 = vmul.f32 %v159, %v1844
    %v1852 = vmul.f32 %v160, %v1844
    %v1853 = vmul.f32 %v161, %v1844
    %v1854 = vmul.f32 %v162, %v1844
    %v1855 = vmul.f32 %v163, %v1844
    %v1856 = vmul.f32 %v164, %v1844
    %v1857 = vmul.f32 %v165, %v1844
    %v1858 = vmul.f32 %v166, %v1844
    %v1859 = vmul.f32 %v167, %v1844
    %v1860 = vmul.f32 %v168, %v1844
    %v1861 = vmul.f32 %v169, %v1844
    %v1862 = vmul.f32 %v170, %v1844
    %v1863 = vmul.f32 %v171, %v1844
    %v1864 = vmul.f32 %v172, %v1844
    %v1865 = vmul.f32 %v173, %v1844
    %v1866 = vmul.f32 %v174, %v1844
    %v1867 = vmul.f32 %v175, %v1844
    %v1868 = vmul.f32 %v176, %v1844
    %v1869 = vmul.f32 %v177, %v1844
    %v1870 = vmul.f32 %v178, %v1844
    %v1871 = vmul.f32 %v179, %v1844
    %v1872 = vmul.f32 %v180, %v1844
    %v1873 = vmul.f32 %v181, %v1844
    %v1874 = vmul.f32 %v182, %v1844
    %v1875 = vmul.f32 %v183, %v1844
    %v1876 = vmul.f32 %v184, %v1844
    %v1877 = vmul.f32 %v185, %v1844
    %v1878 = vmul.f32 %v186, %v1844
    %v1879 = vmul.f32 %v187, %v1844
    %v1880 = vmul.f32 %v188, %v1844
    %v1881 = vmul.f32 %v189, %v1844
    %v1882 = vmul.f32 %v190, %v1844
    %v1883 = vmul.f32 %v191, %v1844
    %v1884 = vmul.f32 %v192, %v1844
    %v1885 = vmul.f32 %v193, %v1844
    %v1886 = vmul.f32 %v194, %v1844
    %v1887 = vmul.f32 %v195, %v1844
    %v1888 = vmul.f32 %v196, %v1844
    %v1889 = vmul.f32 %v197, %v1844
    %v1890 = vmul.f32 %v198, %v1844
    %v1891 = vmul.f32 %v199, %v1844
    %v1892 = vmul.f32 %v200, %v1844
    %v1893 = vmul.f32 %v201, %v1844
    %v1894 = vmul.f32 %v202, %v1844
    %v1895 = vmul.f32 %v203, %v1844
    %v1896 = vmul.f32 %v204, %v1844
    %v1897 = vmul.f32 %v205, %v1844
    %v1898 = vmul.f32 %v206, %v1844
    %v1899 = vmul.f32 %v207, %v1844
    %v1900 = vmul.f32 %v208, %v1844
    %v1901 = vmul.f32 %v209, %v1844
    %v1902 = vmul.f32 %v210, %v1844
    %v1903 = vmul.f32 %v211, %v1844
    %v1904 = vmul.f32 %v212, %v1844
    %v1905 = vmul.f32 %v213, %v1844
    %v1906 = vmul.f32 %v214, %v1844
    %v1907 = vmul.f32 %v215, %v1844
    %v1908 = vmul.f32 %v216, %v1844
    %v1909 = vmul.f32 %v217, %v1844
    %v1910 = vmul.f32 %v218, %v1844
    %v1911 = vmul.f32 %v219, %v1844
    %v1912 = vmul.f32 %v220, %v1844
    %v1913 = vmul.f32 %v221, %v1844
    %v1914 = vmul.f32 %v222, %v1844
    %v1915 = vmul.f32 %v223, %v1844
    %v1916 = vmul.f32 %v224, %v1844
    %v1917 = vmul.f32 %v225, %v1844
    %v1918 = vmul.f32 %v226, %v1844
    %v1919 = vmul.f32 %v227, %v1844
    %v1920 = vmul.f32 %v228, %v1844
    %v1921 = vmul.f32 %v229, %v1844
    %v1922 = vmul.f32 %v230, %v1844
    %v1923 = vmul.f32 %v231, %v1844
    %v1924 = vmul.f32 %v232, %v1844
    %v1925 = vmul.f32 %v233, %v1844
    %v1926 = vmul.f32 %v234, %v1844
    %v1927 = vmul.f32 %v235, %v1844
    %v1928 = vmul.f32 %v236, %v1844
    %v1929 = vmul.f32 %v497, %v1844
    %v1930 = vmul.f32 %v498, %v1844
    %v1931 = vmul.f32 %v759, %v1844
    %v1932 = vmul.f32 %v760, %v1844
    %v1933 = vmul.f32 %v1021, %v1844
    %v1934 = vmul.f32 %v1022, %v1844
    %v1935 = vmul.f32 %v1023, %v1844
    %v1936 = vmul.f32 %v1024, %v1844
    %v1937 = vmul.f32 %v1025, %v1844
    %v1938 = vmul.f32 %v1026, %v1844
    %v1939 = vmul.f32 %v1027, %v1844
    %v1940 = vmul.f32 %v1028, %v1844
    %v1941 = vmul.f32 %v1029, %v1844
    %v1942 = vmul.f32 %v1030, %v1844
    %v1943 = vmul.f32 %v1031, %v1844
    %v1944 = vmul.f32 %v1032, %v1844
    %v1945 = vmul.f32 %v1033, %v1844
    %v1946 = vmul.f32 %v1034, %v1844
    %v1947 = vmul.f32 %v1035, %v1844
    %v1948 = vmul.f32 %v1036, %v1844
    %v1949 = vmul.f32 %v1037, %v1844
    %v1950 = vmul.f32 %v1038, %v1844
    %v1951 = vmul.f32 %v1299, %v1844
    %v1952 = vmul.f32 %v1300, %v1844
    %v1953 = vmul.f32 %v1561, %v1844
    %v1954 = vmul.f32 %v1562, %v1844
    %v1955 = vmul.f32 %v1823, %v1844
    %v1956 = vmul.f32 %v1824, %v1844
    %v1957 = vmul.f32 %v1825, %v1844
    %v1958 = vmul.f32 %v1826, %v1844
    %v1959 = vmul.f32 %v1827, %v1844
    %v1960 = vmul.f32 %v1828, %v1844
    %v1961 = vmul.f32 %v1829, %v1844
    %v1962 = vmul.f32 %v1830, %v1844
    %v1963 = vmul.f32 %v1831, %v1844
    %v1964 = vmul.f32 %v1832, %v1844
    %v1965 = vmul.f32 %v1833, %v1844
    %v1966 = vmul.f32 %v1834, %v1844
    %v1967 = vmul.f32 %v1835, %v1844
    %v1968 = vmul.f32 %v1836, %v1844
    %v1969 = vmul.f32 %v1837, %v1844
    %v1970 = vmul.f32 %v1838, %v1844
    %v1971 = vmul.f32 %v1839, %v1844
    %v1972 = vmul.f32 %v1840, %v1844
    %v1973 = vadd.f32 %v1695, %v1845
    %v1974 = vadd.f32 %v1696, %v1846
    %v1975 = vadd.f32 %v1697, %v1847
    %v1976 = vadd.f32 %v1698, %v1848
    %v1977 = vadd.f32 %v1699, %v1849
    %v1978 = vadd.f32 %v1700, %v1850
    %v1979 = vadd.f32 %v1701, %v1851
    %v1980 = vadd.f32 %v1702, %v1852
    %v1981 = vadd.f32 %v1703, %v1853
    %v1982 = vadd.f32 %v1704, %v1854
    %v1983 = vadd.f32 %v1705, %v1855
    %v1984 = vadd.f32 %v1706, %v1856
    %v1985 = vadd.f32 %v1707, %v1857
    %v1986 = vadd.f32 %v1708, %v1858
    %v1987 = vadd.f32 %v1709, %v1859
    %v1988 = vadd.f32 %v1710, %v1860
    %v1989 = vadd.f32 %v1711, %v1861
    %v1990 = vadd.f32 %v1712, %v1862
    %v1991 = vadd.f32 %v1713, %v1863
    %v1992 = vadd.f32 %v1714, %v1864
    %v1993 = vadd.f32 %v1715, %v1865
    %v1994 = vadd.f32 %v1716, %v1866
    %v1995 = vadd.f32 %v1717, %v1867
    %v1996 = vadd.f32 %v1718, %v1868
    %v1997 = vadd.f32 %v1719, %v1869
    %v1998 = vadd.f32 %v1720, %v1870
    %v1999 = vadd.f32 %v1721, %v1871
    %v2000 = vadd.f32 %v1722, %v1872
    %v2001 = vadd.f32 %v1723, %v1873
    %v2002 = vadd.f32 %v1724, %v1874
    %v2003 = vadd.f32 %v1725, %v1875
    %v2004 = vadd.f32 %v1726, %v1876
    %v2005 = vadd.f32 %v1727, %v1877
    %v2006 = vadd.f32 %v1728, %v1878
    %v2007 = vadd.f32 %v1729, %v1879
    %v2008 = vadd.f32 %v1730, %v1880
    %v2009 = vadd.f32 %v1731, %v1881
    %v2010 = vadd.f32 %v1732, %v1882
    %v2011 = vadd.f32 %v1733, %v1883
    %v2012 = vadd.f32 %v1734, %v1884
    %v2013 = vadd.f32 %v1735, %v1885
    %v2014 = vadd.f32 %v1736, %v1886
    %v2015 = vadd.f32 %v1737, %v1887
    %v2016 = vadd.f32 %v1738, %v1888
    %v2017 = vadd.f32 %v1739, %v1889
    %v2018 = vadd.f32 %v1740, %v1890
    %v2019 = vadd.f32 %v1741, %v1891
    %v2020 = vadd.f32 %v1742, %v1892
    %v2021 = vadd.f32 %v1743, %v1893
    %v2022 = vadd.f32 %v1744, %v1894
    %v2023 = vadd.f32 %v1745, %v1895
    %v2024 = vadd.f32 %v1746, %v1896
    %v2025 = vadd.f32 %v1747, %v1897
    %v2026 = vadd.f32 %v1748, %v1898
    %v2027 = vadd.f32 %v1749, %v1899
    %v2028 = vadd.f32 %v1750, %v1900
    %v2029 = vadd.f32 %v1751, %v1901
    %v2030 = vadd.f32 %v1752, %v1902
    %v2031 = vadd.f32 %v1753, %v1903
    %v2032 = vadd.f32 %v1754, %v1904
    %v2033 = vadd.f32 %v1755, %v1905
    %v2034 = vadd.f32 %v1756, %v1906
    %v2035 = vadd.f32 %v1757, %v1907
    %v2036 = vadd.f32 %v1758, %v1908
    %v2037 = vadd.f32 %v1759, %v1909
    %v2038 = vadd.f32 %v1760, %v1910
    %v2039 = vadd.f32 %v1761, %v1911
    %v2040 = vadd.f32 %v1762, %v1912
    %v2041 = vadd.f32 %v1763, %v1913
    %v2042 = vadd.f32 %v1764, %v1914
    %v2043 = vadd.f32 %v1765, %v1915
    %v2044 = vadd.f32 %v1766, %v1916
    %v2045 = vadd.f32 %v1767, %v1917
    %v2046 = vadd.f32 %v1768, %v1918
    %v2047 = vadd.f32 %v1769, %v1919
    %v2048 = vadd.f32 %v1770, %v1920
    %v2049 = vadd.f32 %v1771, %v1921
    %v2050 = vadd.f32 %v1772, %v1922
    %v2051 = vadd.f32 %v1773, %v1923
    %v2052 = vadd.f32 %v1774, %v1924
    %v2053 = vadd.f32 %v1775, %v1925
    %v2054 = vadd.f32 %v1776, %v1926
    %v2055 = vadd.f32 %v1777, %v1927
    %v2056 = vadd.f32 %v1778, %v1928
    %v2057 = vadd.f32 %v1779, %v1929
    %v2058 = vadd.f32 %v1780, %v1930
    %v2059 = vadd.f32 %v1781, %v1931
    %v2060 = vadd.f32 %v1782, %v1932
    %v2061 = vadd.f32 %v1783, %v1933
    %v2062 = vadd.f32 %v1784, %v1934
    %v2063 = vadd.f32 %v1785, %v1935
    %v2064 = vadd.f32 %v1786, %v1936
    %v2065 = vadd.f32 %v1787, %v1937
    %v2066 = vadd.f32 %v1788, %v1938
    %v2067 = vadd.f32 %v1789, %v1939
    %v2068 = vadd.f32 %v1790, %v1940
    %v2069 = vadd.f32 %v1791, %v1941
    %v2070 = vadd.f32 %v1792, %v1942
    %v2071 = vadd.f32 %v1793, %v1943
    %v2072 = vadd.f32 %v1794, %v1944
    %v2073 = vadd.f32 %v1795, %v1945
    %v2074 = vadd.f32 %v1796, %v1946
    %v2075 = vadd.f32 %v1797, %v1947
    %v2076 = vadd.f32 %v1798, %v1948
    %v2077 = vadd.f32 %v1799, %v1949
    %v2078 = vadd.f32 %v1800, %v1950
    %v2079 = vadd.f32 %v1801, %v1951
    %v2080 = vadd.f32 %v1802, %v1952
    %v2081 = vadd.f32 %v1803, %v1953
    %v2082 = vadd.f32 %v1804, %v1954
    %v2083 = vadd.f32 %v1805, %v1955
    %v2084 = vadd.f32 %v1806, %v1956
    %v2085 = vadd.f32 %v1807, %v1957
    %v2086 = vadd.f32 %v1808, %v1958
    %v2087 = vadd.f32 %v1809, %v1959
    %v2088 = vadd.f32 %v1810, %v1960
    %v2089 = vadd.f32 %v1811, %v1961
    %v2090 = vadd.f32 %v1812, %v1962
    %v2091 = vadd.f32 %v1813, %v1963
    %v2092 = vadd.f32 %v1814, %v1964
    %v2093 = vadd.f32 %v1815, %v1965
    %v2094 = vadd.f32 %v1816, %v1966
    %v2095 = vadd.f32 %v1817, %v1967
    %v2096 = vadd.f32 %v1818, %v1968
    %v2097 = vadd.f32 %v1819, %v1969
    %v2098 = vadd.f32 %v1820, %v1970
    %v2099 = vadd.f32 %v1821, %v1971
    %v2100 = vadd.f32 %v1822, %v1972
    %v2101 = vld [vmem:[%s0 + $0x560] sm:$0xff]
    %v2102 = vld [vmem:[%s0 + $0x568] sm:$0xff]
    %v2103 = vlaneseq
    %v2104 = vshrl.u32 %v2103, 7
    %v2105 = vsub.s32 7, %v2104
    %v2106 = vrot.slane %v107, %v2105
    %v2107 = vmul.f32 %v155, %v2106
    %v2108 = vmul.f32 %v156, %v2106
    %v2109 = vmul.f32 %v157, %v2106
    %v2110 = vmul.f32 %v158, %v2106
    %v2111 = vmul.f32 %v159, %v2106
    %v2112 = vmul.f32 %v160, %v2106
    %v2113 = vmul.f32 %v161, %v2106
    %v2114 = vmul.f32 %v162, %v2106
    %v2115 = vmul.f32 %v163, %v2106
    %v2116 = vmul.f32 %v164, %v2106
    %v2117 = vmul.f32 %v165, %v2106
    %v2118 = vmul.f32 %v166, %v2106
    %v2119 = vmul.f32 %v167, %v2106
    %v2120 = vmul.f32 %v168, %v2106
    %v2121 = vmul.f32 %v169, %v2106
    %v2122 = vmul.f32 %v170, %v2106
    %v2123 = vmul.f32 %v171, %v2106
    %v2124 = vmul.f32 %v172, %v2106
    %v2125 = vmul.f32 %v173, %v2106
    %v2126 = vmul.f32 %v174, %v2106
    %v2127 = vmul.f32 %v175, %v2106
    %v2128 = vmul.f32 %v176, %v2106
    %v2129 = vmul.f32 %v177, %v2106
    %v2130 = vmul.f32 %v178, %v2106
    %v2131 = vmul.f32 %v179, %v2106
    %v2132 = vmul.f32 %v180, %v2106
    %v2133 = vmul.f32 %v181, %v2106
    %v2134 = vmul.f32 %v182, %v2106
    %v2135 = vmul.f32 %v183, %v2106
    %v2136 = vmul.f32 %v184, %v2106
    %v2137 = vmul.f32 %v185, %v2106
    %v2138 = vmul.f32 %v186, %v2106
    %v2139 = vmul.f32 %v187, %v2106
    %v2140 = vmul.f32 %v188, %v2106
    %v2141 = vmul.f32 %v189, %v2106
    %v2142 = vmul.f32 %v190, %v2106
    %v2143 = vmul.f32 %v191, %v2106
    %v2144 = vmul.f32 %v192, %v2106
    %v2145 = vmul.f32 %v193, %v2106
    %v2146 = vmul.f32 %v194, %v2106
    %v2147 = vmul.f32 %v195, %v2106
    %v2148 = vmul.f32 %v196, %v2106
    %v2149 = vmul.f32 %v197, %v2106
    %v2150 = vmul.f32 %v198, %v2106
    %v2151 = vmul.f32 %v199, %v2106
    %v2152 = vmul.f32 %v200, %v2106
    %v2153 = vmul.f32 %v201, %v2106
    %v2154 = vmul.f32 %v202, %v2106
    %v2155 = vmul.f32 %v203, %v2106
    %v2156 = vmul.f32 %v204, %v2106
    %v2157 = vmul.f32 %v205, %v2106
    %v2158 = vmul.f32 %v206, %v2106
    %v2159 = vmul.f32 %v207, %v2106
    %v2160 = vmul.f32 %v208, %v2106
    %v2161 = vmul.f32 %v209, %v2106
    %v2162 = vmul.f32 %v210, %v2106
    %v2163 = vmul.f32 %v211, %v2106
    %v2164 = vmul.f32 %v212, %v2106
    %v2165 = vmul.f32 %v213, %v2106
    %v2166 = vmul.f32 %v214, %v2106
    %v2167 = vmul.f32 %v215, %v2106
    %v2168 = vmul.f32 %v216, %v2106
    %v2169 = vmul.f32 %v217, %v2106
    %v2170 = vmul.f32 %v218, %v2106
    %v2171 = vmul.f32 %v219, %v2106
    %v2172 = vmul.f32 %v220, %v2106
    %v2173 = vmul.f32 %v221, %v2106
    %v2174 = vmul.f32 %v222, %v2106
    %v2175 = vmul.f32 %v223, %v2106
    %v2176 = vmul.f32 %v224, %v2106
    %v2177 = vmul.f32 %v225, %v2106
    %v2178 = vmul.f32 %v226, %v2106
    %v2179 = vmul.f32 %v227, %v2106
    %v2180 = vmul.f32 %v228, %v2106
    %v2181 = vmul.f32 %v229, %v2106
    %v2182 = vmul.f32 %v230, %v2106
    %v2183 = vmul.f32 %v231, %v2106
    %v2184 = vmul.f32 %v232, %v2106
    %v2185 = vmul.f32 %v233, %v2106
    %v2186 = vmul.f32 %v234, %v2106
    %v2187 = vmul.f32 %v235, %v2106
    %v2188 = vmul.f32 %v236, %v2106
    %v2189 = vmul.f32 %v497, %v2106
    %v2190 = vmul.f32 %v498, %v2106
    %v2191 = vmul.f32 %v759, %v2106
    %v2192 = vmul.f32 %v760, %v2106
    %v2193 = vmul.f32 %v1021, %v2106
    %v2194 = vmul.f32 %v1022, %v2106
    %v2195 = vmul.f32 %v1023, %v2106
    %v2196 = vmul.f32 %v1024, %v2106
    %v2197 = vmul.f32 %v1025, %v2106
    %v2198 = vmul.f32 %v1026, %v2106
    %v2199 = vmul.f32 %v1027, %v2106
    %v2200 = vmul.f32 %v1028, %v2106
    %v2201 = vmul.f32 %v1029, %v2106
    %v2202 = vmul.f32 %v1030, %v2106
    %v2203 = vmul.f32 %v1031, %v2106
    %v2204 = vmul.f32 %v1032, %v2106
    %v2205 = vmul.f32 %v1033, %v2106
    %v2206 = vmul.f32 %v1034, %v2106
    %v2207 = vmul.f32 %v1035, %v2106
    %v2208 = vmul.f32 %v1036, %v2106
    %v2209 = vmul.f32 %v1037, %v2106
    %v2210 = vmul.f32 %v1038, %v2106
    %v2211 = vmul.f32 %v1299, %v2106
    %v2212 = vmul.f32 %v1300, %v2106
    %v2213 = vmul.f32 %v1561, %v2106
    %v2214 = vmul.f32 %v1562, %v2106
    %v2215 = vmul.f32 %v1823, %v2106
    %v2216 = vmul.f32 %v1824, %v2106
    %v2217 = vmul.f32 %v1825, %v2106
    %v2218 = vmul.f32 %v1826, %v2106
    %v2219 = vmul.f32 %v1827, %v2106
    %v2220 = vmul.f32 %v1828, %v2106
    %v2221 = vmul.f32 %v1829, %v2106
    %v2222 = vmul.f32 %v1830, %v2106
    %v2223 = vmul.f32 %v1831, %v2106
    %v2224 = vmul.f32 %v1832, %v2106
    %v2225 = vmul.f32 %v1833, %v2106
    %v2226 = vmul.f32 %v1834, %v2106
    %v2227 = vmul.f32 %v1835, %v2106
    %v2228 = vmul.f32 %v1836, %v2106
    %v2229 = vmul.f32 %v1837, %v2106
    %v2230 = vmul.f32 %v1838, %v2106
    %v2231 = vmul.f32 %v1839, %v2106
    %v2232 = vmul.f32 %v1840, %v2106
    %v2233 = vmul.f32 %v2101, %v2106
    %v2234 = vmul.f32 %v2102, %v2106
    %v2235 = vadd.f32 %v1973, %v2107
    %v2236 = vadd.f32 %v1974, %v2108
    %v2237 = vadd.f32 %v1975, %v2109
    %v2238 = vadd.f32 %v1976, %v2110
    %v2239 = vadd.f32 %v1977, %v2111
    %v2240 = vadd.f32 %v1978, %v2112
    %v2241 = vadd.f32 %v1979, %v2113
    %v2242 = vadd.f32 %v1980, %v2114
    %v2243 = vadd.f32 %v1981, %v2115
    %v2244 = vadd.f32 %v1982, %v2116
    %v2245 = vadd.f32 %v1983, %v2117
    %v2246 = vadd.f32 %v1984, %v2118
    %v2247 = vadd.f32 %v1985, %v2119
    %v2248 = vadd.f32 %v1986, %v2120
    %v2249 = vadd.f32 %v1987, %v2121
    %v2250 = vadd.f32 %v1988, %v2122
    %v2251 = vadd.f32 %v1989, %v2123
    %v2252 = vadd.f32 %v1990, %v2124
    %v2253 = vadd.f32 %v1991, %v2125
    %v2254 = vadd.f32 %v1992, %v2126
    %v2255 = vadd.f32 %v1993, %v2127
    %v2256 = vadd.f32 %v1994, %v2128
    %v2257 = vadd.f32 %v1995, %v2129
    %v2258 = vadd.f32 %v1996, %v2130
    %v2259 = vadd.f32 %v1997, %v2131
    %v2260 = vadd.f32 %v1998, %v2132
    %v2261 = vadd.f32 %v1999, %v2133
    %v2262 = vadd.f32 %v2000, %v2134
    %v2263 = vadd.f32 %v2001, %v2135
    %v2264 = vadd.f32 %v2002, %v2136
    %v2265 = vadd.f32 %v2003, %v2137
    %v2266 = vadd.f32 %v2004, %v2138
    %v2267 = vadd.f32 %v2005, %v2139
    %v2268 = vadd.f32 %v2006, %v2140
    %v2269 = vadd.f32 %v2007, %v2141
    %v2270 = vadd.f32 %v2008, %v2142
    %v2271 = vadd.f32 %v2009, %v2143
    %v2272 = vadd.f32 %v2010, %v2144
    %v2273 = vadd.f32 %v2011, %v2145
    %v2274 = vadd.f32 %v2012, %v2146
    %v2275 = vadd.f32 %v2013, %v2147
    %v2276 = vadd.f32 %v2014, %v2148
    %v2277 = vadd.f32 %v2015, %v2149
    %v2278 = vadd.f32 %v2016, %v2150
    %v2279 = vadd.f32 %v2017, %v2151
    %v2280 = vadd.f32 %v2018, %v2152
    %v2281 = vadd.f32 %v2019, %v2153
    %v2282 = vadd.f32 %v2020, %v2154
    %v2283 = vadd.f32 %v2021, %v2155
    %v2284 = vadd.f32 %v2022, %v2156
    %v2285 = vadd.f32 %v2023, %v2157
    %v2286 = vadd.f32 %v2024, %v2158
    %v2287 = vadd.f32 %v2025, %v2159
    %v2288 = vadd.f32 %v2026, %v2160
    %v2289 = vadd.f32 %v2027, %v2161
    %v2290 = vadd.f32 %v2028, %v2162
    %v2291 = vadd.f32 %v2029, %v2163
    %v2292 = vadd.f32 %v2030, %v2164
    %v2293 = vadd.f32 %v2031, %v2165
    %v2294 = vadd.f32 %v2032, %v2166
    %v2295 = vadd.f32 %v2033, %v2167
    %v2296 = vadd.f32 %v2034, %v2168
    %v2297 = vadd.f32 %v2035, %v2169
    %v2298 = vadd.f32 %v2036, %v2170
    %v2299 = vadd.f32 %v2037, %v2171
    %v2300 = vadd.f32 %v2038, %v2172
    %v2301 = vadd.f32 %v2039, %v2173
    %v2302 = vadd.f32 %v2040, %v2174
    %v2303 = vadd.f32 %v2041, %v2175
    %v2304 = vadd.f32 %v2042, %v2176
    %v2305 = vadd.f32 %v2043, %v2177
    %v2306 = vadd.f32 %v2044, %v2178
    %v2307 = vadd.f32 %v2045, %v2179
    %v2308 = vadd.f32 %v2046, %v2180
    %v2309 = vadd.f32 %v2047, %v2181
    %v2310 = vadd.f32 %v2048, %v2182
    %v2311 = vadd.f32 %v2049, %v2183
    %v2312 = vadd.f32 %v2050, %v2184
    %v2313 = vadd.f32 %v2051, %v2185
    %v2314 = vadd.f32 %v2052, %v2186
    %v2315 = vadd.f32 %v2053, %v2187
    %v2316 = vadd.f32 %v2054, %v2188
    %v2317 = vadd.f32 %v2055, %v2189
    %v2318 = vadd.f32 %v2056, %v2190
    %v2319 = vadd.f32 %v2057, %v2191
    %v2320 = vadd.f32 %v2058, %v2192
    %v2321 = vadd.f32 %v2059, %v2193
    %v2322 = vadd.f32 %v2060, %v2194
    %v2323 = vadd.f32 %v2061, %v2195
    %v2324 = vadd.f32 %v2062, %v2196
    %v2325 = vadd.f32 %v2063, %v2197
    %v2326 = vadd.f32 %v2064, %v2198
    %v2327 = vadd.f32 %v2065, %v2199
    %v2328 = vadd.f32 %v2066, %v2200
    %v2329 = vadd.f32 %v2067, %v2201
    %v2330 = vadd.f32 %v2068, %v2202
    %v2331 = vadd.f32 %v2069, %v2203
    %v2332 = vadd.f32 %v2070, %v2204
    %v2333 = vadd.f32 %v2071, %v2205
    %v2334 = vadd.f32 %v2072, %v2206
    %v2335 = vadd.f32 %v2073, %v2207
    %v2336 = vadd.f32 %v2074, %v2208
    %v2337 = vadd.f32 %v2075, %v2209
    %v2338 = vadd.f32 %v2076, %v2210
    %v2339 = vadd.f32 %v2077, %v2211
    %v2340 = vadd.f32 %v2078, %v2212
    %v2341 = vadd.f32 %v2079, %v2213
    %v2342 = vadd.f32 %v2080, %v2214
    %v2343 = vadd.f32 %v2081, %v2215
    %v2344 = vadd.f32 %v2082, %v2216
    %v2345 = vadd.f32 %v2083, %v2217
    %v2346 = vadd.f32 %v2084, %v2218
    %v2347 = vadd.f32 %v2085, %v2219
    %v2348 = vadd.f32 %v2086, %v2220
    %v2349 = vadd.f32 %v2087, %v2221
    %v2350 = vadd.f32 %v2088, %v2222
    %v2351 = vadd.f32 %v2089, %v2223
    %v2352 = vadd.f32 %v2090, %v2224
    %v2353 = vadd.f32 %v2091, %v2225
    %v2354 = vadd.f32 %v2092, %v2226
    %v2355 = vadd.f32 %v2093, %v2227
    %v2356 = vadd.f32 %v2094, %v2228
    %v2357 = vadd.f32 %v2095, %v2229
    %v2358 = vadd.f32 %v2096, %v2230
    %v2359 = vadd.f32 %v2097, %v2231
    %v2360 = vadd.f32 %v2098, %v2232
    %v2361 = vadd.f32 %v2099, %v2233
    %v2362 = vadd.f32 %v2100, %v2234
    %v2363 = vld [vmem:[%s0 + $0x570] sm:$0xff]
    %v2364 = vld [vmem:[%s0 + $0x578] sm:$0xff]
    %v2365 = vlaneseq
    %v2366 = vshrl.u32 %v2365, 7
    %v2367 = vsub.s32 0, %v2366
    %v2368 = vrot.slane %v108, %v2367
    %v2369 = vmul.f32 %v157, %v2368
    %v2370 = vmul.f32 %v158, %v2368
    %v2371 = vmul.f32 %v159, %v2368
    %v2372 = vmul.f32 %v160, %v2368
    %v2373 = vmul.f32 %v161, %v2368
    %v2374 = vmul.f32 %v162, %v2368
    %v2375 = vmul.f32 %v163, %v2368
    %v2376 = vmul.f32 %v164, %v2368
    %v2377 = vmul.f32 %v165, %v2368
    %v2378 = vmul.f32 %v166, %v2368
    %v2379 = vmul.f32 %v167, %v2368
    %v2380 = vmul.f32 %v168, %v2368
    %v2381 = vmul.f32 %v169, %v2368
    %v2382 = vmul.f32 %v170, %v2368
    %v2383 = vmul.f32 %v171, %v2368
    %v2384 = vmul.f32 %v172, %v2368
    %v2385 = vmul.f32 %v173, %v2368
    %v2386 = vmul.f32 %v174, %v2368
    %v2387 = vmul.f32 %v175, %v2368
    %v2388 = vmul.f32 %v176, %v2368
    %v2389 = vmul.f32 %v177, %v2368
    %v2390 = vmul.f32 %v178, %v2368
    %v2391 = vmul.f32 %v179, %v2368
    %v2392 = vmul.f32 %v180, %v2368
    %v2393 = vmul.f32 %v181, %v2368
    %v2394 = vmul.f32 %v182, %v2368
    %v2395 = vmul.f32 %v183, %v2368
    %v2396 = vmul.f32 %v184, %v2368
    %v2397 = vmul.f32 %v185, %v2368
    %v2398 = vmul.f32 %v186, %v2368
    %v2399 = vmul.f32 %v187, %v2368
    %v2400 = vmul.f32 %v188, %v2368
    %v2401 = vmul.f32 %v189, %v2368
    %v2402 = vmul.f32 %v190, %v2368
    %v2403 = vmul.f32 %v191, %v2368
    %v2404 = vmul.f32 %v192, %v2368
    %v2405 = vmul.f32 %v193, %v2368
    %v2406 = vmul.f32 %v194, %v2368
    %v2407 = vmul.f32 %v195, %v2368
    %v2408 = vmul.f32 %v196, %v2368
    %v2409 = vmul.f32 %v197, %v2368
    %v2410 = vmul.f32 %v198, %v2368
    %v2411 = vmul.f32 %v199, %v2368
    %v2412 = vmul.f32 %v200, %v2368
    %v2413 = vmul.f32 %v201, %v2368
    %v2414 = vmul.f32 %v202, %v2368
    %v2415 = vmul.f32 %v203, %v2368
    %v2416 = vmul.f32 %v204, %v2368
    %v2417 = vmul.f32 %v205, %v2368
    %v2418 = vmul.f32 %v206, %v2368
    %v2419 = vmul.f32 %v207, %v2368
    %v2420 = vmul.f32 %v208, %v2368
    %v2421 = vmul.f32 %v209, %v2368
    %v2422 = vmul.f32 %v210, %v2368
    %v2423 = vmul.f32 %v211, %v2368
    %v2424 = vmul.f32 %v212, %v2368
    %v2425 = vmul.f32 %v213, %v2368
    %v2426 = vmul.f32 %v214, %v2368
    %v2427 = vmul.f32 %v215, %v2368
    %v2428 = vmul.f32 %v216, %v2368
    %v2429 = vmul.f32 %v217, %v2368
    %v2430 = vmul.f32 %v218, %v2368
    %v2431 = vmul.f32 %v219, %v2368
    %v2432 = vmul.f32 %v220, %v2368
    %v2433 = vmul.f32 %v221, %v2368
    %v2434 = vmul.f32 %v222, %v2368
    %v2435 = vmul.f32 %v223, %v2368
    %v2436 = vmul.f32 %v224, %v2368
    %v2437 = vmul.f32 %v225, %v2368
    %v2438 = vmul.f32 %v226, %v2368
    %v2439 = vmul.f32 %v227, %v2368
    %v2440 = vmul.f32 %v228, %v2368
    %v2441 = vmul.f32 %v229, %v2368
    %v2442 = vmul.f32 %v230, %v2368
    %v2443 = vmul.f32 %v231, %v2368
    %v2444 = vmul.f32 %v232, %v2368
    %v2445 = vmul.f32 %v233, %v2368
    %v2446 = vmul.f32 %v234, %v2368
    %v2447 = vmul.f32 %v235, %v2368
    %v2448 = vmul.f32 %v236, %v2368
    %v2449 = vmul.f32 %v497, %v2368
    %v2450 = vmul.f32 %v498, %v2368
    %v2451 = vmul.f32 %v759, %v2368
    %v2452 = vmul.f32 %v760, %v2368
    %v2453 = vmul.f32 %v1021, %v2368
    %v2454 = vmul.f32 %v1022, %v2368
    %v2455 = vmul.f32 %v1023, %v2368
    %v2456 = vmul.f32 %v1024, %v2368
    %v2457 = vmul.f32 %v1025, %v2368
    %v2458 = vmul.f32 %v1026, %v2368
    %v2459 = vmul.f32 %v1027, %v2368
    %v2460 = vmul.f32 %v1028, %v2368
    %v2461 = vmul.f32 %v1029, %v2368
    %v2462 = vmul.f32 %v1030, %v2368
    %v2463 = vmul.f32 %v1031, %v2368
    %v2464 = vmul.f32 %v1032, %v2368
    %v2465 = vmul.f32 %v1033, %v2368
    %v2466 = vmul.f32 %v1034, %v2368
    %v2467 = vmul.f32 %v1035, %v2368
    %v2468 = vmul.f32 %v1036, %v2368
    %v2469 = vmul.f32 %v1037, %v2368
    %v2470 = vmul.f32 %v1038, %v2368
    %v2471 = vmul.f32 %v1299, %v2368
    %v2472 = vmul.f32 %v1300, %v2368
    %v2473 = vmul.f32 %v1561, %v2368
    %v2474 = vmul.f32 %v1562, %v2368
    %v2475 = vmul.f32 %v1823, %v2368
    %v2476 = vmul.f32 %v1824, %v2368
    %v2477 = vmul.f32 %v1825, %v2368
    %v2478 = vmul.f32 %v1826, %v2368
    %v2479 = vmul.f32 %v1827, %v2368
    %v2480 = vmul.f32 %v1828, %v2368
    %v2481 = vmul.f32 %v1829, %v2368
    %v2482 = vmul.f32 %v1830, %v2368
    %v2483 = vmul.f32 %v1831, %v2368
    %v2484 = vmul.f32 %v1832, %v2368
    %v2485 = vmul.f32 %v1833, %v2368
    %v2486 = vmul.f32 %v1834, %v2368
    %v2487 = vmul.f32 %v1835, %v2368
    %v2488 = vmul.f32 %v1836, %v2368
    %v2489 = vmul.f32 %v1837, %v2368
    %v2490 = vmul.f32 %v1838, %v2368
    %v2491 = vmul.f32 %v1839, %v2368
    %v2492 = vmul.f32 %v1840, %v2368
    %v2493 = vmul.f32 %v2101, %v2368
    %v2494 = vmul.f32 %v2102, %v2368
    %v2495 = vmul.f32 %v2363, %v2368
    %v2496 = vmul.f32 %v2364, %v2368
    %v2497 = vadd.f32 %v2235, %v2369
    %v2498 = vadd.f32 %v2236, %v2370
    %v2499 = vadd.f32 %v2237, %v2371
    %v2500 = vadd.f32 %v2238, %v2372
    %v2501 = vadd.f32 %v2239, %v2373
    %v2502 = vadd.f32 %v2240, %v2374
    %v2503 = vadd.f32 %v2241, %v2375
    %v2504 = vadd.f32 %v2242, %v2376
    %v2505 = vadd.f32 %v2243, %v2377
    %v2506 = vadd.f32 %v2244, %v2378
    %v2507 = vadd.f32 %v2245, %v2379
    %v2508 = vadd.f32 %v2246, %v2380
    %v2509 = vadd.f32 %v2247, %v2381
    %v2510 = vadd.f32 %v2248, %v2382
    %v2511 = vadd.f32 %v2249, %v2383
    %v2512 = vadd.f32 %v2250, %v2384
    %v2513 = vadd.f32 %v2251, %v2385
    %v2514 = vadd.f32 %v2252, %v2386
    %v2515 = vadd.f32 %v2253, %v2387
    %v2516 = vadd.f32 %v2254, %v2388
    %v2517 = vadd.f32 %v2255, %v2389
    %v2518 = vadd.f32 %v2256, %v2390
    %v2519 = vadd.f32 %v2257, %v2391
    %v2520 = vadd.f32 %v2258, %v2392
    %v2521 = vadd.f32 %v2259, %v2393
    %v2522 = vadd.f32 %v2260, %v2394
    %v2523 = vadd.f32 %v2261, %v2395
    %v2524 = vadd.f32 %v2262, %v2396
    %v2525 = vadd.f32 %v2263, %v2397
    %v2526 = vadd.f32 %v2264, %v2398
    %v2527 = vadd.f32 %v2265, %v2399
    %v2528 = vadd.f32 %v2266, %v2400
    %v2529 = vadd.f32 %v2267, %v2401
    %v2530 = vadd.f32 %v2268, %v2402
    %v2531 = vadd.f32 %v2269, %v2403
    %v2532 = vadd.f32 %v2270, %v2404
    %v2533 = vadd.f32 %v2271, %v2405
    %v2534 = vadd.f32 %v2272, %v2406
    %v2535 = vadd.f32 %v2273, %v2407
    %v2536 = vadd.f32 %v2274, %v2408
    %v2537 = vadd.f32 %v2275, %v2409
    %v2538 = vadd.f32 %v2276, %v2410
    %v2539 = vadd.f32 %v2277, %v2411
    %v2540 = vadd.f32 %v2278, %v2412
    %v2541 = vadd.f32 %v2279, %v2413
    %v2542 = vadd.f32 %v2280, %v2414
    %v2543 = vadd.f32 %v2281, %v2415
    %v2544 = vadd.f32 %v2282, %v2416
    %v2545 = vadd.f32 %v2283, %v2417
    %v2546 = vadd.f32 %v2284, %v2418
    %v2547 = vadd.f32 %v2285, %v2419
    %v2548 = vadd.f32 %v2286, %v2420
    %v2549 = vadd.f32 %v2287, %v2421
    %v2550 = vadd.f32 %v2288, %v2422
    %v2551 = vadd.f32 %v2289, %v2423
    %v2552 = vadd.f32 %v2290, %v2424
    %v2553 = vadd.f32 %v2291, %v2425
    %v2554 = vadd.f32 %v2292, %v2426
    %v2555 = vadd.f32 %v2293, %v2427
    %v2556 = vadd.f32 %v2294, %v2428
    %v2557 = vadd.f32 %v2295, %v2429
    %v2558 = vadd.f32 %v2296, %v2430
    %v2559 = vadd.f32 %v2297, %v2431
    %v2560 = vadd.f32 %v2298, %v2432
    %v2561 = vadd.f32 %v2299, %v2433
    %v2562 = vadd.f32 %v2300, %v2434
    %v2563 = vadd.f32 %v2301, %v2435
    %v2564 = vadd.f32 %v2302, %v2436
    %v2565 = vadd.f32 %v2303, %v2437
    %v2566 = vadd.f32 %v2304, %v2438
    %v2567 = vadd.f32 %v2305, %v2439
    %v2568 = vadd.f32 %v2306, %v2440
    %v2569 = vadd.f32 %v2307, %v2441
    %v2570 = vadd.f32 %v2308, %v2442
    %v2571 = vadd.f32 %v2309, %v2443
    %v2572 = vadd.f32 %v2310, %v2444
    %v2573 = vadd.f32 %v2311, %v2445
    %v2574 = vadd.f32 %v2312, %v2446
    %v2575 = vadd.f32 %v2313, %v2447
    %v2576 = vadd.f32 %v2314, %v2448
    %v2577 = vadd.f32 %v2315, %v2449
    %v2578 = vadd.f32 %v2316, %v2450
    %v2579 = vadd.f32 %v2317, %v2451
    %v2580 = vadd.f32 %v2318, %v2452
    %v2581 = vadd.f32 %v2319, %v2453
    %v2582 = vadd.f32 %v2320, %v2454
    %v2583 = vadd.f32 %v2321, %v2455
    %v2584 = vadd.f32 %v2322, %v2456
    %v2585 = vadd.f32 %v2323, %v2457
    %v2586 = vadd.f32 %v2324, %v2458
    %v2587 = vadd.f32 %v2325, %v2459
    %v2588 = vadd.f32 %v2326, %v2460
    %v2589 = vadd.f32 %v2327, %v2461
    %v2590 = vadd.f32 %v2328, %v2462
    %v2591 = vadd.f32 %v2329, %v2463
    %v2592 = vadd.f32 %v2330, %v2464
    %v2593 = vadd.f32 %v2331, %v2465
    %v2594 = vadd.f32 %v2332, %v2466
    %v2595 = vadd.f32 %v2333, %v2467
    %v2596 = vadd.f32 %v2334, %v2468
    %v2597 = vadd.f32 %v2335, %v2469
    %v2598 = vadd.f32 %v2336, %v2470
    %v2599 = vadd.f32 %v2337, %v2471
    %v2600 = vadd.f32 %v2338, %v2472
    %v2601 = vadd.f32 %v2339, %v2473
    %v2602 = vadd.f32 %v2340, %v2474
    %v2603 = vadd.f32 %v2341, %v2475
    %v2604 = vadd.f32 %v2342, %v2476
    %v2605 = vadd.f32 %v2343, %v2477
    %v2606 = vadd.f32 %v2344, %v2478
    %v2607 = vadd.f32 %v2345, %v2479
    %v2608 = vadd.f32 %v2346, %v2480
    %v2609 = vadd.f32 %v2347, %v2481
    %v2610 = vadd.f32 %v2348, %v2482
    %v2611 = vadd.f32 %v2349, %v2483
    %v2612 = vadd.f32 %v2350, %v2484
    %v2613 = vadd.f32 %v2351, %v2485
    %v2614 = vadd.f32 %v2352, %v2486
    %v2615 = vadd.f32 %v2353, %v2487
    %v2616 = vadd.f32 %v2354, %v2488
    %v2617 = vadd.f32 %v2355, %v2489
    %v2618 = vadd.f32 %v2356, %v2490
    %v2619 = vadd.f32 %v2357, %v2491
    %v2620 = vadd.f32 %v2358, %v2492
    %v2621 = vadd.f32 %v2359, %v2493
    %v2622 = vadd.f32 %v2360, %v2494
    %v2623 = vadd.f32 %v2361, %v2495
    %v2624 = vadd.f32 %v2362, %v2496
    %v2625 = vld [vmem:[#allocation8] sm:$0x1]
    %v2627 = vlaneseq
    %v2628 = vshrl.u32 %v2627, 7
    %v2629 = vsub.s32 0, %v2628
    %v2630 = vrot.slane %v2625, %v2629
    %v2632 = vadd.f32 %v2497, %v2630
    %v2633 = vadd.f32 %v2498, %v2630
    %v2634 = vadd.f32 %v2499, %v2630
    %v2635 = vadd.f32 %v2500, %v2630
    %v2636 = vadd.f32 %v2501, %v2630
    %v2637 = vadd.f32 %v2502, %v2630
    %v2638 = vadd.f32 %v2503, %v2630
    %v2639 = vadd.f32 %v2504, %v2630
    %v2640 = vadd.f32 %v2505, %v2630
    %v2641 = vadd.f32 %v2506, %v2630
    %v2642 = vadd.f32 %v2507, %v2630
    %v2643 = vadd.f32 %v2508, %v2630
    %v2644 = vadd.f32 %v2509, %v2630
    %v2645 = vadd.f32 %v2510, %v2630
    %v2646 = vadd.f32 %v2511, %v2630
    %v2647 = vadd.f32 %v2512, %v2630
    %v2648 = vadd.f32 %v2513, %v2630
    %v2649 = vadd.f32 %v2514, %v2630
    %v2650 = vadd.f32 %v2515, %v2630
    %v2651 = vadd.f32 %v2516, %v2630
    %v2652 = vadd.f32 %v2517, %v2630
    %v2653 = vadd.f32 %v2518, %v2630
    %v2654 = vadd.f32 %v2519, %v2630
    %v2655 = vadd.f32 %v2520, %v2630
    %v2656 = vadd.f32 %v2521, %v2630
    %v2657 = vadd.f32 %v2522, %v2630
    %v2658 = vadd.f32 %v2523, %v2630
    %v2659 = vadd.f32 %v2524, %v2630
    %v2660 = vadd.f32 %v2525, %v2630
    %v2661 = vadd.f32 %v2526, %v2630
    %v2662 = vadd.f32 %v2527, %v2630
    %v2663 = vadd.f32 %v2528, %v2630
    %v2664 = vadd.f32 %v2529, %v2630
    %v2665 = vadd.f32 %v2530, %v2630
    %v2666 = vadd.f32 %v2531, %v2630
    %v2667 = vadd.f32 %v2532, %v2630
    %v2668 = vadd.f32 %v2533, %v2630
    %v2669 = vadd.f32 %v2534, %v2630
    %v2670 = vadd.f32 %v2535, %v2630
    %v2671 = vadd.f32 %v2536, %v2630
    %v2672 = vadd.f32 %v2537, %v2630
    %v2673 = vadd.f32 %v2538, %v2630
    %v2674 = vadd.f32 %v2539, %v2630
    %v2675 = vadd.f32 %v2540, %v2630
    %v2676 = vadd.f32 %v2541, %v2630
    %v2677 = vadd.f32 %v2542, %v2630
    %v2678 = vadd.f32 %v2543, %v2630
    %v2679 = vadd.f32 %v2544, %v2630
    %v2680 = vadd.f32 %v2545, %v2630
    %v2681 = vadd.f32 %v2546, %v2630
    %v2682 = vadd.f32 %v2547, %v2630
    %v2683 = vadd.f32 %v2548, %v2630
    %v2684 = vadd.f32 %v2549, %v2630
    %v2685 = vadd.f32 %v2550, %v2630
    %v2686 = vadd.f32 %v2551, %v2630
    %v2687 = vadd.f32 %v2552, %v2630
    %v2688 = vadd.f32 %v2553, %v2630
    %v2689 = vadd.f32 %v2554, %v2630
    %v2690 = vadd.f32 %v2555, %v2630
    %v2691 = vadd.f32 %v2556, %v2630
    %v2692 = vadd.f32 %v2557, %v2630
    %v2693 = vadd.f32 %v2558, %v2630
    %v2694 = vadd.f32 %v2559, %v2630
    %v2695 = vadd.f32 %v2560, %v2630
    %v2696 = vadd.f32 %v2561, %v2630
    %v2697 = vadd.f32 %v2562, %v2630
    %v2698 = vadd.f32 %v2563, %v2630
    %v2699 = vadd.f32 %v2564, %v2630
    %v2700 = vadd.f32 %v2565, %v2630
    %v2701 = vadd.f32 %v2566, %v2630
    %v2702 = vadd.f32 %v2567, %v2630
    %v2703 = vadd.f32 %v2568, %v2630
    %v2704 = vadd.f32 %v2569, %v2630
    %v2705 = vadd.f32 %v2570, %v2630
    %v2706 = vadd.f32 %v2571, %v2630
    %v2707 = vadd.f32 %v2572, %v2630
    %v2708 = vadd.f32 %v2573, %v2630
    %v2709 = vadd.f32 %v2574, %v2630
    %v2710 = vadd.f32 %v2575, %v2630
    %v2711 = vadd.f32 %v2576, %v2630
    %v2712 = vadd.f32 %v2577, %v2630
    %v2713 = vadd.f32 %v2578, %v2630
    %v2714 = vadd.f32 %v2579, %v2630
    %v2715 = vadd.f32 %v2580, %v2630
    %v2716 = vadd.f32 %v2581, %v2630
    %v2717 = vadd.f32 %v2582, %v2630
    %v2718 = vadd.f32 %v2583, %v2630
    %v2719 = vadd.f32 %v2584, %v2630
    %v2720 = vadd.f32 %v2585, %v2630
    %v2721 = vadd.f32 %v2586, %v2630
    %v2722 = vadd.f32 %v2587, %v2630
    %v2723 = vadd.f32 %v2588, %v2630
    %v2724 = vadd.f32 %v2589, %v2630
    %v2725 = vadd.f32 %v2590, %v2630
    %v2726 = vadd.f32 %v2591, %v2630
    %v2727 = vadd.f32 %v2592, %v2630
    %v2728 = vadd.f32 %v2593, %v2630
    %v2729 = vadd.f32 %v2594, %v2630
    %v2730 = vadd.f32 %v2595, %v2630
    %v2731 = vadd.f32 %v2596, %v2630
    %v2732 = vadd.f32 %v2597, %v2630
    %v2733 = vadd.f32 %v2598, %v2630
    %v2734 = vadd.f32 %v2599, %v2630
    %v2735 = vadd.f32 %v2600, %v2630
    %v2736 = vadd.f32 %v2601, %v2630
    %v2737 = vadd.f32 %v2602, %v2630
    %v2738 = vadd.f32 %v2603, %v2630
    %v2739 = vadd.f32 %v2604, %v2630
    %v2740 = vadd.f32 %v2605, %v2630
    %v2741 = vadd.f32 %v2606, %v2630
    %v2742 = vadd.f32 %v2607, %v2630
    %v2743 = vadd.f32 %v2608, %v2630
    %v2744 = vadd.f32 %v2609, %v2630
    %v2745 = vadd.f32 %v2610, %v2630
    %v2746 = vadd.f32 %v2611, %v2630
    %v2747 = vadd.f32 %v2612, %v2630
    %v2748 = vadd.f32 %v2613, %v2630
    %v2749 = vadd.f32 %v2614, %v2630
    %v2750 = vadd.f32 %v2615, %v2630
    %v2751 = vadd.f32 %v2616, %v2630
    %v2752 = vadd.f32 %v2617, %v2630
    %v2753 = vadd.f32 %v2618, %v2630
    %v2754 = vadd.f32 %v2619, %v2630
    %v2755 = vadd.f32 %v2620, %v2630
    %v2756 = vadd.f32 %v2621, %v2630
    %v2757 = vadd.f32 %v2622, %v2630
    %v2758 = vadd.f32 %v2623, %v2630
    %v2759 = vadd.f32 %v2624, %v2630
    %v2760 = vmax.f32 %v2632, 0.0
    %v2761 = vmax.f32 %v2633, 0.0
    %v2762 = vmax.f32 %v2634, 0.0
    %v2763 = vmax.f32 %v2635, 0.0
    %v2764 = vmax.f32 %v2636, 0.0
    %v2765 = vmax.f32 %v2637, 0.0
    %v2766 = vmax.f32 %v2638, 0.0
    %v2767 = vmax.f32 %v2639, 0.0
    %v2768 = vmax.f32 %v2640, 0.0
    %v2769 = vmax.f32 %v2641, 0.0
    %v2770 = vmax.f32 %v2642, 0.0
    %v2771 = vmax.f32 %v2643, 0.0
    %v2772 = vmax.f32 %v2644, 0.0
    %v2773 = vmax.f32 %v2645, 0.0
    %v2774 = vmax.f32 %v2646, 0.0
    %v2775 = vmax.f32 %v2647, 0.0
    %v2776 = vmax.f32 %v2648, 0.0
    %v2777 = vmax.f32 %v2649, 0.0
    %v2778 = vmax.f32 %v2650, 0.0
    %v2779 = vmax.f32 %v2651, 0.0
    %v2780 = vmax.f32 %v2652, 0.0
    %v2781 = vmax.f32 %v2653, 0.0
    %v2782 = vmax.f32 %v2654, 0.0
    %v2783 = vmax.f32 %v2655, 0.0
    %v2784 = vmax.f32 %v2656, 0.0
    %v2785 = vmax.f32 %v2657, 0.0
    %v2786 = vmax.f32 %v2658, 0.0
    %v2787 = vmax.f32 %v2659, 0.0
    %v2788 = vmax.f32 %v2660, 0.0
    %v2789 = vmax.f32 %v2661, 0.0
    %v2790 = vmax.f32 %v2662, 0.0
    %v2791 = vmax.f32 %v2663, 0.0
    %v2792 = vmax.f32 %v2664, 0.0
    %v2793 = vmax.f32 %v2665, 0.0
    %v2794 = vmax.f32 %v2666, 0.0
    %v2795 = vmax.f32 %v2667, 0.0
    %v2796 = vmax.f32 %v2668, 0.0
    %v2797 = vmax.f32 %v2669, 0.0
    %v2798 = vmax.f32 %v2670, 0.0
    %v2799 = vmax.f32 %v2671, 0.0
    %v2800 = vmax.f32 %v2672, 0.0
    %v2801 = vmax.f32 %v2673, 0.0
    %v2802 = vmax.f32 %v2674, 0.0
    %v2803 = vmax.f32 %v2675, 0.0
    %v2804 = vmax.f32 %v2676, 0.0
    %v2805 = vmax.f32 %v2677, 0.0
    %v2806 = vmax.f32 %v2678, 0.0
    %v2807 = vmax.f32 %v2679, 0.0
    %v2808 = vmax.f32 %v2680, 0.0
    %v2809 = vmax.f32 %v2681, 0.0
    %v2810 = vmax.f32 %v2682, 0.0
    %v2811 = vmax.f32 %v2683, 0.0
    %v2812 = vmax.f32 %v2684, 0.0
    %v2813 = vmax.f32 %v2685, 0.0
    %v2814 = vmax.f32 %v2686, 0.0
    %v2815 = vmax.f32 %v2687, 0.0
    %v2816 = vmax.f32 %v2688, 0.0
    %v2817 = vmax.f32 %v2689, 0.0
    %v2818 = vmax.f32 %v2690, 0.0
    %v2819 = vmax.f32 %v2691, 0.0
    %v2820 = vmax.f32 %v2692, 0.0
    %v2821 = vmax.f32 %v2693, 0.0
    %v2822 = vmax.f32 %v2694, 0.0
    %v2823 = vmax.f32 %v2695, 0.0
    %v2824 = vmax.f32 %v2696, 0.0
    %v2825 = vmax.f32 %v2697, 0.0
    %v2826 = vmax.f32 %v2698, 0.0
    %v2827 = vmax.f32 %v2699, 0.0
    %v2828 = vmax.f32 %v2700, 0.0
    %v2829 = vmax.f32 %v2701, 0.0
    %v2830 = vmax.f32 %v2702, 0.0
    %v2831 = vmax.f32 %v2703, 0.0
    %v2832 = vmax.f32 %v2704, 0.0
    %v2833 = vmax.f32 %v2705, 0.0
    %v2834 = vmax.f32 %v2706, 0.0
    %v2835 = vmax.f32 %v2707, 0.0
    %v2836 = vmax.f32 %v2708, 0.0
    %v2837 = vmax.f32 %v2709, 0.0
    %v2838 = vmax.f32 %v2710, 0.0
    %v2839 = vmax.f32 %v2711, 0.0
    %v2840 = vmax.f32 %v2712, 0.0
    %v2841 = vmax.f32 %v2713, 0.0
    %v2842 = vmax.f32 %v2714, 0.0
    %v2843 = vmax.f32 %v2715, 0.0
    %v2844 = vmax.f32 %v2716, 0.0
    %v2845 = vmax.f32 %v2717, 0.0
    %v2846 = vmax.f32 %v2718, 0.0
    %v2847 = vmax.f32 %v2719, 0.0
    %v2848 = vmax.f32 %v2720, 0.0
    %v2849 = vmax.f32 %v2721, 0.0
    %v2850 = vmax.f32 %v2722, 0.0
    %v2851 = vmax.f32 %v2723, 0.0
    %v2852 = vmax.f32 %v2724, 0.0
    %v2853 = vmax.f32 %v2725, 0.0
    %v2854 = vmax.f32 %v2726, 0.0
    %v2855 = vmax.f32 %v2727, 0.0
    %v2856 = vmax.f32 %v2728, 0.0
    %v2857 = vmax.f32 %v2729, 0.0
    %v2858 = vmax.f32 %v2730, 0.0
    %v2859 = vmax.f32 %v2731, 0.0
    %v2860 = vmax.f32 %v2732, 0.0
    %v2861 = vmax.f32 %v2733, 0.0
    %v2862 = vmax.f32 %v2734, 0.0
    %v2863 = vmax.f32 %v2735, 0.0
    %v2864 = vmax.f32 %v2736, 0.0
    %v2865 = vmax.f32 %v2737, 0.0
    %v2866 = vmax.f32 %v2738, 0.0
    %v2867 = vmax.f32 %v2739, 0.0
    %v2868 = vmax.f32 %v2740, 0.0
    %v2869 = vmax.f32 %v2741, 0.0
    %v2870 = vmax.f32 %v2742, 0.0
    %v2871 = vmax.f32 %v2743, 0.0
    %v2872 = vmax.f32 %v2744, 0.0
    %v2873 = vmax.f32 %v2745, 0.0
    %v2874 = vmax.f32 %v2746, 0.0
    %v2875 = vmax.f32 %v2747, 0.0
    %v2876 = vmax.f32 %v2748, 0.0
    %v2877 = vmax.f32 %v2749, 0.0
    %v2878 = vmax.f32 %v2750, 0.0
    %v2879 = vmax.f32 %v2751, 0.0
    %v2880 = vmax.f32 %v2752, 0.0
    %v2881 = vmax.f32 %v2753, 0.0
    %v2882 = vmax.f32 %v2754, 0.0
    %v2883 = vmax.f32 %v2755, 0.0
    %v2884 = vmax.f32 %v2756, 0.0
    %v2885 = vmax.f32 %v2757, 0.0
    %v2886 = vmax.f32 %v2758, 0.0
    %v2887 = vmax.f32 %v2759, 0.0
    %v2888 = vpack.c.bf16 %v2761, %v2760
    %v2889 = vpack.c.bf16 %v2763, %v2762
    %v2890 = vpack.c.bf16 %v2765, %v2764
    %v2891 = vpack.c.bf16 %v2767, %v2766
    %v2892 = vpack.c.bf16 %v2769, %v2768
    %v2893 = vpack.c.bf16 %v2771, %v2770
    %v2894 = vpack.c.bf16 %v2773, %v2772
    %v2895 = vpack.c.bf16 %v2775, %v2774
    %v2896 = vpack.c.bf16 %v2777, %v2776
    %v2897 = vpack.c.bf16 %v2779, %v2778
    %v2898 = vpack.c.bf16 %v2781, %v2780
    %v2899 = vpack.c.bf16 %v2783, %v2782
    %v2900 = vpack.c.bf16 %v2785, %v2784
    %v2901 = vpack.c.bf16 %v2787, %v2786
    %v2902 = vpack.c.bf16 %v2789, %v2788
    %v2903 = vpack.c.bf16 %v2791, %v2790
    %v2904 = vpack.c.bf16 %v2793, %v2792
    %v2905 = vpack.c.bf16 %v2795, %v2794
    %v2906 = vpack.c.bf16 %v2797, %v2796
    %v2907 = vpack.c.bf16 %v2799, %v2798
    %v2908 = vpack.c.bf16 %v2801, %v2800
    %v2909 = vpack.c.bf16 %v2803, %v2802
    %v2910 = vpack.c.bf16 %v2805, %v2804
    %v2911 = vpack.c.bf16 %v2807, %v2806
    %v2912 = vpack.c.bf16 %v2809, %v2808
    %v2913 = vpack.c.bf16 %v2811, %v2810
    %v2914 = vpack.c.bf16 %v2813, %v2812
    %v2915 = vpack.c.bf16 %v2815, %v2814
    %v2916 = vpack.c.bf16 %v2817, %v2816
    %v2917 = vpack.c.bf16 %v2819, %v2818
    %v2918 = vpack.c.bf16 %v2821, %v2820
    %v2919 = vpack.c.bf16 %v2823, %v2822
    %v2920 = vpack.c.bf16 %v2825, %v2824
    %v2921 = vpack.c.bf16 %v2827, %v2826
    %v2922 = vpack.c.bf16 %v2829, %v2828
    %v2923 = vpack.c.bf16 %v2831, %v2830
    %v2924 = vpack.c.bf16 %v2833, %v2832
    %v2925 = vpack.c.bf16 %v2835, %v2834
    %v2926 = vpack.c.bf16 %v2837, %v2836
    %v2927 = vpack.c.bf16 %v2839, %v2838
    %v2928 = vpack.c.bf16 %v2841, %v2840
    %v2929 = vpack.c.bf16 %v2843, %v2842
    %v2930 = vpack.c.bf16 %v2845, %v2844
    %v2931 = vpack.c.bf16 %v2847, %v2846
    %v2932 = vpack.c.bf16 %v2849, %v2848
    %v2933 = vpack.c.bf16 %v2851, %v2850
    %v2934 = vpack.c.bf16 %v2853, %v2852
    %v2935 = vpack.c.bf16 %v2855, %v2854
    %v2936 = vpack.c.bf16 %v2857, %v2856
    %v2937 = vpack.c.bf16 %v2859, %v2858
    %v2938 = vpack.c.bf16 %v2861, %v2860
    %v2939 = vpack.c.bf16 %v2863, %v2862
    %v2940 = vpack.c.bf16 %v2865, %v2864
    %v2941 = vpack.c.bf16 %v2867, %v2866
    %v2942 = vpack.c.bf16 %v2869, %v2868
    %v2943 = vpack.c.bf16 %v2871, %v2870
    %v2944 = vpack.c.bf16 %v2873, %v2872
    %v2945 = vpack.c.bf16 %v2875, %v2874
    %v2946 = vpack.c.bf16 %v2877, %v2876
    %v2947 = vpack.c.bf16 %v2879, %v2878
    %v2948 = vpack.c.bf16 %v2881, %v2880
    %v2949 = vpack.c.bf16 %v2883, %v2882
    %v2950 = vpack.c.bf16 %v2885, %v2884
    %v2951 = vpack.c.bf16 %v2887, %v2886
    %vm2952 = vcmask 261120
    %2953 = vst.msk [vmem:[#allocation2] sm:$0xff] %vm2952, %v2888
    %2954 = vst.msk [vmem:[#allocation2 + $0x8] sm:$0xff] %vm2952, %v2889
    %2955 = vst.msk [vmem:[#allocation2 + $0x10] sm:$0xff] %vm2952, %v2890
    %2956 = vst.msk [vmem:[#allocation2 + $0x18] sm:$0xff] %vm2952, %v2891
    %2957 = vst.msk [vmem:[#allocation2 + $0x20] sm:$0xff] %vm2952, %v2892
    %2958 = vst.msk [vmem:[#allocation2 + $0x28] sm:$0xff] %vm2952, %v2893
    %2959 = vst.msk [vmem:[#allocation2 + $0x30] sm:$0xff] %vm2952, %v2894
    %2960 = vst.msk [vmem:[#allocation2 + $0x38] sm:$0xff] %vm2952, %v2895
    %2961 = vst.msk [vmem:[#allocation2 + $0x40] sm:$0xff] %vm2952, %v2896
    %2962 = vst.msk [vmem:[#allocation2 + $0x48] sm:$0xff] %vm2952, %v2897
    %2963 = vst.msk [vmem:[#allocation2 + $0x50] sm:$0xff] %vm2952, %v2898
    %2964 = vst.msk [vmem:[#allocation2 + $0x58] sm:$0xff] %vm2952, %v2899
    %2965 = vst.msk [vmem:[#allocation2 + $0x60] sm:$0xff] %vm2952, %v2900
    %2966 = vst.msk [vmem:[#allocation2 + $0x68] sm:$0xff] %vm2952, %v2901
    %2967 = vst.msk [vmem:[#allocation2 + $0x70] sm:$0xff] %vm2952, %v2902
    %2968 = vst.msk [vmem:[#allocation2 + $0x78] sm:$0xff] %vm2952, %v2903
    %2969 = vst.msk [vmem:[#allocation2 + $0x80] sm:$0xff] %vm2952, %v2904
    %2970 = vst.msk [vmem:[#allocation2 + $0x88] sm:$0xff] %vm2952, %v2905
    %2971 = vst.msk [vmem:[#allocation2 + $0x90] sm:$0xff] %vm2952, %v2906
    %2972 = vst.msk [vmem:[#allocation2 + $0x98] sm:$0xff] %vm2952, %v2907
    %2973 = vst.msk [vmem:[#allocation2 + $0xa0] sm:$0xff] %vm2952, %v2908
    %2974 = vst.msk [vmem:[#allocation2 + $0xa8] sm:$0xff] %vm2952, %v2909
    %2975 = vst.msk [vmem:[#allocation2 + $0xb0] sm:$0xff] %vm2952, %v2910
    %2976 = vst.msk [vmem:[#allocation2 + $0xb8] sm:$0xff] %vm2952, %v2911
    %2977 = vst.msk [vmem:[#allocation2 + $0xc0] sm:$0xff] %vm2952, %v2912
    %2978 = vst.msk [vmem:[#allocation2 + $0xc8] sm:$0xff] %vm2952, %v2913
    %2979 = vst.msk [vmem:[#allocation2 + $0xd0] sm:$0xff] %vm2952, %v2914
    %2980 = vst.msk [vmem:[#allocation2 + $0xd8] sm:$0xff] %vm2952, %v2915
    %2981 = vst.msk [vmem:[#allocation2 + $0xe0] sm:$0xff] %vm2952, %v2916
    %2982 = vst.msk [vmem:[#allocation2 + $0xe8] sm:$0xff] %vm2952, %v2917
    %2983 = vst.msk [vmem:[#allocation2 + $0xf0] sm:$0xff] %vm2952, %v2918
    %2984 = vst.msk [vmem:[#allocation2 + $0xf8] sm:$0xff] %vm2952, %v2919
    %2985 = vst.msk [vmem:[#allocation2 + $0x100] sm:$0xff] %vm2952, %v2920
    %2986 = vst.msk [vmem:[#allocation2 + $0x108] sm:$0xff] %vm2952, %v2921
    %2987 = vst.msk [vmem:[#allocation2 + $0x110] sm:$0xff] %vm2952, %v2922
    %2988 = vst.msk [vmem:[#allocation2 + $0x118] sm:$0xff] %vm2952, %v2923
    %2989 = vst.msk [vmem:[#allocation2 + $0x120] sm:$0xff] %vm2952, %v2924
    %2990 = vst.msk [vmem:[#allocation2 + $0x128] sm:$0xff] %vm2952, %v2925
    %2991 = vst.msk [vmem:[#allocation2 + $0x130] sm:$0xff] %vm2952, %v2926
    %2992 = vst.msk [vmem:[#allocation2 + $0x138] sm:$0xff] %vm2952, %v2927
    %2993 = vst.msk [vmem:[#allocation2 + $0x140] sm:$0xff] %vm2952, %v2928
    %2994 = vst.msk [vmem:[#allocation2 + $0x148] sm:$0xff] %vm2952, %v2929
    %2995 = vst.msk [vmem:[#allocation2 + $0x150] sm:$0xff] %vm2952, %v2930
    %2996 = vst.msk [vmem:[#allocation2 + $0x158] sm:$0xff] %vm2952, %v2931
    %2997 = vst.msk [vmem:[#allocation2 + $0x160] sm:$0xff] %vm2952, %v2932
    %2998 = vst.msk [vmem:[#allocation2 + $0x168] sm:$0xff] %vm2952, %v2933
    %2999 = vst.msk [vmem:[#allocation2 + $0x170] sm:$0xff] %vm2952, %v2934
    %3000 = vst.msk [vmem:[#allocation2 + $0x178] sm:$0xff] %vm2952, %v2935
    %3001 = vst.msk [vmem:[#allocation2 + $0x180] sm:$0xff] %vm2952, %v2936
    %3002 = vst.msk [vmem:[#allocation2 + $0x188] sm:$0xff] %vm2952, %v2937
    %3003 = vst.msk [vmem:[#allocation2 + $0x190] sm:$0xff] %vm2952, %v2938
    %3004 = vst.msk [vmem:[#allocation2 + $0x198] sm:$0xff] %vm2952, %v2939
    %3005 = vst.msk [vmem:[#allocation2 + $0x1a0] sm:$0xff] %vm2952, %v2940
    %3006 = vst.msk [vmem:[#allocation2 + $0x1a8] sm:$0xff] %vm2952, %v2941
    %3007 = vst.msk [vmem:[#allocation2 + $0x1b0] sm:$0xff] %vm2952, %v2942
    %3008 = vst.msk [vmem:[#allocation2 + $0x1b8] sm:$0xff] %vm2952, %v2943
    %3009 = vst.msk [vmem:[#allocation2 + $0x1c0] sm:$0xff] %vm2952, %v2944
    %3010 = vst.msk [vmem:[#allocation2 + $0x1c8] sm:$0xff] %vm2952, %v2945
    %3011 = vst.msk [vmem:[#allocation2 + $0x1d0] sm:$0xff] %vm2952, %v2946
    %3012 = vst.msk [vmem:[#allocation2 + $0x1d8] sm:$0xff] %vm2952, %v2947
    %3013 = vst.msk [vmem:[#allocation2 + $0x1e0] sm:$0xff] %vm2952, %v2948
    %3014 = vst.msk [vmem:[#allocation2 + $0x1e8] sm:$0xff] %vm2952, %v2949
    %3015 = vst.msk [vmem:[#allocation2 + $0x1f0] sm:$0xff] %vm2952, %v2950
    %3016 = vst.msk [vmem:[#allocation2 + $0x1f8] sm:$0xff] %vm2952, %v2951
    %v3017 = vld [vmem:[#allocation2] sm:$0xff]
    %v3018 = vld [vmem:[#allocation2 + $0x8] sm:$0xff]
    %v3019 = vld [vmem:[#allocation2 + $0x10] sm:$0xff]
    %v3020 = vld [vmem:[#allocation2 + $0x18] sm:$0xff]
    %v3021 = vld [vmem:[#allocation2 + $0x20] sm:$0xff]
    %v3022 = vld [vmem:[#allocation2 + $0x28] sm:$0xff]
    %v3023 = vld [vmem:[#allocation2 + $0x30] sm:$0xff]
    %v3024 = vld [vmem:[#allocation2 + $0x38] sm:$0xff]
    %v3025 = vld [vmem:[#allocation2 + $0x40] sm:$0xff]
    %v3026 = vld [vmem:[#allocation2 + $0x48] sm:$0xff]
    %v3027 = vld [vmem:[#allocation2 + $0x50] sm:$0xff]
    %v3028 = vld [vmem:[#allocation2 + $0x58] sm:$0xff]
    %v3029 = vld [vmem:[#allocation2 + $0x60] sm:$0xff]
    %v3030 = vld [vmem:[#allocation2 + $0x68] sm:$0xff]
    %v3031 = vld [vmem:[#allocation2 + $0x70] sm:$0xff]
    %v3032 = vld [vmem:[#allocation2 + $0x78] sm:$0xff]
    %v3033 = vld [vmem:[#allocation2 + $0x80] sm:$0xff]
    %v3034 = vld [vmem:[#allocation2 + $0x88] sm:$0xff]
    %v3035 = vld [vmem:[#allocation2 + $0x90] sm:$0xff]
    %v3036 = vld [vmem:[#allocation2 + $0x98] sm:$0xff]
    %v3037 = vld [vmem:[#allocation2 + $0xa0] sm:$0xff]
    %v3038 = vld [vmem:[#allocation2 + $0xa8] sm:$0xff]
    %v3039 = vld [vmem:[#allocation2 + $0xb0] sm:$0xff]
    %v3040 = vld [vmem:[#allocation2 + $0xb8] sm:$0xff]
    %v3041 = vld [vmem:[#allocation2 + $0xc0] sm:$0xff]
    %v3042 = vld [vmem:[#allocation2 + $0xc8] sm:$0xff]
    %v3043 = vld [vmem:[#allocation2 + $0xd0] sm:$0xff]
    %v3044 = vld [vmem:[#allocation2 + $0xd8] sm:$0xff]
    %v3045 = vld [vmem:[#allocation2 + $0xe0] sm:$0xff]
    %v3046 = vld [vmem:[#allocation2 + $0xe8] sm:$0xff]
    %v3047 = vld [vmem:[#allocation2 + $0xf0] sm:$0xff]
    %v3048 = vld [vmem:[#allocation2 + $0xf8] sm:$0xff]
    %v3049 = vld [vmem:[#allocation2 + $0x100] sm:$0xff]
    %v3050 = vld [vmem:[#allocation2 + $0x108] sm:$0xff]
    %v3051 = vld [vmem:[#allocation2 + $0x110] sm:$0xff]
    %v3052 = vld [vmem:[#allocation2 + $0x118] sm:$0xff]
    %v3053 = vld [vmem:[#allocation2 + $0x120] sm:$0xff]
    %v3054 = vld [vmem:[#allocation2 + $0x128] sm:$0xff]
    %v3055 = vld [vmem:[#allocation2 + $0x130] sm:$0xff]
    %v3056 = vld [vmem:[#allocation2 + $0x138] sm:$0xff]
    %3057 = vst.msk [vmem:[#allocation3] sm:$0xff] %vm2952, %v3017
    %3058 = vst.msk [vmem:[#allocation3 + $0x18] sm:$0xff] %vm2952, %v3018
    %3059 = vst.msk [vmem:[#allocation3 + $0x30] sm:$0xff] %vm2952, %v3019
    %3060 = vst.msk [vmem:[#allocation3 + $0x48] sm:$0xff] %vm2952, %v3020
    %3061 = vst.msk [vmem:[#allocation3 + $0x60] sm:$0xff] %vm2952, %v3021
    %3062 = vst.msk [vmem:[#allocation3 + $0x78] sm:$0xff] %vm2952, %v3022
    %3063 = vst.msk [vmem:[#allocation3 + $0x90] sm:$0xff] %vm2952, %v3023
    %3064 = vst.msk [vmem:[#allocation3 + $0xa8] sm:$0xff] %vm2952, %v3024
    %3065 = vst.msk [vmem:[#allocation3 + $0xc0] sm:$0xff] %vm2952, %v3025
    %3066 = vst.msk [vmem:[#allocation3 + $0xd8] sm:$0xff] %vm2952, %v3026
    %3067 = vst.msk [vmem:[#allocation3 + $0xf0] sm:$0xff] %vm2952, %v3027
    %3068 = vst.msk [vmem:[#allocation3 + $0x108] sm:$0xff] %vm2952, %v3028
    %3069 = vst.msk [vmem:[#allocation3 + $0x120] sm:$0xff] %vm2952, %v3029
    %3070 = vst.msk [vmem:[#allocation3 + $0x138] sm:$0xff] %vm2952, %v3030
    %3071 = vst.msk [vmem:[#allocation3 + $0x150] sm:$0xff] %vm2952, %v3031
    %3072 = vst.msk [vmem:[#allocation3 + $0x168] sm:$0xff] %vm2952, %v3032
    %3073 = vst.msk [vmem:[#allocation3 + $0x180] sm:$0xff] %vm2952, %v3033
    %3074 = vst.msk [vmem:[#allocation3 + $0x198] sm:$0xff] %vm2952, %v3034
    %3075 = vst.msk [vmem:[#allocation3 + $0x1b0] sm:$0xff] %vm2952, %v3035
    %3076 = vst.msk [vmem:[#allocation3 + $0x1c8] sm:$0xff] %vm2952, %v3036
    %3077 = vst.msk [vmem:[#allocation3 + $0x1e0] sm:$0xff] %vm2952, %v3037
    %3078 = vst.msk [vmem:[#allocation3 + $0x1f8] sm:$0xff] %vm2952, %v3038
    %3079 = vst.msk [vmem:[#allocation3 + $0x210] sm:$0xff] %vm2952, %v3039
    %3080 = vst.msk [vmem:[#allocation3 + $0x228] sm:$0xff] %vm2952, %v3040
    %3081 = vst.msk [vmem:[#allocation3 + $0x240] sm:$0xff] %vm2952, %v3041
    %3082 = vst.msk [vmem:[#allocation3 + $0x258] sm:$0xff] %vm2952, %v3042
    %3083 = vst.msk [vmem:[#allocation3 + $0x270] sm:$0xff] %vm2952, %v3043
    %3084 = vst.msk [vmem:[#allocation3 + $0x288] sm:$0xff] %vm2952, %v3044
    %3085 = vst.msk [vmem:[#allocation3 + $0x2a0] sm:$0xff] %vm2952, %v3045
    %3086 = vst.msk [vmem:[#allocation3 + $0x2b8] sm:$0xff] %vm2952, %v3046
    %3087 = vst.msk [vmem:[#allocation3 + $0x2d0] sm:$0xff] %vm2952, %v3047
    %3088 = vst.msk [vmem:[#allocation3 + $0x2e8] sm:$0xff] %vm2952, %v3048
    %3089 = vst.msk [vmem:[#allocation3 + $0x300] sm:$0xff] %vm2952, %v3049
    %3090 = vst.msk [vmem:[#allocation3 + $0x318] sm:$0xff] %vm2952, %v3050
    %3091 = vst.msk [vmem:[#allocation3 + $0x330] sm:$0xff] %vm2952, %v3051
    %3092 = vst.msk [vmem:[#allocation3 + $0x348] sm:$0xff] %vm2952, %v3052
    %3093 = vst.msk [vmem:[#allocation3 + $0x360] sm:$0xff] %vm2952, %v3053
    %3094 = vst.msk [vmem:[#allocation3 + $0x378] sm:$0xff] %vm2952, %v3054
    %3095 = vst.msk [vmem:[#allocation3 + $0x390] sm:$0xff] %vm2952, %v3055
    %3096 = vst.msk [vmem:[#allocation3 + $0x3a8] sm:$0xff] %vm2952, %v3056
    %v3097 = vld [vmem:[#allocation2 + $0x8] sm:$0xff]
    %v3098 = vld [vmem:[#allocation2 + $0x10] sm:$0xff]
    %v3099 = vld [vmem:[#allocation2 + $0x18] sm:$0xff]
    %v3100 = vld [vmem:[#allocation2 + $0x20] sm:$0xff]
    %v3101 = vld [vmem:[#allocation2 + $0x28] sm:$0xff]
    %v3102 = vld [vmem:[#allocation2 + $0x30] sm:$0xff]
    %v3103 = vld [vmem:[#allocation2 + $0x38] sm:$0xff]
    %v3104 = vld [vmem:[#allocation2 + $0x40] sm:$0xff]
    %v3105 = vld [vmem:[#allocation2 + $0x48] sm:$0xff]
    %v3106 = vld [vmem:[#allocation2 + $0x50] sm:$0xff]
    %v3107 = vld [vmem:[#allocation2 + $0x58] sm:$0xff]
    %v3108 = vld [vmem:[#allocation2 + $0x60] sm:$0xff]
    %v3109 = vld [vmem:[#allocation2 + $0x68] sm:$0xff]
    %v3110 = vld [vmem:[#allocation2 + $0x70] sm:$0xff]
    %v3111 = vld [vmem:[#allocation2 + $0x78] sm:$0xff]
    %v3112 = vld [vmem:[#allocation2 + $0x80] sm:$0xff]
    %v3113 = vld [vmem:[#allocation2 + $0x88] sm:$0xff]
    %v3114 = vld [vmem:[#allocation2 + $0x90] sm:$0xff]
    %v3115 = vld [vmem:[#allocation2 + $0x98] sm:$0xff]
    %v3116 = vld [vmem:[#allocation2 + $0xa0] sm:$0xff]
    %v3117 = vld [vmem:[#allocation2 + $0xa8] sm:$0xff]
    %v3118 = vld [vmem:[#allocation2 + $0xb0] sm:$0xff]
    %v3119 = vld [vmem:[#allocation2 + $0xb8] sm:$0xff]
    %v3120 = vld [vmem:[#allocation2 + $0xc0] sm:$0xff]
    %v3121 = vld [vmem:[#allocation2 + $0xc8] sm:$0xff]
    %v3122 = vld [vmem:[#allocation2 + $0xd0] sm:$0xff]
    %v3123 = vld [vmem:[#allocation2 + $0xd8] sm:$0xff]
    %v3124 = vld [vmem:[#allocation2 + $0xe0] sm:$0xff]
    %v3125 = vld [vmem:[#allocation2 + $0xe8] sm:$0xff]
    %v3126 = vld [vmem:[#allocation2 + $0xf0] sm:$0xff]
    %v3127 = vld [vmem:[#allocation2 + $0xf8] sm:$0xff]
    %v3128 = vld [vmem:[#allocation2 + $0x100] sm:$0xff]
    %v3129 = vld [vmem:[#allocation2 + $0x108] sm:$0xff]
    %v3130 = vld [vmem:[#allocation2 + $0x110] sm:$0xff]
    %v3131 = vld [vmem:[#allocation2 + $0x118] sm:$0xff]
    %v3132 = vld [vmem:[#allocation2 + $0x120] sm:$0xff]
    %v3133 = vld [vmem:[#allocation2 + $0x128] sm:$0xff]
    %v3134 = vld [vmem:[#allocation2 + $0x130] sm:$0xff]
    %v3135 = vld [vmem:[#allocation2 + $0x138] sm:$0xff]
    %v3136 = vld [vmem:[#allocation2 + $0x140] sm:$0xff]
    %3177 = vrot.lane.b32.xlu0 %v3097, 32
    %v3178 = vpop.permute.xlu0 %3177
    %3179 = vrot.lane.b32.xlu0 %v3098, 32
    %v3180 = vpop.permute.xlu0 %3179
    %3181 = vrot.lane.b32.xlu0 %v3099, 32
    %v3182 = vpop.permute.xlu0 %3181
    %3183 = vrot.lane.b32.xlu0 %v3100, 32
    %v3184 = vpop.permute.xlu0 %3183
    %3185 = vrot.lane.b32.xlu0 %v3101, 32
    %v3186 = vpop.permute.xlu0 %3185
    %3187 = vrot.lane.b32.xlu0 %v3102, 32
    %v3188 = vpop.permute.xlu0 %3187
    %3189 = vrot.lane.b32.xlu0 %v3103, 32
    %v3190 = vpop.permute.xlu0 %3189
    %3191 = vrot.lane.b32.xlu0 %v3104, 32
    %v3192 = vpop.permute.xlu0 %3191
    %3193 = vrot.lane.b32.xlu0 %v3105, 32
    %v3194 = vpop.permute.xlu0 %3193
    %3195 = vrot.lane.b32.xlu0 %v3106, 32
    %v3196 = vpop.permute.xlu0 %3195
    %3197 = vrot.lane.b32.xlu0 %v3107, 32
    %v3198 = vpop.permute.xlu0 %3197
    %3199 = vrot.lane.b32.xlu0 %v3108, 32
    %v3200 = vpop.permute.xlu0 %3199
    %3201 = vrot.lane.b32.xlu0 %v3109, 32
    %v3202 = vpop.permute.xlu0 %3201
    %3203 = vrot.lane.b32.xlu0 %v3110, 32
    %v3204 = vpop.permute.xlu0 %3203
    %3205 = vrot.lane.b32.xlu0 %v3111, 32
    %v3206 = vpop.permute.xlu0 %3205
    %3207 = vrot.lane.b32.xlu0 %v3112, 32
    %v3208 = vpop.permute.xlu0 %3207
    %3209 = vrot.lane.b32.xlu0 %v3113, 32
    %v3210 = vpop.permute.xlu0 %3209
    %3211 = vrot.lane.b32.xlu0 %v3114, 32
    %v3212 = vpop.permute.xlu0 %3211
    %3213 = vrot.lane.b32.xlu0 %v3115, 32
    %v3214 = vpop.permute.xlu0 %3213
    %3215 = vrot.lane.b32.xlu0 %v3116, 32
    %v3216 = vpop.permute.xlu0 %3215
    %3217 = vrot.lane.b32.xlu0 %v3117, 32
    %v3218 = vpop.permute.xlu0 %3217
    %3219 = vrot.lane.b32.xlu0 %v3118, 32
    %v3220 = vpop.permute.xlu0 %3219
    %3221 = vrot.lane.b32.xlu0 %v3119, 32
    %v3222 = vpop.permute.xlu0 %3221
    %3223 = vrot.lane.b32.xlu0 %v3120, 32
    %v3224 = vpop.permute.xlu0 %3223
    %3225 = vrot.lane.b32.xlu0 %v3121, 32
    %v3226 = vpop.permute.xlu0 %3225
    %3227 = vrot.lane.b32.xlu0 %v3122, 32
    %v3228 = vpop.permute.xlu0 %3227
    %3229 = vrot.lane.b32.xlu0 %v3123, 32
    %v3230 = vpop.permute.xlu0 %3229
    %3231 = vrot.lane.b32.xlu0 %v3124, 32
    %v3232 = vpop.permute.xlu0 %3231
    %3233 = vrot.lane.b32.xlu0 %v3125, 32
    %v3234 = vpop.permute.xlu0 %3233
    %3235 = vrot.lane.b32.xlu0 %v3126, 32
    %v3236 = vpop.permute.xlu0 %3235
    %3237 = vrot.lane.b32.xlu0 %v3127, 32
    %v3238 = vpop.permute.xlu0 %3237
    %3239 = vrot.lane.b32.xlu0 %v3128, 32
    %v3240 = vpop.permute.xlu0 %3239
    %3241 = vrot.lane.b32.xlu0 %v3129, 32
    %v3242 = vpop.permute.xlu0 %3241
    %3243 = vrot.lane.b32.xlu0 %v3130, 32
    %v3244 = vpop.permute.xlu0 %3243
    %3245 = vrot.lane.b32.xlu0 %v3131, 32
    %v3246 = vpop.permute.xlu0 %3245
    %3247 = vrot.lane.b32.xlu0 %v3132, 32
    %v3248 = vpop.permute.xlu0 %3247
    %3249 = vrot.lane.b32.xlu0 %v3133, 32
    %v3250 = vpop.permute.xlu0 %3249
    %3251 = vrot.lane.b32.xlu0 %v3134, 32
    %v3252 = vpop.permute.xlu0 %3251
    %3253 = vrot.lane.b32.xlu0 %v3135, 32
    %v3254 = vpop.permute.xlu0 %3253
    %3255 = vrot.lane.b32.xlu0 %v3136, 32
    %v3256 = vpop.permute.xlu0 %3255
    %vm3297 = vcmask 523520
    %3298 = vst.msk [vmem:[#allocation3] sm:$0xff] %vm3297, %v3178
    %3299 = vst.msk [vmem:[#allocation3 + $0x18] sm:$0xff] %vm3297, %v3180
    %3300 = vst.msk [vmem:[#allocation3 + $0x30] sm:$0xff] %vm3297, %v3182
    %3301 = vst.msk [vmem:[#allocation3 + $0x48] sm:$0xff] %vm3297, %v3184
    %3302 = vst.msk [vmem:[#allocation3 + $0x60] sm:$0xff] %vm3297, %v3186
    %3303 = vst.msk [vmem:[#allocation3 + $0x78] sm:$0xff] %vm3297, %v3188
    %3304 = vst.msk [vmem:[#allocation3 + $0x90] sm:$0xff] %vm3297, %v3190
    %3305 = vst.msk [vmem:[#allocation3 + $0xa8] sm:$0xff] %vm3297, %v3192
    %3306 = vst.msk [vmem:[#allocation3 + $0xc0] sm:$0xff] %vm3297, %v3194
    %3307 = vst.msk [vmem:[#allocation3 + $0xd8] sm:$0xff] %vm3297, %v3196
    %3308 = vst.msk [vmem:[#allocation3 + $0xf0] sm:$0xff] %vm3297, %v3198
    %3309 = vst.msk [vmem:[#allocation3 + $0x108] sm:$0xff] %vm3297, %v3200
    %3310 = vst.msk [vmem:[#allocation3 + $0x120] sm:$0xff] %vm3297, %v3202
    %3311 = vst.msk [vmem:[#allocation3 + $0x138] sm:$0xff] %vm3297, %v3204
    %3312 = vst.msk [vmem:[#allocation3 + $0x150] sm:$0xff] %vm3297, %v3206
    %3313 = vst.msk [vmem:[#allocation3 + $0x168] sm:$0xff] %vm3297, %v3208
    %3314 = vst.msk [vmem:[#allocation3 + $0x180] sm:$0xff] %vm3297, %v3210
    %3315 = vst.msk [vmem:[#allocation3 + $0x198] sm:$0xff] %vm3297, %v3212
    %3316 = vst.msk [vmem:[#allocation3 + $0x1b0] sm:$0xff] %vm3297, %v3214
    %3317 = vst.msk [vmem:[#allocation3 + $0x1c8] sm:$0xff] %vm3297, %v3216
    %3318 = vst.msk [vmem:[#allocation3 + $0x1e0] sm:$0xff] %vm3297, %v3218
    %3319 = vst.msk [vmem:[#allocation3 + $0x1f8] sm:$0xff] %vm3297, %v3220
    %3320 = vst.msk [vmem:[#allocation3 + $0x210] sm:$0xff] %vm3297, %v3222
    %3321 = vst.msk [vmem:[#allocation3 + $0x228] sm:$0xff] %vm3297, %v3224
    %3322 = vst.msk [vmem:[#allocation3 + $0x240] sm:$0xff] %vm3297, %v3226
    %3323 = vst.msk [vmem:[#allocation3 + $0x258] sm:$0xff] %vm3297, %v3228
    %3324 = vst.msk [vmem:[#allocation3 + $0x270] sm:$0xff] %vm3297, %v3230
    %3325 = vst.msk [vmem:[#allocation3 + $0x288] sm:$0xff] %vm3297, %v3232
    %3326 = vst.msk [vmem:[#allocation3 + $0x2a0] sm:$0xff] %vm3297, %v3234
    %3327 = vst.msk [vmem:[#allocation3 + $0x2b8] sm:$0xff] %vm3297, %v3236
    %3328 = vst.msk [vmem:[#allocation3 + $0x2d0] sm:$0xff] %vm3297, %v3238
    %3329 = vst.msk [vmem:[#allocation3 + $0x2e8] sm:$0xff] %vm3297, %v3240
    %3330 = vst.msk [vmem:[#allocation3 + $0x300] sm:$0xff] %vm3297, %v3242
    %3331 = vst.msk [vmem:[#allocation3 + $0x318] sm:$0xff] %vm3297, %v3244
    %3332 = vst.msk [vmem:[#allocation3 + $0x330] sm:$0xff] %vm3297, %v3246
    %3333 = vst.msk [vmem:[#allocation3 + $0x348] sm:$0xff] %vm3297, %v3248
    %3334 = vst.msk [vmem:[#allocation3 + $0x360] sm:$0xff] %vm3297, %v3250
    %3335 = vst.msk [vmem:[#allocation3 + $0x378] sm:$0xff] %vm3297, %v3252
    %3336 = vst.msk [vmem:[#allocation3 + $0x390] sm:$0xff] %vm3297, %v3254
    %3337 = vst.msk [vmem:[#allocation3 + $0x3a8] sm:$0xff] %vm3297, %v3256
    %v3338 = vld [vmem:[#allocation2 + $0x10] sm:$0xff]
    %v3339 = vld [vmem:[#allocation2 + $0x18] sm:$0xff]
    %v3340 = vld [vmem:[#allocation2 + $0x20] sm:$0xff]
    %v3341 = vld [vmem:[#allocation2 + $0x28] sm:$0xff]
    %v3342 = vld [vmem:[#allocation2 + $0x30] sm:$0xff]
    %v3343 = vld [vmem:[#allocation2 + $0x38] sm:$0xff]
    %v3344 = vld [vmem:[#allocation2 + $0x40] sm:$0xff]
    %v3345 = vld [vmem:[#allocation2 + $0x48] sm:$0xff]
    %v3346 = vld [vmem:[#allocation2 + $0x50] sm:$0xff]
    %v3347 = vld [vmem:[#allocation2 + $0x58] sm:$0xff]
    %v3348 = vld [vmem:[#allocation2 + $0x60] sm:$0xff]
    %v3349 = vld [vmem:[#allocation2 + $0x68] sm:$0xff]
    %v3350 = vld [vmem:[#allocation2 + $0x70] sm:$0xff]
    %v3351 = vld [vmem:[#allocation2 + $0x78] sm:$0xff]
    %v3352 = vld [vmem:[#allocation2 + $0x80] sm:$0xff]
    %v3353 = vld [vmem:[#allocation2 + $0x88] sm:$0xff]
    %v3354 = vld [vmem:[#allocation2 + $0x90] sm:$0xff]
    %v3355 = vld [vmem:[#allocation2 + $0x98] sm:$0xff]
    %v3356 = vld [vmem:[#allocation2 + $0xa0] sm:$0xff]
    %v3357 = vld [vmem:[#allocation2 + $0xa8] sm:$0xff]
    %v3358 = vld [vmem:[#allocation2 + $0xb0] sm:$0xff]
    %v3359 = vld [vmem:[#allocation2 + $0xb8] sm:$0xff]
    %v3360 = vld [vmem:[#allocation2 + $0xc0] sm:$0xff]
    %v3361 = vld [vmem:[#allocation2 + $0xc8] sm:$0xff]
    %v3362 = vld [vmem:[#allocation2 + $0xd0] sm:$0xff]
    %v3363 = vld [vmem:[#allocation2 + $0xd8] sm:$0xff]
    %v3364 = vld [vmem:[#allocation2 + $0xe0] sm:$0xff]
    %v3365 = vld [vmem:[#allocation2 + $0xe8] sm:$0xff]
    %v3366 = vld [vmem:[#allocation2 + $0xf0] sm:$0xff]
    %v3367 = vld [vmem:[#allocation2 + $0xf8] sm:$0xff]
    %v3368 = vld [vmem:[#allocation2 + $0x100] sm:$0xff]
    %v3369 = vld [vmem:[#allocation2 + $0x108] sm:$0xff]
    %v3370 = vld [vmem:[#allocation2 + $0x110] sm:$0xff]
    %v3371 = vld [vmem:[#allocation2 + $0x118] sm:$0xff]
    %v3372 = vld [vmem:[#allocation2 + $0x120] sm:$0xff]
    %v3373 = vld [vmem:[#allocation2 + $0x128] sm:$0xff]
    %v3374 = vld [vmem:[#allocation2 + $0x130] sm:$0xff]
    %v3375 = vld [vmem:[#allocation2 + $0x138] sm:$0xff]
    %v3376 = vld [vmem:[#allocation2 + $0x140] sm:$0xff]
    %v3377 = vld [vmem:[#allocation2 + $0x148] sm:$0xff]
    %3418 = vrot.lane.b32.xlu0 %v3338, 64
    %v3419 = vpop.permute.xlu0 %3418
    %3420 = vrot.lane.b32.xlu0 %v3339, 64
    %v3421 = vpop.permute.xlu0 %3420
    %3422 = vrot.lane.b32.xlu0 %v3340, 64
    %v3423 = vpop.permute.xlu0 %3422
    %3424 = vrot.lane.b32.xlu0 %v3341, 64
    %v3425 = vpop.permute.xlu0 %3424
    %3426 = vrot.lane.b32.xlu0 %v3342, 64
    %v3427 = vpop.permute.xlu0 %3426
    %3428 = vrot.lane.b32.xlu0 %v3343, 64
    %v3429 = vpop.permute.xlu0 %3428
    %3430 = vrot.lane.b32.xlu0 %v3344, 64
    %v3431 = vpop.permute.xlu0 %3430
    %3432 = vrot.lane.b32.xlu0 %v3345, 64
    %v3433 = vpop.permute.xlu0 %3432
    %3434 = vrot.lane.b32.xlu0 %v3346, 64
    %v3435 = vpop.permute.xlu0 %3434
    %3436 = vrot.lane.b32.xlu0 %v3347, 64
    %v3437 = vpop.permute.xlu0 %3436
    %3438 = vrot.lane.b32.xlu0 %v3348, 64
    %v3439 = vpop.permute.xlu0 %3438
    %3440 = vrot.lane.b32.xlu0 %v3349, 64
    %v3441 = vpop.permute.xlu0 %3440
    %3442 = vrot.lane.b32.xlu0 %v3350, 64
    %v3443 = vpop.permute.xlu0 %3442
    %3444 = vrot.lane.b32.xlu0 %v3351, 64
    %v3445 = vpop.permute.xlu0 %3444
    %3446 = vrot.lane.b32.xlu0 %v3352, 64
    %v3447 = vpop.permute.xlu0 %3446
    %3448 = vrot.lane.b32.xlu0 %v3353, 64
    %v3449 = vpop.permute.xlu0 %3448
    %3450 = vrot.lane.b32.xlu0 %v3354, 64
    %v3451 = vpop.permute.xlu0 %3450
    %3452 = vrot.lane.b32.xlu0 %v3355, 64
    %v3453 = vpop.permute.xlu0 %3452
    %3454 = vrot.lane.b32.xlu0 %v3356, 64
    %v3455 = vpop.permute.xlu0 %3454
    %3456 = vrot.lane.b32.xlu0 %v3357, 64
    %v3457 = vpop.permute.xlu0 %3456
    %3458 = vrot.lane.b32.xlu0 %v3358, 64
    %v3459 = vpop.permute.xlu0 %3458
    %3460 = vrot.lane.b32.xlu0 %v3359, 64
    %v3461 = vpop.permute.xlu0 %3460
    %3462 = vrot.lane.b32.xlu0 %v3360, 64
    %v3463 = vpop.permute.xlu0 %3462
    %3464 = vrot.lane.b32.xlu0 %v3361, 64
    %v3465 = vpop.permute.xlu0 %3464
    %3466 = vrot.lane.b32.xlu0 %v3362, 64
    %v3467 = vpop.permute.xlu0 %3466
    %3468 = vrot.lane.b32.xlu0 %v3363, 64
    %v3469 = vpop.permute.xlu0 %3468
    %3470 = vrot.lane.b32.xlu0 %v3364, 64
    %v3471 = vpop.permute.xlu0 %3470
    %3472 = vrot.lane.b32.xlu0 %v3365, 64
    %v3473 = vpop.permute.xlu0 %3472
    %3474 = vrot.lane.b32.xlu0 %v3366, 64
    %v3475 = vpop.permute.xlu0 %3474
    %3476 = vrot.lane.b32.xlu0 %v3367, 64
    %v3477 = vpop.permute.xlu0 %3476
    %3478 = vrot.lane.b32.xlu0 %v3368, 64
    %v3479 = vpop.permute.xlu0 %3478
    %3480 = vrot.lane.b32.xlu0 %v3369, 64
    %v3481 = vpop.permute.xlu0 %3480
    %3482 = vrot.lane.b32.xlu0 %v3370, 64
    %v3483 = vpop.permute.xlu0 %3482
    %3484 = vrot.lane.b32.xlu0 %v3371, 64
    %v3485 = vpop.permute.xlu0 %3484
    %3486 = vrot.lane.b32.xlu0 %v3372, 64
    %v3487 = vpop.permute.xlu0 %3486
    %3488 = vrot.lane.b32.xlu0 %v3373, 64
    %v3489 = vpop.permute.xlu0 %3488
    %3490 = vrot.lane.b32.xlu0 %v3374, 64
    %v3491 = vpop.permute.xlu0 %3490
    %3492 = vrot.lane.b32.xlu0 %v3375, 64
    %v3493 = vpop.permute.xlu0 %3492
    %3494 = vrot.lane.b32.xlu0 %v3376, 64
    %v3495 = vpop.permute.xlu0 %3494
    %3496 = vrot.lane.b32.xlu0 %v3377, 64
    %v3497 = vpop.permute.xlu0 %3496
    %vm3538 = vcmask 785920
    %3539 = vst.msk [vmem:[#allocation3] sm:$0xff] %vm3538, %v3419
    %3540 = vst.msk [vmem:[#allocation3 + $0x18] sm:$0xff] %vm3538, %v3421
    %3541 = vst.msk [vmem:[#allocation3 + $0x30] sm:$0xff] %vm3538, %v3423
    %3542 = vst.msk [vmem:[#allocation3 + $0x48] sm:$0xff] %vm3538, %v3425
    %3543 = vst.msk [vmem:[#allocation3 + $0x60] sm:$0xff] %vm3538, %v3427
    %3544 = vst.msk [vmem:[#allocation3 + $0x78] sm:$0xff] %vm3538, %v3429
    %3545 = vst.msk [vmem:[#allocation3 + $0x90] sm:$0xff] %vm3538, %v3431
    %3546 = vst.msk [vmem:[#allocation3 + $0xa8] sm:$0xff] %vm3538, %v3433
    %3547 = vst.msk [vmem:[#allocation3 + $0xc0] sm:$0xff] %vm3538, %v3435
    %3548 = vst.msk [vmem:[#allocation3 + $0xd8] sm:$0xff] %vm3538, %v3437
    %3549 = vst.msk [vmem:[#allocation3 + $0xf0] sm:$0xff] %vm3538, %v3439
    %3550 = vst.msk [vmem:[#allocation3 + $0x108] sm:$0xff] %vm3538, %v3441
    %3551 = vst.msk [vmem:[#allocation3 + $0x120] sm:$0xff] %vm3538, %v3443
    %3552 = vst.msk [vmem:[#allocation3 + $0x138] sm:$0xff] %vm3538, %v3445
    %3553 = vst.msk [vmem:[#allocation3 + $0x150] sm:$0xff] %vm3538, %v3447
    %3554 = vst.msk [vmem:[#allocation3 + $0x168] sm:$0xff] %vm3538, %v3449
    %3555 = vst.msk [vmem:[#allocation3 + $0x180] sm:$0xff] %vm3538, %v3451
    %3556 = vst.msk [vmem:[#allocation3 + $0x198] sm:$0xff] %vm3538, %v3453
    %3557 = vst.msk [vmem:[#allocation3 + $0x1b0] sm:$0xff] %vm3538, %v3455
    %3558 = vst.msk [vmem:[#allocation3 + $0x1c8] sm:$0xff] %vm3538, %v3457
    %3559 = vst.msk [vmem:[#allocation3 + $0x1e0] sm:$0xff] %vm3538, %v3459
    %3560 = vst.msk [vmem:[#allocation3 + $0x1f8] sm:$0xff] %vm3538, %v3461
    %3561 = vst.msk [vmem:[#allocation3 + $0x210] sm:$0xff] %vm3538, %v3463
    %3562 = vst.msk [vmem:[#allocation3 + $0x228] sm:$0xff] %vm3538, %v3465
    %3563 = vst.msk [vmem:[#allocation3 + $0x240] sm:$0xff] %vm3538, %v3467
    %3564 = vst.msk [vmem:[#allocation3 + $0x258] sm:$0xff] %vm3538, %v3469
    %3565 = vst.msk [vmem:[#allocation3 + $0x270] sm:$0xff] %vm3538, %v3471
    %3566 = vst.msk [vmem:[#allocation3 + $0x288] sm:$0xff] %vm3538, %v3473
    %3567 = vst.msk [vmem:[#allocation3 + $0x2a0] sm:$0xff] %vm3538, %v3475
    %3568 = vst.msk [vmem:[#allocation3 + $0x2b8] sm:$0xff] %vm3538, %v3477
    %3569 = vst.msk [vmem:[#allocation3 + $0x2d0] sm:$0xff] %vm3538, %v3479
    %3570 = vst.msk [vmem:[#allocation3 + $0x2e8] sm:$0xff] %vm3538, %v3481
    %3571 = vst.msk [vmem:[#allocation3 + $0x300] sm:$0xff] %vm3538, %v3483
    %3572 = vst.msk [vmem:[#allocation3 + $0x318] sm:$0xff] %vm3538, %v3485
    %3573 = vst.msk [vmem:[#allocation3 + $0x330] sm:$0xff] %vm3538, %v3487
    %3574 = vst.msk [vmem:[#allocation3 + $0x348] sm:$0xff] %vm3538, %v3489
    %3575 = vst.msk [vmem:[#allocation3 + $0x360] sm:$0xff] %vm3538, %v3491
    %3576 = vst.msk [vmem:[#allocation3 + $0x378] sm:$0xff] %vm3538, %v3493
    %3577 = vst.msk [vmem:[#allocation3 + $0x390] sm:$0xff] %vm3538, %v3495
    %3578 = vst.msk [vmem:[#allocation3 + $0x3a8] sm:$0xff] %vm3538, %v3497
    %v3579 = vld [vmem:[#allocation2 + $0x58] sm:$0xff]
    %v3580 = vld [vmem:[#allocation2 + $0x60] sm:$0xff]
    %v3581 = vld [vmem:[#allocation2 + $0x68] sm:$0xff]
    %v3582 = vld [vmem:[#allocation2 + $0x70] sm:$0xff]
    %v3583 = vld [vmem:[#allocation2 + $0x78] sm:$0xff]
    %v3584 = vld [vmem:[#allocation2 + $0x80] sm:$0xff]
    %v3585 = vld [vmem:[#allocation2 + $0x88] sm:$0xff]
    %v3586 = vld [vmem:[#allocation2 + $0x90] sm:$0xff]
    %v3587 = vld [vmem:[#allocation2 + $0x98] sm:$0xff]
    %v3588 = vld [vmem:[#allocation2 + $0xa0] sm:$0xff]
    %v3589 = vld [vmem:[#allocation2 + $0xa8] sm:$0xff]
    %v3590 = vld [vmem:[#allocation2 + $0xb0] sm:$0xff]
    %v3591 = vld [vmem:[#allocation2 + $0xb8] sm:$0xff]
    %v3592 = vld [vmem:[#allocation2 + $0xc0] sm:$0xff]
    %v3593 = vld [vmem:[#allocation2 + $0xc8] sm:$0xff]
    %v3594 = vld [vmem:[#allocation2 + $0xd0] sm:$0xff]
    %v3595 = vld [vmem:[#allocation2 + $0xd8] sm:$0xff]
    %v3596 = vld [vmem:[#allocation2 + $0xe0] sm:$0xff]
    %v3597 = vld [vmem:[#allocation2 + $0xe8] sm:$0xff]
    %v3598 = vld [vmem:[#allocation2 + $0xf0] sm:$0xff]
    %v3599 = vld [vmem:[#allocation2 + $0xf8] sm:$0xff]
    %v3600 = vld [vmem:[#allocation2 + $0x100] sm:$0xff]
    %v3601 = vld [vmem:[#allocation2 + $0x108] sm:$0xff]
    %v3602 = vld [vmem:[#allocation2 + $0x110] sm:$0xff]
    %v3603 = vld [vmem:[#allocation2 + $0x118] sm:$0xff]
    %v3604 = vld [vmem:[#allocation2 + $0x120] sm:$0xff]
    %v3605 = vld [vmem:[#allocation2 + $0x128] sm:$0xff]
    %v3606 = vld [vmem:[#allocation2 + $0x130] sm:$0xff]
    %v3607 = vld [vmem:[#allocation2 + $0x138] sm:$0xff]
    %v3608 = vld [vmem:[#allocation2 + $0x140] sm:$0xff]
    %v3609 = vld [vmem:[#allocation2 + $0x148] sm:$0xff]
    %v3610 = vld [vmem:[#allocation2 + $0x150] sm:$0xff]
    %v3611 = vld [vmem:[#allocation2 + $0x158] sm:$0xff]
    %v3612 = vld [vmem:[#allocation2 + $0x160] sm:$0xff]
    %v3613 = vld [vmem:[#allocation2 + $0x168] sm:$0xff]
    %v3614 = vld [vmem:[#allocation2 + $0x170] sm:$0xff]
    %v3615 = vld [vmem:[#allocation2 + $0x178] sm:$0xff]
    %v3616 = vld [vmem:[#allocation2 + $0x180] sm:$0xff]
    %v3617 = vld [vmem:[#allocation2 + $0x188] sm:$0xff]
    %v3618 = vld [vmem:[#allocation2 + $0x190] sm:$0xff]
    %3659 = vrot.lane.b32.xlu0 %v3579, 96
    %v3660 = vpop.permute.xlu0 %3659
    %3661 = vrot.lane.b32.xlu0 %v3580, 96
    %v3662 = vpop.permute.xlu0 %3661
    %3663 = vrot.lane.b32.xlu0 %v3581, 96
    %v3664 = vpop.permute.xlu0 %3663
    %3665 = vrot.lane.b32.xlu0 %v3582, 96
    %v3666 = vpop.permute.xlu0 %3665
    %3667 = vrot.lane.b32.xlu0 %v3583, 96
    %v3668 = vpop.permute.xlu0 %3667
    %3669 = vrot.lane.b32.xlu0 %v3584, 96
    %v3670 = vpop.permute.xlu0 %3669
    %3671 = vrot.lane.b32.xlu0 %v3585, 96
    %v3672 = vpop.permute.xlu0 %3671
    %3673 = vrot.lane.b32.xlu0 %v3586, 96
    %v3674 = vpop.permute.xlu0 %3673
    %3675 = vrot.lane.b32.xlu0 %v3587, 96
    %v3676 = vpop.permute.xlu0 %3675
    %3677 = vrot.lane.b32.xlu0 %v3588, 96
    %v3678 = vpop.permute.xlu0 %3677
    %3679 = vrot.lane.b32.xlu0 %v3589, 96
    %v3680 = vpop.permute.xlu0 %3679
    %3681 = vrot.lane.b32.xlu0 %v3590, 96
    %v3682 = vpop.permute.xlu0 %3681
    %3683 = vrot.lane.b32.xlu0 %v3591, 96
    %v3684 = vpop.permute.xlu0 %3683
    %3685 = vrot.lane.b32.xlu0 %v3592, 96
    %v3686 = vpop.permute.xlu0 %3685
    %3687 = vrot.lane.b32.xlu0 %v3593, 96
    %v3688 = vpop.permute.xlu0 %3687
    %3689 = vrot.lane.b32.xlu0 %v3594, 96
    %v3690 = vpop.permute.xlu0 %3689
    %3691 = vrot.lane.b32.xlu0 %v3595, 96
    %v3692 = vpop.permute.xlu0 %3691
    %3693 = vrot.lane.b32.xlu0 %v3596, 96
    %v3694 = vpop.permute.xlu0 %3693
    %3695 = vrot.lane.b32.xlu0 %v3597, 96
    %v3696 = vpop.permute.xlu0 %3695
    %3697 = vrot.lane.b32.xlu0 %v3598, 96
    %v3698 = vpop.permute.xlu0 %3697
    %3699 = vrot.lane.b32.xlu0 %v3599, 96
    %v3700 = vpop.permute.xlu0 %3699
    %3701 = vrot.lane.b32.xlu0 %v3600, 96
    %v3702 = vpop.permute.xlu0 %3701
    %3703 = vrot.lane.b32.xlu0 %v3601, 96
    %v3704 = vpop.permute.xlu0 %3703
    %3705 = vrot.lane.b32.xlu0 %v3602, 96
    %v3706 = vpop.permute.xlu0 %3705
    %3707 = vrot.lane.b32.xlu0 %v3603, 96
    %v3708 = vpop.permute.xlu0 %3707
    %3709 = vrot.lane.b32.xlu0 %v3604, 96
    %v3710 = vpop.permute.xlu0 %3709
    %3711 = vrot.lane.b32.xlu0 %v3605, 96
    %v3712 = vpop.permute.xlu0 %3711
    %3713 = vrot.lane.b32.xlu0 %v3606, 96
    %v3714 = vpop.permute.xlu0 %3713
    %3715 = vrot.lane.b32.xlu0 %v3607, 96
    %v3716 = vpop.permute.xlu0 %3715
    %3717 = vrot.lane.b32.xlu0 %v3608, 96
    %v3718 = vpop.permute.xlu0 %3717
    %3719 = vrot.lane.b32.xlu0 %v3609, 96
    %v3720 = vpop.permute.xlu0 %3719
    %3721 = vrot.lane.b32.xlu0 %v3610, 96
    %v3722 = vpop.permute.xlu0 %3721
    %3723 = vrot.lane.b32.xlu0 %v3611, 96
    %v3724 = vpop.permute.xlu0 %3723
    %3725 = vrot.lane.b32.xlu0 %v3612, 96
    %v3726 = vpop.permute.xlu0 %3725
    %3727 = vrot.lane.b32.xlu0 %v3613, 96
    %v3728 = vpop.permute.xlu0 %3727
    %3729 = vrot.lane.b32.xlu0 %v3614, 96
    %v3730 = vpop.permute.xlu0 %3729
    %3731 = vrot.lane.b32.xlu0 %v3615, 96
    %v3732 = vpop.permute.xlu0 %3731
    %3733 = vrot.lane.b32.xlu0 %v3616, 96
    %v3734 = vpop.permute.xlu0 %3733
    %3735 = vrot.lane.b32.xlu0 %v3617, 96
    %v3736 = vpop.permute.xlu0 %3735
    %3737 = vrot.lane.b32.xlu0 %v3618, 96
    %v3738 = vpop.permute.xlu0 %3737
    %vm3779 = vcmask 1048320
    %3780 = vst.msk [vmem:[#allocation3] sm:$0xff] %vm3779, %v3660
    %3781 = vst.msk [vmem:[#allocation3 + $0x18] sm:$0xff] %vm3779, %v3662
    %3782 = vst.msk [vmem:[#allocation3 + $0x30] sm:$0xff] %vm3779, %v3664
    %3783 = vst.msk [vmem:[#allocation3 + $0x48] sm:$0xff] %vm3779, %v3666
    %3784 = vst.msk [vmem:[#allocation3 + $0x60] sm:$0xff] %vm3779, %v3668
    %3785 = vst.msk [vmem:[#allocation3 + $0x78] sm:$0xff] %vm3779, %v3670
    %3786 = vst.msk [vmem:[#allocation3 + $0x90] sm:$0xff] %vm3779, %v3672
    %3787 = vst.msk [vmem:[#allocation3 + $0xa8] sm:$0xff] %vm3779, %v3674
    %3788 = vst.msk [vmem:[#allocation3 + $0xc0] sm:$0xff] %vm3779, %v3676
    %3789 = vst.msk [vmem:[#allocation3 + $0xd8] sm:$0xff] %vm3779, %v3678
    %3790 = vst.msk [vmem:[#allocation3 + $0xf0] sm:$0xff] %vm3779, %v3680
    %3791 = vst.msk [vmem:[#allocation3 + $0x108] sm:$0xff] %vm3779, %v3682
    %3792 = vst.msk [vmem:[#allocation3 + $0x120] sm:$0xff] %vm3779, %v3684
    %3793 = vst.msk [vmem:[#allocation3 + $0x138] sm:$0xff] %vm3779, %v3686
    %3794 = vst.msk [vmem:[#allocation3 + $0x150] sm:$0xff] %vm3779, %v3688
    %3795 = vst.msk [vmem:[#allocation3 + $0x168] sm:$0xff] %vm3779, %v3690
    %3796 = vst.msk [vmem:[#allocation3 + $0x180] sm:$0xff] %vm3779, %v3692
    %3797 = vst.msk [vmem:[#allocation3 + $0x198] sm:$0xff] %vm3779, %v3694
    %3798 = vst.msk [vmem:[#allocation3 + $0x1b0] sm:$0xff] %vm3779, %v3696
    %3799 = vst.msk [vmem:[#allocation3 + $0x1c8] sm:$0xff] %vm3779, %v3698
    %3800 = vst.msk [vmem:[#allocation3 + $0x1e0] sm:$0xff] %vm3779, %v3700
    %3801 = vst.msk [vmem:[#allocation3 + $0x1f8] sm:$0xff] %vm3779, %v3702
    %3802 = vst.msk [vmem:[#allocation3 + $0x210] sm:$0xff] %vm3779, %v3704
    %3803 = vst.msk [vmem:[#allocation3 + $0x228] sm:$0xff] %vm3779, %v3706
    %3804 = vst.msk [vmem:[#allocation3 + $0x240] sm:$0xff] %vm3779, %v3708
    %3805 = vst.msk [vmem:[#allocation3 + $0x258] sm:$0xff] %vm3779, %v3710
    %3806 = vst.msk [vmem:[#allocation3 + $0x270] sm:$0xff] %vm3779, %v3712
    %3807 = vst.msk [vmem:[#allocation3 + $0x288] sm:$0xff] %vm3779, %v3714
    %3808 = vst.msk [vmem:[#allocation3 + $0x2a0] sm:$0xff] %vm3779, %v3716
    %3809 = vst.msk [vmem:[#allocation3 + $0x2b8] sm:$0xff] %vm3779, %v3718
    %3810 = vst.msk [vmem:[#allocation3 + $0x2d0] sm:$0xff] %vm3779, %v3720
    %3811 = vst.msk [vmem:[#allocation3 + $0x2e8] sm:$0xff] %vm3779, %v3722
    %3812 = vst.msk [vmem:[#allocation3 + $0x300] sm:$0xff] %vm3779, %v3724
    %3813 = vst.msk [vmem:[#allocation3 + $0x318] sm:$0xff] %vm3779, %v3726
    %3814 = vst.msk [vmem:[#allocation3 + $0x330] sm:$0xff] %vm3779, %v3728
    %3815 = vst.msk [vmem:[#allocation3 + $0x348] sm:$0xff] %vm3779, %v3730
    %3816 = vst.msk [vmem:[#allocation3 + $0x360] sm:$0xff] %vm3779, %v3732
    %3817 = vst.msk [vmem:[#allocation3 + $0x378] sm:$0xff] %vm3779, %v3734
    %3818 = vst.msk [vmem:[#allocation3 + $0x390] sm:$0xff] %vm3779, %v3736
    %3819 = vst.msk [vmem:[#allocation3 + $0x3a8] sm:$0xff] %vm3779, %v3738
    %v3820 = vld [vmem:[#allocation2 + $0x60] sm:$0xff]
    %v3821 = vld [vmem:[#allocation2 + $0x68] sm:$0xff]
    %v3822 = vld [vmem:[#allocation2 + $0x70] sm:$0xff]
    %v3823 = vld [vmem:[#allocation2 + $0x78] sm:$0xff]
    %v3824 = vld [vmem:[#allocation2 + $0x80] sm:$0xff]
    %v3825 = vld [vmem:[#allocation2 + $0x88] sm:$0xff]
    %v3826 = vld [vmem:[#allocation2 + $0x90] sm:$0xff]
    %v3827 = vld [vmem:[#allocation2 + $0x98] sm:$0xff]
    %v3828 = vld [vmem:[#allocation2 + $0xa0] sm:$0xff]
    %v3829 = vld [vmem:[#allocation2 + $0xa8] sm:$0xff]
    %v3830 = vld [vmem:[#allocation2 + $0xb0] sm:$0xff]
    %v3831 = vld [vmem:[#allocation2 + $0xb8] sm:$0xff]
    %v3832 = vld [vmem:[#allocation2 + $0xc0] sm:$0xff]
    %v3833 = vld [vmem:[#allocation2 + $0xc8] sm:$0xff]
    %v3834 = vld [vmem:[#allocation2 + $0xd0] sm:$0xff]
    %v3835 = vld [vmem:[#allocation2 + $0xd8] sm:$0xff]
    %v3836 = vld [vmem:[#allocation2 + $0xe0] sm:$0xff]
    %v3837 = vld [vmem:[#allocation2 + $0xe8] sm:$0xff]
    %v3838 = vld [vmem:[#allocation2 + $0xf0] sm:$0xff]
    %v3839 = vld [vmem:[#allocation2 + $0xf8] sm:$0xff]
    %v3840 = vld [vmem:[#allocation2 + $0x100] sm:$0xff]
    %v3841 = vld [vmem:[#allocation2 + $0x108] sm:$0xff]
    %v3842 = vld [vmem:[#allocation2 + $0x110] sm:$0xff]
    %v3843 = vld [vmem:[#allocation2 + $0x118] sm:$0xff]
    %v3844 = vld [vmem:[#allocation2 + $0x120] sm:$0xff]
    %v3845 = vld [vmem:[#allocation2 + $0x128] sm:$0xff]
    %v3846 = vld [vmem:[#allocation2 + $0x130] sm:$0xff]
    %v3847 = vld [vmem:[#allocation2 + $0x138] sm:$0xff]
    %v3848 = vld [vmem:[#allocation2 + $0x140] sm:$0xff]
    %v3849 = vld [vmem:[#allocation2 + $0x148] sm:$0xff]
    %v3850 = vld [vmem:[#allocation2 + $0x150] sm:$0xff]
    %v3851 = vld [vmem:[#allocation2 + $0x158] sm:$0xff]
    %v3852 = vld [vmem:[#allocation2 + $0x160] sm:$0xff]
    %v3853 = vld [vmem:[#allocation2 + $0x168] sm:$0xff]
    %v3854 = vld [vmem:[#allocation2 + $0x170] sm:$0xff]
    %v3855 = vld [vmem:[#allocation2 + $0x178] sm:$0xff]
    %v3856 = vld [vmem:[#allocation2 + $0x180] sm:$0xff]
    %v3857 = vld [vmem:[#allocation2 + $0x188] sm:$0xff]
    %v3858 = vld [vmem:[#allocation2 + $0x190] sm:$0xff]
    %v3859 = vld [vmem:[#allocation2 + $0x198] sm:$0xff]
    %3860 = vst.msk [vmem:[#allocation3 + $0x8] sm:$0xff] %vm2952, %v3820
    %3861 = vst.msk [vmem:[#allocation3 + $0x20] sm:$0xff] %vm2952, %v3821
    %3862 = vst.msk [vmem:[#allocation3 + $0x38] sm:$0xff] %vm2952, %v3822
    %3863 = vst.msk [vmem:[#allocation3 + $0x50] sm:$0xff] %vm2952, %v3823
    %3864 = vst.msk [vmem:[#allocation3 + $0x68] sm:$0xff] %vm2952, %v3824
    %3865 = vst.msk [vmem:[#allocation3 + $0x80] sm:$0xff] %vm2952, %v3825
    %3866 = vst.msk [vmem:[#allocation3 + $0x98] sm:$0xff] %vm2952, %v3826
    %3867 = vst.msk [vmem:[#allocation3 + $0xb0] sm:$0xff] %vm2952, %v3827
    %3868 = vst.msk [vmem:[#allocation3 + $0xc8] sm:$0xff] %vm2952, %v3828
    %3869 = vst.msk [vmem:[#allocation3 + $0xe0] sm:$0xff] %vm2952, %v3829
    %3870 = vst.msk [vmem:[#allocation3 + $0xf8] sm:$0xff] %vm2952, %v3830
    %3871 = vst.msk [vmem:[#allocation3 + $0x110] sm:$0xff] %vm2952, %v3831
    %3872 = vst.msk [vmem:[#allocation3 + $0x128] sm:$0xff] %vm2952, %v3832
    %3873 = vst.msk [vmem:[#allocation3 + $0x140] sm:$0xff] %vm2952, %v3833
    %3874 = vst.msk [vmem:[#allocation3 + $0x158] sm:$0xff] %vm2952, %v3834
    %3875 = vst.msk [vmem:[#allocation3 + $0x170] sm:$0xff] %vm2952, %v3835
    %3876 = vst.msk [vmem:[#allocation3 + $0x188] sm:$0xff] %vm2952, %v3836
    %3877 = vst.msk [vmem:[#allocation3 + $0x1a0] sm:$0xff] %vm2952, %v3837
    %3878 = vst.msk [vmem:[#allocation3 + $0x1b8] sm:$0xff] %vm2952, %v3838
    %3879 = vst.msk [vmem:[#allocation3 + $0x1d0] sm:$0xff] %vm2952, %v3839
    %3880 = vst.msk [vmem:[#allocation3 + $0x1e8] sm:$0xff] %vm2952, %v3840
    %3881 = vst.msk [vmem:[#allocation3 + $0x200] sm:$0xff] %vm2952, %v3841
    %3882 = vst.msk [vmem:[#allocation3 + $0x218] sm:$0xff] %vm2952, %v3842
    %3883 = vst.msk [vmem:[#allocation3 + $0x230] sm:$0xff] %vm2952, %v3843
    %3884 = vst.msk [vmem:[#allocation3 + $0x248] sm:$0xff] %vm2952, %v3844
    %3885 = vst.msk [vmem:[#allocation3 + $0x260] sm:$0xff] %vm2952, %v3845
    %3886 = vst.msk [vmem:[#allocation3 + $0x278] sm:$0xff] %vm2952, %v3846
    %3887 = vst.msk [vmem:[#allocation3 + $0x290] sm:$0xff] %vm2952, %v3847
    %3888 = vst.msk [vmem:[#allocation3 + $0x2a8] sm:$0xff] %vm2952, %v3848
    %3889 = vst.msk [vmem:[#allocation3 + $0x2c0] sm:$0xff] %vm2952, %v3849
    %3890 = vst.msk [vmem:[#allocation3 + $0x2d8] sm:$0xff] %vm2952, %v3850
    %3891 = vst.msk [vmem:[#allocation3 + $0x2f0] sm:$0xff] %vm2952, %v3851
    %3892 = vst.msk [vmem:[#allocation3 + $0x308] sm:$0xff] %vm2952, %v3852
    %3893 = vst.msk [vmem:[#allocation3 + $0x320] sm:$0xff] %vm2952, %v3853
    %3894 = vst.msk [vmem:[#allocation3 + $0x338] sm:$0xff] %vm2952, %v3854
    %3895 = vst.msk [vmem:[#allocation3 + $0x350] sm:$0xff] %vm2952, %v3855
    %3896 = vst.msk [vmem:[#allocation3 + $0x368] sm:$0xff] %vm2952, %v3856
    %3897 = vst.msk [vmem:[#allocation3 + $0x380] sm:$0xff] %vm2952, %v3857
    %3898 = vst.msk [vmem:[#allocation3 + $0x398] sm:$0xff] %vm2952, %v3858
    %3899 = vst.msk [vmem:[#allocation3 + $0x3b0] sm:$0xff] %vm2952, %v3859
    %v3900 = vld [vmem:[#allocation2 + $0x68] sm:$0xff]
    %v3901 = vld [vmem:[#allocation2 + $0x70] sm:$0xff]
    %v3902 = vld [vmem:[#allocation2 + $0x78] sm:$0xff]
    %v3903 = vld [vmem:[#allocation2 + $0x80] sm:$0xff]
    %v3904 = vld [vmem:[#allocation2 + $0x88] sm:$0xff]
    %v3905 = vld [vmem:[#allocation2 + $0x90] sm:$0xff]
    %v3906 = vld [vmem:[#allocation2 + $0x98] sm:$0xff]
    %v3907 = vld [vmem:[#allocation2 + $0xa0] sm:$0xff]
    %v3908 = vld [vmem:[#allocation2 + $0xa8] sm:$0xff]
    %v3909 = vld [vmem:[#allocation2 + $0xb0] sm:$0xff]
    %v3910 = vld [vmem:[#allocation2 + $0xb8] sm:$0xff]
    %v3911 = vld [vmem:[#allocation2 + $0xc0] sm:$0xff]
    %v3912 = vld [vmem:[#allocation2 + $0xc8] sm:$0xff]
    %v3913 = vld [vmem:[#allocation2 + $0xd0] sm:$0xff]
    %v3914 = vld [vmem:[#allocation2 + $0xd8] sm:$0xff]
    %v3915 = vld [vmem:[#allocation2 + $0xe0] sm:$0xff]
    %v3916 = vld [vmem:[#allocation2 + $0xe8] sm:$0xff]
    %v3917 = vld [vmem:[#allocation2 + $0xf0] sm:$0xff]
    %v3918 = vld [vmem:[#allocation2 + $0xf8] sm:$0xff]
    %v3919 = vld [vmem:[#allocation2 + $0x100] sm:$0xff]
    %v3920 = vld [vmem:[#allocation2 + $0x108] sm:$0xff]
    %v3921 = vld [vmem:[#allocation2 + $0x110] sm:$0xff]
    %v3922 = vld [vmem:[#allocation2 + $0x118] sm:$0xff]
    %v3923 = vld [vmem:[#allocation2 + $0x120] sm:$0xff]
    %v3924 = vld [vmem:[#allocation2 + $0x128] sm:$0xff]
    %v3925 = vld [vmem:[#allocation2 + $0x130] sm:$0xff]
    %v3926 = vld [vmem:[#allocation2 + $0x138] sm:$0xff]
    %v3927 = vld [vmem:[#allocation2 + $0x140] sm:$0xff]
    %v3928 = vld [vmem:[#allocation2 + $0x148] sm:$0xff]
    %v3929 = vld [vmem:[#allocation2 + $0x150] sm:$0xff]
    %v3930 = vld [vmem:[#allocation2 + $0x158] sm:$0xff]
    %v3931 = vld [vmem:[#allocation2 + $0x160] sm:$0xff]
    %v3932 = vld [vmem:[#allocation2 + $0x168] sm:$0xff]
    %v3933 = vld [vmem:[#allocation2 + $0x170] sm:$0xff]
    %v3934 = vld [vmem:[#allocation2 + $0x178] sm:$0xff]
    %v3935 = vld [vmem:[#allocation2 + $0x180] sm:$0xff]
    %v3936 = vld [vmem:[#allocation2 + $0x188] sm:$0xff]
    %v3937 = vld [vmem:[#allocation2 + $0x190] sm:$0xff]
    %v3938 = vld [vmem:[#allocation2 + $0x198] sm:$0xff]
    %v3939 = vld [vmem:[#allocation2 + $0x1a0] sm:$0xff]
    %3980 = vrot.lane.b32.xlu0 %v3900, 32
    %v3981 = vpop.permute.xlu0 %3980
    %3982 = vrot.lane.b32.xlu0 %v3901, 32
    %v3983 = vpop.permute.xlu0 %3982
    %3984 = vrot.lane.b32.xlu0 %v3902, 32
    %v3985 = vpop.permute.xlu0 %3984
    %3986 = vrot.lane.b32.xlu0 %v3903, 32
    %v3987 = vpop.permute.xlu0 %3986
    %3988 = vrot.lane.b32.xlu0 %v3904, 32
    %v3989 = vpop.permute.xlu0 %3988
    %3990 = vrot.lane.b32.xlu0 %v3905, 32
    %v3991 = vpop.permute.xlu0 %3990
    %3992 = vrot.lane.b32.xlu0 %v3906, 32
    %v3993 = vpop.permute.xlu0 %3992
    %3994 = vrot.lane.b32.xlu0 %v3907, 32
    %v3995 = vpop.permute.xlu0 %3994
    %3996 = vrot.lane.b32.xlu0 %v3908, 32
    %v3997 = vpop.permute.xlu0 %3996
    %3998 = vrot.lane.b32.xlu0 %v3909, 32
    %v3999 = vpop.permute.xlu0 %3998
    %4000 = vrot.lane.b32.xlu0 %v3910, 32
    %v4001 = vpop.permute.xlu0 %4000
    %4002 = vrot.lane.b32.xlu0 %v3911, 32
    %v4003 = vpop.permute.xlu0 %4002
    %4004 = vrot.lane.b32.xlu0 %v3912, 32
    %v4005 = vpop.permute.xlu0 %4004
    %4006 = vrot.lane.b32.xlu0 %v3913, 32
    %v4007 = vpop.permute.xlu0 %4006
    %4008 = vrot.lane.b32.xlu0 %v3914, 32
    %v4009 = vpop.permute.xlu0 %4008
    %4010 = vrot.lane.b32.xlu0 %v3915, 32
    %v4011 = vpop.permute.xlu0 %4010
    %4012 = vrot.lane.b32.xlu0 %v3916, 32
    %v4013 = vpop.permute.xlu0 %4012
    %4014 = vrot.lane.b32.xlu0 %v3917, 32
    %v4015 = vpop.permute.xlu0 %4014
    %4016 = vrot.lane.b32.xlu0 %v3918, 32
    %v4017 = vpop.permute.xlu0 %4016
    %4018 = vrot.lane.b32.xlu0 %v3919, 32
    %v4019 = vpop.permute.xlu0 %4018
    %4020 = vrot.lane.b32.xlu0 %v3920, 32
    %v4021 = vpop.permute.xlu0 %4020
    %4022 = vrot.lane.b32.xlu0 %v3921, 32
    %v4023 = vpop.permute.xlu0 %4022
    %4024 = vrot.lane.b32.xlu0 %v3922, 32
    %v4025 = vpop.permute.xlu0 %4024
    %4026 = vrot.lane.b32.xlu0 %v3923, 32
    %v4027 = vpop.permute.xlu0 %4026
    %4028 = vrot.lane.b32.xlu0 %v3924, 32
    %v4029 = vpop.permute.xlu0 %4028
    %4030 = vrot.lane.b32.xlu0 %v3925, 32
    %v4031 = vpop.permute.xlu0 %4030
    %4032 = vrot.lane.b32.xlu0 %v3926, 32
    %v4033 = vpop.permute.xlu0 %4032
    %4034 = vrot.lane.b32.xlu0 %v3927, 32
    %v4035 = vpop.permute.xlu0 %4034
    %4036 = vrot.lane.b32.xlu0 %v3928, 32
    %v4037 = vpop.permute.xlu0 %4036
    %4038 = vrot.lane.b32.xlu0 %v3929, 32
    %v4039 = vpop.permute.xlu0 %4038
    %4040 = vrot.lane.b32.xlu0 %v3930, 32
    %v4041 = vpop.permute.xlu0 %4040
    %4042 = vrot.lane.b32.xlu0 %v3931, 32
    %v4043 = vpop.permute.xlu0 %4042
    %4044 = vrot.lane.b32.xlu0 %v3932, 32
    %v4045 = vpop.permute.xlu0 %4044
    %4046 = vrot.lane.b32.xlu0 %v3933, 32
    %v4047 = vpop.permute.xlu0 %4046
    %4048 = vrot.lane.b32.xlu0 %v3934, 32
    %v4049 = vpop.permute.xlu0 %4048
    %4050 = vrot.lane.b32.xlu0 %v3935, 32
    %v4051 = vpop.permute.xlu0 %4050
    %4052 = vrot.lane.b32.xlu0 %v3936, 32
    %v4053 = vpop.permute.xlu0 %4052
    %4054 = vrot.lane.b32.xlu0 %v3937, 32
    %v4055 = vpop.permute.xlu0 %4054
    %4056 = vrot.lane.b32.xlu0 %v3938, 32
    %v4057 = vpop.permute.xlu0 %4056
    %4058 = vrot.lane.b32.xlu0 %v3939, 32
    %v4059 = vpop.permute.xlu0 %4058
    %4100 = vst.msk [vmem:[#allocation3 + $0x8] sm:$0xff] %vm3297, %v3981
    %4101 = vst.msk [vmem:[#allocation3 + $0x20] sm:$0xff] %vm3297, %v3983
    %4102 = vst.msk [vmem:[#allocation3 + $0x38] sm:$0xff] %vm3297, %v3985
    %4103 = vst.msk [vmem:[#allocation3 + $0x50] sm:$0xff] %vm3297, %v3987
    %4104 = vst.msk [vmem:[#allocation3 + $0x68] sm:$0xff] %vm3297, %v3989
    %4105 = vst.msk [vmem:[#allocation3 + $0x80] sm:$0xff] %vm3297, %v3991
    %4106 = vst.msk [vmem:[#allocation3 + $0x98] sm:$0xff] %vm3297, %v3993
    %4107 = vst.msk [vmem:[#allocation3 + $0xb0] sm:$0xff] %vm3297, %v3995
    %4108 = vst.msk [vmem:[#allocation3 + $0xc8] sm:$0xff] %vm3297, %v3997
    %4109 = vst.msk [vmem:[#allocation3 + $0xe0] sm:$0xff] %vm3297, %v3999
    %4110 = vst.msk [vmem:[#allocation3 + $0xf8] sm:$0xff] %vm3297, %v4001
    %4111 = vst.msk [vmem:[#allocation3 + $0x110] sm:$0xff] %vm3297, %v4003
    %4112 = vst.msk [vmem:[#allocation3 + $0x128] sm:$0xff] %vm3297, %v4005
    %4113 = vst.msk [vmem:[#allocation3 + $0x140] sm:$0xff] %vm3297, %v4007
    %4114 = vst.msk [vmem:[#allocation3 + $0x158] sm:$0xff] %vm3297, %v4009
    %4115 = vst.msk [vmem:[#allocation3 + $0x170] sm:$0xff] %vm3297, %v4011
    %4116 = vst.msk [vmem:[#allocation3 + $0x188] sm:$0xff] %vm3297, %v4013
    %4117 = vst.msk [vmem:[#allocation3 + $0x1a0] sm:$0xff] %vm3297, %v4015
    %4118 = vst.msk [vmem:[#allocation3 + $0x1b8] sm:$0xff] %vm3297, %v4017
    %4119 = vst.msk [vmem:[#allocation3 + $0x1d0] sm:$0xff] %vm3297, %v4019
    %4120 = vst.msk [vmem:[#allocation3 + $0x1e8] sm:$0xff] %vm3297, %v4021
    %4121 = vst.msk [vmem:[#allocation3 + $0x200] sm:$0xff] %vm3297, %v4023
    %4122 = vst.msk [vmem:[#allocation3 + $0x218] sm:$0xff] %vm3297, %v4025
    %4123 = vst.msk [vmem:[#allocation3 + $0x230] sm:$0xff] %vm3297, %v4027
    %4124 = vst.msk [vmem:[#allocation3 + $0x248] sm:$0xff] %vm3297, %v4029
    %4125 = vst.msk [vmem:[#allocation3 + $0x260] sm:$0xff] %vm3297, %v4031
    %4126 = vst.msk [vmem:[#allocation3 + $0x278] sm:$0xff] %vm3297, %v4033
    %4127 = vst.msk [vmem:[#allocation3 + $0x290] sm:$0xff] %vm3297, %v4035
    %4128 = vst.msk [vmem:[#allocation3 + $0x2a8] sm:$0xff] %vm3297, %v4037
    %4129 = vst.msk [vmem:[#allocation3 + $0x2c0] sm:$0xff] %vm3297, %v4039
    %4130 = vst.msk [vmem:[#allocation3 + $0x2d8] sm:$0xff] %vm3297, %v4041
    %4131 = vst.msk [vmem:[#allocation3 + $0x2f0] sm:$0xff] %vm3297, %v4043
    %4132 = vst.msk [vmem:[#allocation3 + $0x308] sm:$0xff] %vm3297, %v4045
    %4133 = vst.msk [vmem:[#allocation3 + $0x320] sm:$0xff] %vm3297, %v4047
    %4134 = vst.msk [vmem:[#allocation3 + $0x338] sm:$0xff] %vm3297, %v4049
    %4135 = vst.msk [vmem:[#allocation3 + $0x350] sm:$0xff] %vm3297, %v4051
    %4136 = vst.msk [vmem:[#allocation3 + $0x368] sm:$0xff] %vm3297, %v4053
    %4137 = vst.msk [vmem:[#allocation3 + $0x380] sm:$0xff] %vm3297, %v4055
    %4138 = vst.msk [vmem:[#allocation3 + $0x398] sm:$0xff] %vm3297, %v4057
    %4139 = vst.msk [vmem:[#allocation3 + $0x3b0] sm:$0xff] %vm3297, %v4059
    %v4140 = vld [vmem:[#allocation2 + $0xb0] sm:$0xff]
    %v4141 = vld [vmem:[#allocation2 + $0xb8] sm:$0xff]
    %v4142 = vld [vmem:[#allocation2 + $0xc0] sm:$0xff]
    %v4143 = vld [vmem:[#allocation2 + $0xc8] sm:$0xff]
    %v4144 = vld [vmem:[#allocation2 + $0xd0] sm:$0xff]
    %v4145 = vld [vmem:[#allocation2 + $0xd8] sm:$0xff]
    %v4146 = vld [vmem:[#allocation2 + $0xe0] sm:$0xff]
    %v4147 = vld [vmem:[#allocation2 + $0xe8] sm:$0xff]
    %v4148 = vld [vmem:[#allocation2 + $0xf0] sm:$0xff]
    %v4149 = vld [vmem:[#allocation2 + $0xf8] sm:$0xff]
    %v4150 = vld [vmem:[#allocation2 + $0x100] sm:$0xff]
    %v4151 = vld [vmem:[#allocation2 + $0x108] sm:$0xff]
    %v4152 = vld [vmem:[#allocation2 + $0x110] sm:$0xff]
    %v4153 = vld [vmem:[#allocation2 + $0x118] sm:$0xff]
    %v4154 = vld [vmem:[#allocation2 + $0x120] sm:$0xff]
    %v4155 = vld [vmem:[#allocation2 + $0x128] sm:$0xff]
    %v4156 = vld [vmem:[#allocation2 + $0x130] sm:$0xff]
    %v4157 = vld [vmem:[#allocation2 + $0x138] sm:$0xff]
    %v4158 = vld [vmem:[#allocation2 + $0x140] sm:$0xff]
    %v4159 = vld [vmem:[#allocation2 + $0x148] sm:$0xff]
    %v4160 = vld [vmem:[#allocation2 + $0x150] sm:$0xff]
    %v4161 = vld [vmem:[#allocation2 + $0x158] sm:$0xff]
    %v4162 = vld [vmem:[#allocation2 + $0x160] sm:$0xff]
    %v4163 = vld [vmem:[#allocation2 + $0x168] sm:$0xff]
    %v4164 = vld [vmem:[#allocation2 + $0x170] sm:$0xff]
    %v4165 = vld [vmem:[#allocation2 + $0x178] sm:$0xff]
    %v4166 = vld [vmem:[#allocation2 + $0x180] sm:$0xff]
    %v4167 = vld [vmem:[#allocation2 + $0x188] sm:$0xff]
    %v4168 = vld [vmem:[#allocation2 + $0x190] sm:$0xff]
    %v4169 = vld [vmem:[#allocation2 + $0x198] sm:$0xff]
    %v4170 = vld [vmem:[#allocation2 + $0x1a0] sm:$0xff]
    %v4171 = vld [vmem:[#allocation2 + $0x1a8] sm:$0xff]
    %v4172 = vld [vmem:[#allocation2 + $0x1b0] sm:$0xff]
    %v4173 = vld [vmem:[#allocation2 + $0x1b8] sm:$0xff]
    %v4174 = vld [vmem:[#allocation2 + $0x1c0] sm:$0xff]
    %v4175 = vld [vmem:[#allocation2 + $0x1c8] sm:$0xff]
    %v4176 = vld [vmem:[#allocation2 + $0x1d0] sm:$0xff]
    %v4177 = vld [vmem:[#allocation2 + $0x1d8] sm:$0xff]
    %v4178 = vld [vmem:[#allocation2 + $0x1e0] sm:$0xff]
    %v4179 = vld [vmem:[#allocation2 + $0x1e8] sm:$0xff]
    %4220 = vrot.lane.b32.xlu0 %v4140, 64
    %v4221 = vpop.permute.xlu0 %4220
    %4222 = vrot.lane.b32.xlu0 %v4141, 64
    %v4223 = vpop.permute.xlu0 %4222
    %4224 = vrot.lane.b32.xlu0 %v4142, 64
    %v4225 = vpop.permute.xlu0 %4224
    %4226 = vrot.lane.b32.xlu0 %v4143, 64
    %v4227 = vpop.permute.xlu0 %4226
    %4228 = vrot.lane.b32.xlu0 %v4144, 64
    %v4229 = vpop.permute.xlu0 %4228
    %4230 = vrot.lane.b32.xlu0 %v4145, 64
    %v4231 = vpop.permute.xlu0 %4230
    %4232 = vrot.lane.b32.xlu0 %v4146, 64
    %v4233 = vpop.permute.xlu0 %4232
    %4234 = vrot.lane.b32.xlu0 %v4147, 64
    %v4235 = vpop.permute.xlu0 %4234
    %4236 = vrot.lane.b32.xlu0 %v4148, 64
    %v4237 = vpop.permute.xlu0 %4236
    %4238 = vrot.lane.b32.xlu0 %v4149, 64
    %v4239 = vpop.permute.xlu0 %4238
    %4240 = vrot.lane.b32.xlu0 %v4150, 64
    %v4241 = vpop.permute.xlu0 %4240
    %4242 = vrot.lane.b32.xlu0 %v4151, 64
    %v4243 = vpop.permute.xlu0 %4242
    %4244 = vrot.lane.b32.xlu0 %v4152, 64
    %v4245 = vpop.permute.xlu0 %4244
    %4246 = vrot.lane.b32.xlu0 %v4153, 64
    %v4247 = vpop.permute.xlu0 %4246
    %4248 = vrot.lane.b32.xlu0 %v4154, 64
    %v4249 = vpop.permute.xlu0 %4248
    %4250 = vrot.lane.b32.xlu0 %v4155, 64
    %v4251 = vpop.permute.xlu0 %4250
    %4252 = vrot.lane.b32.xlu0 %v4156, 64
    %v4253 = vpop.permute.xlu0 %4252
    %4254 = vrot.lane.b32.xlu0 %v4157, 64
    %v4255 = vpop.permute.xlu0 %4254
    %4256 = vrot.lane.b32.xlu0 %v4158, 64
    %v4257 = vpop.permute.xlu0 %4256
    %4258 = vrot.lane.b32.xlu0 %v4159, 64
    %v4259 = vpop.permute.xlu0 %4258
    %4260 = vrot.lane.b32.xlu0 %v4160, 64
    %v4261 = vpop.permute.xlu0 %4260
    %4262 = vrot.lane.b32.xlu0 %v4161, 64
    %v4263 = vpop.permute.xlu0 %4262
    %4264 = vrot.lane.b32.xlu0 %v4162, 64
    %v4265 = vpop.permute.xlu0 %4264
    %4266 = vrot.lane.b32.xlu0 %v4163, 64
    %v4267 = vpop.permute.xlu0 %4266
    %4268 = vrot.lane.b32.xlu0 %v4164, 64
    %v4269 = vpop.permute.xlu0 %4268
    %4270 = vrot.lane.b32.xlu0 %v4165, 64
    %v4271 = vpop.permute.xlu0 %4270
    %4272 = vrot.lane.b32.xlu0 %v4166, 64
    %v4273 = vpop.permute.xlu0 %4272
    %4274 = vrot.lane.b32.xlu0 %v4167, 64
    %v4275 = vpop.permute.xlu0 %4274
    %4276 = vrot.lane.b32.xlu0 %v4168, 64
    %v4277 = vpop.permute.xlu0 %4276
    %4278 = vrot.lane.b32.xlu0 %v4169, 64
    %v4279 = vpop.permute.xlu0 %4278
    %4280 = vrot.lane.b32.xlu0 %v4170, 64
    %v4281 = vpop.permute.xlu0 %4280
    %4282 = vrot.lane.b32.xlu0 %v4171, 64
    %v4283 = vpop.permute.xlu0 %4282
    %4284 = vrot.lane.b32.xlu0 %v4172, 64
    %v4285 = vpop.permute.xlu0 %4284
    %4286 = vrot.lane.b32.xlu0 %v4173, 64
    %v4287 = vpop.permute.xlu0 %4286
    %4288 = vrot.lane.b32.xlu0 %v4174, 64
    %v4289 = vpop.permute.xlu0 %4288
    %4290 = vrot.lane.b32.xlu0 %v4175, 64
    %v4291 = vpop.permute.xlu0 %4290
    %4292 = vrot.lane.b32.xlu0 %v4176, 64
    %v4293 = vpop.permute.xlu0 %4292
    %4294 = vrot.lane.b32.xlu0 %v4177, 64
    %v4295 = vpop.permute.xlu0 %4294
    %4296 = vrot.lane.b32.xlu0 %v4178, 64
    %v4297 = vpop.permute.xlu0 %4296
    %4298 = vrot.lane.b32.xlu0 %v4179, 64
    %v4299 = vpop.permute.xlu0 %4298
    %4340 = vst.msk [vmem:[#allocation3 + $0x8] sm:$0xff] %vm3538, %v4221
    %4341 = vst.msk [vmem:[#allocation3 + $0x20] sm:$0xff] %vm3538, %v4223
    %4342 = vst.msk [vmem:[#allocation3 + $0x38] sm:$0xff] %vm3538, %v4225
    %4343 = vst.msk [vmem:[#allocation3 + $0x50] sm:$0xff] %vm3538, %v4227
    %4344 = vst.msk [vmem:[#allocation3 + $0x68] sm:$0xff] %vm3538, %v4229
    %4345 = vst.msk [vmem:[#allocation3 + $0x80] sm:$0xff] %vm3538, %v4231
    %4346 = vst.msk [vmem:[#allocation3 + $0x98] sm:$0xff] %vm3538, %v4233
    %4347 = vst.msk [vmem:[#allocation3 + $0xb0] sm:$0xff] %vm3538, %v4235
    %4348 = vst.msk [vmem:[#allocation3 + $0xc8] sm:$0xff] %vm3538, %v4237
    %4349 = vst.msk [vmem:[#allocation3 + $0xe0] sm:$0xff] %vm3538, %v4239
    %4350 = vst.msk [vmem:[#allocation3 + $0xf8] sm:$0xff] %vm3538, %v4241
    %4351 = vst.msk [vmem:[#allocation3 + $0x110] sm:$0xff] %vm3538, %v4243
    %4352 = vst.msk [vmem:[#allocation3 + $0x128] sm:$0xff] %vm3538, %v4245
    %4353 = vst.msk [vmem:[#allocation3 + $0x140] sm:$0xff] %vm3538, %v4247
    %4354 = vst.msk [vmem:[#allocation3 + $0x158] sm:$0xff] %vm3538, %v4249
    %4355 = vst.msk [vmem:[#allocation3 + $0x170] sm:$0xff] %vm3538, %v4251
    %4356 = vst.msk [vmem:[#allocation3 + $0x188] sm:$0xff] %vm3538, %v4253
    %4357 = vst.msk [vmem:[#allocation3 + $0x1a0] sm:$0xff] %vm3538, %v4255
    %4358 = vst.msk [vmem:[#allocation3 + $0x1b8] sm:$0xff] %vm3538, %v4257
    %4359 = vst.msk [vmem:[#allocation3 + $0x1d0] sm:$0xff] %vm3538, %v4259
    %4360 = vst.msk [vmem:[#allocation3 + $0x1e8] sm:$0xff] %vm3538, %v4261
    %4361 = vst.msk [vmem:[#allocation3 + $0x200] sm:$0xff] %vm3538, %v4263
    %4362 = vst.msk [vmem:[#allocation3 + $0x218] sm:$0xff] %vm3538, %v4265
    %4363 = vst.msk [vmem:[#allocation3 + $0x230] sm:$0xff] %vm3538, %v4267
    %4364 = vst.msk [vmem:[#allocation3 + $0x248] sm:$0xff] %vm3538, %v4269
    %4365 = vst.msk [vmem:[#allocation3 + $0x260] sm:$0xff] %vm3538, %v4271
    %4366 = vst.msk [vmem:[#allocation3 + $0x278] sm:$0xff] %vm3538, %v4273
    %4367 = vst.msk [vmem:[#allocation3 + $0x290] sm:$0xff] %vm3538, %v4275
    %4368 = vst.msk [vmem:[#allocation3 + $0x2a8] sm:$0xff] %vm3538, %v4277
    %4369 = vst.msk [vmem:[#allocation3 + $0x2c0] sm:$0xff] %vm3538, %v4279
    %4370 = vst.msk [vmem:[#allocation3 + $0x2d8] sm:$0xff] %vm3538, %v4281
    %4371 = vst.msk [vmem:[#allocation3 + $0x2f0] sm:$0xff] %vm3538, %v4283
    %4372 = vst.msk [vmem:[#allocation3 + $0x308] sm:$0xff] %vm3538, %v4285
    %4373 = vst.msk [vmem:[#allocation3 + $0x320] sm:$0xff] %vm3538, %v4287
    %4374 = vst.msk [vmem:[#allocation3 + $0x338] sm:$0xff] %vm3538, %v4289
    %4375 = vst.msk [vmem:[#allocation3 + $0x350] sm:$0xff] %vm3538, %v4291
    %4376 = vst.msk [vmem:[#allocation3 + $0x368] sm:$0xff] %vm3538, %v4293
    %4377 = vst.msk [vmem:[#allocation3 + $0x380] sm:$0xff] %vm3538, %v4295
    %4378 = vst.msk [vmem:[#allocation3 + $0x398] sm:$0xff] %vm3538, %v4297
    %4379 = vst.msk [vmem:[#allocation3 + $0x3b0] sm:$0xff] %vm3538, %v4299
    %v4380 = vld [vmem:[#allocation2 + $0xb8] sm:$0xff]
    %v4381 = vld [vmem:[#allocation2 + $0xc0] sm:$0xff]
    %v4382 = vld [vmem:[#allocation2 + $0xc8] sm:$0xff]
    %v4383 = vld [vmem:[#allocation2 + $0xd0] sm:$0xff]
    %v4384 = vld [vmem:[#allocation2 + $0xd8] sm:$0xff]
    %v4385 = vld [vmem:[#allocation2 + $0xe0] sm:$0xff]
    %v4386 = vld [vmem:[#allocation2 + $0xe8] sm:$0xff]
    %v4387 = vld [vmem:[#allocation2 + $0xf0] sm:$0xff]
    %v4388 = vld [vmem:[#allocation2 + $0xf8] sm:$0xff]
    %v4389 = vld [vmem:[#allocation2 + $0x100] sm:$0xff]
    %v4390 = vld [vmem:[#allocation2 + $0x108] sm:$0xff]
    %v4391 = vld [vmem:[#allocation2 + $0x110] sm:$0xff]
    %v4392 = vld [vmem:[#allocation2 + $0x118] sm:$0xff]
    %v4393 = vld [vmem:[#allocation2 + $0x120] sm:$0xff]
    %v4394 = vld [vmem:[#allocation2 + $0x128] sm:$0xff]
    %v4395 = vld [vmem:[#allocation2 + $0x130] sm:$0xff]
    %v4396 = vld [vmem:[#allocation2 + $0x138] sm:$0xff]
    %v4397 = vld [vmem:[#allocation2 + $0x140] sm:$0xff]
    %v4398 = vld [vmem:[#allocation2 + $0x148] sm:$0xff]
    %v4399 = vld [vmem:[#allocation2 + $0x150] sm:$0xff]
    %v4400 = vld [vmem:[#allocation2 + $0x158] sm:$0xff]
    %v4401 = vld [vmem:[#allocation2 + $0x160] sm:$0xff]
    %v4402 = vld [vmem:[#allocation2 + $0x168] sm:$0xff]
    %v4403 = vld [vmem:[#allocation2 + $0x170] sm:$0xff]
    %v4404 = vld [vmem:[#allocation2 + $0x178] sm:$0xff]
    %v4405 = vld [vmem:[#allocation2 + $0x180] sm:$0xff]
    %v4406 = vld [vmem:[#allocation2 + $0x188] sm:$0xff]
    %v4407 = vld [vmem:[#allocation2 + $0x190] sm:$0xff]
    %v4408 = vld [vmem:[#allocation2 + $0x198] sm:$0xff]
    %v4409 = vld [vmem:[#allocation2 + $0x1a0] sm:$0xff]
    %v4410 = vld [vmem:[#allocation2 + $0x1a8] sm:$0xff]
    %v4411 = vld [vmem:[#allocation2 + $0x1b0] sm:$0xff]
    %v4412 = vld [vmem:[#allocation2 + $0x1b8] sm:$0xff]
    %v4413 = vld [vmem:[#allocation2 + $0x1c0] sm:$0xff]
    %v4414 = vld [vmem:[#allocation2 + $0x1c8] sm:$0xff]
    %v4415 = vld [vmem:[#allocation2 + $0x1d0] sm:$0xff]
    %v4416 = vld [vmem:[#allocation2 + $0x1d8] sm:$0xff]
    %v4417 = vld [vmem:[#allocation2 + $0x1e0] sm:$0xff]
    %v4418 = vld [vmem:[#allocation2 + $0x1e8] sm:$0xff]
    %v4419 = vld [vmem:[#allocation2 + $0x1f0] sm:$0xff]
    %4460 = vrot.lane.b32.xlu0 %v4380, 96
    %v4461 = vpop.permute.xlu0 %4460
    %4462 = vrot.lane.b32.xlu0 %v4381, 96
    %v4463 = vpop.permute.xlu0 %4462
    %4464 = vrot.lane.b32.xlu0 %v4382, 96
    %v4465 = vpop.permute.xlu0 %4464
    %4466 = vrot.lane.b32.xlu0 %v4383, 96
    %v4467 = vpop.permute.xlu0 %4466
    %4468 = vrot.lane.b32.xlu0 %v4384, 96
    %v4469 = vpop.permute.xlu0 %4468
    %4470 = vrot.lane.b32.xlu0 %v4385, 96
    %v4471 = vpop.permute.xlu0 %4470
    %4472 = vrot.lane.b32.xlu0 %v4386, 96
    %v4473 = vpop.permute.xlu0 %4472
    %4474 = vrot.lane.b32.xlu0 %v4387, 96
    %v4475 = vpop.permute.xlu0 %4474
    %4476 = vrot.lane.b32.xlu0 %v4388, 96
    %v4477 = vpop.permute.xlu0 %4476
    %4478 = vrot.lane.b32.xlu0 %v4389, 96
    %v4479 = vpop.permute.xlu0 %4478
    %4480 = vrot.lane.b32.xlu0 %v4390, 96
    %v4481 = vpop.permute.xlu0 %4480
    %4482 = vrot.lane.b32.xlu0 %v4391, 96
    %v4483 = vpop.permute.xlu0 %4482
    %4484 = vrot.lane.b32.xlu0 %v4392, 96
    %v4485 = vpop.permute.xlu0 %4484
    %4486 = vrot.lane.b32.xlu0 %v4393, 96
    %v4487 = vpop.permute.xlu0 %4486
    %4488 = vrot.lane.b32.xlu0 %v4394, 96
    %v4489 = vpop.permute.xlu0 %4488
    %4490 = vrot.lane.b32.xlu0 %v4395, 96
    %v4491 = vpop.permute.xlu0 %4490
    %4492 = vrot.lane.b32.xlu0 %v4396, 96
    %v4493 = vpop.permute.xlu0 %4492
    %4494 = vrot.lane.b32.xlu0 %v4397, 96
    %v4495 = vpop.permute.xlu0 %4494
    %4496 = vrot.lane.b32.xlu0 %v4398, 96
    %v4497 = vpop.permute.xlu0 %4496
    %4498 = vrot.lane.b32.xlu0 %v4399, 96
    %v4499 = vpop.permute.xlu0 %4498
    %4500 = vrot.lane.b32.xlu0 %v4400, 96
    %v4501 = vpop.permute.xlu0 %4500
    %4502 = vrot.lane.b32.xlu0 %v4401, 96
    %v4503 = vpop.permute.xlu0 %4502
    %4504 = vrot.lane.b32.xlu0 %v4402, 96
    %v4505 = vpop.permute.xlu0 %4504
    %4506 = vrot.lane.b32.xlu0 %v4403, 96
    %v4507 = vpop.permute.xlu0 %4506
    %4508 = vrot.lane.b32.xlu0 %v4404, 96
    %v4509 = vpop.permute.xlu0 %4508
    %4510 = vrot.lane.b32.xlu0 %v4405, 96
    %v4511 = vpop.permute.xlu0 %4510
    %4512 = vrot.lane.b32.xlu0 %v4406, 96
    %v4513 = vpop.permute.xlu0 %4512
    %4514 = vrot.lane.b32.xlu0 %v4407, 96
    %v4515 = vpop.permute.xlu0 %4514
    %4516 = vrot.lane.b32.xlu0 %v4408, 96
    %v4517 = vpop.permute.xlu0 %4516
    %4518 = vrot.lane.b32.xlu0 %v4409, 96
    %v4519 = vpop.permute.xlu0 %4518
    %4520 = vrot.lane.b32.xlu0 %v4410, 96
    %v4521 = vpop.permute.xlu0 %4520
    %4522 = vrot.lane.b32.xlu0 %v4411, 96
    %v4523 = vpop.permute.xlu0 %4522
    %4524 = vrot.lane.b32.xlu0 %v4412, 96
    %v4525 = vpop.permute.xlu0 %4524
    %4526 = vrot.lane.b32.xlu0 %v4413, 96
    %v4527 = vpop.permute.xlu0 %4526
    %4528 = vrot.lane.b32.xlu0 %v4414, 96
    %v4529 = vpop.permute.xlu0 %4528
    %4530 = vrot.lane.b32.xlu0 %v4415, 96
    %v4531 = vpop.permute.xlu0 %4530
    %4532 = vrot.lane.b32.xlu0 %v4416, 96
    %v4533 = vpop.permute.xlu0 %4532
    %4534 = vrot.lane.b32.xlu0 %v4417, 96
    %v4535 = vpop.permute.xlu0 %4534
    %4536 = vrot.lane.b32.xlu0 %v4418, 96
    %v4537 = vpop.permute.xlu0 %4536
    %4538 = vrot.lane.b32.xlu0 %v4419, 96
    %v4539 = vpop.permute.xlu0 %4538
    %4580 = vst.msk [vmem:[#allocation3 + $0x8] sm:$0xff] %vm3779, %v4461
    %4581 = vst.msk [vmem:[#allocation3 + $0x20] sm:$0xff] %vm3779, %v4463
    %4582 = vst.msk [vmem:[#allocation3 + $0x38] sm:$0xff] %vm3779, %v4465
    %4583 = vst.msk [vmem:[#allocation3 + $0x50] sm:$0xff] %vm3779, %v4467
    %4584 = vst.msk [vmem:[#allocation3 + $0x68] sm:$0xff] %vm3779, %v4469
    %4585 = vst.msk [vmem:[#allocation3 + $0x80] sm:$0xff] %vm3779, %v4471
    %4586 = vst.msk [vmem:[#allocation3 + $0x98] sm:$0xff] %vm3779, %v4473
    %4587 = vst.msk [vmem:[#allocation3 + $0xb0] sm:$0xff] %vm3779, %v4475
    %4588 = vst.msk [vmem:[#allocation3 + $0xc8] sm:$0xff] %vm3779, %v4477
    %4589 = vst.msk [vmem:[#allocation3 + $0xe0] sm:$0xff] %vm3779, %v4479
    %4590 = vst.msk [vmem:[#allocation3 + $0xf8] sm:$0xff] %vm3779, %v4481
    %4591 = vst.msk [vmem:[#allocation3 + $0x110] sm:$0xff] %vm3779, %v4483
    %4592 = vst.msk [vmem:[#allocation3 + $0x128] sm:$0xff] %vm3779, %v4485
    %4593 = vst.msk [vmem:[#allocation3 + $0x140] sm:$0xff] %vm3779, %v4487
    %4594 = vst.msk [vmem:[#allocation3 + $0x158] sm:$0xff] %vm3779, %v4489
    %4595 = vst.msk [vmem:[#allocation3 + $0x170] sm:$0xff] %vm3779, %v4491
    %4596 = vst.msk [vmem:[#allocation3 + $0x188] sm:$0xff] %vm3779, %v4493
    %4597 = vst.msk [vmem:[#allocation3 + $0x1a0] sm:$0xff] %vm3779, %v4495
    %4598 = vst.msk [vmem:[#allocation3 + $0x1b8] sm:$0xff] %vm3779, %v4497
    %4599 = vst.msk [vmem:[#allocation3 + $0x1d0] sm:$0xff] %vm3779, %v4499
    %4600 = vst.msk [vmem:[#allocation3 + $0x1e8] sm:$0xff] %vm3779, %v4501
    %4601 = vst.msk [vmem:[#allocation3 + $0x200] sm:$0xff] %vm3779, %v4503
    %4602 = vst.msk [vmem:[#allocation3 + $0x218] sm:$0xff] %vm3779, %v4505
    %4603 = vst.msk [vmem:[#allocation3 + $0x230] sm:$0xff] %vm3779, %v4507
    %4604 = vst.msk [vmem:[#allocation3 + $0x248] sm:$0xff] %vm3779, %v4509
    %4605 = vst.msk [vmem:[#allocation3 + $0x260] sm:$0xff] %vm3779, %v4511
    %4606 = vst.msk [vmem:[#allocation3 + $0x278] sm:$0xff] %vm3779, %v4513
    %4607 = vst.msk [vmem:[#allocation3 + $0x290] sm:$0xff] %vm3779, %v4515
    %4608 = vst.msk [vmem:[#allocation3 + $0x2a8] sm:$0xff] %vm3779, %v4517
    %4609 = vst.msk [vmem:[#allocation3 + $0x2c0] sm:$0xff] %vm3779, %v4519
    %4610 = vst.msk [vmem:[#allocation3 + $0x2d8] sm:$0xff] %vm3779, %v4521
    %4611 = vst.msk [vmem:[#allocation3 + $0x2f0] sm:$0xff] %vm3779, %v4523
    %4612 = vst.msk [vmem:[#allocation3 + $0x308] sm:$0xff] %vm3779, %v4525
    %4613 = vst.msk [vmem:[#allocation3 + $0x320] sm:$0xff] %vm3779, %v4527
    %4614 = vst.msk [vmem:[#allocation3 + $0x338] sm:$0xff] %vm3779, %v4529
    %4615 = vst.msk [vmem:[#allocation3 + $0x350] sm:$0xff] %vm3779, %v4531
    %4616 = vst.msk [vmem:[#allocation3 + $0x368] sm:$0xff] %vm3779, %v4533
    %4617 = vst.msk [vmem:[#allocation3 + $0x380] sm:$0xff] %vm3779, %v4535
    %4618 = vst.msk [vmem:[#allocation3 + $0x398] sm:$0xff] %vm3779, %v4537
    %4619 = vst.msk [vmem:[#allocation3 + $0x3b0] sm:$0xff] %vm3779, %v4539
    %v4620 = vld [vmem:[#allocation2 + $0xc0] sm:$0xff]
    %v4621 = vld [vmem:[#allocation2 + $0xc8] sm:$0xff]
    %v4622 = vld [vmem:[#allocation2 + $0xd0] sm:$0xff]
    %v4623 = vld [vmem:[#allocation2 + $0xd8] sm:$0xff]
    %v4624 = vld [vmem:[#allocation2 + $0xe0] sm:$0xff]
    %v4625 = vld [vmem:[#allocation2 + $0xe8] sm:$0xff]
    %v4626 = vld [vmem:[#allocation2 + $0xf0] sm:$0xff]
    %v4627 = vld [vmem:[#allocation2 + $0xf8] sm:$0xff]
    %v4628 = vld [vmem:[#allocation2 + $0x100] sm:$0xff]
    %v4629 = vld [vmem:[#allocation2 + $0x108] sm:$0xff]
    %v4630 = vld [vmem:[#allocation2 + $0x110] sm:$0xff]
    %v4631 = vld [vmem:[#allocation2 + $0x118] sm:$0xff]
    %v4632 = vld [vmem:[#allocation2 + $0x120] sm:$0xff]
    %v4633 = vld [vmem:[#allocation2 + $0x128] sm:$0xff]
    %v4634 = vld [vmem:[#allocation2 + $0x130] sm:$0xff]
    %v4635 = vld [vmem:[#allocation2 + $0x138] sm:$0xff]
    %v4636 = vld [vmem:[#allocation2 + $0x140] sm:$0xff]
    %v4637 = vld [vmem:[#allocation2 + $0x148] sm:$0xff]
    %v4638 = vld [vmem:[#allocation2 + $0x150] sm:$0xff]
    %v4639 = vld [vmem:[#allocation2 + $0x158] sm:$0xff]
    %v4640 = vld [vmem:[#allocation2 + $0x160] sm:$0xff]
    %v4641 = vld [vmem:[#allocation2 + $0x168] sm:$0xff]
    %v4642 = vld [vmem:[#allocation2 + $0x170] sm:$0xff]
    %v4643 = vld [vmem:[#allocation2 + $0x178] sm:$0xff]
    %v4644 = vld [vmem:[#allocation2 + $0x180] sm:$0xff]
    %v4645 = vld [vmem:[#allocation2 + $0x188] sm:$0xff]
    %v4646 = vld [vmem:[#allocation2 + $0x190] sm:$0xff]
    %v4647 = vld [vmem:[#allocation2 + $0x198] sm:$0xff]
    %v4648 = vld [vmem:[#allocation2 + $0x1a0] sm:$0xff]
    %v4649 = vld [vmem:[#allocation2 + $0x1a8] sm:$0xff]
    %v4650 = vld [vmem:[#allocation2 + $0x1b0] sm:$0xff]
    %v4651 = vld [vmem:[#allocation2 + $0x1b8] sm:$0xff]
    %v4652 = vld [vmem:[#allocation2 + $0x1c0] sm:$0xff]
    %v4653 = vld [vmem:[#allocation2 + $0x1c8] sm:$0xff]
    %v4654 = vld [vmem:[#allocation2 + $0x1d0] sm:$0xff]
    %v4655 = vld [vmem:[#allocation2 + $0x1d8] sm:$0xff]
    %v4656 = vld [vmem:[#allocation2 + $0x1e0] sm:$0xff]
    %v4657 = vld [vmem:[#allocation2 + $0x1e8] sm:$0xff]
    %v4658 = vld [vmem:[#allocation2 + $0x1f0] sm:$0xff]
    %v4659 = vld [vmem:[#allocation2 + $0x1f8] sm:$0xff]
    %4660 = vst.msk [vmem:[#allocation3 + $0x10] sm:$0xff] %vm2952, %v4620
    %4661 = vst.msk [vmem:[#allocation3 + $0x28] sm:$0xff] %vm2952, %v4621
    %4662 = vst.msk [vmem:[#allocation3 + $0x40] sm:$0xff] %vm2952, %v4622
    %4663 = vst.msk [vmem:[#allocation3 + $0x58] sm:$0xff] %vm2952, %v4623
    %4664 = vst.msk [vmem:[#allocation3 + $0x70] sm:$0xff] %vm2952, %v4624
    %4665 = vst.msk [vmem:[#allocation3 + $0x88] sm:$0xff] %vm2952, %v4625
    %4666 = vst.msk [vmem:[#allocation3 + $0xa0] sm:$0xff] %vm2952, %v4626
    %4667 = vst.msk [vmem:[#allocation3 + $0xb8] sm:$0xff] %vm2952, %v4627
    %4668 = vst.msk [vmem:[#allocation3 + $0xd0] sm:$0xff] %vm2952, %v4628
    %4669 = vst.msk [vmem:[#allocation3 + $0xe8] sm:$0xff] %vm2952, %v4629
    %4670 = vst.msk [vmem:[#allocation3 + $0x100] sm:$0xff] %vm2952, %v4630
    %4671 = vst.msk [vmem:[#allocation3 + $0x118] sm:$0xff] %vm2952, %v4631
    %4672 = vst.msk [vmem:[#allocation3 + $0x130] sm:$0xff] %vm2952, %v4632
    %4673 = vst.msk [vmem:[#allocation3 + $0x148] sm:$0xff] %vm2952, %v4633
    %4674 = vst.msk [vmem:[#allocation3 + $0x160] sm:$0xff] %vm2952, %v4634
    %4675 = vst.msk [vmem:[#allocation3 + $0x178] sm:$0xff] %vm2952, %v4635
    %4676 = vst.msk [vmem:[#allocation3 + $0x190] sm:$0xff] %vm2952, %v4636
    %4677 = vst.msk [vmem:[#allocation3 + $0x1a8] sm:$0xff] %vm2952, %v4637
    %4678 = vst.msk [vmem:[#allocation3 + $0x1c0] sm:$0xff] %vm2952, %v4638
    %4679 = vst.msk [vmem:[#allocation3 + $0x1d8] sm:$0xff] %vm2952, %v4639
    %4680 = vst.msk [vmem:[#allocation3 + $0x1f0] sm:$0xff] %vm2952, %v4640
    %4681 = vst.msk [vmem:[#allocation3 + $0x208] sm:$0xff] %vm2952, %v4641
    %4682 = vst.msk [vmem:[#allocation3 + $0x220] sm:$0xff] %vm2952, %v4642
    %4683 = vst.msk [vmem:[#allocation3 + $0x238] sm:$0xff] %vm2952, %v4643
    %4684 = vst.msk [vmem:[#allocation3 + $0x250] sm:$0xff] %vm2952, %v4644
    %4685 = vst.msk [vmem:[#allocation3 + $0x268] sm:$0xff] %vm2952, %v4645
    %4686 = vst.msk [vmem:[#allocation3 + $0x280] sm:$0xff] %vm2952, %v4646
    %4687 = vst.msk [vmem:[#allocation3 + $0x298] sm:$0xff] %vm2952, %v4647
    %4688 = vst.msk [vmem:[#allocation3 + $0x2b0] sm:$0xff] %vm2952, %v4648
    %4689 = vst.msk [vmem:[#allocation3 + $0x2c8] sm:$0xff] %vm2952, %v4649
    %4690 = vst.msk [vmem:[#allocation3 + $0x2e0] sm:$0xff] %vm2952, %v4650
    %4691 = vst.msk [vmem:[#allocation3 + $0x2f8] sm:$0xff] %vm2952, %v4651
    %4692 = vst.msk [vmem:[#allocation3 + $0x310] sm:$0xff] %vm2952, %v4652
    %4693 = vst.msk [vmem:[#allocation3 + $0x328] sm:$0xff] %vm2952, %v4653
    %4694 = vst.msk [vmem:[#allocation3 + $0x340] sm:$0xff] %vm2952, %v4654
    %4695 = vst.msk [vmem:[#allocation3 + $0x358] sm:$0xff] %vm2952, %v4655
    %4696 = vst.msk [vmem:[#allocation3 + $0x370] sm:$0xff] %vm2952, %v4656
    %4697 = vst.msk [vmem:[#allocation3 + $0x388] sm:$0xff] %vm2952, %v4657
    %4698 = vst.msk [vmem:[#allocation3 + $0x3a0] sm:$0xff] %vm2952, %v4658
    %4699 = vst.msk [vmem:[#allocation3 + $0x3b8] sm:$0xff] %vm2952, %v4659
    %v4700 = vld [vmem:[#allocation3] sm:$0xff]
    %v4701 = vld [vmem:[#allocation3 + $0x8] sm:$0xff]
    %v4702 = vld [vmem:[#allocation3 + $0x10] sm:$0xff]
    %v4703 = vld [vmem:[#allocation3 + $0x18] sm:$0xff]
    %v4704 = vld [vmem:[#allocation3 + $0x20] sm:$0xff]
    %v4705 = vld [vmem:[#allocation3 + $0x28] sm:$0xff]
    %v4706 = vld [vmem:[#allocation3 + $0x30] sm:$0xff]
    %v4707 = vld [vmem:[#allocation3 + $0x38] sm:$0xff]
    %v4708 = vld [vmem:[#allocation3 + $0x40] sm:$0xff]
    %v4709 = vld [vmem:[#allocation3 + $0x48] sm:$0xff]
    %v4710 = vld [vmem:[#allocation3 + $0x50] sm:$0xff]
    %v4711 = vld [vmem:[#allocation3 + $0x58] sm:$0xff]
    %v4712 = vld [vmem:[#allocation3 + $0x60] sm:$0xff]
    %v4713 = vld [vmem:[#allocation3 + $0x68] sm:$0xff]
    %v4714 = vld [vmem:[#allocation3 + $0x70] sm:$0xff]
    %v4715 = vld [vmem:[#allocation3 + $0x78] sm:$0xff]
    %v4716 = vld [vmem:[#allocation3 + $0x80] sm:$0xff]
    %v4717 = vld [vmem:[#allocation3 + $0x88] sm:$0xff]
    %v4718 = vld [vmem:[#allocation3 + $0x90] sm:$0xff]
    %v4719 = vld [vmem:[#allocation3 + $0x98] sm:$0xff]
    %v4720 = vld [vmem:[#allocation3 + $0xa0] sm:$0xff]
    %v4721 = vld [vmem:[#allocation3 + $0xa8] sm:$0xff]
    %v4722 = vld [vmem:[#allocation3 + $0xb0] sm:$0xff]
    %v4723 = vld [vmem:[#allocation3 + $0xb8] sm:$0xff]
    %v4724 = vld [vmem:[#allocation3 + $0xc0] sm:$0xff]
    %v4725 = vld [vmem:[#allocation3 + $0xc8] sm:$0xff]
    %v4726 = vld [vmem:[#allocation3 + $0xd0] sm:$0xff]
    %v4727 = vld [vmem:[#allocation3 + $0xd8] sm:$0xff]
    %v4728 = vld [vmem:[#allocation3 + $0xe0] sm:$0xff]
    %v4729 = vld [vmem:[#allocation3 + $0xe8] sm:$0xff]
    %v4730 = vld [vmem:[#allocation3 + $0xf0] sm:$0xff]
    %v4731 = vld [vmem:[#allocation3 + $0xf8] sm:$0xff]
    %v4732 = vld [vmem:[#allocation3 + $0x100] sm:$0xff]
    %v4733 = vld [vmem:[#allocation3 + $0x108] sm:$0xff]
    %v4734 = vld [vmem:[#allocation3 + $0x110] sm:$0xff]
    %v4735 = vld [vmem:[#allocation3 + $0x118] sm:$0xff]
    %v4736 = vld [vmem:[#allocation3 + $0x120] sm:$0xff]
    %v4737 = vld [vmem:[#allocation3 + $0x128] sm:$0xff]
    %v4738 = vld [vmem:[#allocation3 + $0x130] sm:$0xff]
    %v4739 = vld [vmem:[#allocation3 + $0x138] sm:$0xff]
    %v4740 = vld [vmem:[#allocation3 + $0x140] sm:$0xff]
    %v4741 = vld [vmem:[#allocation3 + $0x148] sm:$0xff]
    %v4742 = vld [vmem:[#allocation3 + $0x150] sm:$0xff]
    %v4743 = vld [vmem:[#allocation3 + $0x158] sm:$0xff]
    %v4744 = vld [vmem:[#allocation3 + $0x160] sm:$0xff]
    %v4745 = vld [vmem:[#allocation3 + $0x168] sm:$0xff]
    %v4746 = vld [vmem:[#allocation3 + $0x170] sm:$0xff]
    %v4747 = vld [vmem:[#allocation3 + $0x178] sm:$0xff]
    %v4748 = vld [vmem:[#allocation3 + $0x180] sm:$0xff]
    %v4749 = vld [vmem:[#allocation3 + $0x188] sm:$0xff]
    %v4750 = vld [vmem:[#allocation3 + $0x190] sm:$0xff]
    %v4751 = vld [vmem:[#allocation3 + $0x198] sm:$0xff]
    %v4752 = vld [vmem:[#allocation3 + $0x1a0] sm:$0xff]
    %v4753 = vld [vmem:[#allocation3 + $0x1a8] sm:$0xff]
    %v4754 = vld [vmem:[#allocation3 + $0x1b0] sm:$0xff]
    %v4755 = vld [vmem:[#allocation3 + $0x1b8] sm:$0xff]
    %v4756 = vld [vmem:[#allocation3 + $0x1c0] sm:$0xff]
    %v4757 = vld [vmem:[#allocation3 + $0x1c8] sm:$0xff]
    %v4758 = vld [vmem:[#allocation3 + $0x1d0] sm:$0xff]
    %v4759 = vld [vmem:[#allocation3 + $0x1d8] sm:$0xff]
    %v4760 = vld [vmem:[#allocation3 + $0x1e0] sm:$0xff]
    %v4761 = vld [vmem:[#allocation3 + $0x1e8] sm:$0xff]
    %v4762 = vld [vmem:[#allocation3 + $0x1f0] sm:$0xff]
    %v4763 = vld [vmem:[#allocation3 + $0x1f8] sm:$0xff]
    %v4764 = vld [vmem:[#allocation3 + $0x200] sm:$0xff]
    %v4765 = vld [vmem:[#allocation3 + $0x208] sm:$0xff]
    %v4766 = vld [vmem:[#allocation3 + $0x210] sm:$0xff]
    %v4767 = vld [vmem:[#allocation3 + $0x218] sm:$0xff]
    %v4768 = vld [vmem:[#allocation3 + $0x220] sm:$0xff]
    %v4769 = vld [vmem:[#allocation3 + $0x228] sm:$0xff]
    %v4770 = vld [vmem:[#allocation3 + $0x230] sm:$0xff]
    %v4771 = vld [vmem:[#allocation3 + $0x238] sm:$0xff]
    %v4772 = vld [vmem:[#allocation3 + $0x240] sm:$0xff]
    %v4773 = vld [vmem:[#allocation3 + $0x248] sm:$0xff]
    %v4774 = vld [vmem:[#allocation3 + $0x250] sm:$0xff]
    %v4775 = vld [vmem:[#allocation3 + $0x258] sm:$0xff]
    %v4776 = vld [vmem:[#allocation3 + $0x260] sm:$0xff]
    %v4777 = vld [vmem:[#allocation3 + $0x268] sm:$0xff]
    %v4778 = vld [vmem:[#allocation3 + $0x270] sm:$0xff]
    %v4779 = vld [vmem:[#allocation3 + $0x278] sm:$0xff]
    %v4780 = vld [vmem:[#allocation3 + $0x280] sm:$0xff]
    %v4781 = vld [vmem:[#allocation3 + $0x288] sm:$0xff]
    %v4782 = vld [vmem:[#allocation3 + $0x290] sm:$0xff]
    %v4783 = vld [vmem:[#allocation3 + $0x298] sm:$0xff]
    %v4784 = vld [vmem:[#allocation3 + $0x2a0] sm:$0xff]
    %v4785 = vld [vmem:[#allocation3 + $0x2a8] sm:$0xff]
    %v4786 = vld [vmem:[#allocation3 + $0x2b0] sm:$0xff]
    %v4787 = vld [vmem:[#allocation3 + $0x2b8] sm:$0xff]
    %v4788 = vld [vmem:[#allocation3 + $0x2c0] sm:$0xff]
    %v4789 = vld [vmem:[#allocation3 + $0x2c8] sm:$0xff]
    %v4790 = vld [vmem:[#allocation3 + $0x2d0] sm:$0xff]
    %v4791 = vld [vmem:[#allocation3 + $0x2d8] sm:$0xff]
    %v4792 = vld [vmem:[#allocation3 + $0x2e0] sm:$0xff]
    %v4793 = vld [vmem:[#allocation3 + $0x2e8] sm:$0xff]
    %v4794 = vld [vmem:[#allocation3 + $0x2f0] sm:$0xff]
    %v4795 = vld [vmem:[#allocation3 + $0x2f8] sm:$0xff]
    %v4796 = vld [vmem:[#allocation3 + $0x300] sm:$0xff]
    %v4797 = vld [vmem:[#allocation3 + $0x308] sm:$0xff]
    %v4798 = vld [vmem:[#allocation3 + $0x310] sm:$0xff]
    %v4799 = vld [vmem:[#allocation3 + $0x318] sm:$0xff]
    %v4800 = vld [vmem:[#allocation3 + $0x320] sm:$0xff]
    %v4801 = vld [vmem:[#allocation3 + $0x328] sm:$0xff]
    %v4802 = vld [vmem:[#allocation3 + $0x330] sm:$0xff]
    %v4803 = vld [vmem:[#allocation3 + $0x338] sm:$0xff]
    %v4804 = vld [vmem:[#allocation3 + $0x340] sm:$0xff]
    %v4805 = vld [vmem:[#allocation3 + $0x348] sm:$0xff]
    %v4806 = vld [vmem:[#allocation3 + $0x350] sm:$0xff]
    %v4807 = vld [vmem:[#allocation3 + $0x358] sm:$0xff]
    %v4808 = vld [vmem:[#allocation3 + $0x360] sm:$0xff]
    %v4809 = vld [vmem:[#allocation3 + $0x368] sm:$0xff]
    %v4810 = vld [vmem:[#allocation3 + $0x370] sm:$0xff]
    %v4811 = vld [vmem:[#allocation3 + $0x378] sm:$0xff]
    %v4812 = vld [vmem:[#allocation3 + $0x380] sm:$0xff]
    %v4813 = vld [vmem:[#allocation3 + $0x388] sm:$0xff]
    %v4814 = vld [vmem:[#allocation3 + $0x390] sm:$0xff]
    %v4815 = vld [vmem:[#allocation3 + $0x398] sm:$0xff]
    %v4816 = vld [vmem:[#allocation3 + $0x3a0] sm:$0xff]
    %v4817 = vld [vmem:[#allocation3 + $0x3a8] sm:$0xff]
    %v4818 = vld [vmem:[#allocation3 + $0x3b0] sm:$0xff]
    %v4819 = vld [vmem:[#allocation3 + $0x3b8] sm:$0xff]
    %v4820 = vld [vmem:[%s3] sm:$0xf]
    %v4821 = vld [vmem:[%s3 + $0x4] sm:$0xf]
    %v4822 = vld [vmem:[%s3 + $0x8] sm:$0xf]
    %v4823 = vld [vmem:[%s3 + $0xc] sm:$0xf]
    %v4824 = vld [vmem:[%s3 + $0x10] sm:$0xf]
    %v4825 = vld [vmem:[%s3 + $0x14] sm:$0xf]
    %v4826 = vld [vmem:[%s3 + $0x18] sm:$0xf]
    %v4827 = vld [vmem:[%s3 + $0x1c] sm:$0xf]
    %v4828 = vld [vmem:[%s3 + $0x20] sm:$0xf]
    %v4829 = vld [vmem:[%s3 + $0x24] sm:$0xf]
    %v4830 = vld [vmem:[%s3 + $0x28] sm:$0xf]
    %v4831 = vld [vmem:[%s3 + $0x2c] sm:$0xf]
    %v4832 = vld [vmem:[%s3 + $0x30] sm:$0xf]
    %v4833 = vld [vmem:[%s3 + $0x34] sm:$0xf]
    %v4834 = vld [vmem:[%s3 + $0x38] sm:$0xf]
    %v4835 = vld [vmem:[%s3 + $0x3c] sm:$0xf]
    %v4836 = vld [vmem:[%s3 + $0x40] sm:$0xf]
    %v4837 = vld [vmem:[%s3 + $0x44] sm:$0xf]
    %v4838 = vld [vmem:[%s3 + $0x48] sm:$0xf]
    %v4839 = vld [vmem:[%s3 + $0x4c] sm:$0xf]
    %v4840 = vld [vmem:[%s3 + $0x50] sm:$0xf]
    %v4841 = vld [vmem:[%s3 + $0x54] sm:$0xf]
    %v4842 = vld [vmem:[%s3 + $0x58] sm:$0xf]
    %v4843 = vld [vmem:[%s3 + $0x5c] sm:$0xf]
    %v4844 = vld [vmem:[%s3 + $0x60] sm:$0xf]
    %v4845 = vld [vmem:[%s3 + $0x64] sm:$0xf]
    %v4846 = vld [vmem:[%s3 + $0x68] sm:$0xf]
    %v4847 = vld [vmem:[%s3 + $0x6c] sm:$0xf]
    %v4848 = vld [vmem:[%s3 + $0x70] sm:$0xf]
    %v4849 = vld [vmem:[%s3 + $0x74] sm:$0xf]
    %v4850 = vld [vmem:[%s3 + $0x78] sm:$0xf]
    %v4851 = vld [vmem:[%s3 + $0x7c] sm:$0xf]
    %v4852 = vld [vmem:[%s3 + $0x80] sm:$0xf]
    %v4853 = vld [vmem:[%s3 + $0x84] sm:$0xf]
    %v4854 = vld [vmem:[%s3 + $0x88] sm:$0xf]
    %v4855 = vld [vmem:[%s3 + $0x8c] sm:$0xf]
    %v4856 = vld [vmem:[#allocation10] sm:$0x1]
    %v4858 = vlaneseq
    %v4859 = vshrl.u32 %v4858, 7
    %v4860 = vsub.s32 0, %v4859
    %v4861 = vrot.slane %v4856, %v4860
    %v4899 = vunpack.c.l.b16 %v4820
    %v4900 = vunpack.c.l.b16 %v4821
    %v4901 = vunpack.c.l.b16 %v4822
    %v4902 = vunpack.c.l.b16 %v4823
    %v4903 = vunpack.c.l.b16 %v4824
    %v4904 = vunpack.c.l.b16 %v4825
    %v4905 = vunpack.c.l.b16 %v4826
    %v4906 = vunpack.c.l.b16 %v4827
    %v4907 = vunpack.c.l.b16 %v4828
    %v4908 = vunpack.c.l.b16 %v4829
    %v4909 = vunpack.c.l.b16 %v4830
    %v4910 = vunpack.c.l.b16 %v4831
    %v4911 = vunpack.c.l.b16 %v4832
    %v4912 = vunpack.c.l.b16 %v4833
    %v4913 = vunpack.c.l.b16 %v4834
    %v4914 = vunpack.c.l.b16 %v4835
    %v4915 = vunpack.c.l.b16 %v4836
    %v4916 = vunpack.c.l.b16 %v4837
    %v4917 = vunpack.c.l.b16 %v4838
    %v4918 = vunpack.c.l.b16 %v4839
    %v4919 = vunpack.c.l.b16 %v4840
    %v4920 = vunpack.c.l.b16 %v4841
    %v4921 = vunpack.c.l.b16 %v4842
    %v4922 = vunpack.c.l.b16 %v4843
    %v4923 = vunpack.c.l.b16 %v4844
    %v4924 = vunpack.c.l.b16 %v4845
    %v4925 = vunpack.c.l.b16 %v4846
    %v4926 = vunpack.c.l.b16 %v4847
    %v4927 = vunpack.c.l.b16 %v4848
    %v4928 = vunpack.c.l.b16 %v4849
    %v4929 = vunpack.c.l.b16 %v4850
    %v4930 = vunpack.c.l.b16 %v4851
    %v4931 = vunpack.c.l.b16 %v4852
    %v4932 = vunpack.c.l.b16 %v4853
    %v4933 = vunpack.c.l.b16 %v4854
    %v4934 = vunpack.c.l.b16 %v4855
    %v4935 = vpack.c.b16 %v4900, %v4899
    %v4936 = vpack.c.b16 %v4902, %v4901
    %v4937 = vpack.c.b16 %v4904, %v4903
    %v4938 = vpack.c.b16 %v4906, %v4905
    %v4939 = vpack.c.b16 %v4908, %v4907
    %v4940 = vpack.c.b16 %v4910, %v4909
    %v4941 = vpack.c.b16 %v4912, %v4911
    %v4942 = vpack.c.b16 %v4914, %v4913
    %v4943 = vpack.c.b16 %v4916, %v4915
    %v4944 = vpack.c.b16 %v4918, %v4917
    %v4945 = vpack.c.b16 %v4920, %v4919
    %v4946 = vpack.c.b16 %v4922, %v4921
    %v4947 = vpack.c.b16 %v4924, %v4923
    %v4948 = vpack.c.b16 %v4926, %v4925
    %v4949 = vpack.c.b16 %v4928, %v4927
    %v4950 = vpack.c.b16 %v4930, %v4929
    %v4951 = vpack.c.b16 %v4932, %v4931
    %v4952 = vpack.c.b16 %v4934, %v4933
    %v4972 = vsel %vm2952, %v4702, 0
    %v4975 = vsel %vm2952, %v4705, 0
    %v4978 = vsel %vm2952, %v4708, 0
    %v4981 = vsel %vm2952, %v4711, 0
    %v4984 = vsel %vm2952, %v4714, 0
    %v4987 = vsel %vm2952, %v4717, 0
    %v4990 = vsel %vm2952, %v4720, 0
    %v4993 = vsel %vm2952, %v4723, 0
    %v4996 = vsel %vm2952, %v4726, 0
    %v4999 = vsel %vm2952, %v4729, 0
    %v5002 = vsel %vm2952, %v4732, 0
    %v5005 = vsel %vm2952, %v4735, 0
    %v5008 = vsel %vm2952, %v4738, 0
    %v5011 = vsel %vm2952, %v4741, 0
    %v5014 = vsel %vm2952, %v4744, 0
    %v5017 = vsel %vm2952, %v4747, 0
    %v5020 = vsel %vm2952, %v4750, 0
    %v5023 = vsel %vm2952, %v4753, 0
    %v5026 = vsel %vm2952, %v4756, 0
    %v5029 = vsel %vm2952, %v4759, 0
    %v5032 = vsel %vm2952, %v4762, 0
    %v5035 = vsel %vm2952, %v4765, 0
    %v5038 = vsel %vm2952, %v4768, 0
    %v5041 = vsel %vm2952, %v4771, 0
    %v5044 = vsel %vm2952, %v4774, 0
    %v5047 = vsel %vm2952, %v4777, 0
    %v5050 = vsel %vm2952, %v4780, 0
    %v5053 = vsel %vm2952, %v4783, 0
    %v5056 = vsel %vm2952, %v4786, 0
    %v5059 = vsel %vm2952, %v4789, 0
    %v5062 = vsel %vm2952, %v4792, 0
    %v5065 = vsel %vm2952, %v4795, 0
    %v5068 = vsel %vm2952, %v4798, 0
    %v5071 = vsel %vm2952, %v4801, 0
    %v5074 = vsel %vm2952, %v4804, 0
    %v5077 = vsel %vm2952, %v4807, 0
    %v5080 = vsel %vm2952, %v4810, 0
    %v5083 = vsel %vm2952, %v4813, 0
    %v5086 = vsel %vm2952, %v4816, 0
    %v5089 = vsel %vm2952, %v4819, 0
    %5091 = vmatprep.subr.bf16.mxu0 0
    %5092 = vmatpush1.bf16.msra.mxu0 %v4935
    %5093 = vmatprep.subr.bf16.mxu0 0
    %5094 = vmatpush1.bf16.msra.mxu0 %v4936
    %5095 = vmatprep.subr.bf16.mxu0 0
    %5096 = vmatpush1.bf16.msra.mxu0 %v4937
    %5097 = vmatprep.subr.bf16.mxu0 0
    %5098 = vmatpush1.bf16.msra.mxu0 %v4938
    %5099 = vmatprep.subr.bf16.mxu0 0
    %5100 = vmatpush1.bf16.msra.mxu0 %v4939
    %5101 = vmatprep.subr.bf16.mxu0 0
    %5102 = vmatpush1.bf16.msra.mxu0 %v4940
    %5103 = vmatprep.subr.bf16.mxu0 0
    %5104 = vmatpush1.bf16.msra.mxu0 %v4941
    %5105 = vmatprep.subr.bf16.mxu0 0
    %5106 = vmatpush1.bf16.msra.mxu0 %v4942
    %5107 = vmatprep.subr.bf16.mxu0 0
    %5108 = vmatpush1.bf16.msra.mxu0 %v4943
    %5109 = vmatprep.subr.bf16.mxu0 0
    %5110 = vmatpush1.bf16.msra.mxu0 %v4944
    %5111 = vmatprep.subr.bf16.mxu0 0
    %5112 = vmatpush1.bf16.msra.mxu0 %v4945
    %5113 = vmatprep.subr.bf16.mxu0 0
    %5114 = vmatpush1.bf16.msra.mxu0 %v4946
    %5115 = vmatprep.subr.bf16.mxu0 0
    %5116 = vmatpush1.bf16.msra.mxu0 %v4947
    %5117 = vmatprep.subr.bf16.mxu0 0
    %5118 = vmatpush1.bf16.msra.mxu0 %v4948
    %5119 = vmatprep.subr.bf16.mxu0 0
    %5120 = vmatpush1.bf16.msra.mxu0 %v4949
    %5121 = vmatprep.subr.bf16.mxu0 0
    %5122 = vmatpush1.bf16.msra.mxu0 %v4950
    %5123 = vmatprep.mubr.bf16.mxu0 %v4701
    %5124 = vmatmul.mubr.bf16.gmra.mrb[0].mxu0 %v4700
    %v5125 = vpop.f32.mrb[0].mxu0
    %v5126 = vadd.f32 %v4861, %v5125
    %v5127 = vpop.f32.mrb[0].mxu0
    %v5128 = vpop.f32.mrb[0].mxu0
    %v5129 = vadd.f32 %v4861, %v5128
    %v5130 = vpop.f32.mrb[0].mxu0
    %5131 = vmatprep.mubr.bf16.mxu0 %v4704
    %5132 = vmatmul.mubr.bf16.gmra.mrb[0].mxu0 %v4703
    %v5133 = vpop.f32.mrb[0].mxu0
    %v5134 = vadd.f32 %v4861, %v5133
    %v5135 = vpop.f32.mrb[0].mxu0
    %v5136 = vpop.f32.mrb[0].mxu0
    %v5137 = vadd.f32 %v4861, %v5136
    %v5138 = vpop.f32.mrb[0].mxu0
    %5139 = vmatprep.mubr.bf16.mxu0 %v4707
    %5140 = vmatmul.mubr.bf16.gmra.mrb[0].mxu0 %v4706
    %v5141 = vpop.f32.mrb[0].mxu0
    %v5142 = vadd.f32 %v4861, %v5141
    %v5143 = vpop.f32.mrb[0].mxu0
    %v5144 = vpop.f32.mrb[0].mxu0
    %v5145 = vadd.f32 %v4861, %v5144
    %v5146 = vpop.f32.mrb[0].mxu0
    %5147 = vmatprep.mubr.bf16.mxu0 %v4710
    %5148 = vmatmul.mubr.bf16.gmra.mrb[0].mxu0 %v4709
    %v5149 = vpop.f32.mrb[0].mxu0
    %v5150 = vadd.f32 %v4861, %v5149
    %v5151 = vpop.f32.mrb[0].mxu0
    %v5152 = vpop.f32.mrb[0].mxu0
    %v5153 = vadd.f32 %v4861, %v5152
    %v5154 = vpop.f32.mrb[0].mxu0
    %5155 = vmatprep.mubr.bf16.mxu0 %v4713
    %5156 = vmatmul.mubr.bf16.gmra.mrb[0].mxu0 %v4712
    %v5157 = vpop.f32.mrb[0].mxu0
    %v5158 = vadd.f32 %v4861, %v5157
    %v5159 = vpop.f32.mrb[0].mxu0
    %v5160 = vpop.f32.mrb[0].mxu0
    %v5161 = vadd.f32 %v4861, %v5160
    %v5162 = vpop.f32.mrb[0].mxu0
    %5163 = vmatprep.mubr.bf16.mxu0 %v4716
    %5164 = vmatmul.mubr.bf16.gmra.mrb[0].mxu0 %v4715
    %v5165 = vpop.f32.mrb[0].mxu0
    %v5166 = vadd.f32 %v4861, %v5165
    %v5167 = vpop.f32.mrb[0].mxu0
    %v5168 = vpop.f32.mrb[0].mxu0
    %v5169 = vadd.f32 %v4861, %v5168
    %v5170 = vpop.f32.mrb[0].mxu0
    %5171 = vmatprep.mubr.bf16.mxu0 %v4719
    %5172 = vmatmul.mubr.bf16.gmra.mrb[0].mxu0 %v4718
    %v5173 = vpop.f32.mrb[0].mxu0
    %v5174 = vadd.f32 %v4861, %v5173
    %v5175 = vpop.f32.mrb[0].mxu0
    %v5176 = vpop.f32.mrb[0].mxu0
    %v5177 = vadd.f32 %v4861, %v5176
    %v5178 = vpop.f32.mrb[0].mxu0
    %5179 = vmatprep.mubr.bf16.mxu0 %v4722
    %5180 = vmatmul.mubr.bf16.gmra.mrb[0].mxu0 %v4721
    %v5181 = vpop.f32.mrb[0].mxu0
    %v5182 = vadd.f32 %v4861, %v5181
    %v5183 = vpop.f32.mrb[0].mxu0
    %v5184 = vpop.f32.mrb[0].mxu0
    %v5185 = vadd.f32 %v4861, %v5184
    %v5186 = vpop.f32.mrb[0].mxu0
    %5187 = vmatprep.mubr.bf16.mxu0 %v4725
    %5188 = vmatmul.mubr.bf16.gmra.mrb[0].mxu0 %v4724
    %v5189 = vpop.f32.mrb[0].mxu0
    %v5190 = vadd.f32 %v4861, %v5189
    %v5191 = vpop.f32.mrb[0].mxu0
    %v5192 = vpop.f32.mrb[0].mxu0
    %v5193 = vadd.f32 %v4861, %v5192
    %v5194 = vpop.f32.mrb[0].mxu0
    %5195 = vmatprep.mubr.bf16.mxu0 %v4728
    %5196 = vmatmul.mubr.bf16.gmra.mrb[0].mxu0 %v4727
    %v5197 = vpop.f32.mrb[0].mxu0
    %v5198 = vadd.f32 %v4861, %v5197
    %v5199 = vpop.f32.mrb[0].mxu0
    %v5200 = vpop.f32.mrb[0].mxu0
    %v5201 = vadd.f32 %v4861, %v5200
    %v5202 = vpop.f32.mrb[0].mxu0
    %5203 = vmatprep.mubr.bf16.mxu0 %v4731
    %5204 = vmatmul.mubr.bf16.gmra.mrb[0].mxu0 %v4730
    %v5205 = vpop.f32.mrb[0].mxu0
    %v5206 = vadd.f32 %v4861, %v5205
    %v5207 = vpop.f32.mrb[0].mxu0
    %v5208 = vpop.f32.mrb[0].mxu0
    %v5209 = vadd.f32 %v4861, %v5208
    %v5210 = vpop.f32.mrb[0].mxu0
    %5211 = vmatprep.mubr.bf16.mxu0 %v4734
    %5212 = vmatmul.mubr.bf16.gmra.mrb[0].mxu0 %v4733
    %v5213 = vpop.f32.mrb[0].mxu0
    %v5214 = vadd.f32 %v4861, %v5213
    %v5215 = vpop.f32.mrb[0].mxu0
    %v5216 = vpop.f32.mrb[0].mxu0
    %v5217 = vadd.f32 %v4861, %v5216
    %v5218 = vpop.f32.mrb[0].mxu0
    %5219 = vmatprep.mubr.bf16.mxu0 %v4737
    %5220 = vmatmul.mubr.bf16.gmra.mrb[0].mxu0 %v4736
    %v5221 = vpop.f32.mrb[0].mxu0
    %v5222 = vadd.f32 %v4861, %v5221
    %v5223 = vpop.f32.mrb[0].mxu0
    %v5224 = vpop.f32.mrb[0].mxu0
    %v5225 = vadd.f32 %v4861, %v5224
    %v5226 = vpop.f32.mrb[0].mxu0
    %5227 = vmatprep.mubr.bf16.mxu0 %v4740
    %5228 = vmatmul.mubr.bf16.gmra.mrb[0].mxu0 %v4739
    %v5229 = vpop.f32.mrb[0].mxu0
    %v5230 = vadd.f32 %v4861, %v5229
    %v5231 = vpop.f32.mrb[0].mxu0
    %v5232 = vpop.f32.mrb[0].mxu0
    %v5233 = vadd.f32 %v4861, %v5232
    %v5234 = vpop.f32.mrb[0].mxu0
    %5235 = vmatprep.mubr.bf16.mxu0 %v4743
    %5236 = vmatmul.mubr.bf16.gmra.mrb[0].mxu0 %v4742
    %v5237 = vpop.f32.mrb[0].mxu0
    %v5238 = vadd.f32 %v4861, %v5237
    %v5239 = vpop.f32.mrb[0].mxu0
    %v5240 = vpop.f32.mrb[0].mxu0
    %v5241 = vadd.f32 %v4861, %v5240
    %v5242 = vpop.f32.mrb[0].mxu0
    %5243 = vmatprep.mubr.bf16.mxu0 %v4746
    %5244 = vmatmul.mubr.bf16.gmra.mrb[0].mxu0 %v4745
    %v5245 = vpop.f32.mrb[0].mxu0
    %v5246 = vadd.f32 %v4861, %v5245
    %v5247 = vpop.f32.mrb[0].mxu0
    %v5248 = vpop.f32.mrb[0].mxu0
    %v5249 = vadd.f32 %v4861, %v5248
    %v5250 = vpop.f32.mrb[0].mxu0
    %5251 = vmatprep.mubr.bf16.mxu0 %v4749
    %5252 = vmatmul.mubr.bf16.gmra.mrb[0].mxu0 %v4748
    %v5253 = vpop.f32.mrb[0].mxu0
    %v5254 = vadd.f32 %v4861, %v5253
    %v5255 = vpop.f32.mrb[0].mxu0
    %v5256 = vpop.f32.mrb[0].mxu0
    %v5257 = vadd.f32 %v4861, %v5256
    %v5258 = vpop.f32.mrb[0].mxu0
    %5259 = vmatprep.mubr.bf16.mxu0 %v4752
    %5260 = vmatmul.mubr.bf16.gmra.mrb[0].mxu0 %v4751
    %v5261 = vpop.f32.mrb[0].mxu0
    %v5262 = vadd.f32 %v4861, %v5261
    %v5263 = vpop.f32.mrb[0].mxu0
    %v5264 = vpop.f32.mrb[0].mxu0
    %v5265 = vadd.f32 %v4861, %v5264
    %v5266 = vpop.f32.mrb[0].mxu0
    %5267 = vmatprep.mubr.bf16.mxu0 %v4755
    %5268 = vmatmul.mubr.bf16.gmra.mrb[0].mxu0 %v4754
    %v5269 = vpop.f32.mrb[0].mxu0
    %v5270 = vadd.f32 %v4861, %v5269
    %v5271 = vpop.f32.mrb[0].mxu0
    %v5272 = vpop.f32.mrb[0].mxu0
    %v5273 = vadd.f32 %v4861, %v5272
    %v5274 = vpop.f32.mrb[0].mxu0
    %5275 = vmatprep.mubr.bf16.mxu0 %v4758
    %5276 = vmatmul.mubr.bf16.gmra.mrb[0].mxu0 %v4757
    %v5277 = vpop.f32.mrb[0].mxu0
    %v5278 = vadd.f32 %v4861, %v5277
    %v5279 = vpop.f32.mrb[0].mxu0
    %v5280 = vpop.f32.mrb[0].mxu0
    %v5281 = vadd.f32 %v4861, %v5280
    %v5282 = vpop.f32.mrb[0].mxu0
    %5283 = vmatprep.mubr.bf16.mxu0 %v4761
    %5284 = vmatmul.mubr.bf16.gmra.mrb[0].mxu0 %v4760
    %v5285 = vpop.f32.mrb[0].mxu0
    %v5286 = vadd.f32 %v4861, %v5285
    %v5287 = vpop.f32.mrb[0].mxu0
    %v5288 = vpop.f32.mrb[0].mxu0
    %v5289 = vadd.f32 %v4861, %v5288
    %v5290 = vpop.f32.mrb[0].mxu0
    %5291 = vmatprep.mubr.bf16.mxu0 %v4764
    %5292 = vmatmul.mubr.bf16.gmra.mrb[0].mxu0 %v4763
    %v5293 = vpop.f32.mrb[0].mxu0
    %v5294 = vadd.f32 %v4861, %v5293
    %v5295 = vpop.f32.mrb[0].mxu0
    %v5296 = vpop.f32.mrb[0].mxu0
    %v5297 = vadd.f32 %v4861, %v5296
    %v5298 = vpop.f32.mrb[0].mxu0
    %5299 = vmatprep.mubr.bf16.mxu0 %v4767
    %5300 = vmatmul.mubr.bf16.gmra.mrb[0].mxu0 %v4766
    %v5301 = vpop.f32.mrb[0].mxu0
    %v5302 = vadd.f32 %v4861, %v5301
    %v5303 = vpop.f32.mrb[0].mxu0
    %v5304 = vpop.f32.mrb[0].mxu0
    %v5305 = vadd.f32 %v4861, %v5304
    %v5306 = vpop.f32.mrb[0].mxu0
    %5307 = vmatprep.mubr.bf16.mxu0 %v4770
    %5308 = vmatmul.mubr.bf16.gmra.mrb[0].mxu0 %v4769
    %v5309 = vpop.f32.mrb[0].mxu0
    %v5310 = vadd.f32 %v4861, %v5309
    %v5311 = vpop.f32.mrb[0].mxu0
    %v5312 = vpop.f32.mrb[0].mxu0
    %v5313 = vadd.f32 %v4861, %v5312
    %v5314 = vpop.f32.mrb[0].mxu0
    %5315 = vmatprep.mubr.bf16.mxu0 %v4773
    %5316 = vmatmul.mubr.bf16.gmra.mrb[0].mxu0 %v4772
    %v5317 = vpop.f32.mrb[0].mxu0
    %v5318 = vadd.f32 %v4861, %v5317
    %v5319 = vpop.f32.mrb[0].mxu0
    %v5320 = vpop.f32.mrb[0].mxu0
    %v5321 = vadd.f32 %v4861, %v5320
    %v5322 = vpop.f32.mrb[0].mxu0
    %5323 = vmatprep.mubr.bf16.mxu0 %v4776
    %5324 = vmatmul.mubr.bf16.gmra.mrb[0].mxu0 %v4775
    %v5325 = vpop.f32.mrb[0].mxu0
    %v5326 = vadd.f32 %v4861, %v5325
    %v5327 = vpop.f32.mrb[0].mxu0
    %v5328 = vpop.f32.mrb[0].mxu0
    %v5329 = vadd.f32 %v4861, %v5328
    %v5330 = vpop.f32.mrb[0].mxu0
    %5331 = vmatprep.mubr.bf16.mxu0 %v4779
    %5332 = vmatmul.mubr.bf16.gmra.mrb[0].mxu0 %v4778
    %v5333 = vpop.f32.mrb[0].mxu0
    %v5334 = vadd.f32 %v4861, %v5333
    %v5335 = vpop.f32.mrb[0].mxu0
    %v5336 = vpop.f32.mrb[0].mxu0
    %v5337 = vadd.f32 %v4861, %v5336
    %v5338 = vpop.f32.mrb[0].mxu0
    %5339 = vmatprep.mubr.bf16.mxu0 %v4782
    %5340 = vmatmul.mubr.bf16.gmra.mrb[0].mxu0 %v4781
    %v5341 = vpop.f32.mrb[0].mxu0
    %v5342 = vadd.f32 %v4861, %v5341
    %v5343 = vpop.f32.mrb[0].mxu0
    %v5344 = vpop.f32.mrb[0].mxu0
    %v5345 = vadd.f32 %v4861, %v5344
    %v5346 = vpop.f32.mrb[0].mxu0
    %5347 = vmatprep.mubr.bf16.mxu0 %v4785
    %5348 = vmatmul.mubr.bf16.gmra.mrb[0].mxu0 %v4784
    %v5349 = vpop.f32.mrb[0].mxu0
    %v5350 = vadd.f32 %v4861, %v5349
    %v5351 = vpop.f32.mrb[0].mxu0
    %v5352 = vpop.f32.mrb[0].mxu0
    %v5353 = vadd.f32 %v4861, %v5352
    %v5354 = vpop.f32.mrb[0].mxu0
    %5355 = vmatprep.mubr.bf16.mxu0 %v4788
    %5356 = vmatmul.mubr.bf16.gmra.mrb[0].mxu0 %v4787
    %v5357 = vpop.f32.mrb[0].mxu0
    %v5358 = vadd.f32 %v4861, %v5357
    %v5359 = vpop.f32.mrb[0].mxu0
    %v5360 = vpop.f32.mrb[0].mxu0
    %v5361 = vadd.f32 %v4861, %v5360
    %v5362 = vpop.f32.mrb[0].mxu0
    %5363 = vmatprep.mubr.bf16.mxu0 %v4791
    %5364 = vmatmul.mubr.bf16.gmra.mrb[0].mxu0 %v4790
    %v5365 = vpop.f32.mrb[0].mxu0
    %v5366 = vadd.f32 %v4861, %v5365
    %v5367 = vpop.f32.mrb[0].mxu0
    %v5368 = vpop.f32.mrb[0].mxu0
    %v5369 = vadd.f32 %v4861, %v5368
    %v5370 = vpop.f32.mrb[0].mxu0
    %5371 = vmatprep.mubr.bf16.mxu0 %v4794
    %5372 = vmatmul.mubr.bf16.gmra.mrb[0].mxu0 %v4793
    %v5373 = vpop.f32.mrb[0].mxu0
    %v5374 = vadd.f32 %v4861, %v5373
    %v5375 = vpop.f32.mrb[0].mxu0
    %v5376 = vpop.f32.mrb[0].mxu0
    %v5377 = vadd.f32 %v4861, %v5376
    %v5378 = vpop.f32.mrb[0].mxu0
    %5379 = vmatprep.mubr.bf16.mxu0 %v4797
    %5380 = vmatmul.mubr.bf16.gmra.mrb[0].mxu0 %v4796
    %v5381 = vpop.f32.mrb[0].mxu0
    %v5382 = vadd.f32 %v4861, %v5381
    %v5383 = vpop.f32.mrb[0].mxu0
    %v5384 = vpop.f32.mrb[0].mxu0
    %v5385 = vadd.f32 %v4861, %v5384
    %v5386 = vpop.f32.mrb[0].mxu0
    %5387 = vmatprep.mubr.bf16.mxu0 %v4800
    %5388 = vmatmul.mubr.bf16.gmra.mrb[0].mxu0 %v4799
    %v5389 = vpop.f32.mrb[0].mxu0
    %v5390 = vadd.f32 %v4861, %v5389
    %v5391 = vpop.f32.mrb[0].mxu0
    %v5392 = vpop.f32.mrb[0].mxu0
    %v5393 = vadd.f32 %v4861, %v5392
    %v5394 = vpop.f32.mrb[0].mxu0
    %5395 = vmatprep.mubr.bf16.mxu0 %v4803
    %5396 = vmatmul.mubr.bf16.gmra.mrb[0].mxu0 %v4802
    %v5397 = vpop.f32.mrb[0].mxu0
    %v5398 = vadd.f32 %v4861, %v5397
    %v5399 = vpop.f32.mrb[0].mxu0
    %v5400 = vpop.f32.mrb[0].mxu0
    %v5401 = vadd.f32 %v4861, %v5400
    %v5402 = vpop.f32.mrb[0].mxu0
    %5403 = vmatprep.mubr.bf16.mxu0 %v4806
    %5404 = vmatmul.mubr.bf16.gmra.mrb[0].mxu0 %v4805
    %v5405 = vpop.f32.mrb[0].mxu0
    %v5406 = vadd.f32 %v4861, %v5405
    %v5407 = vpop.f32.mrb[0].mxu0
    %v5408 = vpop.f32.mrb[0].mxu0
    %v5409 = vadd.f32 %v4861, %v5408
    %v5410 = vpop.f32.mrb[0].mxu0
    %5411 = vmatprep.mubr.bf16.mxu0 %v4809
    %5412 = vmatmul.mubr.bf16.gmra.mrb[0].mxu0 %v4808
    %v5413 = vpop.f32.mrb[0].mxu0
    %v5414 = vadd.f32 %v4861, %v5413
    %v5415 = vpop.f32.mrb[0].mxu0
    %v5416 = vpop.f32.mrb[0].mxu0
    %v5417 = vadd.f32 %v4861, %v5416
    %v5418 = vpop.f32.mrb[0].mxu0
    %5419 = vmatprep.mubr.bf16.mxu0 %v4812
    %5420 = vmatmul.mubr.bf16.gmra.mrb[0].mxu0 %v4811
    %v5421 = vpop.f32.mrb[0].mxu0
    %v5422 = vadd.f32 %v4861, %v5421
    %v5423 = vpop.f32.mrb[0].mxu0
    %v5424 = vpop.f32.mrb[0].mxu0
    %v5425 = vadd.f32 %v4861, %v5424
    %v5426 = vpop.f32.mrb[0].mxu0
    %5427 = vmatprep.mubr.bf16.mxu0 %v4815
    %5428 = vmatmul.mubr.bf16.gmra.mrb[0].mxu0 %v4814
    %v5429 = vpop.f32.mrb[0].mxu0
    %v5430 = vadd.f32 %v4861, %v5429
    %v5431 = vpop.f32.mrb[0].mxu0
    %v5432 = vpop.f32.mrb[0].mxu0
    %v5433 = vadd.f32 %v4861, %v5432
    %v5434 = vpop.f32.mrb[0].mxu0
    %5435 = vmatprep.mubr.bf16.mxu0 %v4818
    %5436 = vmatmul.mubr.bf16.gmra.mrb[0].mxu0 %v4817
    %v5437 = vpop.f32.mrb[0].mxu0
    %v5438 = vadd.f32 %v4861, %v5437
    %v5439 = vpop.f32.mrb[0].mxu0
    %v5440 = vpop.f32.mrb[0].mxu0
    %v5441 = vadd.f32 %v4861, %v5440
    %v5442 = vpop.f32.mrb[0].mxu0
    %5443 = vdwg.mxu0
    %5444 = vmatprep.subr.bf16.mxu0 0
    %5445 = vmatpush1.bf16.msra.mxu0 %v4951
    %5446 = vmatprep.subr.bf16.mxu0 0
    %5447 = vmatpush1.bf16.msra.mxu0 %v4952
    %5448 = vmatprep.subr.bf16.mxu0 0
    %5449 = vmatpush1.bf16.msra.mxu0 0
    %5450 = vmatprep.subr.bf16.mxu0 0
    %5451 = vmatpush1.bf16.msra.mxu0 0
    %5452 = vmatprep.subr.bf16.mxu0 0
    %5453 = vmatpush1.bf16.msra.mxu0 0
    %5454 = vmatprep.subr.bf16.mxu0 0
    %5455 = vmatpush1.bf16.msra.mxu0 0
    %5456 = vmatprep.subr.bf16.mxu0 0
    %5457 = vmatpush1.bf16.msra.mxu0 0
    %5458 = vmatprep.subr.bf16.mxu0 0
    %5459 = vmatpush1.bf16.msra.mxu0 0
    %5460 = vmatprep.subr.bf16.mxu0 0
    %5461 = vmatpush1.bf16.msra.mxu0 0
    %5462 = vmatprep.subr.bf16.mxu0 0
    %5463 = vmatpush1.bf16.msra.mxu0 0
    %5464 = vmatprep.subr.bf16.mxu0 0
    %5465 = vmatpush1.bf16.msra.mxu0 0
    %5466 = vmatprep.subr.bf16.mxu0 0
    %5467 = vmatpush1.bf16.msra.mxu0 0
    %5468 = vmatprep.subr.bf16.mxu0 0
    %5469 = vmatpush1.bf16.msra.mxu0 0
    %5470 = vmatprep.subr.bf16.mxu0 0
    %5471 = vmatpush1.bf16.msra.mxu0 0
    %5472 = vmatprep.subr.bf16.mxu0 0
    %5473 = vmatpush1.bf16.msra.mxu0 0
    %5474 = vmatprep.subr.bf16.mxu0 0
    %5475 = vmatpush1.bf16.msra.mxu0 0
    %5476 = vmatprep.mubr.bf16.mxu0 0
    %5477 = vmatmul.mubr.bf16.gmra.mrb[0].mxu0 %v4972
    %v5478 = vpop.f32.mrb[0].mxu0
    %v5479 = vadd.f32 %v5126, %v5478
    %v5480 = vpop.f32.mrb[0].mxu0
    %v5481 = vpop.f32.mrb[0].mxu0
    %v5482 = vadd.f32 %v5129, %v5481
    %v5483 = vpop.f32.mrb[0].mxu0
    %5484 = vmatprep.mubr.bf16.mxu0 0
    %5485 = vmatmul.mubr.bf16.gmra.mrb[0].mxu0 %v4975
    %v5486 = vpop.f32.mrb[0].mxu0
    %v5487 = vadd.f32 %v5134, %v5486
    %v5488 = vpop.f32.mrb[0].mxu0
    %v5489 = vpop.f32.mrb[0].mxu0
    %v5490 = vadd.f32 %v5137, %v5489
    %v5491 = vpop.f32.mrb[0].mxu0
    %5492 = vmatprep.mubr.bf16.mxu0 0
    %5493 = vmatmul.mubr.bf16.gmra.mrb[0].mxu0 %v4978
    %v5494 = vpop.f32.mrb[0].mxu0
    %v5495 = vadd.f32 %v5142, %v5494
    %v5496 = vpop.f32.mrb[0].mxu0
    %v5497 = vpop.f32.mrb[0].mxu0
    %v5498 = vadd.f32 %v5145, %v5497
    %v5499 = vpop.f32.mrb[0].mxu0
    %5500 = vmatprep.mubr.bf16.mxu0 0
    %5501 = vmatmul.mubr.bf16.gmra.mrb[0].mxu0 %v4981
    %v5502 = vpop.f32.mrb[0].mxu0
    %v5503 = vadd.f32 %v5150, %v5502
    %v5504 = vpop.f32.mrb[0].mxu0
    %v5505 = vpop.f32.mrb[0].mxu0
    %v5506 = vadd.f32 %v5153, %v5505
    %v5507 = vpop.f32.mrb[0].mxu0
    %5508 = vmatprep.mubr.bf16.mxu0 0
    %5509 = vmatmul.mubr.bf16.gmra.mrb[0].mxu0 %v4984
    %v5510 = vpop.f32.mrb[0].mxu0
    %v5511 = vadd.f32 %v5158, %v5510
    %v5512 = vpop.f32.mrb[0].mxu0
    %v5513 = vpop.f32.mrb[0].mxu0
    %v5514 = vadd.f32 %v5161, %v5513
    %v5515 = vpop.f32.mrb[0].mxu0
    %5516 = vmatprep.mubr.bf16.mxu0 0
    %5517 = vmatmul.mubr.bf16.gmra.mrb[0].mxu0 %v4987
    %v5518 = vpop.f32.mrb[0].mxu0
    %v5519 = vadd.f32 %v5166, %v5518
    %v5520 = vpop.f32.mrb[0].mxu0
    %v5521 = vpop.f32.mrb[0].mxu0
    %v5522 = vadd.f32 %v5169, %v5521
    %v5523 = vpop.f32.mrb[0].mxu0
    %5524 = vmatprep.mubr.bf16.mxu0 0
    %5525 = vmatmul.mubr.bf16.gmra.mrb[0].mxu0 %v4990
    %v5526 = vpop.f32.mrb[0].mxu0
    %v5527 = vadd.f32 %v5174, %v5526
    %v5528 = vpop.f32.mrb[0].mxu0
    %v5529 = vpop.f32.mrb[0].mxu0
    %v5530 = vadd.f32 %v5177, %v5529
    %v5531 = vpop.f32.mrb[0].mxu0
    %5532 = vmatprep.mubr.bf16.mxu0 0
    %5533 = vmatmul.mubr.bf16.gmra.mrb[0].mxu0 %v4993
    %v5534 = vpop.f32.mrb[0].mxu0
    %v5535 = vadd.f32 %v5182, %v5534
    %v5536 = vpop.f32.mrb[0].mxu0
    %v5537 = vpop.f32.mrb[0].mxu0
    %v5538 = vadd.f32 %v5185, %v5537
    %v5539 = vpop.f32.mrb[0].mxu0
    %5540 = vmatprep.mubr.bf16.mxu0 0
    %5541 = vmatmul.mubr.bf16.gmra.mrb[0].mxu0 %v4996
    %v5542 = vpop.f32.mrb[0].mxu0
    %v5543 = vadd.f32 %v5190, %v5542
    %v5544 = vpop.f32.mrb[0].mxu0
    %v5545 = vpop.f32.mrb[0].mxu0
    %v5546 = vadd.f32 %v5193, %v5545
    %v5547 = vpop.f32.mrb[0].mxu0
    %5548 = vmatprep.mubr.bf16.mxu0 0
    %5549 = vmatmul.mubr.bf16.gmra.mrb[0].mxu0 %v4999
    %v5550 = vpop.f32.mrb[0].mxu0
    %v5551 = vadd.f32 %v5198, %v5550
    %v5552 = vpop.f32.mrb[0].mxu0
    %v5553 = vpop.f32.mrb[0].mxu0
    %v5554 = vadd.f32 %v5201, %v5553
    %v5555 = vpop.f32.mrb[0].mxu0
    %5556 = vmatprep.mubr.bf16.mxu0 0
    %5557 = vmatmul.mubr.bf16.gmra.mrb[0].mxu0 %v5002
    %v5558 = vpop.f32.mrb[0].mxu0
    %v5559 = vadd.f32 %v5206, %v5558
    %v5560 = vpop.f32.mrb[0].mxu0
    %v5561 = vpop.f32.mrb[0].mxu0
    %v5562 = vadd.f32 %v5209, %v5561
    %v5563 = vpop.f32.mrb[0].mxu0
    %5564 = vmatprep.mubr.bf16.mxu0 0
    %5565 = vmatmul.mubr.bf16.gmra.mrb[0].mxu0 %v5005
    %v5566 = vpop.f32.mrb[0].mxu0
    %v5567 = vadd.f32 %v5214, %v5566
    %v5568 = vpop.f32.mrb[0].mxu0
    %v5569 = vpop.f32.mrb[0].mxu0
    %v5570 = vadd.f32 %v5217, %v5569
    %v5571 = vpop.f32.mrb[0].mxu0
    %5572 = vmatprep.mubr.bf16.mxu0 0
    %5573 = vmatmul.mubr.bf16.gmra.mrb[0].mxu0 %v5008
    %v5574 = vpop.f32.mrb[0].mxu0
    %v5575 = vadd.f32 %v5222, %v5574
    %v5576 = vpop.f32.mrb[0].mxu0
    %v5577 = vpop.f32.mrb[0].mxu0
    %v5578 = vadd.f32 %v5225, %v5577
    %v5579 = vpop.f32.mrb[0].mxu0
    %5580 = vmatprep.mubr.bf16.mxu0 0
    %5581 = vmatmul.mubr.bf16.gmra.mrb[0].mxu0 %v5011
    %v5582 = vpop.f32.mrb[0].mxu0
    %v5583 = vadd.f32 %v5230, %v5582
    %v5584 = vpop.f32.mrb[0].mxu0
    %v5585 = vpop.f32.mrb[0].mxu0
    %v5586 = vadd.f32 %v5233, %v5585
    %v5587 = vpop.f32.mrb[0].mxu0
    %5588 = vmatprep.mubr.bf16.mxu0 0
    %5589 = vmatmul.mubr.bf16.gmra.mrb[0].mxu0 %v5014
    %v5590 = vpop.f32.mrb[0].mxu0
    %v5591 = vadd.f32 %v5238, %v5590
    %v5592 = vpop.f32.mrb[0].mxu0
    %v5593 = vpop.f32.mrb[0].mxu0
    %v5594 = vadd.f32 %v5241, %v5593
    %v5595 = vpop.f32.mrb[0].mxu0
    %5596 = vmatprep.mubr.bf16.mxu0 0
    %5597 = vmatmul.mubr.bf16.gmra.mrb[0].mxu0 %v5017
    %v5598 = vpop.f32.mrb[0].mxu0
    %v5599 = vadd.f32 %v5246, %v5598
    %v5600 = vpop.f32.mrb[0].mxu0
    %v5601 = vpop.f32.mrb[0].mxu0
    %v5602 = vadd.f32 %v5249, %v5601
    %v5603 = vpop.f32.mrb[0].mxu0
    %5604 = vmatprep.mubr.bf16.mxu0 0
    %5605 = vmatmul.mubr.bf16.gmra.mrb[0].mxu0 %v5020
    %v5606 = vpop.f32.mrb[0].mxu0
    %v5607 = vadd.f32 %v5254, %v5606
    %v5608 = vpop.f32.mrb[0].mxu0
    %v5609 = vpop.f32.mrb[0].mxu0
    %v5610 = vadd.f32 %v5257, %v5609
    %v5611 = vpop.f32.mrb[0].mxu0
    %5612 = vmatprep.mubr.bf16.mxu0 0
    %5613 = vmatmul.mubr.bf16.gmra.mrb[0].mxu0 %v5023
    %v5614 = vpop.f32.mrb[0].mxu0
    %v5615 = vadd.f32 %v5262, %v5614
    %v5616 = vpop.f32.mrb[0].mxu0
    %v5617 = vpop.f32.mrb[0].mxu0
    %v5618 = vadd.f32 %v5265, %v5617
    %v5619 = vpop.f32.mrb[0].mxu0
    %5620 = vmatprep.mubr.bf16.mxu0 0
    %5621 = vmatmul.mubr.bf16.gmra.mrb[0].mxu0 %v5026
    %v5622 = vpop.f32.mrb[0].mxu0
    %v5623 = vadd.f32 %v5270, %v5622
    %v5624 = vpop.f32.mrb[0].mxu0
    %v5625 = vpop.f32.mrb[0].mxu0
    %v5626 = vadd.f32 %v5273, %v5625
    %v5627 = vpop.f32.mrb[0].mxu0
    %5628 = vmatprep.mubr.bf16.mxu0 0
    %5629 = vmatmul.mubr.bf16.gmra.mrb[0].mxu0 %v5029
    %v5630 = vpop.f32.mrb[0].mxu0
    %v5631 = vadd.f32 %v5278, %v5630
    %v5632 = vpop.f32.mrb[0].mxu0
    %v5633 = vpop.f32.mrb[0].mxu0
    %v5634 = vadd.f32 %v5281, %v5633
    %v5635 = vpop.f32.mrb[0].mxu0
    %5636 = vmatprep.mubr.bf16.mxu0 0
    %5637 = vmatmul.mubr.bf16.gmra.mrb[0].mxu0 %v5032
    %v5638 = vpop.f32.mrb[0].mxu0
    %v5639 = vadd.f32 %v5286, %v5638
    %v5640 = vpop.f32.mrb[0].mxu0
    %v5641 = vpop.f32.mrb[0].mxu0
    %v5642 = vadd.f32 %v5289, %v5641
    %v5643 = vpop.f32.mrb[0].mxu0
    %5644 = vmatprep.mubr.bf16.mxu0 0
    %5645 = vmatmul.mubr.bf16.gmra.mrb[0].mxu0 %v5035
    %v5646 = vpop.f32.mrb[0].mxu0
    %v5647 = vadd.f32 %v5294, %v5646
    %v5648 = vpop.f32.mrb[0].mxu0
    %v5649 = vpop.f32.mrb[0].mxu0
    %v5650 = vadd.f32 %v5297, %v5649
    %v5651 = vpop.f32.mrb[0].mxu0
    %5652 = vmatprep.mubr.bf16.mxu0 0
    %5653 = vmatmul.mubr.bf16.gmra.mrb[0].mxu0 %v5038
    %v5654 = vpop.f32.mrb[0].mxu0
    %v5655 = vadd.f32 %v5302, %v5654
    %v5656 = vpop.f32.mrb[0].mxu0
    %v5657 = vpop.f32.mrb[0].mxu0
    %v5658 = vadd.f32 %v5305, %v5657
    %v5659 = vpop.f32.mrb[0].mxu0
    %5660 = vmatprep.mubr.bf16.mxu0 0
    %5661 = vmatmul.mubr.bf16.gmra.mrb[0].mxu0 %v5041
    %v5662 = vpop.f32.mrb[0].mxu0
    %v5663 = vadd.f32 %v5310, %v5662
    %v5664 = vpop.f32.mrb[0].mxu0
    %v5665 = vpop.f32.mrb[0].mxu0
    %v5666 = vadd.f32 %v5313, %v5665
    %v5667 = vpop.f32.mrb[0].mxu0
    %5668 = vmatprep.mubr.bf16.mxu0 0
    %5669 = vmatmul.mubr.bf16.gmra.mrb[0].mxu0 %v5044
    %v5670 = vpop.f32.mrb[0].mxu0
    %v5671 = vadd.f32 %v5318, %v5670
    %v5672 = vpop.f32.mrb[0].mxu0
    %v5673 = vpop.f32.mrb[0].mxu0
    %v5674 = vadd.f32 %v5321, %v5673
    %v5675 = vpop.f32.mrb[0].mxu0
    %5676 = vmatprep.mubr.bf16.mxu0 0
    %5677 = vmatmul.mubr.bf16.gmra.mrb[0].mxu0 %v5047
    %v5678 = vpop.f32.mrb[0].mxu0
    %v5679 = vadd.f32 %v5326, %v5678
    %v5680 = vpop.f32.mrb[0].mxu0
    %v5681 = vpop.f32.mrb[0].mxu0
    %v5682 = vadd.f32 %v5329, %v5681
    %v5683 = vpop.f32.mrb[0].mxu0
    %5684 = vmatprep.mubr.bf16.mxu0 0
    %5685 = vmatmul.mubr.bf16.gmra.mrb[0].mxu0 %v5050
    %v5686 = vpop.f32.mrb[0].mxu0
    %v5687 = vadd.f32 %v5334, %v5686
    %v5688 = vpop.f32.mrb[0].mxu0
    %v5689 = vpop.f32.mrb[0].mxu0
    %v5690 = vadd.f32 %v5337, %v5689
    %v5691 = vpop.f32.mrb[0].mxu0
    %5692 = vmatprep.mubr.bf16.mxu0 0
    %5693 = vmatmul.mubr.bf16.gmra.mrb[0].mxu0 %v5053
    %v5694 = vpop.f32.mrb[0].mxu0
    %v5695 = vadd.f32 %v5342, %v5694
    %v5696 = vpop.f32.mrb[0].mxu0
    %v5697 = vpop.f32.mrb[0].mxu0
    %v5698 = vadd.f32 %v5345, %v5697
    %v5699 = vpop.f32.mrb[0].mxu0
    %5700 = vmatprep.mubr.bf16.mxu0 0
    %5701 = vmatmul.mubr.bf16.gmra.mrb[0].mxu0 %v5056
    %v5702 = vpop.f32.mrb[0].mxu0
    %v5703 = vadd.f32 %v5350, %v5702
    %v5704 = vpop.f32.mrb[0].mxu0
    %v5705 = vpop.f32.mrb[0].mxu0
    %v5706 = vadd.f32 %v5353, %v5705
    %v5707 = vpop.f32.mrb[0].mxu0
    %5708 = vmatprep.mubr.bf16.mxu0 0
    %5709 = vmatmul.mubr.bf16.gmra.mrb[0].mxu0 %v5059
    %v5710 = vpop.f32.mrb[0].mxu0
    %v5711 = vadd.f32 %v5358, %v5710
    %v5712 = vpop.f32.mrb[0].mxu0
    %v5713 = vpop.f32.mrb[0].mxu0
    %v5714 = vadd.f32 %v5361, %v5713
    %v5715 = vpop.f32.mrb[0].mxu0
    %5716 = vmatprep.mubr.bf16.mxu0 0
    %5717 = vmatmul.mubr.bf16.gmra.mrb[0].mxu0 %v5062
    %v5718 = vpop.f32.mrb[0].mxu0
    %v5719 = vadd.f32 %v5366, %v5718
    %v5720 = vpop.f32.mrb[0].mxu0
    %v5721 = vpop.f32.mrb[0].mxu0
    %v5722 = vadd.f32 %v5369, %v5721
    %v5723 = vpop.f32.mrb[0].mxu0
    %5724 = vmatprep.mubr.bf16.mxu0 0
    %5725 = vmatmul.mubr.bf16.gmra.mrb[0].mxu0 %v5065
    %v5726 = vpop.f32.mrb[0].mxu0
    %v5727 = vadd.f32 %v5374, %v5726
    %v5728 = vpop.f32.mrb[0].mxu0
    %v5729 = vpop.f32.mrb[0].mxu0
    %v5730 = vadd.f32 %v5377, %v5729
    %v5731 = vpop.f32.mrb[0].mxu0
    %5732 = vmatprep.mubr.bf16.mxu0 0
    %5733 = vmatmul.mubr.bf16.gmra.mrb[0].mxu0 %v5068
    %v5734 = vpop.f32.mrb[0].mxu0
    %v5735 = vadd.f32 %v5382, %v5734
    %v5736 = vpop.f32.mrb[0].mxu0
    %v5737 = vpop.f32.mrb[0].mxu0
    %v5738 = vadd.f32 %v5385, %v5737
    %v5739 = vpop.f32.mrb[0].mxu0
    %5740 = vmatprep.mubr.bf16.mxu0 0
    %5741 = vmatmul.mubr.bf16.gmra.mrb[0].mxu0 %v5071
    %v5742 = vpop.f32.mrb[0].mxu0
    %v5743 = vadd.f32 %v5390, %v5742
    %v5744 = vpop.f32.mrb[0].mxu0
    %v5745 = vpop.f32.mrb[0].mxu0
    %v5746 = vadd.f32 %v5393, %v5745
    %v5747 = vpop.f32.mrb[0].mxu0
    %5748 = vmatprep.mubr.bf16.mxu0 0
    %5749 = vmatmul.mubr.bf16.gmra.mrb[0].mxu0 %v5074
    %v5750 = vpop.f32.mrb[0].mxu0
    %v5751 = vadd.f32 %v5398, %v5750
    %v5752 = vpop.f32.mrb[0].mxu0
    %v5753 = vpop.f32.mrb[0].mxu0
    %v5754 = vadd.f32 %v5401, %v5753
    %v5755 = vpop.f32.mrb[0].mxu0
    %5756 = vmatprep.mubr.bf16.mxu0 0
    %5757 = vmatmul.mubr.bf16.gmra.mrb[0].mxu0 %v5077
    %v5758 = vpop.f32.mrb[0].mxu0
    %v5759 = vadd.f32 %v5406, %v5758
    %v5760 = vpop.f32.mrb[0].mxu0
    %v5761 = vpop.f32.mrb[0].mxu0
    %v5762 = vadd.f32 %v5409, %v5761
    %v5763 = vpop.f32.mrb[0].mxu0
    %5764 = vmatprep.mubr.bf16.mxu0 0
    %5765 = vmatmul.mubr.bf16.gmra.mrb[0].mxu0 %v5080
    %v5766 = vpop.f32.mrb[0].mxu0
    %v5767 = vadd.f32 %v5414, %v5766
    %v5768 = vpop.f32.mrb[0].mxu0
    %v5769 = vpop.f32.mrb[0].mxu0
    %v5770 = vadd.f32 %v5417, %v5769
    %v5771 = vpop.f32.mrb[0].mxu0
    %5772 = vmatprep.mubr.bf16.mxu0 0
    %5773 = vmatmul.mubr.bf16.gmra.mrb[0].mxu0 %v5083
    %v5774 = vpop.f32.mrb[0].mxu0
    %v5775 = vadd.f32 %v5422, %v5774
    %v5776 = vpop.f32.mrb[0].mxu0
    %v5777 = vpop.f32.mrb[0].mxu0
    %v5778 = vadd.f32 %v5425, %v5777
    %v5779 = vpop.f32.mrb[0].mxu0
    %5780 = vmatprep.mubr.bf16.mxu0 0
    %5781 = vmatmul.mubr.bf16.gmra.mrb[0].mxu0 %v5086
    %v5782 = vpop.f32.mrb[0].mxu0
    %v5783 = vadd.f32 %v5430, %v5782
    %v5784 = vpop.f32.mrb[0].mxu0
    %v5785 = vpop.f32.mrb[0].mxu0
    %v5786 = vadd.f32 %v5433, %v5785
    %v5787 = vpop.f32.mrb[0].mxu0
    %5788 = vmatprep.mubr.bf16.mxu0 0
    %5789 = vmatmul.mubr.bf16.gmra.mrb[0].mxu0 %v5089
    %v5790 = vpop.f32.mrb[0].mxu0
    %v5791 = vadd.f32 %v5438, %v5790
    %v5792 = vpop.f32.mrb[0].mxu0
    %v5793 = vpop.f32.mrb[0].mxu0
    %v5794 = vadd.f32 %v5441, %v5793
    %v5795 = vpop.f32.mrb[0].mxu0
    %5796 = vdwg.mxu0
    %v5797 = vmax.f32 %v5479, 0.0
    %v5798 = vmax.f32 %v5482, 0.0
    %v5799 = vmax.f32 %v5487, 0.0
    %v5800 = vmax.f32 %v5490, 0.0
    %v5801 = vmax.f32 %v5495, 0.0
    %v5802 = vmax.f32 %v5498, 0.0
    %v5803 = vmax.f32 %v5503, 0.0
    %v5804 = vmax.f32 %v5506, 0.0
    %v5805 = vmax.f32 %v5511, 0.0
    %v5806 = vmax.f32 %v5514, 0.0
    %v5807 = vmax.f32 %v5519, 0.0
    %v5808 = vmax.f32 %v5522, 0.0
    %v5809 = vmax.f32 %v5527, 0.0
    %v5810 = vmax.f32 %v5530, 0.0
    %v5811 = vmax.f32 %v5535, 0.0
    %v5812 = vmax.f32 %v5538, 0.0
    %v5813 = vmax.f32 %v5543, 0.0
    %v5814 = vmax.f32 %v5546, 0.0
    %v5815 = vmax.f32 %v5551, 0.0
    %v5816 = vmax.f32 %v5554, 0.0
    %v5817 = vmax.f32 %v5559, 0.0
    %v5818 = vmax.f32 %v5562, 0.0
    %v5819 = vmax.f32 %v5567, 0.0
    %v5820 = vmax.f32 %v5570, 0.0
    %v5821 = vmax.f32 %v5575, 0.0
    %v5822 = vmax.f32 %v5578, 0.0
    %v5823 = vmax.f32 %v5583, 0.0
    %v5824 = vmax.f32 %v5586, 0.0
    %v5825 = vmax.f32 %v5591, 0.0
    %v5826 = vmax.f32 %v5594, 0.0
    %v5827 = vmax.f32 %v5599, 0.0
    %v5828 = vmax.f32 %v5602, 0.0
    %v5829 = vmax.f32 %v5607, 0.0
    %v5830 = vmax.f32 %v5610, 0.0
    %v5831 = vmax.f32 %v5615, 0.0
    %v5832 = vmax.f32 %v5618, 0.0
    %v5833 = vmax.f32 %v5623, 0.0
    %v5834 = vmax.f32 %v5626, 0.0
    %v5835 = vmax.f32 %v5631, 0.0
    %v5836 = vmax.f32 %v5634, 0.0
    %v5837 = vmax.f32 %v5639, 0.0
    %v5838 = vmax.f32 %v5642, 0.0
    %v5839 = vmax.f32 %v5647, 0.0
    %v5840 = vmax.f32 %v5650, 0.0
    %v5841 = vmax.f32 %v5655, 0.0
    %v5842 = vmax.f32 %v5658, 0.0
    %v5843 = vmax.f32 %v5663, 0.0
    %v5844 = vmax.f32 %v5666, 0.0
    %v5845 = vmax.f32 %v5671, 0.0
    %v5846 = vmax.f32 %v5674, 0.0
    %v5847 = vmax.f32 %v5679, 0.0
    %v5848 = vmax.f32 %v5682, 0.0
    %v5849 = vmax.f32 %v5687, 0.0
    %v5850 = vmax.f32 %v5690, 0.0
    %v5851 = vmax.f32 %v5695, 0.0
    %v5852 = vmax.f32 %v5698, 0.0
    %v5853 = vmax.f32 %v5703, 0.0
    %v5854 = vmax.f32 %v5706, 0.0
    %v5855 = vmax.f32 %v5711, 0.0
    %v5856 = vmax.f32 %v5714, 0.0
    %v5857 = vmax.f32 %v5719, 0.0
    %v5858 = vmax.f32 %v5722, 0.0
    %v5859 = vmax.f32 %v5727, 0.0
    %v5860 = vmax.f32 %v5730, 0.0
    %v5861 = vmax.f32 %v5735, 0.0
    %v5862 = vmax.f32 %v5738, 0.0
    %v5863 = vmax.f32 %v5743, 0.0
    %v5864 = vmax.f32 %v5746, 0.0
    %v5865 = vmax.f32 %v5751, 0.0
    %v5866 = vmax.f32 %v5754, 0.0
    %v5867 = vmax.f32 %v5759, 0.0
    %v5868 = vmax.f32 %v5762, 0.0
    %v5869 = vmax.f32 %v5767, 0.0
    %v5870 = vmax.f32 %v5770, 0.0
    %v5871 = vmax.f32 %v5775, 0.0
    %v5872 = vmax.f32 %v5778, 0.0
    %v5873 = vmax.f32 %v5783, 0.0
    %v5874 = vmax.f32 %v5786, 0.0
    %v5875 = vmax.f32 %v5791, 0.0
    %v5876 = vmax.f32 %v5794, 0.0
    %v5877 = vpack.c.bf16 %v5798, %v5797
    %v5878 = vpack.c.bf16 %v5800, %v5799
    %v5879 = vpack.c.bf16 %v5802, %v5801
    %v5880 = vpack.c.bf16 %v5804, %v5803
    %v5881 = vpack.c.bf16 %v5806, %v5805
    %v5882 = vpack.c.bf16 %v5808, %v5807
    %v5883 = vpack.c.bf16 %v5810, %v5809
    %v5884 = vpack.c.bf16 %v5812, %v5811
    %v5885 = vpack.c.bf16 %v5814, %v5813
    %v5886 = vpack.c.bf16 %v5816, %v5815
    %v5887 = vpack.c.bf16 %v5818, %v5817
    %v5888 = vpack.c.bf16 %v5820, %v5819
    %v5889 = vpack.c.bf16 %v5822, %v5821
    %v5890 = vpack.c.bf16 %v5824, %v5823
    %v5891 = vpack.c.bf16 %v5826, %v5825
    %v5892 = vpack.c.bf16 %v5828, %v5827
    %v5893 = vpack.c.bf16 %v5830, %v5829
    %v5894 = vpack.c.bf16 %v5832, %v5831
    %v5895 = vpack.c.bf16 %v5834, %v5833
    %v5896 = vpack.c.bf16 %v5836, %v5835
    %v5897 = vpack.c.bf16 %v5838, %v5837
    %v5898 = vpack.c.bf16 %v5840, %v5839
    %v5899 = vpack.c.bf16 %v5842, %v5841
    %v5900 = vpack.c.bf16 %v5844, %v5843
    %v5901 = vpack.c.bf16 %v5846, %v5845
    %v5902 = vpack.c.bf16 %v5848, %v5847
    %v5903 = vpack.c.bf16 %v5850, %v5849
    %v5904 = vpack.c.bf16 %v5852, %v5851
    %v5905 = vpack.c.bf16 %v5854, %v5853
    %v5906 = vpack.c.bf16 %v5856, %v5855
    %v5907 = vpack.c.bf16 %v5858, %v5857
    %v5908 = vpack.c.bf16 %v5860, %v5859
    %v5909 = vpack.c.bf16 %v5862, %v5861
    %v5910 = vpack.c.bf16 %v5864, %v5863
    %v5911 = vpack.c.bf16 %v5866, %v5865
    %v5912 = vpack.c.bf16 %v5868, %v5867
    %v5913 = vpack.c.bf16 %v5870, %v5869
    %v5914 = vpack.c.bf16 %v5872, %v5871
    %v5915 = vpack.c.bf16 %v5874, %v5873
    %v5916 = vpack.c.bf16 %v5876, %v5875
    %vm5917 = vcmask 523264
    %5918 = vst.msk [vmem:[#allocation4] sm:$0xff] %vm5917, %v5877
    %5919 = vst.msk [vmem:[#allocation4 + $0x8] sm:$0xff] %vm5917, %v5878
    %5920 = vst.msk [vmem:[#allocation4 + $0x10] sm:$0xff] %vm5917, %v5879
    %5921 = vst.msk [vmem:[#allocation4 + $0x18] sm:$0xff] %vm5917, %v5880
    %5922 = vst.msk [vmem:[#allocation4 + $0x20] sm:$0xff] %vm5917, %v5881
    %5923 = vst.msk [vmem:[#allocation4 + $0x28] sm:$0xff] %vm5917, %v5882
    %5924 = vst.msk [vmem:[#allocation4 + $0x30] sm:$0xff] %vm5917, %v5883
    %5925 = vst.msk [vmem:[#allocation4 + $0x38] sm:$0xff] %vm5917, %v5884
    %5926 = vst.msk [vmem:[#allocation4 + $0x40] sm:$0xff] %vm5917, %v5885
    %5927 = vst.msk [vmem:[#allocation4 + $0x48] sm:$0xff] %vm5917, %v5886
    %5928 = vst.msk [vmem:[#allocation4 + $0x50] sm:$0xff] %vm5917, %v5887
    %5929 = vst.msk [vmem:[#allocation4 + $0x58] sm:$0xff] %vm5917, %v5888
    %5930 = vst.msk [vmem:[#allocation4 + $0x60] sm:$0xff] %vm5917, %v5889
    %5931 = vst.msk [vmem:[#allocation4 + $0x68] sm:$0xff] %vm5917, %v5890
    %5932 = vst.msk [vmem:[#allocation4 + $0x70] sm:$0xff] %vm5917, %v5891
    %5933 = vst.msk [vmem:[#allocation4 + $0x78] sm:$0xff] %vm5917, %v5892
    %5934 = vst.msk [vmem:[#allocation4 + $0x80] sm:$0xff] %vm5917, %v5893
    %5935 = vst.msk [vmem:[#allocation4 + $0x88] sm:$0xff] %vm5917, %v5894
    %5936 = vst.msk [vmem:[#allocation4 + $0x90] sm:$0xff] %vm5917, %v5895
    %5937 = vst.msk [vmem:[#allocation4 + $0x98] sm:$0xff] %vm5917, %v5896
    %5938 = vst.msk [vmem:[#allocation4 + $0xa0] sm:$0xff] %vm5917, %v5897
    %5939 = vst.msk [vmem:[#allocation4 + $0xa8] sm:$0xff] %vm5917, %v5898
    %5940 = vst.msk [vmem:[#allocation4 + $0xb0] sm:$0xff] %vm5917, %v5899
    %5941 = vst.msk [vmem:[#allocation4 + $0xb8] sm:$0xff] %vm5917, %v5900
    %5942 = vst.msk [vmem:[#allocation4 + $0xc0] sm:$0xff] %vm5917, %v5901
    %5943 = vst.msk [vmem:[#allocation4 + $0xc8] sm:$0xff] %vm5917, %v5902
    %5944 = vst.msk [vmem:[#allocation4 + $0xd0] sm:$0xff] %vm5917, %v5903
    %5945 = vst.msk [vmem:[#allocation4 + $0xd8] sm:$0xff] %vm5917, %v5904
    %5946 = vst.msk [vmem:[#allocation4 + $0xe0] sm:$0xff] %vm5917, %v5905
    %5947 = vst.msk [vmem:[#allocation4 + $0xe8] sm:$0xff] %vm5917, %v5906
    %5948 = vst.msk [vmem:[#allocation4 + $0xf0] sm:$0xff] %vm5917, %v5907
    %5949 = vst.msk [vmem:[#allocation4 + $0xf8] sm:$0xff] %vm5917, %v5908
    %5950 = vst.msk [vmem:[#allocation4 + $0x100] sm:$0xff] %vm5917, %v5909
    %5951 = vst.msk [vmem:[#allocation4 + $0x108] sm:$0xff] %vm5917, %v5910
    %5952 = vst.msk [vmem:[#allocation4 + $0x110] sm:$0xff] %vm5917, %v5911
    %5953 = vst.msk [vmem:[#allocation4 + $0x118] sm:$0xff] %vm5917, %v5912
    %5954 = vst.msk [vmem:[#allocation4 + $0x120] sm:$0xff] %vm5917, %v5913
    %5955 = vst.msk [vmem:[#allocation4 + $0x128] sm:$0xff] %vm5917, %v5914
    %5956 = vst.msk [vmem:[#allocation4 + $0x130] sm:$0xff] %vm5917, %v5915
    %5957 = vst.msk [vmem:[#allocation4 + $0x138] sm:$0xff] %vm5917, %v5916
    %v5958 = vld [vmem:[#allocation4] sm:$0xff]
    %5959 = vst.msk [vmem:[#allocation5] sm:$0xff] %vm5917, %v5958
    %v5960 = vld [vmem:[#allocation4 + $0x8] sm:$0xff]
    %5962 = vrot.lane.b32.xlu0 %v5960, 64
    %v5963 = vpop.permute.xlu0 %5962
    %vm5965 = vcmask 1048064
    %5966 = vst.msk [vmem:[#allocation5] sm:$0xff] %vm5965, %v5963
    %v5967 = vld [vmem:[#allocation4 + $0x10] sm:$0xff]
    %5968 = vst.msk [vmem:[#allocation5 + $0x8] sm:$0xff] %vm5917, %v5967
    %v5969 = vld [vmem:[#allocation4 + $0x18] sm:$0xff]
    %5971 = vrot.lane.b32.xlu0 %v5969, 64
    %v5972 = vpop.permute.xlu0 %5971
    %5974 = vst.msk [vmem:[#allocation5 + $0x8] sm:$0xff] %vm5965, %v5972
    %v5975 = vld [vmem:[#allocation4 + $0x20] sm:$0xff]
    %5976 = vst.msk [vmem:[#allocation5 + $0x10] sm:$0xff] %vm5917, %v5975
    %v5977 = vld [vmem:[#allocation4 + $0x28] sm:$0xff]
    %5979 = vrot.lane.b32.xlu0 %v5977, 64
    %v5980 = vpop.permute.xlu0 %5979
    %5982 = vst.msk [vmem:[#allocation5 + $0x10] sm:$0xff] %vm5965, %v5980
    %v5983 = vld [vmem:[#allocation4 + $0x30] sm:$0xff]
    %5984 = vst.msk [vmem:[#allocation5 + $0x18] sm:$0xff] %vm5917, %v5983
    %v5985 = vld [vmem:[#allocation4 + $0x38] sm:$0xff]
    %5987 = vrot.lane.b32.xlu0 %v5985, 64
    %v5988 = vpop.permute.xlu0 %5987
    %5990 = vst.msk [vmem:[#allocation5 + $0x18] sm:$0xff] %vm5965, %v5988
    %v5991 = vld [vmem:[#allocation4 + $0x40] sm:$0xff]
    %5992 = vst.msk [vmem:[#allocation5 + $0x20] sm:$0xff] %vm5917, %v5991
    %v5993 = vld [vmem:[#allocation4 + $0x48] sm:$0xff]
    %5995 = vrot.lane.b32.xlu0 %v5993, 64
    %v5996 = vpop.permute.xlu0 %5995
    %5998 = vst.msk [vmem:[#allocation5 + $0x20] sm:$0xff] %vm5965, %v5996
    %v5999 = vld [vmem:[#allocation4 + $0x50] sm:$0xff]
    %6000 = vst.msk [vmem:[#allocation5 + $0x28] sm:$0xff] %vm5917, %v5999
    %v6001 = vld [vmem:[#allocation4 + $0x58] sm:$0xff]
    %6003 = vrot.lane.b32.xlu0 %v6001, 64
    %v6004 = vpop.permute.xlu0 %6003
    %6006 = vst.msk [vmem:[#allocation5 + $0x28] sm:$0xff] %vm5965, %v6004
    %v6007 = vld [vmem:[#allocation4 + $0x60] sm:$0xff]
    %6008 = vst.msk [vmem:[#allocation5 + $0x30] sm:$0xff] %vm5917, %v6007
    %v6009 = vld [vmem:[#allocation4 + $0x68] sm:$0xff]
    %6011 = vrot.lane.b32.xlu0 %v6009, 64
    %v6012 = vpop.permute.xlu0 %6011
    %6014 = vst.msk [vmem:[#allocation5 + $0x30] sm:$0xff] %vm5965, %v6012
    %v6015 = vld [vmem:[#allocation4 + $0x70] sm:$0xff]
    %6016 = vst.msk [vmem:[#allocation5 + $0x38] sm:$0xff] %vm5917, %v6015
    %v6017 = vld [vmem:[#allocation4 + $0x78] sm:$0xff]
    %6019 = vrot.lane.b32.xlu0 %v6017, 64
    %v6020 = vpop.permute.xlu0 %6019
    %6022 = vst.msk [vmem:[#allocation5 + $0x38] sm:$0xff] %vm5965, %v6020
    %v6023 = vld [vmem:[#allocation4 + $0x80] sm:$0xff]
    %6024 = vst.msk [vmem:[#allocation5 + $0x40] sm:$0xff] %vm5917, %v6023
    %v6025 = vld [vmem:[#allocation4 + $0x88] sm:$0xff]
    %6027 = vrot.lane.b32.xlu0 %v6025, 64
    %v6028 = vpop.permute.xlu0 %6027
    %6030 = vst.msk [vmem:[#allocation5 + $0x40] sm:$0xff] %vm5965, %v6028
    %v6031 = vld [vmem:[#allocation4 + $0x90] sm:$0xff]
    %6032 = vst.msk [vmem:[#allocation5 + $0x48] sm:$0xff] %vm5917, %v6031
    %v6033 = vld [vmem:[#allocation4 + $0x98] sm:$0xff]
    %6035 = vrot.lane.b32.xlu0 %v6033, 64
    %v6036 = vpop.permute.xlu0 %6035
    %6038 = vst.msk [vmem:[#allocation5 + $0x48] sm:$0xff] %vm5965, %v6036
    %v6039 = vld [vmem:[#allocation4 + $0xa0] sm:$0xff]
    %6040 = vst.msk [vmem:[#allocation5 + $0x50] sm:$0xff] %vm5917, %v6039
    %v6041 = vld [vmem:[#allocation4 + $0xa8] sm:$0xff]
    %6043 = vrot.lane.b32.xlu0 %v6041, 64
    %v6044 = vpop.permute.xlu0 %6043
    %6046 = vst.msk [vmem:[#allocation5 + $0x50] sm:$0xff] %vm5965, %v6044
    %v6047 = vld [vmem:[#allocation4 + $0xb0] sm:$0xff]
    %6048 = vst.msk [vmem:[#allocation5 + $0x58] sm:$0xff] %vm5917, %v6047
    %v6049 = vld [vmem:[#allocation4 + $0xb8] sm:$0xff]
    %6051 = vrot.lane.b32.xlu0 %v6049, 64
    %v6052 = vpop.permute.xlu0 %6051
    %6054 = vst.msk [vmem:[#allocation5 + $0x58] sm:$0xff] %vm5965, %v6052
    %v6055 = vld [vmem:[#allocation4 + $0xc0] sm:$0xff]
    %6056 = vst.msk [vmem:[#allocation5 + $0x60] sm:$0xff] %vm5917, %v6055
    %v6057 = vld [vmem:[#allocation4 + $0xc8] sm:$0xff]
    %6059 = vrot.lane.b32.xlu0 %v6057, 64
    %v6060 = vpop.permute.xlu0 %6059
    %6062 = vst.msk [vmem:[#allocation5 + $0x60] sm:$0xff] %vm5965, %v6060
    %v6063 = vld [vmem:[#allocation4 + $0xd0] sm:$0xff]
    %6064 = vst.msk [vmem:[#allocation5 + $0x68] sm:$0xff] %vm5917, %v6063
    %v6065 = vld [vmem:[#allocation4 + $0xd8] sm:$0xff]
    %6067 = vrot.lane.b32.xlu0 %v6065, 64
    %v6068 = vpop.permute.xlu0 %6067
    %6070 = vst.msk [vmem:[#allocation5 + $0x68] sm:$0xff] %vm5965, %v6068
    %v6071 = vld [vmem:[#allocation4 + $0xe0] sm:$0xff]
    %6072 = vst.msk [vmem:[#allocation5 + $0x70] sm:$0xff] %vm5917, %v6071
    %v6073 = vld [vmem:[#allocation4 + $0xe8] sm:$0xff]
    %6075 = vrot.lane.b32.xlu0 %v6073, 64
    %v6076 = vpop.permute.xlu0 %6075
    %6078 = vst.msk [vmem:[#allocation5 + $0x70] sm:$0xff] %vm5965, %v6076
    %v6079 = vld [vmem:[#allocation4 + $0xf0] sm:$0xff]
    %6080 = vst.msk [vmem:[#allocation5 + $0x78] sm:$0xff] %vm5917, %v6079
    %v6081 = vld [vmem:[#allocation4 + $0xf8] sm:$0xff]
    %6083 = vrot.lane.b32.xlu0 %v6081, 64
    %v6084 = vpop.permute.xlu0 %6083
    %6086 = vst.msk [vmem:[#allocation5 + $0x78] sm:$0xff] %vm5965, %v6084
    %v6087 = vld [vmem:[#allocation4 + $0x100] sm:$0xff]
    %6088 = vst.msk [vmem:[#allocation5 + $0x80] sm:$0xff] %vm5917, %v6087
    %v6089 = vld [vmem:[#allocation4 + $0x108] sm:$0xff]
    %6091 = vrot.lane.b32.xlu0 %v6089, 64
    %v6092 = vpop.permute.xlu0 %6091
    %6094 = vst.msk [vmem:[#allocation5 + $0x80] sm:$0xff] %vm5965, %v6092
    %v6095 = vld [vmem:[#allocation4 + $0x110] sm:$0xff]
    %6096 = vst.msk [vmem:[#allocation5 + $0x88] sm:$0xff] %vm5917, %v6095
    %v6097 = vld [vmem:[#allocation4 + $0x118] sm:$0xff]
    %6099 = vrot.lane.b32.xlu0 %v6097, 64
    %v6100 = vpop.permute.xlu0 %6099
    %6102 = vst.msk [vmem:[#allocation5 + $0x88] sm:$0xff] %vm5965, %v6100
    %v6103 = vld [vmem:[#allocation4 + $0x120] sm:$0xff]
    %6104 = vst.msk [vmem:[#allocation5 + $0x90] sm:$0xff] %vm5917, %v6103
    %v6105 = vld [vmem:[#allocation4 + $0x128] sm:$0xff]
    %6107 = vrot.lane.b32.xlu0 %v6105, 64
    %v6108 = vpop.permute.xlu0 %6107
    %6110 = vst.msk [vmem:[#allocation5 + $0x90] sm:$0xff] %vm5965, %v6108
    %v6111 = vld [vmem:[#allocation4 + $0x130] sm:$0xff]
    %6112 = vst.msk [vmem:[#allocation5 + $0x98] sm:$0xff] %vm5917, %v6111
    %v6113 = vld [vmem:[#allocation4 + $0x138] sm:$0xff]
    %6115 = vrot.lane.b32.xlu0 %v6113, 64
    %v6116 = vpop.permute.xlu0 %6115
    %6118 = vst.msk [vmem:[#allocation5 + $0x98] sm:$0xff] %vm5965, %v6116
    %v6119 = vld [vmem:[#allocation5] sm:$0xff]
    %v6120 = vld [vmem:[#allocation5 + $0x8] sm:$0xff]
    %v6121 = vld [vmem:[#allocation5 + $0x10] sm:$0xff]
    %v6122 = vld [vmem:[#allocation5 + $0x18] sm:$0xff]
    %v6123 = vld [vmem:[#allocation5 + $0x20] sm:$0xff]
    %v6124 = vld [vmem:[#allocation5 + $0x28] sm:$0xff]
    %v6125 = vld [vmem:[#allocation5 + $0x30] sm:$0xff]
    %v6126 = vld [vmem:[#allocation5 + $0x38] sm:$0xff]
    %v6127 = vld [vmem:[#allocation5 + $0x40] sm:$0xff]
    %v6128 = vld [vmem:[#allocation5 + $0x48] sm:$0xff]
    %v6129 = vld [vmem:[#allocation5 + $0x50] sm:$0xff]
    %v6130 = vld [vmem:[#allocation5 + $0x58] sm:$0xff]
    %v6131 = vld [vmem:[#allocation5 + $0x60] sm:$0xff]
    %v6132 = vld [vmem:[#allocation5 + $0x68] sm:$0xff]
    %v6133 = vld [vmem:[#allocation5 + $0x70] sm:$0xff]
    %v6134 = vld [vmem:[#allocation5 + $0x78] sm:$0xff]
    %v6135 = vld [vmem:[#allocation5 + $0x80] sm:$0xff]
    %v6136 = vld [vmem:[#allocation5 + $0x88] sm:$0xff]
    %v6137 = vld [vmem:[#allocation5 + $0x90] sm:$0xff]
    %v6138 = vld [vmem:[#allocation5 + $0x98] sm:$0xff]
    %v6139 = vld [vmem:[#allocation11] sm:$0xff]
    %v6140 = vld [vmem:[#allocation11 + $0x8] sm:$0xff]
    %v6141 = vld [vmem:[#allocation11 + $0x10] sm:$0xff]
    %v6142 = vld [vmem:[#allocation11 + $0x18] sm:$0xff]
    %v6143 = vld [vmem:[#allocation11 + $0x20] sm:$0xff]
    %v6144 = vld [vmem:[#allocation11 + $0x28] sm:$0xff]
    %v6145 = vld [vmem:[#allocation11 + $0x30] sm:$0xff]
    %v6146 = vld [vmem:[#allocation11 + $0x38] sm:$0xff]
    %v6147 = vld [vmem:[#allocation11 + $0x40] sm:$0xff]
    %v6148 = vld [vmem:[#allocation11 + $0x48] sm:$0xff]
    %v6149 = vld [vmem:[#allocation11 + $0x50] sm:$0xff]
    %v6150 = vld [vmem:[#allocation11 + $0x58] sm:$0xff]
    %v6151 = vld [vmem:[#allocation11 + $0x60] sm:$0xff]
    %v6152 = vld [vmem:[#allocation11 + $0x68] sm:$0xff]
    %v6153 = vld [vmem:[#allocation11 + $0x70] sm:$0xff]
    %v6154 = vld [vmem:[#allocation11 + $0x78] sm:$0xff]
    %v6155 = vld [vmem:[#allocation11 + $0x80] sm:$0xff]
    %v6156 = vld [vmem:[#allocation11 + $0x88] sm:$0xff]
    %v6157 = vld [vmem:[#allocation11 + $0x90] sm:$0xff]
    %v6158 = vld [vmem:[#allocation11 + $0x98] sm:$0xff]
    %v6159 = vld [vmem:[#allocation11 + $0xa0] sm:$0xff]
    %v6160 = vld [vmem:[#allocation11 + $0xa8] sm:$0xff]
    %v6161 = vld [vmem:[#allocation11 + $0xb0] sm:$0xff]
    %v6162 = vld [vmem:[#allocation11 + $0xb8] sm:$0xff]
    %v6163 = vld [vmem:[#allocation11 + $0xc0] sm:$0xff]
    %v6164 = vld [vmem:[#allocation11 + $0xc8] sm:$0xff]
    %v6165 = vld [vmem:[#allocation11 + $0xd0] sm:$0xff]
    %v6166 = vld [vmem:[#allocation11 + $0xd8] sm:$0xff]
    %v6167 = vld [vmem:[#allocation11 + $0xe0] sm:$0xff]
    %v6168 = vld [vmem:[#allocation11 + $0xe8] sm:$0xff]
    %v6169 = vld [vmem:[#allocation11 + $0xf0] sm:$0xff]
    %v6170 = vld [vmem:[#allocation11 + $0xf8] sm:$0xff]
    %v6171 = vld [vmem:[#allocation11 + $0x100] sm:$0xff]
    %v6172 = vld [vmem:[#allocation11 + $0x108] sm:$0xff]
    %v6173 = vld [vmem:[#allocation11 + $0x110] sm:$0xff]
    %v6174 = vld [vmem:[#allocation11 + $0x118] sm:$0xff]
    %v6175 = vld [vmem:[#allocation11 + $0x120] sm:$0xff]
    %v6176 = vld [vmem:[#allocation11 + $0x128] sm:$0xff]
    %v6177 = vld [vmem:[#allocation11 + $0x130] sm:$0xff]
    %v6178 = vld [vmem:[#allocation11 + $0x138] sm:$0xff]
    %v6179 = vld [vmem:[#allocation11 + $0x140] sm:$0xff]
    %v6180 = vld [vmem:[#allocation11 + $0x148] sm:$0xff]
    %v6181 = vld [vmem:[#allocation11 + $0x150] sm:$0xff]
    %v6182 = vld [vmem:[#allocation11 + $0x158] sm:$0xff]
    %v6183 = vld [vmem:[#allocation11 + $0x160] sm:$0xff]
    %v6184 = vld [vmem:[#allocation11 + $0x168] sm:$0xff]
    %v6185 = vld [vmem:[#allocation11 + $0x170] sm:$0xff]
    %v6186 = vld [vmem:[#allocation11 + $0x178] sm:$0xff]
    %v6187 = vld [vmem:[#allocation11 + $0x180] sm:$0xff]
    %v6188 = vld [vmem:[#allocation11 + $0x188] sm:$0xff]
    %v6189 = vld [vmem:[#allocation11 + $0x190] sm:$0xff]
    %v6190 = vld [vmem:[#allocation11 + $0x198] sm:$0xff]
    %v6191 = vld [vmem:[#allocation11 + $0x1a0] sm:$0xff]
    %v6192 = vld [vmem:[#allocation11 + $0x1a8] sm:$0xff]
    %v6193 = vld [vmem:[#allocation11 + $0x1b0] sm:$0xff]
    %v6194 = vld [vmem:[#allocation11 + $0x1b8] sm:$0xff]
    %v6195 = vld [vmem:[#allocation11 + $0x1c0] sm:$0xff]
    %v6196 = vld [vmem:[#allocation11 + $0x1c8] sm:$0xff]
    %v6197 = vld [vmem:[#allocation11 + $0x1d0] sm:$0xff]
    %v6198 = vld [vmem:[#allocation11 + $0x1d8] sm:$0xff]
    %v6199 = vld [vmem:[#allocation11 + $0x1e0] sm:$0xff]
    %v6200 = vld [vmem:[#allocation11 + $0x1e8] sm:$0xff]
    %v6201 = vld [vmem:[#allocation11 + $0x1f0] sm:$0xff]
    %v6202 = vld [vmem:[#allocation11 + $0x1f8] sm:$0xff]
    %v6203 = vld [vmem:[#allocation11 + $0x200] sm:$0xff]
    %v6204 = vld [vmem:[#allocation11 + $0x208] sm:$0xff]
    %v6205 = vld [vmem:[#allocation11 + $0x210] sm:$0xff]
    %v6206 = vld [vmem:[#allocation11 + $0x218] sm:$0xff]
    %v6207 = vld [vmem:[#allocation11 + $0x220] sm:$0xff]
    %v6208 = vld [vmem:[#allocation11 + $0x228] sm:$0xff]
    %v6209 = vld [vmem:[#allocation11 + $0x230] sm:$0xff]
    %v6210 = vld [vmem:[#allocation11 + $0x238] sm:$0xff]
    %v6211 = vld [vmem:[#allocation11 + $0x240] sm:$0xff]
    %v6212 = vld [vmem:[#allocation11 + $0x248] sm:$0xff]
    %v6213 = vld [vmem:[#allocation11 + $0x250] sm:$0xff]
    %v6214 = vld [vmem:[#allocation11 + $0x258] sm:$0xff]
    %v6215 = vld [vmem:[#allocation11 + $0x260] sm:$0xff]
    %v6216 = vld [vmem:[#allocation11 + $0x268] sm:$0xff]
    %v6217 = vld [vmem:[#allocation11 + $0x270] sm:$0xff]
    %v6218 = vld [vmem:[#allocation11 + $0x278] sm:$0xff]
    %v6219 = vld [vmem:[#allocation11 + $0x280] sm:$0xff]
    %v6220 = vld [vmem:[#allocation11 + $0x288] sm:$0xff]
    %v6221 = vld [vmem:[#allocation11 + $0x290] sm:$0xff]
    %v6222 = vld [vmem:[#allocation11 + $0x298] sm:$0xff]
    %v6223 = vld [vmem:[#allocation11 + $0x2a0] sm:$0xff]
    %v6224 = vld [vmem:[#allocation11 + $0x2a8] sm:$0xff]
    %v6225 = vld [vmem:[#allocation11 + $0x2b0] sm:$0xff]
    %v6226 = vld [vmem:[#allocation11 + $0x2b8] sm:$0xff]
    %v6227 = vld [vmem:[#allocation11 + $0x2c0] sm:$0xff]
    %v6228 = vld [vmem:[#allocation11 + $0x2c8] sm:$0xff]
    %v6229 = vld [vmem:[#allocation11 + $0x2d0] sm:$0xff]
    %v6230 = vld [vmem:[#allocation11 + $0x2d8] sm:$0xff]
    %v6231 = vld [vmem:[#allocation11 + $0x2e0] sm:$0xff]
    %v6232 = vld [vmem:[#allocation11 + $0x2e8] sm:$0xff]
    %v6233 = vld [vmem:[#allocation11 + $0x2f0] sm:$0xff]
    %v6234 = vld [vmem:[#allocation11 + $0x2f8] sm:$0xff]
    %v6235 = vld [vmem:[#allocation11 + $0x300] sm:$0xff]
    %v6236 = vld [vmem:[#allocation11 + $0x308] sm:$0xff]
    %v6237 = vld [vmem:[#allocation11 + $0x310] sm:$0xff]
    %v6238 = vld [vmem:[#allocation11 + $0x318] sm:$0xff]
    %v6239 = vld [vmem:[#allocation11 + $0x320] sm:$0xff]
    %v6240 = vld [vmem:[#allocation11 + $0x328] sm:$0xff]
    %v6241 = vld [vmem:[#allocation11 + $0x330] sm:$0xff]
    %v6242 = vld [vmem:[#allocation11 + $0x338] sm:$0xff]
    %v6243 = vld [vmem:[#allocation11 + $0x340] sm:$0xff]
    %v6244 = vld [vmem:[#allocation11 + $0x348] sm:$0xff]
    %v6245 = vld [vmem:[#allocation11 + $0x350] sm:$0xff]
    %v6246 = vld [vmem:[#allocation11 + $0x358] sm:$0xff]
    %v6247 = vld [vmem:[#allocation11 + $0x360] sm:$0xff]
    %v6248 = vld [vmem:[#allocation11 + $0x368] sm:$0xff]
    %v6249 = vld [vmem:[#allocation11 + $0x370] sm:$0xff]
    %v6250 = vld [vmem:[#allocation11 + $0x378] sm:$0xff]
    %v6251 = vld [vmem:[#allocation11 + $0x380] sm:$0xff]
    %v6252 = vld [vmem:[#allocation11 + $0x388] sm:$0xff]
    %v6253 = vld [vmem:[#allocation11 + $0x390] sm:$0xff]
    %v6254 = vld [vmem:[#allocation11 + $0x398] sm:$0xff]
    %v6255 = vld [vmem:[#allocation11 + $0x3a0] sm:$0xff]
    %v6256 = vld [vmem:[#allocation11 + $0x3a8] sm:$0xff]
    %v6257 = vld [vmem:[#allocation11 + $0x3b0] sm:$0xff]
    %v6258 = vld [vmem:[#allocation11 + $0x3b8] sm:$0xff]
    %v6259 = vld [vmem:[#allocation11 + $0x3c0] sm:$0xff]
    %v6260 = vld [vmem:[#allocation11 + $0x3c8] sm:$0xff]
    %v6261 = vld [vmem:[#allocation11 + $0x3d0] sm:$0xff]
    %v6262 = vld [vmem:[#allocation11 + $0x3d8] sm:$0xff]
    %v6263 = vld [vmem:[#allocation11 + $0x3e0] sm:$0xff]
    %v6264 = vld [vmem:[#allocation11 + $0x3e8] sm:$0xff]
    %v6265 = vld [vmem:[#allocation11 + $0x3f0] sm:$0xff]
    %v6266 = vld [vmem:[#allocation11 + $0x3f8] sm:$0xff]
    %v6267 = vld [vmem:[#allocation11 + $0x400] sm:$0xff]
    %v6268 = vld [vmem:[#allocation11 + $0x408] sm:$0xff]
    %v6269 = vld [vmem:[#allocation11 + $0x410] sm:$0xff]
    %v6270 = vld [vmem:[#allocation11 + $0x418] sm:$0xff]
    %v6271 = vld [vmem:[#allocation11 + $0x420] sm:$0xff]
    %v6272 = vld [vmem:[#allocation11 + $0x428] sm:$0xff]
    %v6273 = vld [vmem:[#allocation11 + $0x430] sm:$0xff]
    %v6274 = vld [vmem:[#allocation11 + $0x438] sm:$0xff]
    %v6275 = vld [vmem:[#allocation11 + $0x440] sm:$0xff]
    %v6276 = vld [vmem:[#allocation11 + $0x448] sm:$0xff]
    %v6277 = vld [vmem:[#allocation11 + $0x450] sm:$0xff]
    %v6278 = vld [vmem:[#allocation11 + $0x458] sm:$0xff]
    %v6279 = vld [vmem:[#allocation11 + $0x460] sm:$0xff]
    %v6280 = vld [vmem:[#allocation11 + $0x468] sm:$0xff]
    %v6281 = vld [vmem:[#allocation11 + $0x470] sm:$0xff]
    %v6282 = vld [vmem:[#allocation11 + $0x478] sm:$0xff]
    %v6283 = vld [vmem:[#allocation11 + $0x480] sm:$0xff]
    %v6284 = vld [vmem:[#allocation11 + $0x488] sm:$0xff]
    %v6285 = vld [vmem:[#allocation11 + $0x490] sm:$0xff]
    %v6286 = vld [vmem:[#allocation11 + $0x498] sm:$0xff]
    %v6287 = vld [vmem:[#allocation11 + $0x4a0] sm:$0xff]
    %v6288 = vld [vmem:[#allocation11 + $0x4a8] sm:$0xff]
    %v6289 = vld [vmem:[#allocation11 + $0x4b0] sm:$0xff]
    %v6290 = vld [vmem:[#allocation11 + $0x4b8] sm:$0xff]
    %v6291 = vld [vmem:[#allocation11 + $0x4c0] sm:$0xff]
    %v6292 = vld [vmem:[#allocation11 + $0x4c8] sm:$0xff]
    %v6293 = vld [vmem:[#allocation11 + $0x4d0] sm:$0xff]
    %v6294 = vld [vmem:[#allocation11 + $0x4d8] sm:$0xff]
    %v6295 = vld [vmem:[#allocation11 + $0x4e0] sm:$0xff]
    %v6296 = vld [vmem:[#allocation11 + $0x4e8] sm:$0xff]
    %v6297 = vld [vmem:[#allocation11 + $0x4f0] sm:$0xff]
    %v6298 = vld [vmem:[#allocation11 + $0x4f8] sm:$0xff]
    %v6299 = vld [vmem:[#allocation11 + $0x500] sm:$0xff]
    %v6300 = vld [vmem:[#allocation11 + $0x508] sm:$0xff]
    %v6301 = vld [vmem:[#allocation11 + $0x510] sm:$0xff]
    %v6302 = vld [vmem:[#allocation11 + $0x518] sm:$0xff]
    %v6303 = vld [vmem:[#allocation11 + $0x520] sm:$0xff]
    %v6304 = vld [vmem:[#allocation11 + $0x528] sm:$0xff]
    %v6305 = vld [vmem:[#allocation11 + $0x530] sm:$0xff]
    %v6306 = vld [vmem:[#allocation11 + $0x538] sm:$0xff]
    %v6307 = vld [vmem:[#allocation11 + $0x540] sm:$0xff]
    %v6308 = vld [vmem:[#allocation11 + $0x548] sm:$0xff]
    %v6309 = vld [vmem:[#allocation11 + $0x550] sm:$0xff]
    %v6310 = vld [vmem:[#allocation11 + $0x558] sm:$0xff]
    %v6311 = vld [vmem:[#allocation11 + $0x560] sm:$0xff]
    %v6312 = vld [vmem:[#allocation11 + $0x568] sm:$0xff]
    %v6313 = vld [vmem:[#allocation11 + $0x570] sm:$0xff]
    %v6314 = vld [vmem:[#allocation11 + $0x578] sm:$0xff]
    %v6315 = vld [vmem:[#allocation11 + $0x580] sm:$0xff]
    %v6316 = vld [vmem:[#allocation11 + $0x588] sm:$0xff]
    %v6317 = vld [vmem:[#allocation11 + $0x590] sm:$0xff]
    %v6318 = vld [vmem:[#allocation11 + $0x598] sm:$0xff]
    %v6319 = vld [vmem:[#allocation11 + $0x5a0] sm:$0xff]
    %v6320 = vld [vmem:[#allocation11 + $0x5a8] sm:$0xff]
    %v6321 = vld [vmem:[#allocation11 + $0x5b0] sm:$0xff]
    %v6322 = vld [vmem:[#allocation11 + $0x5b8] sm:$0xff]
    %v6323 = vld [vmem:[#allocation11 + $0x5c0] sm:$0xff]
    %v6324 = vld [vmem:[#allocation11 + $0x5c8] sm:$0xff]
    %v6325 = vld [vmem:[#allocation11 + $0x5d0] sm:$0xff]
    %v6326 = vld [vmem:[#allocation11 + $0x5d8] sm:$0xff]
    %v6327 = vld [vmem:[#allocation11 + $0x5e0] sm:$0xff]
    %v6328 = vld [vmem:[#allocation11 + $0x5e8] sm:$0xff]
    %v6329 = vld [vmem:[#allocation11 + $0x5f0] sm:$0xff]
    %v6330 = vld [vmem:[#allocation11 + $0x5f8] sm:$0xff]
    %v6331 = vld [vmem:[#allocation11 + $0x600] sm:$0xff]
    %v6332 = vld [vmem:[#allocation11 + $0x608] sm:$0xff]
    %v6333 = vld [vmem:[#allocation11 + $0x610] sm:$0xff]
    %v6334 = vld [vmem:[#allocation11 + $0x618] sm:$0xff]
    %v6335 = vld [vmem:[#allocation11 + $0x620] sm:$0xff]
    %v6336 = vld [vmem:[#allocation11 + $0x628] sm:$0xff]
    %v6337 = vld [vmem:[#allocation11 + $0x630] sm:$0xff]
    %v6338 = vld [vmem:[#allocation11 + $0x638] sm:$0xff]
    %v6339 = vld [vmem:[#allocation11 + $0x640] sm:$0xff]
    %v6340 = vld [vmem:[#allocation11 + $0x648] sm:$0xff]
    %v6341 = vld [vmem:[#allocation11 + $0x650] sm:$0xff]
    %v6342 = vld [vmem:[#allocation11 + $0x658] sm:$0xff]
    %v6343 = vld [vmem:[#allocation11 + $0x660] sm:$0xff]
    %v6344 = vld [vmem:[#allocation11 + $0x668] sm:$0xff]
    %v6345 = vld [vmem:[#allocation11 + $0x670] sm:$0xff]
    %v6346 = vld [vmem:[#allocation11 + $0x678] sm:$0xff]
    %v6347 = vld [vmem:[#allocation11 + $0x680] sm:$0xff]
    %v6348 = vld [vmem:[#allocation11 + $0x688] sm:$0xff]
    %v6349 = vld [vmem:[#allocation11 + $0x690] sm:$0xff]
    %v6350 = vld [vmem:[#allocation11 + $0x698] sm:$0xff]
    %v6351 = vld [vmem:[#allocation11 + $0x6a0] sm:$0xff]
    %v6352 = vld [vmem:[#allocation11 + $0x6a8] sm:$0xff]
    %v6353 = vld [vmem:[#allocation11 + $0x6b0] sm:$0xff]
    %v6354 = vld [vmem:[#allocation11 + $0x6b8] sm:$0xff]
    %v6355 = vld [vmem:[#allocation11 + $0x6c0] sm:$0xff]
    %v6356 = vld [vmem:[#allocation11 + $0x6c8] sm:$0xff]
    %v6357 = vld [vmem:[#allocation11 + $0x6d0] sm:$0xff]
    %v6358 = vld [vmem:[#allocation11 + $0x6d8] sm:$0xff]
    %v6359 = vld [vmem:[#allocation11 + $0x6e0] sm:$0xff]
    %v6360 = vld [vmem:[#allocation11 + $0x6e8] sm:$0xff]
    %v6361 = vld [vmem:[#allocation11 + $0x6f0] sm:$0xff]
    %v6362 = vld [vmem:[#allocation11 + $0x6f8] sm:$0xff]
    %v6363 = vld [vmem:[#allocation11 + $0x700] sm:$0xff]
    %v6364 = vld [vmem:[#allocation11 + $0x708] sm:$0xff]
    %v6365 = vld [vmem:[#allocation11 + $0x710] sm:$0xff]
    %v6366 = vld [vmem:[#allocation11 + $0x718] sm:$0xff]
    %v6367 = vld [vmem:[#allocation11 + $0x720] sm:$0xff]
    %v6368 = vld [vmem:[#allocation11 + $0x728] sm:$0xff]
    %v6369 = vld [vmem:[#allocation11 + $0x730] sm:$0xff]
    %v6370 = vld [vmem:[#allocation11 + $0x738] sm:$0xff]
    %v6371 = vld [vmem:[#allocation11 + $0x740] sm:$0xff]
    %v6372 = vld [vmem:[#allocation11 + $0x748] sm:$0xff]
    %v6373 = vld [vmem:[#allocation11 + $0x750] sm:$0xff]
    %v6374 = vld [vmem:[#allocation11 + $0x758] sm:$0xff]
    %v6375 = vld [vmem:[#allocation11 + $0x760] sm:$0xff]
    %v6376 = vld [vmem:[#allocation11 + $0x768] sm:$0xff]
    %v6377 = vld [vmem:[#allocation11 + $0x770] sm:$0xff]
    %v6378 = vld [vmem:[#allocation11 + $0x778] sm:$0xff]
    %v6379 = vld [vmem:[#allocation11 + $0x780] sm:$0xff]
    %v6380 = vld [vmem:[#allocation11 + $0x788] sm:$0xff]
    %v6381 = vld [vmem:[#allocation11 + $0x790] sm:$0xff]
    %v6382 = vld [vmem:[#allocation11 + $0x798] sm:$0xff]
    %v6383 = vld [vmem:[#allocation11 + $0x7a0] sm:$0xff]
    %v6384 = vld [vmem:[#allocation11 + $0x7a8] sm:$0xff]
    %v6385 = vld [vmem:[#allocation11 + $0x7b0] sm:$0xff]
    %v6386 = vld [vmem:[#allocation11 + $0x7b8] sm:$0xff]
    %v6387 = vld [vmem:[#allocation11 + $0x7c0] sm:$0xff]
    %v6388 = vld [vmem:[#allocation11 + $0x7c8] sm:$0xff]
    %v6389 = vld [vmem:[#allocation11 + $0x7d0] sm:$0xff]
    %v6390 = vld [vmem:[#allocation11 + $0x7d8] sm:$0xff]
    %v6391 = vld [vmem:[#allocation11 + $0x7e0] sm:$0xff]
    %v6392 = vld [vmem:[#allocation11 + $0x7e8] sm:$0xff]
    %v6393 = vld [vmem:[#allocation11 + $0x7f0] sm:$0xff]
    %v6394 = vld [vmem:[#allocation11 + $0x7f8] sm:$0xff]
    %v6395 = vld [vmem:[#allocation11 + $0x800] sm:$0xff]
    %v6396 = vld [vmem:[#allocation11 + $0x808] sm:$0xff]
    %v6397 = vld [vmem:[#allocation11 + $0x810] sm:$0xff]
    %v6398 = vld [vmem:[#allocation11 + $0x818] sm:$0xff]
    %v6399 = vld [vmem:[#allocation11 + $0x820] sm:$0xff]
    %v6400 = vld [vmem:[#allocation11 + $0x828] sm:$0xff]
    %v6401 = vld [vmem:[#allocation11 + $0x830] sm:$0xff]
    %v6402 = vld [vmem:[#allocation11 + $0x838] sm:$0xff]
    %v6403 = vld [vmem:[#allocation11 + $0x840] sm:$0xff]
    %v6404 = vld [vmem:[#allocation11 + $0x848] sm:$0xff]
    %v6405 = vld [vmem:[#allocation11 + $0x850] sm:$0xff]
    %v6406 = vld [vmem:[#allocation11 + $0x858] sm:$0xff]
    %v6407 = vld [vmem:[#allocation11 + $0x860] sm:$0xff]
    %v6408 = vld [vmem:[#allocation11 + $0x868] sm:$0xff]
    %v6409 = vld [vmem:[#allocation11 + $0x870] sm:$0xff]
    %v6410 = vld [vmem:[#allocation11 + $0x878] sm:$0xff]
    %v6411 = vld [vmem:[#allocation11 + $0x880] sm:$0xff]
    %v6412 = vld [vmem:[#allocation11 + $0x888] sm:$0xff]
    %v6413 = vld [vmem:[#allocation11 + $0x890] sm:$0xff]
    %v6414 = vld [vmem:[#allocation11 + $0x898] sm:$0xff]
    %v6415 = vld [vmem:[#allocation11 + $0x8a0] sm:$0xff]
    %v6416 = vld [vmem:[#allocation11 + $0x8a8] sm:$0xff]
    %v6417 = vld [vmem:[#allocation11 + $0x8b0] sm:$0xff]
    %v6418 = vld [vmem:[#allocation11 + $0x8b8] sm:$0xff]
    %v6419 = vld [vmem:[#allocation11 + $0x8c0] sm:$0xff]
    %v6420 = vld [vmem:[#allocation11 + $0x8c8] sm:$0xff]
    %v6421 = vld [vmem:[#allocation11 + $0x8d0] sm:$0xff]
    %v6422 = vld [vmem:[#allocation11 + $0x8d8] sm:$0xff]
    %v6423 = vld [vmem:[#allocation11 + $0x8e0] sm:$0xff]
    %v6424 = vld [vmem:[#allocation11 + $0x8e8] sm:$0xff]
    %v6425 = vld [vmem:[#allocation11 + $0x8f0] sm:$0xff]
    %v6426 = vld [vmem:[#allocation11 + $0x8f8] sm:$0xff]
    %v6427 = vld [vmem:[#allocation11 + $0x900] sm:$0xff]
    %v6428 = vld [vmem:[#allocation11 + $0x908] sm:$0xff]
    %v6429 = vld [vmem:[#allocation11 + $0x910] sm:$0xff]
    %v6430 = vld [vmem:[#allocation11 + $0x918] sm:$0xff]
    %v6431 = vld [vmem:[#allocation11 + $0x920] sm:$0xff]
    %v6432 = vld [vmem:[#allocation11 + $0x928] sm:$0xff]
    %v6433 = vld [vmem:[#allocation11 + $0x930] sm:$0xff]
    %v6434 = vld [vmem:[#allocation11 + $0x938] sm:$0xff]
    %v6435 = vld [vmem:[#allocation11 + $0x940] sm:$0xff]
    %v6436 = vld [vmem:[#allocation11 + $0x948] sm:$0xff]
    %v6437 = vld [vmem:[#allocation11 + $0x950] sm:$0xff]
    %v6438 = vld [vmem:[#allocation11 + $0x958] sm:$0xff]
    %v6439 = vld [vmem:[#allocation11 + $0x960] sm:$0xff]
    %v6440 = vld [vmem:[#allocation11 + $0x968] sm:$0xff]
    %v6441 = vld [vmem:[#allocation11 + $0x970] sm:$0xff]
    %v6442 = vld [vmem:[#allocation11 + $0x978] sm:$0xff]
    %v6443 = vld [vmem:[#allocation11 + $0x980] sm:$0xff]
    %v6444 = vld [vmem:[#allocation11 + $0x988] sm:$0xff]
    %v6445 = vld [vmem:[#allocation11 + $0x990] sm:$0xff]
    %v6446 = vld [vmem:[#allocation11 + $0x998] sm:$0xff]
    %v6447 = vld [vmem:[#allocation11 + $0x9a0] sm:$0xff]
    %v6448 = vld [vmem:[#allocation11 + $0x9a8] sm:$0xff]
    %v6449 = vld [vmem:[#allocation11 + $0x9b0] sm:$0xff]
    %v6450 = vld [vmem:[#allocation11 + $0x9b8] sm:$0xff]
    %v6451 = vld [vmem:[#allocation11 + $0x9c0] sm:$0xff]
    %v6452 = vld [vmem:[#allocation11 + $0x9c8] sm:$0xff]
    %v6453 = vld [vmem:[#allocation11 + $0x9d0] sm:$0xff]
    %v6454 = vld [vmem:[#allocation11 + $0x9d8] sm:$0xff]
    %v6455 = vld [vmem:[#allocation11 + $0x9e0] sm:$0xff]
    %v6456 = vld [vmem:[#allocation11 + $0x9e8] sm:$0xff]
    %v6457 = vld [vmem:[#allocation11 + $0x9f0] sm:$0xff]
    %v6458 = vld [vmem:[#allocation11 + $0x9f8] sm:$0xff]
    %v6459 = vld [vmem:[#allocation13] sm:$0x3]
    %v6461 = vlaneseq
    %v6462 = vshrl.u32 %v6461, 7
    %v6463 = vsub.s32 0, %v6462
    %v6464 = vrot.slane %v6459, %v6463
    %v6465 = vlaneseq
    %v6466 = vshrl.u32 %v6465, 7
    %v6467 = vsub.s32 1, %v6466
    %v6468 = vrot.slane %v6459, %v6467
    %v6791 = vunpack.c.l.b16 %v6139
    %v6792 = vunpack.c.h.b16 %v6139
    %v6793 = vunpack.c.l.b16 %v6140
    %v6794 = vunpack.c.h.b16 %v6140
    %v6795 = vunpack.c.l.b16 %v6141
    %v6796 = vunpack.c.h.b16 %v6141
    %v6797 = vunpack.c.l.b16 %v6142
    %v6798 = vunpack.c.h.b16 %v6142
    %v6799 = vunpack.c.l.b16 %v6143
    %v6800 = vunpack.c.h.b16 %v6143
    %v6801 = vunpack.c.l.b16 %v6144
    %v6802 = vunpack.c.h.b16 %v6144
    %v6803 = vunpack.c.l.b16 %v6145
    %v6804 = vunpack.c.h.b16 %v6145
    %v6805 = vunpack.c.l.b16 %v6146
    %v6806 = vunpack.c.h.b16 %v6146
    %v6807 = vunpack.c.l.b16 %v6147
    %v6808 = vunpack.c.h.b16 %v6147
    %v6809 = vunpack.c.l.b16 %v6148
    %v6810 = vunpack.c.h.b16 %v6148
    %v6811 = vunpack.c.l.b16 %v6149
    %v6812 = vunpack.c.h.b16 %v6149
    %v6813 = vunpack.c.l.b16 %v6150
    %v6814 = vunpack.c.h.b16 %v6150
    %v6815 = vunpack.c.l.b16 %v6151
    %v6816 = vunpack.c.h.b16 %v6151
    %v6817 = vunpack.c.l.b16 %v6152
    %v6818 = vunpack.c.h.b16 %v6152
    %v6819 = vunpack.c.l.b16 %v6153
    %v6820 = vunpack.c.h.b16 %v6153
    %v6821 = vunpack.c.l.b16 %v6154
    %v6822 = vunpack.c.h.b16 %v6154
    %v6823 = vunpack.c.l.b16 %v6155
    %v6824 = vunpack.c.h.b16 %v6155
    %v6825 = vunpack.c.l.b16 %v6156
    %v6826 = vunpack.c.h.b16 %v6156
    %v6827 = vunpack.c.l.b16 %v6157
    %v6828 = vunpack.c.h.b16 %v6157
    %v6829 = vunpack.c.l.b16 %v6158
    %v6830 = vunpack.c.h.b16 %v6158
    %v6831 = vunpack.c.l.b16 %v6159
    %v6832 = vunpack.c.h.b16 %v6159
    %v6833 = vunpack.c.l.b16 %v6160
    %v6834 = vunpack.c.h.b16 %v6160
    %v6835 = vunpack.c.l.b16 %v6161
    %v6836 = vunpack.c.h.b16 %v6161
    %v6837 = vunpack.c.l.b16 %v6162
    %v6838 = vunpack.c.h.b16 %v6162
    %v6839 = vunpack.c.l.b16 %v6163
    %v6840 = vunpack.c.h.b16 %v6163
    %v6841 = vunpack.c.l.b16 %v6164
    %v6842 = vunpack.c.h.b16 %v6164
    %v6843 = vunpack.c.l.b16 %v6165
    %v6844 = vunpack.c.h.b16 %v6165
    %v6845 = vunpack.c.l.b16 %v6166
    %v6846 = vunpack.c.h.b16 %v6166
    %v6847 = vunpack.c.l.b16 %v6167
    %v6848 = vunpack.c.h.b16 %v6167
    %v6849 = vunpack.c.l.b16 %v6168
    %v6850 = vunpack.c.h.b16 %v6168
    %v6851 = vunpack.c.l.b16 %v6169
    %v6852 = vunpack.c.h.b16 %v6169
    %v6853 = vunpack.c.l.b16 %v6170
    %v6854 = vunpack.c.h.b16 %v6170
    %v6855 = vunpack.c.l.b16 %v6171
    %v6856 = vunpack.c.h.b16 %v6171
    %v6857 = vunpack.c.l.b16 %v6172
    %v6858 = vunpack.c.h.b16 %v6172
    %v6859 = vunpack.c.l.b16 %v6173
    %v6860 = vunpack.c.h.b16 %v6173
    %v6861 = vunpack.c.l.b16 %v6174
    %v6862 = vunpack.c.h.b16 %v6174
    %v6863 = vunpack.c.l.b16 %v6175
    %v6864 = vunpack.c.h.b16 %v6175
    %v6865 = vunpack.c.l.b16 %v6176
    %v6866 = vunpack.c.h.b16 %v6176
    %v6867 = vunpack.c.l.b16 %v6177
    %v6868 = vunpack.c.h.b16 %v6177
    %v6869 = vunpack.c.l.b16 %v6178
    %v6870 = vunpack.c.h.b16 %v6178
    %v6871 = vunpack.c.l.b16 %v6179
    %v6872 = vunpack.c.h.b16 %v6179
    %v6873 = vunpack.c.l.b16 %v6180
    %v6874 = vunpack.c.h.b16 %v6180
    %v6875 = vunpack.c.l.b16 %v6181
    %v6876 = vunpack.c.h.b16 %v6181
    %v6877 = vunpack.c.l.b16 %v6182
    %v6878 = vunpack.c.h.b16 %v6182
    %v6879 = vunpack.c.l.b16 %v6183
    %v6880 = vunpack.c.h.b16 %v6183
    %v6881 = vunpack.c.l.b16 %v6184
    %v6882 = vunpack.c.h.b16 %v6184
    %v6883 = vunpack.c.l.b16 %v6185
    %v6884 = vunpack.c.h.b16 %v6185
    %v6885 = vunpack.c.l.b16 %v6186
    %v6886 = vunpack.c.h.b16 %v6186
    %v6887 = vunpack.c.l.b16 %v6187
    %v6888 = vunpack.c.h.b16 %v6187
    %v6889 = vunpack.c.l.b16 %v6188
    %v6890 = vunpack.c.h.b16 %v6188
    %v6891 = vunpack.c.l.b16 %v6189
    %v6892 = vunpack.c.h.b16 %v6189
    %v6893 = vunpack.c.l.b16 %v6190
    %v6894 = vunpack.c.h.b16 %v6190
    %v6895 = vunpack.c.l.b16 %v6191
    %v6896 = vunpack.c.h.b16 %v6191
    %v6897 = vunpack.c.l.b16 %v6192
    %v6898 = vunpack.c.h.b16 %v6192
    %v6899 = vunpack.c.l.b16 %v6193
    %v6900 = vunpack.c.h.b16 %v6193
    %v6901 = vunpack.c.l.b16 %v6194
    %v6902 = vunpack.c.h.b16 %v6194
    %v6903 = vunpack.c.l.b16 %v6195
    %v6904 = vunpack.c.h.b16 %v6195
    %v6905 = vunpack.c.l.b16 %v6196
    %v6906 = vunpack.c.h.b16 %v6196
    %v6907 = vunpack.c.l.b16 %v6197
    %v6908 = vunpack.c.h.b16 %v6197
    %v6909 = vunpack.c.l.b16 %v6198
    %v6910 = vunpack.c.h.b16 %v6198
    %v6911 = vunpack.c.l.b16 %v6199
    %v6912 = vunpack.c.h.b16 %v6199
    %v6913 = vunpack.c.l.b16 %v6200
    %v6914 = vunpack.c.h.b16 %v6200
    %v6915 = vunpack.c.l.b16 %v6201
    %v6916 = vunpack.c.h.b16 %v6201
    %v6917 = vunpack.c.l.b16 %v6202
    %v6918 = vunpack.c.h.b16 %v6202
    %v6919 = vunpack.c.l.b16 %v6203
    %v6920 = vunpack.c.h.b16 %v6203
    %v6921 = vunpack.c.l.b16 %v6204
    %v6922 = vunpack.c.h.b16 %v6204
    %v6923 = vunpack.c.l.b16 %v6205
    %v6924 = vunpack.c.h.b16 %v6205
    %v6925 = vunpack.c.l.b16 %v6206
    %v6926 = vunpack.c.h.b16 %v6206
    %v6927 = vunpack.c.l.b16 %v6207
    %v6928 = vunpack.c.h.b16 %v6207
    %v6929 = vunpack.c.l.b16 %v6208
    %v6930 = vunpack.c.h.b16 %v6208
    %v6931 = vunpack.c.l.b16 %v6209
    %v6932 = vunpack.c.h.b16 %v6209
    %v6933 = vunpack.c.l.b16 %v6210
    %v6934 = vunpack.c.h.b16 %v6210
    %v6935 = vunpack.c.l.b16 %v6211
    %v6936 = vunpack.c.h.b16 %v6211
    %v6937 = vunpack.c.l.b16 %v6212
    %v6938 = vunpack.c.h.b16 %v6212
    %v6939 = vunpack.c.l.b16 %v6213
    %v6940 = vunpack.c.h.b16 %v6213
    %v6941 = vunpack.c.l.b16 %v6214
    %v6942 = vunpack.c.h.b16 %v6214
    %v6943 = vunpack.c.l.b16 %v6215
    %v6944 = vunpack.c.h.b16 %v6215
    %v6945 = vunpack.c.l.b16 %v6216
    %v6946 = vunpack.c.h.b16 %v6216
    %v6947 = vunpack.c.l.b16 %v6217
    %v6948 = vunpack.c.h.b16 %v6217
    %v6949 = vunpack.c.l.b16 %v6218
    %v6950 = vunpack.c.h.b16 %v6218
    %v6951 = vunpack.c.l.b16 %v6219
    %v6952 = vunpack.c.h.b16 %v6219
    %v6953 = vunpack.c.l.b16 %v6220
    %v6954 = vunpack.c.h.b16 %v6220
    %v6955 = vunpack.c.l.b16 %v6221
    %v6956 = vunpack.c.h.b16 %v6221
    %v6957 = vunpack.c.l.b16 %v6222
    %v6958 = vunpack.c.h.b16 %v6222
    %v6959 = vunpack.c.l.b16 %v6223
    %v6960 = vunpack.c.h.b16 %v6223
    %v6961 = vunpack.c.l.b16 %v6224
    %v6962 = vunpack.c.h.b16 %v6224
    %v6963 = vunpack.c.l.b16 %v6225
    %v6964 = vunpack.c.h.b16 %v6225
    %v6965 = vunpack.c.l.b16 %v6226
    %v6966 = vunpack.c.h.b16 %v6226
    %v6967 = vunpack.c.l.b16 %v6227
    %v6968 = vunpack.c.h.b16 %v6227
    %v6969 = vunpack.c.l.b16 %v6228
    %v6970 = vunpack.c.h.b16 %v6228
    %v6971 = vunpack.c.l.b16 %v6229
    %v6972 = vunpack.c.h.b16 %v6229
    %v6973 = vunpack.c.l.b16 %v6230
    %v6974 = vunpack.c.h.b16 %v6230
    %v6975 = vunpack.c.l.b16 %v6231
    %v6976 = vunpack.c.h.b16 %v6231
    %v6977 = vunpack.c.l.b16 %v6232
    %v6978 = vunpack.c.h.b16 %v6232
    %v6979 = vunpack.c.l.b16 %v6233
    %v6980 = vunpack.c.h.b16 %v6233
    %v6981 = vunpack.c.l.b16 %v6234
    %v6982 = vunpack.c.h.b16 %v6234
    %v6983 = vunpack.c.l.b16 %v6235
    %v6984 = vunpack.c.h.b16 %v6235
    %v6985 = vunpack.c.l.b16 %v6236
    %v6986 = vunpack.c.h.b16 %v6236
    %v6987 = vunpack.c.l.b16 %v6237
    %v6988 = vunpack.c.h.b16 %v6237
    %v6989 = vunpack.c.l.b16 %v6238
    %v6990 = vunpack.c.h.b16 %v6238
    %v6991 = vunpack.c.l.b16 %v6239
    %v6992 = vunpack.c.h.b16 %v6239
    %v6993 = vunpack.c.l.b16 %v6240
    %v6994 = vunpack.c.h.b16 %v6240
    %v6995 = vunpack.c.l.b16 %v6241
    %v6996 = vunpack.c.h.b16 %v6241
    %v6997 = vunpack.c.l.b16 %v6242
    %v6998 = vunpack.c.h.b16 %v6242
    %v6999 = vunpack.c.l.b16 %v6243
    %v7000 = vunpack.c.h.b16 %v6243
    %v7001 = vunpack.c.l.b16 %v6244
    %v7002 = vunpack.c.h.b16 %v6244
    %v7003 = vunpack.c.l.b16 %v6245
    %v7004 = vunpack.c.h.b16 %v6245
    %v7005 = vunpack.c.l.b16 %v6246
    %v7006 = vunpack.c.h.b16 %v6246
    %v7007 = vunpack.c.l.b16 %v6247
    %v7008 = vunpack.c.h.b16 %v6247
    %v7009 = vunpack.c.l.b16 %v6248
    %v7010 = vunpack.c.h.b16 %v6248
    %v7011 = vunpack.c.l.b16 %v6249
    %v7012 = vunpack.c.h.b16 %v6249
    %v7013 = vunpack.c.l.b16 %v6250
    %v7014 = vunpack.c.h.b16 %v6250
    %v7015 = vunpack.c.l.b16 %v6251
    %v7016 = vunpack.c.h.b16 %v6251
    %v7017 = vunpack.c.l.b16 %v6252
    %v7018 = vunpack.c.h.b16 %v6252
    %v7019 = vunpack.c.l.b16 %v6253
    %v7020 = vunpack.c.h.b16 %v6253
    %v7021 = vunpack.c.l.b16 %v6254
    %v7022 = vunpack.c.h.b16 %v6254
    %v7023 = vunpack.c.l.b16 %v6255
    %v7024 = vunpack.c.h.b16 %v6255
    %v7025 = vunpack.c.l.b16 %v6256
    %v7026 = vunpack.c.h.b16 %v6256
    %v7027 = vunpack.c.l.b16 %v6257
    %v7028 = vunpack.c.h.b16 %v6257
    %v7029 = vunpack.c.l.b16 %v6258
    %v7030 = vunpack.c.h.b16 %v6258
    %v7031 = vunpack.c.l.b16 %v6259
    %v7032 = vunpack.c.h.b16 %v6259
    %v7033 = vunpack.c.l.b16 %v6260
    %v7034 = vunpack.c.h.b16 %v6260
    %v7035 = vunpack.c.l.b16 %v6261
    %v7036 = vunpack.c.h.b16 %v6261
    %v7037 = vunpack.c.l.b16 %v6262
    %v7038 = vunpack.c.h.b16 %v6262
    %v7039 = vunpack.c.l.b16 %v6263
    %v7040 = vunpack.c.h.b16 %v6263
    %v7041 = vunpack.c.l.b16 %v6264
    %v7042 = vunpack.c.h.b16 %v6264
    %v7043 = vunpack.c.l.b16 %v6265
    %v7044 = vunpack.c.h.b16 %v6265
    %v7045 = vunpack.c.l.b16 %v6266
    %v7046 = vunpack.c.h.b16 %v6266
    %v7047 = vunpack.c.l.b16 %v6267
    %v7048 = vunpack.c.h.b16 %v6267
    %v7049 = vunpack.c.l.b16 %v6268
    %v7050 = vunpack.c.h.b16 %v6268
    %v7051 = vunpack.c.l.b16 %v6269
    %v7052 = vunpack.c.h.b16 %v6269
    %v7053 = vunpack.c.l.b16 %v6270
    %v7054 = vunpack.c.h.b16 %v6270
    %v7055 = vunpack.c.l.b16 %v6271
    %v7056 = vunpack.c.h.b16 %v6271
    %v7057 = vunpack.c.l.b16 %v6272
    %v7058 = vunpack.c.h.b16 %v6272
    %v7059 = vunpack.c.l.b16 %v6273
    %v7060 = vunpack.c.h.b16 %v6273
    %v7061 = vunpack.c.l.b16 %v6274
    %v7062 = vunpack.c.h.b16 %v6274
    %v7063 = vunpack.c.l.b16 %v6275
    %v7064 = vunpack.c.h.b16 %v6275
    %v7065 = vunpack.c.l.b16 %v6276
    %v7066 = vunpack.c.h.b16 %v6276
    %v7067 = vunpack.c.l.b16 %v6277
    %v7068 = vunpack.c.h.b16 %v6277
    %v7069 = vunpack.c.l.b16 %v6278
    %v7070 = vunpack.c.h.b16 %v6278
    %v7071 = vunpack.c.l.b16 %v6279
    %v7072 = vunpack.c.h.b16 %v6279
    %v7073 = vunpack.c.l.b16 %v6280
    %v7074 = vunpack.c.h.b16 %v6280
    %v7075 = vunpack.c.l.b16 %v6281
    %v7076 = vunpack.c.h.b16 %v6281
    %v7077 = vunpack.c.l.b16 %v6282
    %v7078 = vunpack.c.h.b16 %v6282
    %v7079 = vunpack.c.l.b16 %v6283
    %v7080 = vunpack.c.h.b16 %v6283
    %v7081 = vunpack.c.l.b16 %v6284
    %v7082 = vunpack.c.h.b16 %v6284
    %v7083 = vunpack.c.l.b16 %v6285
    %v7084 = vunpack.c.h.b16 %v6285
    %v7085 = vunpack.c.l.b16 %v6286
    %v7086 = vunpack.c.h.b16 %v6286
    %v7087 = vunpack.c.l.b16 %v6287
    %v7088 = vunpack.c.h.b16 %v6287
    %v7089 = vunpack.c.l.b16 %v6288
    %v7090 = vunpack.c.h.b16 %v6288
    %v7091 = vunpack.c.l.b16 %v6289
    %v7092 = vunpack.c.h.b16 %v6289
    %v7093 = vunpack.c.l.b16 %v6290
    %v7094 = vunpack.c.h.b16 %v6290
    %v7095 = vunpack.c.l.b16 %v6291
    %v7096 = vunpack.c.h.b16 %v6291
    %v7097 = vunpack.c.l.b16 %v6292
    %v7098 = vunpack.c.h.b16 %v6292
    %v7099 = vunpack.c.l.b16 %v6293
    %v7100 = vunpack.c.h.b16 %v6293
    %v7101 = vunpack.c.l.b16 %v6294
    %v7102 = vunpack.c.h.b16 %v6294
    %v7103 = vunpack.c.l.b16 %v6295
    %v7104 = vunpack.c.h.b16 %v6295
    %v7105 = vunpack.c.l.b16 %v6296
    %v7106 = vunpack.c.h.b16 %v6296
    %v7107 = vunpack.c.l.b16 %v6297
    %v7108 = vunpack.c.h.b16 %v6297
    %v7109 = vunpack.c.l.b16 %v6298
    %v7110 = vunpack.c.h.b16 %v6298
    %v7111 = vunpack.c.l.b16 %v6299
    %v7112 = vunpack.c.h.b16 %v6299
    %v7113 = vunpack.c.l.b16 %v6300
    %v7114 = vunpack.c.h.b16 %v6300
    %v7115 = vunpack.c.l.b16 %v6301
    %v7116 = vunpack.c.h.b16 %v6301
    %v7117 = vunpack.c.l.b16 %v6302
    %v7118 = vunpack.c.h.b16 %v6302
    %v7119 = vunpack.c.l.b16 %v6303
    %v7120 = vunpack.c.h.b16 %v6303
    %v7121 = vunpack.c.l.b16 %v6304
    %v7122 = vunpack.c.h.b16 %v6304
    %v7123 = vunpack.c.l.b16 %v6305
    %v7124 = vunpack.c.h.b16 %v6305
    %v7125 = vunpack.c.l.b16 %v6306
    %v7126 = vunpack.c.h.b16 %v6306
    %v7127 = vunpack.c.l.b16 %v6307
    %v7128 = vunpack.c.h.b16 %v6307
    %v7129 = vunpack.c.l.b16 %v6308
    %v7130 = vunpack.c.h.b16 %v6308
    %v7131 = vunpack.c.l.b16 %v6309
    %v7132 = vunpack.c.h.b16 %v6309
    %v7133 = vunpack.c.l.b16 %v6310
    %v7134 = vunpack.c.h.b16 %v6310
    %v7135 = vunpack.c.l.b16 %v6311
    %v7136 = vunpack.c.h.b16 %v6311
    %v7137 = vunpack.c.l.b16 %v6312
    %v7138 = vunpack.c.h.b16 %v6312
    %v7139 = vunpack.c.l.b16 %v6313
    %v7140 = vunpack.c.h.b16 %v6313
    %v7141 = vunpack.c.l.b16 %v6314
    %v7142 = vunpack.c.h.b16 %v6314
    %v7143 = vunpack.c.l.b16 %v6315
    %v7144 = vunpack.c.h.b16 %v6315
    %v7145 = vunpack.c.l.b16 %v6316
    %v7146 = vunpack.c.h.b16 %v6316
    %v7147 = vunpack.c.l.b16 %v6317
    %v7148 = vunpack.c.h.b16 %v6317
    %v7149 = vunpack.c.l.b16 %v6318
    %v7150 = vunpack.c.h.b16 %v6318
    %v7151 = vunpack.c.l.b16 %v6319
    %v7152 = vunpack.c.h.b16 %v6319
    %v7153 = vunpack.c.l.b16 %v6320
    %v7154 = vunpack.c.h.b16 %v6320
    %v7155 = vunpack.c.l.b16 %v6321
    %v7156 = vunpack.c.h.b16 %v6321
    %v7157 = vunpack.c.l.b16 %v6322
    %v7158 = vunpack.c.h.b16 %v6322
    %v7159 = vunpack.c.l.b16 %v6323
    %v7160 = vunpack.c.h.b16 %v6323
    %v7161 = vunpack.c.l.b16 %v6324
    %v7162 = vunpack.c.h.b16 %v6324
    %v7163 = vunpack.c.l.b16 %v6325
    %v7164 = vunpack.c.h.b16 %v6325
    %v7165 = vunpack.c.l.b16 %v6326
    %v7166 = vunpack.c.h.b16 %v6326
    %v7167 = vunpack.c.l.b16 %v6327
    %v7168 = vunpack.c.h.b16 %v6327
    %v7169 = vunpack.c.l.b16 %v6328
    %v7170 = vunpack.c.h.b16 %v6328
    %v7171 = vunpack.c.l.b16 %v6329
    %v7172 = vunpack.c.h.b16 %v6329
    %v7173 = vunpack.c.l.b16 %v6330
    %v7174 = vunpack.c.h.b16 %v6330
    %v7175 = vunpack.c.l.b16 %v6331
    %v7176 = vunpack.c.h.b16 %v6331
    %v7177 = vunpack.c.l.b16 %v6332
    %v7178 = vunpack.c.h.b16 %v6332
    %v7179 = vunpack.c.l.b16 %v6333
    %v7180 = vunpack.c.h.b16 %v6333
    %v7181 = vunpack.c.l.b16 %v6334
    %v7182 = vunpack.c.h.b16 %v6334
    %v7183 = vunpack.c.l.b16 %v6335
    %v7184 = vunpack.c.h.b16 %v6335
    %v7185 = vunpack.c.l.b16 %v6336
    %v7186 = vunpack.c.h.b16 %v6336
    %v7187 = vunpack.c.l.b16 %v6337
    %v7188 = vunpack.c.h.b16 %v6337
    %v7189 = vunpack.c.l.b16 %v6338
    %v7190 = vunpack.c.h.b16 %v6338
    %v7191 = vunpack.c.l.b16 %v6339
    %v7192 = vunpack.c.h.b16 %v6339
    %v7193 = vunpack.c.l.b16 %v6340
    %v7194 = vunpack.c.h.b16 %v6340
    %v7195 = vunpack.c.l.b16 %v6341
    %v7196 = vunpack.c.h.b16 %v6341
    %v7197 = vunpack.c.l.b16 %v6342
    %v7198 = vunpack.c.h.b16 %v6342
    %v7199 = vunpack.c.l.b16 %v6343
    %v7200 = vunpack.c.h.b16 %v6343
    %v7201 = vunpack.c.l.b16 %v6344
    %v7202 = vunpack.c.h.b16 %v6344
    %v7203 = vunpack.c.l.b16 %v6345
    %v7204 = vunpack.c.h.b16 %v6345
    %v7205 = vunpack.c.l.b16 %v6346
    %v7206 = vunpack.c.h.b16 %v6346
    %v7207 = vunpack.c.l.b16 %v6347
    %v7208 = vunpack.c.h.b16 %v6347
    %v7209 = vunpack.c.l.b16 %v6348
    %v7210 = vunpack.c.h.b16 %v6348
    %v7211 = vunpack.c.l.b16 %v6349
    %v7212 = vunpack.c.h.b16 %v6349
    %v7213 = vunpack.c.l.b16 %v6350
    %v7214 = vunpack.c.h.b16 %v6350
    %v7215 = vunpack.c.l.b16 %v6351
    %v7216 = vunpack.c.h.b16 %v6351
    %v7217 = vunpack.c.l.b16 %v6352
    %v7218 = vunpack.c.h.b16 %v6352
    %v7219 = vunpack.c.l.b16 %v6353
    %v7220 = vunpack.c.h.b16 %v6353
    %v7221 = vunpack.c.l.b16 %v6354
    %v7222 = vunpack.c.h.b16 %v6354
    %v7223 = vunpack.c.l.b16 %v6355
    %v7224 = vunpack.c.h.b16 %v6355
    %v7225 = vunpack.c.l.b16 %v6356
    %v7226 = vunpack.c.h.b16 %v6356
    %v7227 = vunpack.c.l.b16 %v6357
    %v7228 = vunpack.c.h.b16 %v6357
    %v7229 = vunpack.c.l.b16 %v6358
    %v7230 = vunpack.c.h.b16 %v6358
    %v7231 = vunpack.c.l.b16 %v6359
    %v7232 = vunpack.c.h.b16 %v6359
    %v7233 = vunpack.c.l.b16 %v6360
    %v7234 = vunpack.c.h.b16 %v6360
    %v7235 = vunpack.c.l.b16 %v6361
    %v7236 = vunpack.c.h.b16 %v6361
    %v7237 = vunpack.c.l.b16 %v6362
    %v7238 = vunpack.c.h.b16 %v6362
    %v7239 = vunpack.c.l.b16 %v6363
    %v7240 = vunpack.c.h.b16 %v6363
    %v7241 = vunpack.c.l.b16 %v6364
    %v7242 = vunpack.c.h.b16 %v6364
    %v7243 = vunpack.c.l.b16 %v6365
    %v7244 = vunpack.c.h.b16 %v6365
    %v7245 = vunpack.c.l.b16 %v6366
    %v7246 = vunpack.c.h.b16 %v6366
    %v7247 = vunpack.c.l.b16 %v6367
    %v7248 = vunpack.c.h.b16 %v6367
    %v7249 = vunpack.c.l.b16 %v6368
    %v7250 = vunpack.c.h.b16 %v6368
    %v7251 = vunpack.c.l.b16 %v6369
    %v7252 = vunpack.c.h.b16 %v6369
    %v7253 = vunpack.c.l.b16 %v6370
    %v7254 = vunpack.c.h.b16 %v6370
    %v7255 = vunpack.c.l.b16 %v6371
    %v7256 = vunpack.c.h.b16 %v6371
    %v7257 = vunpack.c.l.b16 %v6372
    %v7258 = vunpack.c.h.b16 %v6372
    %v7259 = vunpack.c.l.b16 %v6373
    %v7260 = vunpack.c.h.b16 %v6373
    %v7261 = vunpack.c.l.b16 %v6374
    %v7262 = vunpack.c.h.b16 %v6374
    %v7263 = vunpack.c.l.b16 %v6375
    %v7264 = vunpack.c.h.b16 %v6375
    %v7265 = vunpack.c.l.b16 %v6376
    %v7266 = vunpack.c.h.b16 %v6376
    %v7267 = vunpack.c.l.b16 %v6377
    %v7268 = vunpack.c.h.b16 %v6377
    %v7269 = vunpack.c.l.b16 %v6378
    %v7270 = vunpack.c.h.b16 %v6378
    %v7271 = vunpack.c.l.b16 %v6379
    %v7272 = vunpack.c.h.b16 %v6379
    %v7273 = vunpack.c.l.b16 %v6380
    %v7274 = vunpack.c.h.b16 %v6380
    %v7275 = vunpack.c.l.b16 %v6381
    %v7276 = vunpack.c.h.b16 %v6381
    %v7277 = vunpack.c.l.b16 %v6382
    %v7278 = vunpack.c.h.b16 %v6382
    %v7279 = vunpack.c.l.b16 %v6383
    %v7280 = vunpack.c.h.b16 %v6383
    %v7281 = vunpack.c.l.b16 %v6384
    %v7282 = vunpack.c.h.b16 %v6384
    %v7283 = vunpack.c.l.b16 %v6385
    %v7284 = vunpack.c.h.b16 %v6385
    %v7285 = vunpack.c.l.b16 %v6386
    %v7286 = vunpack.c.h.b16 %v6386
    %v7287 = vunpack.c.l.b16 %v6387
    %v7288 = vunpack.c.h.b16 %v6387
    %v7289 = vunpack.c.l.b16 %v6388
    %v7290 = vunpack.c.h.b16 %v6388
    %v7291 = vunpack.c.l.b16 %v6389
    %v7292 = vunpack.c.h.b16 %v6389
    %v7293 = vunpack.c.l.b16 %v6390
    %v7294 = vunpack.c.h.b16 %v6390
    %v7295 = vunpack.c.l.b16 %v6391
    %v7296 = vunpack.c.h.b16 %v6391
    %v7297 = vunpack.c.l.b16 %v6392
    %v7298 = vunpack.c.h.b16 %v6392
    %v7299 = vunpack.c.l.b16 %v6393
    %v7300 = vunpack.c.h.b16 %v6393
    %v7301 = vunpack.c.l.b16 %v6394
    %v7302 = vunpack.c.h.b16 %v6394
    %v7303 = vunpack.c.l.b16 %v6395
    %v7304 = vunpack.c.h.b16 %v6395
    %v7305 = vunpack.c.l.b16 %v6396
    %v7306 = vunpack.c.h.b16 %v6396
    %v7307 = vunpack.c.l.b16 %v6397
    %v7308 = vunpack.c.h.b16 %v6397
    %v7309 = vunpack.c.l.b16 %v6398
    %v7310 = vunpack.c.h.b16 %v6398
    %v7311 = vunpack.c.l.b16 %v6399
    %v7312 = vunpack.c.h.b16 %v6399
    %v7313 = vunpack.c.l.b16 %v6400
    %v7314 = vunpack.c.h.b16 %v6400
    %v7315 = vunpack.c.l.b16 %v6401
    %v7316 = vunpack.c.h.b16 %v6401
    %v7317 = vunpack.c.l.b16 %v6402
    %v7318 = vunpack.c.h.b16 %v6402
    %v7319 = vunpack.c.l.b16 %v6403
    %v7320 = vunpack.c.h.b16 %v6403
    %v7321 = vunpack.c.l.b16 %v6404
    %v7322 = vunpack.c.h.b16 %v6404
    %v7323 = vunpack.c.l.b16 %v6405
    %v7324 = vunpack.c.h.b16 %v6405
    %v7325 = vunpack.c.l.b16 %v6406
    %v7326 = vunpack.c.h.b16 %v6406
    %v7327 = vunpack.c.l.b16 %v6407
    %v7328 = vunpack.c.h.b16 %v6407
    %v7329 = vunpack.c.l.b16 %v6408
    %v7330 = vunpack.c.h.b16 %v6408
    %v7331 = vunpack.c.l.b16 %v6409
    %v7332 = vunpack.c.h.b16 %v6409
    %v7333 = vunpack.c.l.b16 %v6410
    %v7334 = vunpack.c.h.b16 %v6410
    %v7335 = vunpack.c.l.b16 %v6411
    %v7336 = vunpack.c.h.b16 %v6411
    %v7337 = vunpack.c.l.b16 %v6412
    %v7338 = vunpack.c.h.b16 %v6412
    %v7339 = vunpack.c.l.b16 %v6413
    %v7340 = vunpack.c.h.b16 %v6413
    %v7341 = vunpack.c.l.b16 %v6414
    %v7342 = vunpack.c.h.b16 %v6414
    %v7343 = vunpack.c.l.b16 %v6415
    %v7344 = vunpack.c.h.b16 %v6415
    %v7345 = vunpack.c.l.b16 %v6416
    %v7346 = vunpack.c.h.b16 %v6416
    %v7347 = vunpack.c.l.b16 %v6417
    %v7348 = vunpack.c.h.b16 %v6417
    %v7349 = vunpack.c.l.b16 %v6418
    %v7350 = vunpack.c.h.b16 %v6418
    %v7351 = vunpack.c.l.b16 %v6419
    %v7352 = vunpack.c.h.b16 %v6419
    %v7353 = vunpack.c.l.b16 %v6420
    %v7354 = vunpack.c.h.b16 %v6420
    %v7355 = vunpack.c.l.b16 %v6421
    %v7356 = vunpack.c.h.b16 %v6421
    %v7357 = vunpack.c.l.b16 %v6422
    %v7358 = vunpack.c.h.b16 %v6422
    %v7359 = vunpack.c.l.b16 %v6423
    %v7360 = vunpack.c.h.b16 %v6423
    %v7361 = vunpack.c.l.b16 %v6424
    %v7362 = vunpack.c.h.b16 %v6424
    %v7363 = vunpack.c.l.b16 %v6425
    %v7364 = vunpack.c.h.b16 %v6425
    %v7365 = vunpack.c.l.b16 %v6426
    %v7366 = vunpack.c.h.b16 %v6426
    %v7367 = vunpack.c.l.b16 %v6427
    %v7368 = vunpack.c.h.b16 %v6427
    %v7369 = vunpack.c.l.b16 %v6428
    %v7370 = vunpack.c.h.b16 %v6428
    %v7371 = vunpack.c.l.b16 %v6429
    %v7372 = vunpack.c.h.b16 %v6429
    %v7373 = vunpack.c.l.b16 %v6430
    %v7374 = vunpack.c.h.b16 %v6430
    %v7375 = vunpack.c.l.b16 %v6431
    %v7376 = vunpack.c.h.b16 %v6431
    %v7377 = vunpack.c.l.b16 %v6432
    %v7378 = vunpack.c.h.b16 %v6432
    %v7379 = vunpack.c.l.b16 %v6433
    %v7380 = vunpack.c.h.b16 %v6433
    %v7381 = vunpack.c.l.b16 %v6434
    %v7382 = vunpack.c.h.b16 %v6434
    %v7383 = vunpack.c.l.b16 %v6435
    %v7384 = vunpack.c.h.b16 %v6435
    %v7385 = vunpack.c.l.b16 %v6436
    %v7386 = vunpack.c.h.b16 %v6436
    %v7387 = vunpack.c.l.b16 %v6437
    %v7388 = vunpack.c.h.b16 %v6437
    %v7389 = vunpack.c.l.b16 %v6438
    %v7390 = vunpack.c.h.b16 %v6438
    %v7391 = vunpack.c.l.b16 %v6439
    %v7392 = vunpack.c.h.b16 %v6439
    %v7393 = vunpack.c.l.b16 %v6440
    %v7394 = vunpack.c.h.b16 %v6440
    %v7395 = vunpack.c.l.b16 %v6441
    %v7396 = vunpack.c.h.b16 %v6441
    %v7397 = vunpack.c.l.b16 %v6442
    %v7398 = vunpack.c.h.b16 %v6442
    %v7399 = vunpack.c.l.b16 %v6443
    %v7400 = vunpack.c.h.b16 %v6443
    %v7401 = vunpack.c.l.b16 %v6444
    %v7402 = vunpack.c.h.b16 %v6444
    %v7403 = vunpack.c.l.b16 %v6445
    %v7404 = vunpack.c.h.b16 %v6445
    %v7405 = vunpack.c.l.b16 %v6446
    %v7406 = vunpack.c.h.b16 %v6446
    %v7407 = vunpack.c.l.b16 %v6447
    %v7408 = vunpack.c.h.b16 %v6447
    %v7409 = vunpack.c.l.b16 %v6448
    %v7410 = vunpack.c.h.b16 %v6448
    %v7411 = vunpack.c.l.b16 %v6449
    %v7412 = vunpack.c.h.b16 %v6449
    %v7413 = vunpack.c.l.b16 %v6450
    %v7414 = vunpack.c.h.b16 %v6450
    %v7415 = vunpack.c.l.b16 %v6451
    %v7416 = vunpack.c.h.b16 %v6451
    %v7417 = vunpack.c.l.b16 %v6452
    %v7418 = vunpack.c.h.b16 %v6452
    %v7419 = vunpack.c.l.b16 %v6453
    %v7420 = vunpack.c.h.b16 %v6453
    %v7421 = vunpack.c.l.b16 %v6454
    %v7422 = vunpack.c.h.b16 %v6454
    %v7423 = vunpack.c.l.b16 %v6455
    %v7424 = vunpack.c.h.b16 %v6455
    %v7425 = vunpack.c.l.b16 %v6456
    %v7426 = vunpack.c.h.b16 %v6456
    %v7427 = vunpack.c.l.b16 %v6457
    %v7428 = vunpack.c.h.b16 %v6457
    %v7429 = vunpack.c.l.b16 %v6458
    %v7430 = vunpack.c.h.b16 %v6458
    %v7431 = vpack.c.b16 %v6793, %v6791
    %v7432 = vpack.c.b16 %v6794, %v6792
    %v7433 = vpack.c.b16 %v6797, %v6795
    %v7434 = vpack.c.b16 %v6798, %v6796
    %v7435 = vpack.c.b16 %v6801, %v6799
    %v7436 = vpack.c.b16 %v6802, %v6800
    %v7437 = vpack.c.b16 %v6805, %v6803
    %v7438 = vpack.c.b16 %v6806, %v6804
    %v7439 = vpack.c.b16 %v6809, %v6807
    %v7440 = vpack.c.b16 %v6810, %v6808
    %v7441 = vpack.c.b16 %v6813, %v6811
    %v7442 = vpack.c.b16 %v6814, %v6812
    %v7443 = vpack.c.b16 %v6817, %v6815
    %v7444 = vpack.c.b16 %v6818, %v6816
    %v7445 = vpack.c.b16 %v6821, %v6819
    %v7446 = vpack.c.b16 %v6822, %v6820
    %v7447 = vpack.c.b16 %v6825, %v6823
    %v7448 = vpack.c.b16 %v6826, %v6824
    %v7449 = vpack.c.b16 %v6829, %v6827
    %v7450 = vpack.c.b16 %v6830, %v6828
    %v7451 = vpack.c.b16 %v6833, %v6831
    %v7452 = vpack.c.b16 %v6834, %v6832
    %v7453 = vpack.c.b16 %v6837, %v6835
    %v7454 = vpack.c.b16 %v6838, %v6836
    %v7455 = vpack.c.b16 %v6841, %v6839
    %v7456 = vpack.c.b16 %v6842, %v6840
    %v7457 = vpack.c.b16 %v6845, %v6843
    %v7458 = vpack.c.b16 %v6846, %v6844
    %v7459 = vpack.c.b16 %v6849, %v6847
    %v7460 = vpack.c.b16 %v6850, %v6848
    %v7461 = vpack.c.b16 %v6853, %v6851
    %v7462 = vpack.c.b16 %v6854, %v6852
    %v7463 = vpack.c.b16 %v6857, %v6855
    %v7464 = vpack.c.b16 %v6858, %v6856
    %v7465 = vpack.c.b16 %v6861, %v6859
    %v7466 = vpack.c.b16 %v6862, %v6860
    %v7467 = vpack.c.b16 %v6865, %v6863
    %v7468 = vpack.c.b16 %v6866, %v6864
    %v7469 = vpack.c.b16 %v6869, %v6867
    %v7470 = vpack.c.b16 %v6870, %v6868
    %v7471 = vpack.c.b16 %v6873, %v6871
    %v7472 = vpack.c.b16 %v6874, %v6872
    %v7473 = vpack.c.b16 %v6877, %v6875
    %v7474 = vpack.c.b16 %v6878, %v6876
    %v7475 = vpack.c.b16 %v6881, %v6879
    %v7476 = vpack.c.b16 %v6882, %v6880
    %v7477 = vpack.c.b16 %v6885, %v6883
    %v7478 = vpack.c.b16 %v6886, %v6884
    %v7479 = vpack.c.b16 %v6889, %v6887
    %v7480 = vpack.c.b16 %v6890, %v6888
    %v7481 = vpack.c.b16 %v6893, %v6891
    %v7482 = vpack.c.b16 %v6894, %v6892
    %v7483 = vpack.c.b16 %v6897, %v6895
    %v7484 = vpack.c.b16 %v6898, %v6896
    %v7485 = vpack.c.b16 %v6901, %v6899
    %v7486 = vpack.c.b16 %v6902, %v6900
    %v7487 = vpack.c.b16 %v6905, %v6903
    %v7488 = vpack.c.b16 %v6906, %v6904
    %v7489 = vpack.c.b16 %v6909, %v6907
    %v7490 = vpack.c.b16 %v6910, %v6908
    %v7491 = vpack.c.b16 %v6913, %v6911
    %v7492 = vpack.c.b16 %v6914, %v6912
    %v7493 = vpack.c.b16 %v6917, %v6915
    %v7494 = vpack.c.b16 %v6918, %v6916
    %v7495 = vpack.c.b16 %v6921, %v6919
    %v7496 = vpack.c.b16 %v6922, %v6920
    %v7497 = vpack.c.b16 %v6925, %v6923
    %v7498 = vpack.c.b16 %v6926, %v6924
    %v7499 = vpack.c.b16 %v6929, %v6927
    %v7500 = vpack.c.b16 %v6930, %v6928
    %v7501 = vpack.c.b16 %v6933, %v6931
    %v7502 = vpack.c.b16 %v6934, %v6932
    %v7503 = vpack.c.b16 %v6937, %v6935
    %v7504 = vpack.c.b16 %v6938, %v6936
    %v7505 = vpack.c.b16 %v6941, %v6939
    %v7506 = vpack.c.b16 %v6942, %v6940
    %v7507 = vpack.c.b16 %v6945, %v6943
    %v7508 = vpack.c.b16 %v6946, %v6944
    %v7509 = vpack.c.b16 %v6949, %v6947
    %v7510 = vpack.c.b16 %v6950, %v6948
    %v7511 = vpack.c.b16 %v6953, %v6951
    %v7512 = vpack.c.b16 %v6954, %v6952
    %v7513 = vpack.c.b16 %v6957, %v6955
    %v7514 = vpack.c.b16 %v6958, %v6956
    %v7515 = vpack.c.b16 %v6961, %v6959
    %v7516 = vpack.c.b16 %v6962, %v6960
    %v7517 = vpack.c.b16 %v6965, %v6963
    %v7518 = vpack.c.b16 %v6966, %v6964
    %v7519 = vpack.c.b16 %v6969, %v6967
    %v7520 = vpack.c.b16 %v6970, %v6968
    %v7521 = vpack.c.b16 %v6973, %v6971
    %v7522 = vpack.c.b16 %v6974, %v6972
    %v7523 = vpack.c.b16 %v6977, %v6975
    %v7524 = vpack.c.b16 %v6978, %v6976
    %v7525 = vpack.c.b16 %v6981, %v6979
    %v7526 = vpack.c.b16 %v6982, %v6980
    %v7527 = vpack.c.b16 %v6985, %v6983
    %v7528 = vpack.c.b16 %v6986, %v6984
    %v7529 = vpack.c.b16 %v6989, %v6987
    %v7530 = vpack.c.b16 %v6990, %v6988
    %v7531 = vpack.c.b16 %v6993, %v6991
    %v7532 = vpack.c.b16 %v6994, %v6992
    %v7533 = vpack.c.b16 %v6997, %v6995
    %v7534 = vpack.c.b16 %v6998, %v6996
    %v7535 = vpack.c.b16 %v7001, %v6999
    %v7536 = vpack.c.b16 %v7002, %v7000
    %v7537 = vpack.c.b16 %v7005, %v7003
    %v7538 = vpack.c.b16 %v7006, %v7004
    %v7539 = vpack.c.b16 %v7009, %v7007
    %v7540 = vpack.c.b16 %v7010, %v7008
    %v7541 = vpack.c.b16 %v7013, %v7011
    %v7542 = vpack.c.b16 %v7014, %v7012
    %v7543 = vpack.c.b16 %v7017, %v7015
    %v7544 = vpack.c.b16 %v7018, %v7016
    %v7545 = vpack.c.b16 %v7021, %v7019
    %v7546 = vpack.c.b16 %v7022, %v7020
    %v7547 = vpack.c.b16 %v7025, %v7023
    %v7548 = vpack.c.b16 %v7026, %v7024
    %v7549 = vpack.c.b16 %v7029, %v7027
    %v7550 = vpack.c.b16 %v7030, %v7028
    %v7551 = vpack.c.b16 %v7033, %v7031
    %v7552 = vpack.c.b16 %v7034, %v7032
    %v7553 = vpack.c.b16 %v7037, %v7035
    %v7554 = vpack.c.b16 %v7038, %v7036
    %v7555 = vpack.c.b16 %v7041, %v7039
    %v7556 = vpack.c.b16 %v7042, %v7040
    %v7557 = vpack.c.b16 %v7045, %v7043
    %v7558 = vpack.c.b16 %v7046, %v7044
    %v7559 = vpack.c.b16 %v7049, %v7047
    %v7560 = vpack.c.b16 %v7050, %v7048
    %v7561 = vpack.c.b16 %v7053, %v7051
    %v7562 = vpack.c.b16 %v7054, %v7052
    %v7563 = vpack.c.b16 %v7057, %v7055
    %v7564 = vpack.c.b16 %v7058, %v7056
    %v7565 = vpack.c.b16 %v7061, %v7059
    %v7566 = vpack.c.b16 %v7062, %v7060
    %v7567 = vpack.c.b16 %v7065, %v7063
    %v7568 = vpack.c.b16 %v7066, %v7064
    %v7569 = vpack.c.b16 %v7069, %v7067
    %v7570 = vpack.c.b16 %v7070, %v7068
    %v7571 = vpack.c.b16 %v7073, %v7071
    %v7572 = vpack.c.b16 %v7074, %v7072
    %v7573 = vpack.c.b16 %v7077, %v7075
    %v7574 = vpack.c.b16 %v7078, %v7076
    %v7575 = vpack.c.b16 %v7081, %v7079
    %v7576 = vpack.c.b16 %v7082, %v7080
    %v7577 = vpack.c.b16 %v7085, %v7083
    %v7578 = vpack.c.b16 %v7086, %v7084
    %v7579 = vpack.c.b16 %v7089, %v7087
    %v7580 = vpack.c.b16 %v7090, %v7088
    %v7581 = vpack.c.b16 %v7093, %v7091
    %v7582 = vpack.c.b16 %v7094, %v7092
    %v7583 = vpack.c.b16 %v7097, %v7095
    %v7584 = vpack.c.b16 %v7098, %v7096
    %v7585 = vpack.c.b16 %v7101, %v7099
    %v7586 = vpack.c.b16 %v7102, %v7100
    %v7587 = vpack.c.b16 %v7105, %v7103
    %v7588 = vpack.c.b16 %v7106, %v7104
    %v7589 = vpack.c.b16 %v7109, %v7107
    %v7590 = vpack.c.b16 %v7110, %v7108
    %v7591 = vpack.c.b16 %v7113, %v7111
    %v7592 = vpack.c.b16 %v7114, %v7112
    %v7593 = vpack.c.b16 %v7117, %v7115
    %v7594 = vpack.c.b16 %v7118, %v7116
    %v7595 = vpack.c.b16 %v7121, %v7119
    %v7596 = vpack.c.b16 %v7122, %v7120
    %v7597 = vpack.c.b16 %v7125, %v7123
    %v7598 = vpack.c.b16 %v7126, %v7124
    %v7599 = vpack.c.b16 %v7129, %v7127
    %v7600 = vpack.c.b16 %v7130, %v7128
    %v7601 = vpack.c.b16 %v7133, %v7131
    %v7602 = vpack.c.b16 %v7134, %v7132
    %v7603 = vpack.c.b16 %v7137, %v7135
    %v7604 = vpack.c.b16 %v7138, %v7136
    %v7605 = vpack.c.b16 %v7141, %v7139
    %v7606 = vpack.c.b16 %v7142, %v7140
    %v7607 = vpack.c.b16 %v7145, %v7143
    %v7608 = vpack.c.b16 %v7146, %v7144
    %v7609 = vpack.c.b16 %v7149, %v7147
    %v7610 = vpack.c.b16 %v7150, %v7148
    %v7611 = vpack.c.b16 %v7153, %v7151
    %v7612 = vpack.c.b16 %v7154, %v7152
    %v7613 = vpack.c.b16 %v7157, %v7155
    %v7614 = vpack.c.b16 %v7158, %v7156
    %v7615 = vpack.c.b16 %v7161, %v7159
    %v7616 = vpack.c.b16 %v7162, %v7160
    %v7617 = vpack.c.b16 %v7165, %v7163
    %v7618 = vpack.c.b16 %v7166, %v7164
    %v7619 = vpack.c.b16 %v7169, %v7167
    %v7620 = vpack.c.b16 %v7170, %v7168
    %v7621 = vpack.c.b16 %v7173, %v7171
    %v7622 = vpack.c.b16 %v7174, %v7172
    %v7623 = vpack.c.b16 %v7177, %v7175
    %v7624 = vpack.c.b16 %v7178, %v7176
    %v7625 = vpack.c.b16 %v7181, %v7179
    %v7626 = vpack.c.b16 %v7182, %v7180
    %v7627 = vpack.c.b16 %v7185, %v7183
    %v7628 = vpack.c.b16 %v7186, %v7184
    %v7629 = vpack.c.b16 %v7189, %v7187
    %v7630 = vpack.c.b16 %v7190, %v7188
    %v7631 = vpack.c.b16 %v7193, %v7191
    %v7632 = vpack.c.b16 %v7194, %v7192
    %v7633 = vpack.c.b16 %v7197, %v7195
    %v7634 = vpack.c.b16 %v7198, %v7196
    %v7635 = vpack.c.b16 %v7201, %v7199
    %v7636 = vpack.c.b16 %v7202, %v7200
    %v7637 = vpack.c.b16 %v7205, %v7203
    %v7638 = vpack.c.b16 %v7206, %v7204
    %v7639 = vpack.c.b16 %v7209, %v7207
    %v7640 = vpack.c.b16 %v7210, %v7208
    %v7641 = vpack.c.b16 %v7213, %v7211
    %v7642 = vpack.c.b16 %v7214, %v7212
    %v7643 = vpack.c.b16 %v7217, %v7215
    %v7644 = vpack.c.b16 %v7218, %v7216
    %v7645 = vpack.c.b16 %v7221, %v7219
    %v7646 = vpack.c.b16 %v7222, %v7220
    %v7647 = vpack.c.b16 %v7225, %v7223
    %v7648 = vpack.c.b16 %v7226, %v7224
    %v7649 = vpack.c.b16 %v7229, %v7227
    %v7650 = vpack.c.b16 %v7230, %v7228
    %v7651 = vpack.c.b16 %v7233, %v7231
    %v7652 = vpack.c.b16 %v7234, %v7232
    %v7653 = vpack.c.b16 %v7237, %v7235
    %v7654 = vpack.c.b16 %v7238, %v7236
    %v7655 = vpack.c.b16 %v7241, %v7239
    %v7656 = vpack.c.b16 %v7242, %v7240
    %v7657 = vpack.c.b16 %v7245, %v7243
    %v7658 = vpack.c.b16 %v7246, %v7244
    %v7659 = vpack.c.b16 %v7249, %v7247
    %v7660 = vpack.c.b16 %v7250, %v7248
    %v7661 = vpack.c.b16 %v7253, %v7251
    %v7662 = vpack.c.b16 %v7254, %v7252
    %v7663 = vpack.c.b16 %v7257, %v7255
    %v7664 = vpack.c.b16 %v7258, %v7256
    %v7665 = vpack.c.b16 %v7261, %v7259
    %v7666 = vpack.c.b16 %v7262, %v7260
    %v7667 = vpack.c.b16 %v7265, %v7263
    %v7668 = vpack.c.b16 %v7266, %v7264
    %v7669 = vpack.c.b16 %v7269, %v7267
    %v7670 = vpack.c.b16 %v7270, %v7268
    %v7671 = vpack.c.b16 %v7273, %v7271
    %v7672 = vpack.c.b16 %v7274, %v7272
    %v7673 = vpack.c.b16 %v7277, %v7275
    %v7674 = vpack.c.b16 %v7278, %v7276
    %v7675 = vpack.c.b16 %v7281, %v7279
    %v7676 = vpack.c.b16 %v7282, %v7280
    %v7677 = vpack.c.b16 %v7285, %v7283
    %v7678 = vpack.c.b16 %v7286, %v7284
    %v7679 = vpack.c.b16 %v7289, %v7287
    %v7680 = vpack.c.b16 %v7290, %v7288
    %v7681 = vpack.c.b16 %v7293, %v7291
    %v7682 = vpack.c.b16 %v7294, %v7292
    %v7683 = vpack.c.b16 %v7297, %v7295
    %v7684 = vpack.c.b16 %v7298, %v7296
    %v7685 = vpack.c.b16 %v7301, %v7299
    %v7686 = vpack.c.b16 %v7302, %v7300
    %v7687 = vpack.c.b16 %v7305, %v7303
    %v7688 = vpack.c.b16 %v7306, %v7304
    %v7689 = vpack.c.b16 %v7309, %v7307
    %v7690 = vpack.c.b16 %v7310, %v7308
    %v7691 = vpack.c.b16 %v7313, %v7311
    %v7692 = vpack.c.b16 %v7314, %v7312
    %v7693 = vpack.c.b16 %v7317, %v7315
    %v7694 = vpack.c.b16 %v7318, %v7316
    %v7695 = vpack.c.b16 %v7321, %v7319
    %v7696 = vpack.c.b16 %v7322, %v7320
    %v7697 = vpack.c.b16 %v7325, %v7323
    %v7698 = vpack.c.b16 %v7326, %v7324
    %v7699 = vpack.c.b16 %v7329, %v7327
    %v7700 = vpack.c.b16 %v7330, %v7328
    %v7701 = vpack.c.b16 %v7333, %v7331
    %v7702 = vpack.c.b16 %v7334, %v7332
    %v7703 = vpack.c.b16 %v7337, %v7335
    %v7704 = vpack.c.b16 %v7338, %v7336
    %v7705 = vpack.c.b16 %v7341, %v7339
    %v7706 = vpack.c.b16 %v7342, %v7340
    %v7707 = vpack.c.b16 %v7345, %v7343
    %v7708 = vpack.c.b16 %v7346, %v7344
    %v7709 = vpack.c.b16 %v7349, %v7347
    %v7710 = vpack.c.b16 %v7350, %v7348
    %v7711 = vpack.c.b16 %v7353, %v7351
    %v7712 = vpack.c.b16 %v7354, %v7352
    %v7713 = vpack.c.b16 %v7357, %v7355
    %v7714 = vpack.c.b16 %v7358, %v7356
    %v7715 = vpack.c.b16 %v7361, %v7359
    %v7716 = vpack.c.b16 %v7362, %v7360
    %v7717 = vpack.c.b16 %v7365, %v7363
    %v7718 = vpack.c.b16 %v7366, %v7364
    %v7719 = vpack.c.b16 %v7369, %v7367
    %v7720 = vpack.c.b16 %v7370, %v7368
    %v7721 = vpack.c.b16 %v7373, %v7371
    %v7722 = vpack.c.b16 %v7374, %v7372
    %v7723 = vpack.c.b16 %v7377, %v7375
    %v7724 = vpack.c.b16 %v7378, %v7376
    %v7725 = vpack.c.b16 %v7381, %v7379
    %v7726 = vpack.c.b16 %v7382, %v7380
    %v7727 = vpack.c.b16 %v7385, %v7383
    %v7728 = vpack.c.b16 %v7386, %v7384
    %v7729 = vpack.c.b16 %v7389, %v7387
    %v7730 = vpack.c.b16 %v7390, %v7388
    %v7731 = vpack.c.b16 %v7393, %v7391
    %v7732 = vpack.c.b16 %v7394, %v7392
    %v7733 = vpack.c.b16 %v7397, %v7395
    %v7734 = vpack.c.b16 %v7398, %v7396
    %v7735 = vpack.c.b16 %v7401, %v7399
    %v7736 = vpack.c.b16 %v7402, %v7400
    %v7737 = vpack.c.b16 %v7405, %v7403
    %v7738 = vpack.c.b16 %v7406, %v7404
    %v7739 = vpack.c.b16 %v7409, %v7407
    %v7740 = vpack.c.b16 %v7410, %v7408
    %v7741 = vpack.c.b16 %v7413, %v7411
    %v7742 = vpack.c.b16 %v7414, %v7412
    %v7743 = vpack.c.b16 %v7417, %v7415
    %v7744 = vpack.c.b16 %v7418, %v7416
    %v7745 = vpack.c.b16 %v7421, %v7419
    %v7746 = vpack.c.b16 %v7422, %v7420
    %v7747 = vpack.c.b16 %v7425, %v7423
    %v7748 = vpack.c.b16 %v7426, %v7424
    %v7749 = vpack.c.b16 %v7429, %v7427
    %v7750 = vpack.c.b16 %v7430, %v7428
    %8071 = vmatprep.subr.bf16.mxu0 %v7432
    %8072 = vmatpush1.bf16.msra.mxu0 %v7431
    %8073 = vmatprep.subr.bf16.mxu0 %v7434
    %8074 = vmatpush1.bf16.msra.mxu0 %v7433
    %8075 = vmatprep.subr.bf16.mxu0 %v7436
    %8076 = vmatpush1.bf16.msra.mxu0 %v7435
    %8077 = vmatprep.subr.bf16.mxu0 %v7438
    %8078 = vmatpush1.bf16.msra.mxu0 %v7437
    %8079 = vmatprep.subr.bf16.mxu0 %v7440
    %8080 = vmatpush1.bf16.msra.mxu0 %v7439
    %8081 = vmatprep.subr.bf16.mxu0 %v7442
    %8082 = vmatpush1.bf16.msra.mxu0 %v7441
    %8083 = vmatprep.subr.bf16.mxu0 %v7444
    %8084 = vmatpush1.bf16.msra.mxu0 %v7443
    %8085 = vmatprep.subr.bf16.mxu0 %v7446
    %8086 = vmatpush1.bf16.msra.mxu0 %v7445
    %8087 = vmatprep.subr.bf16.mxu0 %v7448
    %8088 = vmatpush1.bf16.msra.mxu0 %v7447
    %8089 = vmatprep.subr.bf16.mxu0 %v7450
    %8090 = vmatpush1.bf16.msra.mxu0 %v7449
    %8091 = vmatprep.subr.bf16.mxu0 %v7452
    %8092 = vmatpush1.bf16.msra.mxu0 %v7451
    %8093 = vmatprep.subr.bf16.mxu0 %v7454
    %8094 = vmatpush1.bf16.msra.mxu0 %v7453
    %8095 = vmatprep.subr.bf16.mxu0 %v7456
    %8096 = vmatpush1.bf16.msra.mxu0 %v7455
    %8097 = vmatprep.subr.bf16.mxu0 %v7458
    %8098 = vmatpush1.bf16.msra.mxu0 %v7457
    %8099 = vmatprep.subr.bf16.mxu0 %v7460
    %8100 = vmatpush1.bf16.msra.mxu0 %v7459
    %8101 = vmatprep.subr.bf16.mxu0 %v7462
    %8102 = vmatpush1.bf16.msra.mxu0 %v7461
    %8103 = vmatprep.mubr.bf16.mxu0 %v6120
    %8104 = vmatmul.mubr.bf16.gmra.mrb[0].mxu0 %v6119
    %v8105 = vpop.f32.mrb[0].mxu0
    %v8106 = vadd.f32 %v6464, %v8105
    %v8107 = vpop.f32.mrb[0].mxu0
    %v8108 = vadd.f32 %v6468, %v8107
    %v8109 = vpop.f32.mrb[0].mxu0
    %v8110 = vadd.f32 %v6464, %v8109
    %v8111 = vpop.f32.mrb[0].mxu0
    %v8112 = vadd.f32 %v6468, %v8111
    %8113 = vdwg.mxu0
    %8114 = vmatprep.subr.bf16.mxu0 %v7464
    %8115 = vmatpush1.bf16.msra.mxu0 %v7463
    %8116 = vmatprep.subr.bf16.mxu0 %v7466
    %8117 = vmatpush1.bf16.msra.mxu0 %v7465
    %8118 = vmatprep.subr.bf16.mxu0 %v7468
    %8119 = vmatpush1.bf16.msra.mxu0 %v7467
    %8120 = vmatprep.subr.bf16.mxu0 %v7470
    %8121 = vmatpush1.bf16.msra.mxu0 %v7469
    %8122 = vmatprep.subr.bf16.mxu0 %v7472
    %8123 = vmatpush1.bf16.msra.mxu0 %v7471
    %8124 = vmatprep.subr.bf16.mxu0 %v7474
    %8125 = vmatpush1.bf16.msra.mxu0 %v7473
    %8126 = vmatprep.subr.bf16.mxu0 %v7476
    %8127 = vmatpush1.bf16.msra.mxu0 %v7475
    %8128 = vmatprep.subr.bf16.mxu0 %v7478
    %8129 = vmatpush1.bf16.msra.mxu0 %v7477
    %8130 = vmatprep.subr.bf16.mxu0 %v7480
    %8131 = vmatpush1.bf16.msra.mxu0 %v7479
    %8132 = vmatprep.subr.bf16.mxu0 %v7482
    %8133 = vmatpush1.bf16.msra.mxu0 %v7481
    %8134 = vmatprep.subr.bf16.mxu0 %v7484
    %8135 = vmatpush1.bf16.msra.mxu0 %v7483
    %8136 = vmatprep.subr.bf16.mxu0 %v7486
    %8137 = vmatpush1.bf16.msra.mxu0 %v7485
    %8138 = vmatprep.subr.bf16.mxu0 %v7488
    %8139 = vmatpush1.bf16.msra.mxu0 %v7487
    %8140 = vmatprep.subr.bf16.mxu0 %v7490
    %8141 = vmatpush1.bf16.msra.mxu0 %v7489
    %8142 = vmatprep.subr.bf16.mxu0 %v7492
    %8143 = vmatpush1.bf16.msra.mxu0 %v7491
    %8144 = vmatprep.subr.bf16.mxu0 %v7494
    %8145 = vmatpush1.bf16.msra.mxu0 %v7493
    %8146 = vmatprep.mubr.bf16.mxu0 %v6122
    %8147 = vmatmul.mubr.bf16.gmra.mrb[0].mxu0 %v6121
    %v8148 = vpop.f32.mrb[0].mxu0
    %v8149 = vadd.f32 %v8106, %v8148
    %v8150 = vpop.f32.mrb[0].mxu0
    %v8151 = vadd.f32 %v8108, %v8150
    %v8152 = vpop.f32.mrb[0].mxu0
    %v8153 = vadd.f32 %v8110, %v8152
    %v8154 = vpop.f32.mrb[0].mxu0
    %v8155 = vadd.f32 %v8112, %v8154
    %8156 = vdwg.mxu0
    %8157 = vmatprep.subr.bf16.mxu0 %v7496
    %8158 = vmatpush1.bf16.msra.mxu0 %v7495
    %8159 = vmatprep.subr.bf16.mxu0 %v7498
    %8160 = vmatpush1.bf16.msra.mxu0 %v7497
    %8161 = vmatprep.subr.bf16.mxu0 %v7500
    %8162 = vmatpush1.bf16.msra.mxu0 %v7499
    %8163 = vmatprep.subr.bf16.mxu0 %v7502
    %8164 = vmatpush1.bf16.msra.mxu0 %v7501
    %8165 = vmatprep.subr.bf16.mxu0 %v7504
    %8166 = vmatpush1.bf16.msra.mxu0 %v7503
    %8167 = vmatprep.subr.bf16.mxu0 %v7506
    %8168 = vmatpush1.bf16.msra.mxu0 %v7505
    %8169 = vmatprep.subr.bf16.mxu0 %v7508
    %8170 = vmatpush1.bf16.msra.mxu0 %v7507
    %8171 = vmatprep.subr.bf16.mxu0 %v7510
    %8172 = vmatpush1.bf16.msra.mxu0 %v7509
    %8173 = vmatprep.subr.bf16.mxu0 %v7512
    %8174 = vmatpush1.bf16.msra.mxu0 %v7511
    %8175 = vmatprep.subr.bf16.mxu0 %v7514
    %8176 = vmatpush1.bf16.msra.mxu0 %v7513
    %8177 = vmatprep.subr.bf16.mxu0 %v7516
    %8178 = vmatpush1.bf16.msra.mxu0 %v7515
    %8179 = vmatprep.subr.bf16.mxu0 %v7518
    %8180 = vmatpush1.bf16.msra.mxu0 %v7517
    %8181 = vmatprep.subr.bf16.mxu0 %v7520
    %8182 = vmatpush1.bf16.msra.mxu0 %v7519
    %8183 = vmatprep.subr.bf16.mxu0 %v7522
    %8184 = vmatpush1.bf16.msra.mxu0 %v7521
    %8185 = vmatprep.subr.bf16.mxu0 %v7524
    %8186 = vmatpush1.bf16.msra.mxu0 %v7523
    %8187 = vmatprep.subr.bf16.mxu0 %v7526
    %8188 = vmatpush1.bf16.msra.mxu0 %v7525
    %8189 = vmatprep.mubr.bf16.mxu0 %v6124
    %8190 = vmatmul.mubr.bf16.gmra.mrb[0].mxu0 %v6123
    %v8191 = vpop.f32.mrb[0].mxu0
    %v8192 = vadd.f32 %v8149, %v8191
    %v8193 = vpop.f32.mrb[0].mxu0
    %v8194 = vadd.f32 %v8151, %v8193
    %v8195 = vpop.f32.mrb[0].mxu0
    %v8196 = vadd.f32 %v8153, %v8195
    %v8197 = vpop.f32.mrb[0].mxu0
    %v8198 = vadd.f32 %v8155, %v8197
    %8199 = vdwg.mxu0
    %8200 = vmatprep.subr.bf16.mxu0 %v7528
    %8201 = vmatpush1.bf16.msra.mxu0 %v7527
    %8202 = vmatprep.subr.bf16.mxu0 %v7530
    %8203 = vmatpush1.bf16.msra.mxu0 %v7529
    %8204 = vmatprep.subr.bf16.mxu0 %v7532
    %8205 = vmatpush1.bf16.msra.mxu0 %v7531
    %8206 = vmatprep.subr.bf16.mxu0 %v7534
    %8207 = vmatpush1.bf16.msra.mxu0 %v7533
    %8208 = vmatprep.subr.bf16.mxu0 %v7536
    %8209 = vmatpush1.bf16.msra.mxu0 %v7535
    %8210 = vmatprep.subr.bf16.mxu0 %v7538
    %8211 = vmatpush1.bf16.msra.mxu0 %v7537
    %8212 = vmatprep.subr.bf16.mxu0 %v7540
    %8213 = vmatpush1.bf16.msra.mxu0 %v7539
    %8214 = vmatprep.subr.bf16.mxu0 %v7542
    %8215 = vmatpush1.bf16.msra.mxu0 %v7541
    %8216 = vmatprep.subr.bf16.mxu0 %v7544
    %8217 = vmatpush1.bf16.msra.mxu0 %v7543
    %8218 = vmatprep.subr.bf16.mxu0 %v7546
    %8219 = vmatpush1.bf16.msra.mxu0 %v7545
    %8220 = vmatprep.subr.bf16.mxu0 %v7548
    %8221 = vmatpush1.bf16.msra.mxu0 %v7547
    %8222 = vmatprep.subr.bf16.mxu0 %v7550
    %8223 = vmatpush1.bf16.msra.mxu0 %v7549
    %8224 = vmatprep.subr.bf16.mxu0 %v7552
    %8225 = vmatpush1.bf16.msra.mxu0 %v7551
    %8226 = vmatprep.subr.bf16.mxu0 %v7554
    %8227 = vmatpush1.bf16.msra.mxu0 %v7553
    %8228 = vmatprep.subr.bf16.mxu0 %v7556
    %8229 = vmatpush1.bf16.msra.mxu0 %v7555
    %8230 = vmatprep.subr.bf16.mxu0 %v7558
    %8231 = vmatpush1.bf16.msra.mxu0 %v7557
    %8232 = vmatprep.mubr.bf16.mxu0 %v6126
    %8233 = vmatmul.mubr.bf16.gmra.mrb[0].mxu0 %v6125
    %v8234 = vpop.f32.mrb[0].mxu0
    %v8235 = vadd.f32 %v8192, %v8234
    %v8236 = vpop.f32.mrb[0].mxu0
    %v8237 = vadd.f32 %v8194, %v8236
    %v8238 = vpop.f32.mrb[0].mxu0
    %v8239 = vadd.f32 %v8196, %v8238
    %v8240 = vpop.f32.mrb[0].mxu0
    %v8241 = vadd.f32 %v8198, %v8240
    %8242 = vdwg.mxu0
    %8243 = vmatprep.subr.bf16.mxu0 %v7560
    %8244 = vmatpush1.bf16.msra.mxu0 %v7559
    %8245 = vmatprep.subr.bf16.mxu0 %v7562
    %8246 = vmatpush1.bf16.msra.mxu0 %v7561
    %8247 = vmatprep.subr.bf16.mxu0 %v7564
    %8248 = vmatpush1.bf16.msra.mxu0 %v7563
    %8249 = vmatprep.subr.bf16.mxu0 %v7566
    %8250 = vmatpush1.bf16.msra.mxu0 %v7565
    %8251 = vmatprep.subr.bf16.mxu0 %v7568
    %8252 = vmatpush1.bf16.msra.mxu0 %v7567
    %8253 = vmatprep.subr.bf16.mxu0 %v7570
    %8254 = vmatpush1.bf16.msra.mxu0 %v7569
    %8255 = vmatprep.subr.bf16.mxu0 %v7572
    %8256 = vmatpush1.bf16.msra.mxu0 %v7571
    %8257 = vmatprep.subr.bf16.mxu0 %v7574
    %8258 = vmatpush1.bf16.msra.mxu0 %v7573
    %8259 = vmatprep.subr.bf16.mxu0 %v7576
    %8260 = vmatpush1.bf16.msra.mxu0 %v7575
    %8261 = vmatprep.subr.bf16.mxu0 %v7578
    %8262 = vmatpush1.bf16.msra.mxu0 %v7577
    %8263 = vmatprep.subr.bf16.mxu0 %v7580
    %8264 = vmatpush1.bf16.msra.mxu0 %v7579
    %8265 = vmatprep.subr.bf16.mxu0 %v7582
    %8266 = vmatpush1.bf16.msra.mxu0 %v7581
    %8267 = vmatprep.subr.bf16.mxu0 %v7584
    %8268 = vmatpush1.bf16.msra.mxu0 %v7583
    %8269 = vmatprep.subr.bf16.mxu0 %v7586
    %8270 = vmatpush1.bf16.msra.mxu0 %v7585
    %8271 = vmatprep.subr.bf16.mxu0 %v7588
    %8272 = vmatpush1.bf16.msra.mxu0 %v7587
    %8273 = vmatprep.subr.bf16.mxu0 %v7590
    %8274 = vmatpush1.bf16.msra.mxu0 %v7589
    %8275 = vmatprep.mubr.bf16.mxu0 %v6128
    %8276 = vmatmul.mubr.bf16.gmra.mrb[0].mxu0 %v6127
    %v8277 = vpop.f32.mrb[0].mxu0
    %v8278 = vadd.f32 %v8235, %v8277
    %v8279 = vpop.f32.mrb[0].mxu0
    %v8280 = vadd.f32 %v8237, %v8279
    %v8281 = vpop.f32.mrb[0].mxu0
    %v8282 = vadd.f32 %v8239, %v8281
    %v8283 = vpop.f32.mrb[0].mxu0
    %v8284 = vadd.f32 %v8241, %v8283
    %8285 = vdwg.mxu0
    %8286 = vmatprep.subr.bf16.mxu0 %v7592
    %8287 = vmatpush1.bf16.msra.mxu0 %v7591
    %8288 = vmatprep.subr.bf16.mxu0 %v7594
    %8289 = vmatpush1.bf16.msra.mxu0 %v7593
    %8290 = vmatprep.subr.bf16.mxu0 %v7596
    %8291 = vmatpush1.bf16.msra.mxu0 %v7595
    %8292 = vmatprep.subr.bf16.mxu0 %v7598
    %8293 = vmatpush1.bf16.msra.mxu0 %v7597
    %8294 = vmatprep.subr.bf16.mxu0 %v7600
    %8295 = vmatpush1.bf16.msra.mxu0 %v7599
    %8296 = vmatprep.subr.bf16.mxu0 %v7602
    %8297 = vmatpush1.bf16.msra.mxu0 %v7601
    %8298 = vmatprep.subr.bf16.mxu0 %v7604
    %8299 = vmatpush1.bf16.msra.mxu0 %v7603
    %8300 = vmatprep.subr.bf16.mxu0 %v7606
    %8301 = vmatpush1.bf16.msra.mxu0 %v7605
    %8302 = vmatprep.subr.bf16.mxu0 %v7608
    %8303 = vmatpush1.bf16.msra.mxu0 %v7607
    %8304 = vmatprep.subr.bf16.mxu0 %v7610
    %8305 = vmatpush1.bf16.msra.mxu0 %v7609
    %8306 = vmatprep.subr.bf16.mxu0 %v7612
    %8307 = vmatpush1.bf16.msra.mxu0 %v7611
    %8308 = vmatprep.subr.bf16.mxu0 %v7614
    %8309 = vmatpush1.bf16.msra.mxu0 %v7613
    %8310 = vmatprep.subr.bf16.mxu0 %v7616
    %8311 = vmatpush1.bf16.msra.mxu0 %v7615
    %8312 = vmatprep.subr.bf16.mxu0 %v7618
    %8313 = vmatpush1.bf16.msra.mxu0 %v7617
    %8314 = vmatprep.subr.bf16.mxu0 %v7620
    %8315 = vmatpush1.bf16.msra.mxu0 %v7619
    %8316 = vmatprep.subr.bf16.mxu0 %v7622
    %8317 = vmatpush1.bf16.msra.mxu0 %v7621
    %8318 = vmatprep.mubr.bf16.mxu0 %v6130
    %8319 = vmatmul.mubr.bf16.gmra.mrb[0].mxu0 %v6129
    %v8320 = vpop.f32.mrb[0].mxu0
    %v8321 = vadd.f32 %v8278, %v8320
    %v8322 = vpop.f32.mrb[0].mxu0
    %v8323 = vadd.f32 %v8280, %v8322
    %v8324 = vpop.f32.mrb[0].mxu0
    %v8325 = vadd.f32 %v8282, %v8324
    %v8326 = vpop.f32.mrb[0].mxu0
    %v8327 = vadd.f32 %v8284, %v8326
    %8328 = vdwg.mxu0
    %8329 = vmatprep.subr.bf16.mxu0 %v7624
    %8330 = vmatpush1.bf16.msra.mxu0 %v7623
    %8331 = vmatprep.subr.bf16.mxu0 %v7626
    %8332 = vmatpush1.bf16.msra.mxu0 %v7625
    %8333 = vmatprep.subr.bf16.mxu0 %v7628
    %8334 = vmatpush1.bf16.msra.mxu0 %v7627
    %8335 = vmatprep.subr.bf16.mxu0 %v7630
    %8336 = vmatpush1.bf16.msra.mxu0 %v7629
    %8337 = vmatprep.subr.bf16.mxu0 %v7632
    %8338 = vmatpush1.bf16.msra.mxu0 %v7631
    %8339 = vmatprep.subr.bf16.mxu0 %v7634
    %8340 = vmatpush1.bf16.msra.mxu0 %v7633
    %8341 = vmatprep.subr.bf16.mxu0 %v7636
    %8342 = vmatpush1.bf16.msra.mxu0 %v7635
    %8343 = vmatprep.subr.bf16.mxu0 %v7638
    %8344 = vmatpush1.bf16.msra.mxu0 %v7637
    %8345 = vmatprep.subr.bf16.mxu0 %v7640
    %8346 = vmatpush1.bf16.msra.mxu0 %v7639
    %8347 = vmatprep.subr.bf16.mxu0 %v7642
    %8348 = vmatpush1.bf16.msra.mxu0 %v7641
    %8349 = vmatprep.subr.bf16.mxu0 %v7644
    %8350 = vmatpush1.bf16.msra.mxu0 %v7643
    %8351 = vmatprep.subr.bf16.mxu0 %v7646
    %8352 = vmatpush1.bf16.msra.mxu0 %v7645
    %8353 = vmatprep.subr.bf16.mxu0 %v7648
    %8354 = vmatpush1.bf16.msra.mxu0 %v7647
    %8355 = vmatprep.subr.bf16.mxu0 %v7650
    %8356 = vmatpush1.bf16.msra.mxu0 %v7649
    %8357 = vmatprep.subr.bf16.mxu0 %v7652
    %8358 = vmatpush1.bf16.msra.mxu0 %v7651
    %8359 = vmatprep.subr.bf16.mxu0 %v7654
    %8360 = vmatpush1.bf16.msra.mxu0 %v7653
    %8361 = vmatprep.mubr.bf16.mxu0 %v6132
    %8362 = vmatmul.mubr.bf16.gmra.mrb[0].mxu0 %v6131
    %v8363 = vpop.f32.mrb[0].mxu0
    %v8364 = vadd.f32 %v8321, %v8363
    %v8365 = vpop.f32.mrb[0].mxu0
    %v8366 = vadd.f32 %v8323, %v8365
    %v8367 = vpop.f32.mrb[0].mxu0
    %v8368 = vadd.f32 %v8325, %v8367
    %v8369 = vpop.f32.mrb[0].mxu0
    %v8370 = vadd.f32 %v8327, %v8369
    %8371 = vdwg.mxu0
    %8372 = vmatprep.subr.bf16.mxu0 %v7656
    %8373 = vmatpush1.bf16.msra.mxu0 %v7655
    %8374 = vmatprep.subr.bf16.mxu0 %v7658
    %8375 = vmatpush1.bf16.msra.mxu0 %v7657
    %8376 = vmatprep.subr.bf16.mxu0 %v7660
    %8377 = vmatpush1.bf16.msra.mxu0 %v7659
    %8378 = vmatprep.subr.bf16.mxu0 %v7662
    %8379 = vmatpush1.bf16.msra.mxu0 %v7661
    %8380 = vmatprep.subr.bf16.mxu0 %v7664
    %8381 = vmatpush1.bf16.msra.mxu0 %v7663
    %8382 = vmatprep.subr.bf16.mxu0 %v7666
    %8383 = vmatpush1.bf16.msra.mxu0 %v7665
    %8384 = vmatprep.subr.bf16.mxu0 %v7668
    %8385 = vmatpush1.bf16.msra.mxu0 %v7667
    %8386 = vmatprep.subr.bf16.mxu0 %v7670
    %8387 = vmatpush1.bf16.msra.mxu0 %v7669
    %8388 = vmatprep.subr.bf16.mxu0 %v7672
    %8389 = vmatpush1.bf16.msra.mxu0 %v7671
    %8390 = vmatprep.subr.bf16.mxu0 %v7674
    %8391 = vmatpush1.bf16.msra.mxu0 %v7673
    %8392 = vmatprep.subr.bf16.mxu0 %v7676
    %8393 = vmatpush1.bf16.msra.mxu0 %v7675
    %8394 = vmatprep.subr.bf16.mxu0 %v7678
    %8395 = vmatpush1.bf16.msra.mxu0 %v7677
    %8396 = vmatprep.subr.bf16.mxu0 %v7680
    %8397 = vmatpush1.bf16.msra.mxu0 %v7679
    %8398 = vmatprep.subr.bf16.mxu0 %v7682
    %8399 = vmatpush1.bf16.msra.mxu0 %v7681
    %8400 = vmatprep.subr.bf16.mxu0 %v7684
    %8401 = vmatpush1.bf16.msra.mxu0 %v7683
    %8402 = vmatprep.subr.bf16.mxu0 %v7686
    %8403 = vmatpush1.bf16.msra.mxu0 %v7685
    %8404 = vmatprep.mubr.bf16.mxu0 %v6134
    %8405 = vmatmul.mubr.bf16.gmra.mrb[0].mxu0 %v6133
    %v8406 = vpop.f32.mrb[0].mxu0
    %v8407 = vadd.f32 %v8364, %v8406
    %v8408 = vpop.f32.mrb[0].mxu0
    %v8409 = vadd.f32 %v8366, %v8408
    %v8410 = vpop.f32.mrb[0].mxu0
    %v8411 = vadd.f32 %v8368, %v8410
    %v8412 = vpop.f32.mrb[0].mxu0
    %v8413 = vadd.f32 %v8370, %v8412
    %8414 = vdwg.mxu0
    %8415 = vmatprep.subr.bf16.mxu0 %v7688
    %8416 = vmatpush1.bf16.msra.mxu0 %v7687
    %8417 = vmatprep.subr.bf16.mxu0 %v7690
    %8418 = vmatpush1.bf16.msra.mxu0 %v7689
    %8419 = vmatprep.subr.bf16.mxu0 %v7692
    %8420 = vmatpush1.bf16.msra.mxu0 %v7691
    %8421 = vmatprep.subr.bf16.mxu0 %v7694
    %8422 = vmatpush1.bf16.msra.mxu0 %v7693
    %8423 = vmatprep.subr.bf16.mxu0 %v7696
    %8424 = vmatpush1.bf16.msra.mxu0 %v7695
    %8425 = vmatprep.subr.bf16.mxu0 %v7698
    %8426 = vmatpush1.bf16.msra.mxu0 %v7697
    %8427 = vmatprep.subr.bf16.mxu0 %v7700
    %8428 = vmatpush1.bf16.msra.mxu0 %v7699
    %8429 = vmatprep.subr.bf16.mxu0 %v7702
    %8430 = vmatpush1.bf16.msra.mxu0 %v7701
    %8431 = vmatprep.subr.bf16.mxu0 %v7704
    %8432 = vmatpush1.bf16.msra.mxu0 %v7703
    %8433 = vmatprep.subr.bf16.mxu0 %v7706
    %8434 = vmatpush1.bf16.msra.mxu0 %v7705
    %8435 = vmatprep.subr.bf16.mxu0 %v7708
    %8436 = vmatpush1.bf16.msra.mxu0 %v7707
    %8437 = vmatprep.subr.bf16.mxu0 %v7710
    %8438 = vmatpush1.bf16.msra.mxu0 %v7709
    %8439 = vmatprep.subr.bf16.mxu0 %v7712
    %8440 = vmatpush1.bf16.msra.mxu0 %v7711
    %8441 = vmatprep.subr.bf16.mxu0 %v7714
    %8442 = vmatpush1.bf16.msra.mxu0 %v7713
    %8443 = vmatprep.subr.bf16.mxu0 %v7716
    %8444 = vmatpush1.bf16.msra.mxu0 %v7715
    %8445 = vmatprep.subr.bf16.mxu0 %v7718
    %8446 = vmatpush1.bf16.msra.mxu0 %v7717
    %8447 = vmatprep.mubr.bf16.mxu0 %v6136
    %8448 = vmatmul.mubr.bf16.gmra.mrb[0].mxu0 %v6135
    %v8449 = vpop.f32.mrb[0].mxu0
    %v8450 = vadd.f32 %v8407, %v8449
    %v8451 = vpop.f32.mrb[0].mxu0
    %v8452 = vadd.f32 %v8409, %v8451
    %v8453 = vpop.f32.mrb[0].mxu0
    %v8454 = vadd.f32 %v8411, %v8453
    %v8455 = vpop.f32.mrb[0].mxu0
    %v8456 = vadd.f32 %v8413, %v8455
    %8457 = vdwg.mxu0
    %8458 = vmatprep.subr.bf16.mxu0 %v7720
    %8459 = vmatpush1.bf16.msra.mxu0 %v7719
    %8460 = vmatprep.subr.bf16.mxu0 %v7722
    %8461 = vmatpush1.bf16.msra.mxu0 %v7721
    %8462 = vmatprep.subr.bf16.mxu0 %v7724
    %8463 = vmatpush1.bf16.msra.mxu0 %v7723
    %8464 = vmatprep.subr.bf16.mxu0 %v7726
    %8465 = vmatpush1.bf16.msra.mxu0 %v7725
    %8466 = vmatprep.subr.bf16.mxu0 %v7728
    %8467 = vmatpush1.bf16.msra.mxu0 %v7727
    %8468 = vmatprep.subr.bf16.mxu0 %v7730
    %8469 = vmatpush1.bf16.msra.mxu0 %v7729
    %8470 = vmatprep.subr.bf16.mxu0 %v7732
    %8471 = vmatpush1.bf16.msra.mxu0 %v7731
    %8472 = vmatprep.subr.bf16.mxu0 %v7734
    %8473 = vmatpush1.bf16.msra.mxu0 %v7733
    %8474 = vmatprep.subr.bf16.mxu0 %v7736
    %8475 = vmatpush1.bf16.msra.mxu0 %v7735
    %8476 = vmatprep.subr.bf16.mxu0 %v7738
    %8477 = vmatpush1.bf16.msra.mxu0 %v7737
    %8478 = vmatprep.subr.bf16.mxu0 %v7740
    %8479 = vmatpush1.bf16.msra.mxu0 %v7739
    %8480 = vmatprep.subr.bf16.mxu0 %v7742
    %8481 = vmatpush1.bf16.msra.mxu0 %v7741
    %8482 = vmatprep.subr.bf16.mxu0 %v7744
    %8483 = vmatpush1.bf16.msra.mxu0 %v7743
    %8484 = vmatprep.subr.bf16.mxu0 %v7746
    %8485 = vmatpush1.bf16.msra.mxu0 %v7745
    %8486 = vmatprep.subr.bf16.mxu0 %v7748
    %8487 = vmatpush1.bf16.msra.mxu0 %v7747
    %8488 = vmatprep.subr.bf16.mxu0 %v7750
    %8489 = vmatpush1.bf16.msra.mxu0 %v7749
    %8490 = vmatprep.mubr.bf16.mxu0 %v6138
    %8491 = vmatmul.mubr.bf16.gmra.mrb[0].mxu0 %v6137
    %v8492 = vpop.f32.mrb[0].mxu0
    %v8493 = vadd.f32 %v8450, %v8492
    %v8494 = vpop.f32.mrb[0].mxu0
    %v8495 = vadd.f32 %v8452, %v8494
    %v8496 = vpop.f32.mrb[0].mxu0
    %v8497 = vadd.f32 %v8454, %v8496
    %v8498 = vpop.f32.mrb[0].mxu0
    %v8499 = vadd.f32 %v8456, %v8498
    %8500 = vdwg.mxu0
    %v8501 = vmax.f32 %v8493, 0.0
    %v8502 = vmax.f32 %v8495, 0.0
    %v8503 = vmax.f32 %v8497, 0.0
    %v8504 = vmax.f32 %v8499, 0.0
    %v8505 = vld [vmem:[%s7] sm:$0xff]
    %v8506 = vld [vmem:[%s7 + $0x8] sm:$0xff]
    %v8507 = vld [vmem:[%s7 + $0x10] sm:$0xff]
    %v8508 = vld [vmem:[%s7 + $0x18] sm:$0xff]
    %v8509 = vld [vmem:[%s7 + $0x20] sm:$0xff]
    %v8510 = vld [vmem:[%s7 + $0x28] sm:$0xff]
    %v8511 = vld [vmem:[%s7 + $0x30] sm:$0xff]
    %v8512 = vld [vmem:[%s7 + $0x38] sm:$0xff]
    %v8513 = vld [vmem:[%s7 + $0x40] sm:$0xff]
    %v8514 = vld [vmem:[%s7 + $0x48] sm:$0xff]
    %v8515 = vld [vmem:[%s7 + $0x50] sm:$0xff]
    %v8516 = vld [vmem:[%s7 + $0x58] sm:$0xff]
    %v8517 = vld [vmem:[%s7 + $0x60] sm:$0xff]
    %v8518 = vld [vmem:[%s7 + $0x68] sm:$0xff]
    %v8519 = vld [vmem:[%s7 + $0x70] sm:$0xff]
    %v8520 = vld [vmem:[%s7 + $0x78] sm:$0xff]
    %v8521 = vld [vmem:[%s7 + $0x80] sm:$0xff]
    %v8522 = vld [vmem:[%s7 + $0x88] sm:$0xff]
    %v8523 = vld [vmem:[%s7 + $0x90] sm:$0xff]
    %v8524 = vld [vmem:[%s7 + $0x98] sm:$0xff]
    %v8525 = vld [vmem:[%s7 + $0xa0] sm:$0xff]
    %v8526 = vld [vmem:[%s7 + $0xa8] sm:$0xff]
    %v8527 = vld [vmem:[%s7 + $0xb0] sm:$0xff]
    %v8528 = vld [vmem:[%s7 + $0xb8] sm:$0xff]
    %v8529 = vld [vmem:[%s7 + $0xc0] sm:$0xff]
    %v8530 = vld [vmem:[%s7 + $0xc8] sm:$0xff]
    %v8531 = vld [vmem:[%s7 + $0xd0] sm:$0xff]
    %v8532 = vld [vmem:[%s7 + $0xd8] sm:$0xff]
    %v8533 = vld [vmem:[%s7 + $0xe0] sm:$0xff]
    %v8534 = vld [vmem:[%s7 + $0xe8] sm:$0xff]
    %v8535 = vld [vmem:[%s7 + $0xf0] sm:$0xff]
    %v8536 = vld [vmem:[%s7 + $0xf8] sm:$0xff]
    %v8537 = vld [vmem:[#allocation14] sm:$0x1]
    %v8539 = vlaneseq
    %v8540 = vshrl.u32 %v8539, 7
    %v8541 = vsub.s32 0, %v8540
    %v8542 = vrot.slane %v8537, %v8541
    %8544 = vmatprep.subr.mxu0 0.0
    %8545 = vmatpush1.msra.mxu0 %v8505
    %8546 = vmatprep.subr.mxu0 0.0
    %8547 = vmatpush1.msra.mxu0 %v8506
    %8548 = vmatprep.subr.mxu0 0.0
    %8549 = vmatpush1.msra.mxu0 %v8507
    %8550 = vmatprep.subr.mxu0 0.0
    %8551 = vmatpush1.msra.mxu0 %v8508
    %8552 = vmatprep.subr.mxu0 0.0
    %8553 = vmatpush1.msra.mxu0 %v8509
    %8554 = vmatprep.subr.mxu0 0.0
    %8555 = vmatpush1.msra.mxu0 %v8510
    %8556 = vmatprep.subr.mxu0 0.0
    %8557 = vmatpush1.msra.mxu0 %v8511
    %8558 = vmatprep.subr.mxu0 0.0
    %8559 = vmatpush1.msra.mxu0 %v8512
    %8560 = vmatprep.subr.mxu0 0.0
    %8561 = vmatpush1.msra.mxu0 %v8513
    %8562 = vmatprep.subr.mxu0 0.0
    %8563 = vmatpush1.msra.mxu0 %v8514
    %8564 = vmatprep.subr.mxu0 0.0
    %8565 = vmatpush1.msra.mxu0 %v8515
    %8566 = vmatprep.subr.mxu0 0.0
    %8567 = vmatpush1.msra.mxu0 %v8516
    %8568 = vmatprep.subr.mxu0 0.0
    %8569 = vmatpush1.msra.mxu0 %v8517
    %8570 = vmatprep.subr.mxu0 0.0
    %8571 = vmatpush1.msra.mxu0 %v8518
    %8572 = vmatprep.subr.mxu0 0.0
    %8573 = vmatpush1.msra.mxu0 %v8519
    %8574 = vmatprep.subr.mxu0 0.0
    %8575 = vmatpush1.msra.mxu0 %v8520
    %8576 = vmatprep.subr.mxu0 0.0
    %8577 = vmatpush1.msra.mxu0 %v8521
    %8578 = vmatprep.subr.mxu0 0.0
    %8579 = vmatpush1.msra.mxu0 %v8522
    %8580 = vmatprep.subr.mxu0 0.0
    %8581 = vmatpush1.msra.mxu0 %v8523
    %8582 = vmatprep.subr.mxu0 0.0
    %8583 = vmatpush1.msra.mxu0 %v8524
    %8584 = vmatprep.subr.mxu0 0.0
    %8585 = vmatpush1.msra.mxu0 %v8525
    %8586 = vmatprep.subr.mxu0 0.0
    %8587 = vmatpush1.msra.mxu0 %v8526
    %8588 = vmatprep.subr.mxu0 0.0
    %8589 = vmatpush1.msra.mxu0 %v8527
    %8590 = vmatprep.subr.mxu0 0.0
    %8591 = vmatpush1.msra.mxu0 %v8528
    %8592 = vmatprep.subr.mxu0 0.0
    %8593 = vmatpush1.msra.mxu0 %v8529
    %8594 = vmatprep.subr.mxu0 0.0
    %8595 = vmatpush1.msra.mxu0 %v8530
    %8596 = vmatprep.subr.mxu0 0.0
    %8597 = vmatpush1.msra.mxu0 %v8531
    %8598 = vmatprep.subr.mxu0 0.0
    %8599 = vmatpush1.msra.mxu0 %v8532
    %8600 = vmatprep.subr.mxu0 0.0
    %8601 = vmatpush1.msra.mxu0 %v8533
    %8602 = vmatprep.subr.mxu0 0.0
    %8603 = vmatpush1.msra.mxu0 %v8534
    %8604 = vmatprep.subr.mxu0 0.0
    %8605 = vmatpush1.msra.mxu0 %v8535
    %8606 = vmatprep.subr.mxu0 0.0
    %8607 = vmatpush1.msra.mxu0 %v8536
    %8608 = vmatprep.mubr.f32.mxu0 %v8502
    %8609 = vmatmul.mubr.f32.gmra.mrb[0].mxu0 %v8501
    %v8610 = vpop.f32.mrb[0].mxu0
    %v8611 = vadd.f32 %v8542, %v8610
    %v8612 = vpop.f32.mrb[0].mxu0
    %8613 = vmatprep.mubr.f32.mxu0 %v8504
    %8614 = vmatmul.mubr.f32.gmra.mrb[0].mxu0 %v8503
    %v8615 = vpop.f32.mrb[0].mxu0
    %v8616 = vadd.f32 %v8542, %v8615
    %v8617 = vpop.f32.mrb[0].mxu0
    %8618 = vdwg.mxu0
    %vm8619 = vcmask 31744
    %8620 = vst.msk [vmem:[%s9] sm:$0xff] %vm8619, %v8611
    %8621 = vst.msk [vmem:[%s9 + $0x8] sm:$0xff] %vm8619, %v8616
    // Predicated region
    $region62: #{convdqn_forward.1} parent=1 // pred_check
      _
    $region63: #{convdqn_forward.1} parent=1 // pred_check_branch
      %8623 = sbr.rel (0) target = $region65
    $region64: #{convdqn_forward.1} parent=1 // pred_region
      _
    $region65: #{convdqn_forward.1} parent=1 // pred_fallthru
      _
    // Predicated region
    $region66: #{convdqn_forward.1} parent=1 // pred_check
      _
    $region67: #{convdqn_forward.1} parent=1 // pred_check_branch
      %8625 = sbr.rel (0) target = $region69
    $region68: #{convdqn_forward.1} parent=1 // pred_region
      _
    $region69: #{convdqn_forward.1} parent=1 // pred_fallthru
      _
    %8626 = vsyncpa [#allocation7], 1
    %8627 = vsyncpa [#allocation9], 1
    %8628 = vsyncpa [#allocation12], 1
    %8629 = vsyncpa [#allocation15], 1

</llo_original>
